<compile_context>
chip_gen: v7x
topology: tpu7x:2x2x1
jax: 0.10.0
libtpu: 0.0.40
codegen_flags: <defaults>
</compile_context>

<pallas_src>
import functools

import jax
import jax.numpy as jnp
from jax.experimental import pallas as pl
from jax.experimental.pallas import tpu as pltpu

LN_EPS = 1e-5
_INV_SQRT2 = 0.7071067811865475

_VMEM = pl.BlockSpec(memory_space=pltpu.MemorySpace.VMEM)  # whole array in VMEM


def _layer_norm(x, w, b):
    # x: (M, D); w, b: (1, D)
    mean = jnp.mean(x, axis=-1, keepdims=True)
    var = jnp.mean((x - mean) ** 2, axis=-1, keepdims=True)
    return (x - mean) * jax.lax.rsqrt(var + LN_EPS) * w + b


# ----------------------------------------------------------------------------
# Fused per-layer kernel: attention + top-k + gather + FFN (+ optional final LN)
# ----------------------------------------------------------------------------
def layer_kernel(x_ref,
                 a_lnw_ref, a_lnb_ref, w_qkv_ref, w_out_ref, b_out_ref,
                 f_lnw_ref, f_lnb_ref, w1_ref, b1_ref, w2_ref, b2_ref,
                 fn_w_ref, fn_b_ref,
                 out_ref,
                 *, batch, n_tok, heads, dim_head, keep, scale,
                 apply_final_ln):
    N = n_tok
    NP = N - 1                    # number of patch tokens (CLS excluded)
    K1 = keep + 1                 # tokens kept (CLS + keep patches)
    inner = heads * dim_head

    x_flat = x_ref[...]                                         # (B*N, D)
    xn = _layer_norm(x_flat, a_lnw_ref[...], a_lnb_ref[...])

    # Fused QKV projection: one lane-dense (B*N, D) @ (D, 3*inner) matmul.
    qkv = jnp.dot(xn, w_qkv_ref[...], preferred_element_type=jnp.float32)
    q_all = qkv[:, 0:inner] * scale          # attention scale folded into q
    k_all = qkv[:, inner:2 * inner]
    v_all = qkv[:, 2 * inner:3 * inner]

    # Constants for the in-kernel top-k / one-hot gather (hoisted out of loops).
    lane_p = jax.lax.broadcasted_iota(jnp.int32, (1, NP), 1)    # patch index p
    lt = (jax.lax.broadcasted_iota(jnp.int32, (NP, NP), 0)
          < jax.lax.broadcasted_iota(jnp.int32, (NP, NP), 1)
          ).astype(jnp.float32)                                 # lt[q, p] = [q < p]
    r_iota = jax.lax.broadcasted_iota(jnp.int32, (K1, NP), 0)   # output row r
    cls_col = (jax.lax.broadcasted_iota(jnp.int32, (K1, 1), 0) == 0
               ).astype(jnp.float32)                            # row 0 <- CLS token

    o_rows = []
    sel_rows = []
    for b in range(batch):                                      # tiny static unroll
        r0, r1 = b * N, (b + 1) * N
        q_b, k_b, v_b = q_all[r0:r1], k_all[r0:r1], v_all[r0:r1]

        cls_b = None
        o_heads = []
        # The score/attend step is inherently per-(b, h).
        for h in range(heads):
            c0, c1 = h * dim_head, (h + 1) * dim_head
            q_h, k_h, v_h = q_b[:, c0:c1], k_b[:, c0:c1], v_b[:, c0:c1]
            dots = jax.lax.dot_general(                          # q_h @ k_h.T
                q_h, k_h, (((1,), (1,)), ((), ())),
                preferred_element_type=jnp.float32)              # (N, N)
            dots = dots - jnp.max(dots, axis=-1, keepdims=True)
            e = jnp.exp(dots)
            inv = 1.0 / jnp.sum(e, axis=-1, keepdims=True)       # exact: top-k parity
            o_heads.append(
                jnp.dot(e, v_h, preferred_element_type=jnp.float32) * inv)
            cls_h = e[0:1, 1:] * inv[0:1]                        # softmax CLS row
            cls_b = cls_h if cls_b is None else jnp.maximum(cls_b, cls_h)

        o_rows.append(jnp.concatenate(o_heads, axis=-1))         # (N, inner)

        # ---- in-kernel top-k over the NP patch scores (iterative argmax) ----
        scores = cls_b                                           # (1, NP) in [0, 1]
        selected = jnp.zeros((1, NP), jnp.float32)
        for _ in range(keep):
            m = jnp.max(scores, axis=-1, keepdims=True)
            cand = jnp.where(scores >= m, lane_p, NP)
            arg = jnp.min(cand, axis=-1, keepdims=True)          # lowest tied index
            one_hot = lane_p == arg
            selected = jnp.where(one_hot, 1.0, selected)
            scores = jnp.where(one_hot, -1.0, scores)
        # pos_p = number of selected patches with lower index (ascending order).
        pos = jnp.dot(selected, lt, preferred_element_type=jnp.float32)
        pos_i = pos.astype(jnp.int32)                            # exact small ints
        keep_b = jnp.broadcast_to(selected, (K1, NP)) > 0.5
        pos_b = jnp.broadcast_to(pos_i, (K1, NP))
        patch_sel = jnp.where((pos_b + 1 == r_iota) & keep_b, 1.0, 0.0)
        sel_rows.append(jnp.concatenate([cls_col, patch_sel], axis=-1))  # (K1, N)

    # Output projection for all rows at once (head sum inside the contraction).
    o_flat = jnp.concatenate(o_rows, axis=0)                     # (B*N, inner)
    emb = jnp.dot(o_flat, w_out_ref[...],
                  preferred_element_type=jnp.float32) + b_out_ref[...]
    res = emb + x_flat                                           # emb.gather + x.gather operand

    # One-hot gather matmul: g_b = sel_b @ res_b  (gather + residual in one push).
    g_rows = [jnp.dot(sel_rows[b], res[b * N:(b + 1) * N],
                      preferred_element_type=jnp.float32) for b in range(batch)]
    g = jnp.concatenate(g_rows, axis=0)                          # (B*K1, D)

    # ---- FFN on the flattened (B*K1, D) rows ----
    gn = _layer_norm(g, f_lnw_ref[...], f_lnb_ref[...])
    h1 = jnp.dot(gn, w1_ref[...], preferred_element_type=jnp.float32) + b1_ref[...]
    h1 = 0.5 * h1 * (1.0 + jax.lax.erf(h1 * _INV_SQRT2))         # exact GELU
    y = (jnp.dot(h1, w2_ref[...], preferred_element_type=jnp.float32)
         + b2_ref[...] + g)
    if apply_final_ln:                                           # transformer's final LN
        y = _layer_norm(y, fn_w_ref[...], fn_b_ref[...])
    out_ref[...] = y


# ----------------------------------------------------------------------------
# Wrapper: one pallas_call per layer (grid=(), whole problem resident in VMEM)
# ----------------------------------------------------------------------------
def layer_forward(x, lp, heads, dim_head, keep, final_norm, apply_final_ln):
    B, N, D = x.shape
    a, f = lp["attn"], lp["ff"]
    kern = functools.partial(
        layer_kernel, batch=B, n_tok=N, heads=heads, dim_head=dim_head,
        keep=keep, scale=dim_head ** -0.5, apply_final_ln=apply_final_ln)
    out = pl.pallas_call(
        kern,
        out_shape=jax.ShapeDtypeStruct((B * (keep + 1), D), x.dtype),
        in_specs=[_VMEM] * 14,
        out_specs=_VMEM,
    )(x.reshape(B * N, D),
      a["ln_w"], a["ln_b"], a["w_qkv"], a["w_out"], a["b_out"],
      f["ln_w"], f["ln_b"], f["w1"], f["b1"], f["w2"], f["b2"],
      final_norm[0], final_norm[1])
    return out.reshape(B, keep + 1, D)


def transformer_topk_forward(x, params, n_patch, heads, dim_head):
    n_layers = len(params["layers"])
    final_norm = (params["norm_w"], params["norm_b"])
    for l, lp in enumerate(params["layers"]):
        x = layer_forward(x, lp, heads, dim_head, n_patch[l], final_norm,
                          apply_final_ln=(l == n_layers - 1))
    return x


# ----------------------------------------------------------------------------
# Parameter init (kernel-friendly row layout; math identical to PyTorch module)
# ----------------------------------------------------------------------------
def init_params(key, dim, depth, heads, dim_head, mlp_dim):
    inner = heads * dim_head
    layers = []
    for _ in range(depth):
        key, k1, k2, k3, k4 = jax.random.split(key, 5)
        attn = {
            "ln_w": jnp.ones((1, dim), jnp.float32),
            "ln_b": jnp.zeros((1, dim), jnp.float32),
            "w_qkv": 0.02 * jax.random.normal(k1, (dim, 3 * inner), jnp.float32),
            "w_out": 0.02 * jax.random.normal(k2, (inner, dim), jnp.float32),
            "b_out": jnp.zeros((1, dim), jnp.float32),
        }
        ff = {
            "ln_w": jnp.ones((1, dim), jnp.float32),
            "ln_b": jnp.zeros((1, dim), jnp.float32),
            "w1": 0.02 * jax.random.normal(k3, (dim, mlp_dim), jnp.float32),
            "b1": jnp.zeros((1, mlp_dim), jnp.float32),
            "w2": 0.02 * jax.random.normal(k4, (mlp_dim, dim), jnp.float32),
            "b2": jnp.zeros((1, dim), jnp.float32),
        }
        layers.append({"attn": attn, "ff": ff})
    return {"layers": layers,
            "norm_w": jnp.ones((1, dim), jnp.float32),
            "norm_b": jnp.zeros((1, dim), jnp.float32)}


# ----------------------------------------------------------------------------
# Pure-JAX reference (mirrors the PyTorch module) for the sanity check
# ----------------------------------------------------------------------------
def _attention_ref(x, p, heads, dim_head):
    B, N, _ = x.shape
    inner = heads * dim_head
    xn = _layer_norm(x, p["ln_w"], p["ln_b"])
    qkv = xn @ p["w_qkv"]
    q, k, v = jnp.split(qkv, 3, axis=-1)
    rs = lambda t: t.reshape(B, N, heads, dim_head).transpose(0, 2, 1, 3)
    q, k, v = map(rs, (q, k, v))
    dots = jnp.einsum("bhnd,bhmd->bhnm", q, k) * dim_head ** -0.5
    attn = jax.nn.softmax(dots, axis=-1)
    out = jnp.einsum("bhnm,bhmd->bhnd", attn, v)
    out = out.transpose(0, 2, 1, 3).reshape(B, N, inner)
    return out @ p["w_out"] + p["b_out"], attn


def transformer_topk_ref(x, params, n_patch, heads, dim_head):
    B, _, D = x.shape
    for l, lp in enumerate(params["layers"]):
        emb, att = _attention_ref(x, lp["attn"], heads, dim_head)
        cls = jnp.max(att[:, :, 0, 1:], axis=1)
        _, idx = jax.lax.top_k(cls, n_patch[l])
        mask = jnp.sort(idx, axis=1) + 1
        mask = jnp.concatenate([jnp.zeros((B, 1), mask.dtype), mask], axis=1)
        gi = jnp.broadcast_to(mask[:, :, None], (B, mask.shape[1], D))
        g = jnp.take_along_axis(emb, gi, 1) + jnp.take_along_axis(x, gi, 1)
        f = lp["ff"]
        gn = _layer_norm(g, f["ln_w"], f["ln_b"])
        h = gn @ f["w1"] + f["b1"]
        h = 0.5 * h * (1.0 + jax.lax.erf(h * _INV_SQRT2))
        x = h @ f["w2"] + f["b2"] + g
    return _layer_norm(x, params["norm_w"], params["norm_b"])


# ----------------------------------------------------------------------------
if __name__ == "__main__":
    # Small ViT-like config: 1 CLS token + 16 patches.
    B, dim, depth, heads, dim_head, mlp_dim = 2, 32, 2, 4, 8, 64
    N = 17
    n_patch = [8, 4]              # tokens kept after each layer

    key = jax.random.PRNGKey(0)
    kx, kp = jax.random.split(key)
    x = jax.random.normal(kx, (B, N, dim), jnp.float32)
    params = init_params(kp, dim, depth, heads, dim_head, mlp_dim)

    fwd = jax.jit(functools.partial(transformer_topk_forward, n_patch=n_patch,
                                    heads=heads, dim_head=dim_head))
    out = jax.block_until_ready(fwd(x, params))
    assert out.shape == (B, n_patch[-1] + 1, dim)

    ref = transformer_topk_ref(x, params, n_patch, heads, dim_head)
    err = float(jnp.max(jnp.abs(out - ref)))
    assert err < 1e-2, f"max abs error {err}"
    print("KERNEL_OK")
</pallas_src>

<mosaic_0001>
module attributes {stable_mosaic.version = 11 : i64} {
  func.func @layer_kernel(%arg0: memref<34x32xf32, #tpu.memory_space<vmem>>, %arg1: memref<1x32xf32, #tpu.memory_space<vmem>>, %arg2: memref<1x32xf32, #tpu.memory_space<vmem>>, %arg3: memref<32x96xf32, #tpu.memory_space<vmem>>, %arg4: memref<32x32xf32, #tpu.memory_space<vmem>>, %arg5: memref<1x32xf32, #tpu.memory_space<vmem>>, %arg6: memref<1x32xf32, #tpu.memory_space<vmem>>, %arg7: memref<1x32xf32, #tpu.memory_space<vmem>>, %arg8: memref<32x64xf32, #tpu.memory_space<vmem>>, %arg9: memref<1x64xf32, #tpu.memory_space<vmem>>, %arg10: memref<64x32xf32, #tpu.memory_space<vmem>>, %arg11: memref<1x32xf32, #tpu.memory_space<vmem>>, %arg12: memref<1x32xf32, #tpu.memory_space<vmem>>, %arg13: memref<1x32xf32, #tpu.memory_space<vmem>>, %arg14: memref<18x32xf32, #tpu.memory_space<vmem>>) attributes {dimension_semantics = [], scalar_prefetch = 0 : i64, scratch_operands = 0 : i64, tpu.core_type = #tpu.core_type<tc>} {
    %c0 = arith.constant 0 : index
    %c0_0 = arith.constant 0 : index
    %0 = vector.load %arg0[%c0, %c0_0] : memref<34x32xf32, #tpu.memory_space<vmem>>, vector<34x32xf32>
    %c0_1 = arith.constant 0 : index
    %c0_2 = arith.constant 0 : index
    %1 = vector.load %arg1[%c0_1, %c0_2] : memref<1x32xf32, #tpu.memory_space<vmem>>, vector<1x32xf32>
    %c0_3 = arith.constant 0 : index
    %c0_4 = arith.constant 0 : index
    %2 = vector.load %arg2[%c0_3, %c0_4] : memref<1x32xf32, #tpu.memory_space<vmem>>, vector<1x32xf32>
    %cst = arith.constant dense<0.000000e+00> : vector<34xf32>
    %3 = vector.multi_reduction <add>, %0, %cst [1] : vector<34x32xf32> to vector<34xf32>
    %4 = vector.shape_cast %3 : vector<34xf32> to vector<34x1xf32>
    %cst_5 = arith.constant 3.200000e+01 : f32
    %5 = vector.broadcast %cst_5 : f32 to vector<34x1xf32>
    %6 = arith.divf %4, %5 : vector<34x1xf32>
    %7 = vector.broadcast %6 : vector<34x1xf32> to vector<34x32xf32>
    %8 = arith.subf %0, %7 : vector<34x32xf32>
    %9 = arith.mulf %8, %8 : vector<34x32xf32>
    %cst_6 = arith.constant dense<0.000000e+00> : vector<34xf32>
    %10 = vector.multi_reduction <add>, %9, %cst_6 [1] : vector<34x32xf32> to vector<34xf32>
    %11 = vector.shape_cast %10 : vector<34xf32> to vector<34x1xf32>
    %cst_7 = arith.constant 3.200000e+01 : f32
    %12 = vector.broadcast %cst_7 : f32 to vector<34x1xf32>
    %13 = arith.divf %11, %12 : vector<34x1xf32>
    %14 = vector.broadcast %6 : vector<34x1xf32> to vector<34x32xf32>
    %15 = arith.subf %0, %14 : vector<34x32xf32>
    %cst_8 = arith.constant 9.99999974E-6 : f32
    %16 = vector.broadcast %cst_8 : f32 to vector<34x1xf32>
    %17 = arith.addf %13, %16 : vector<34x1xf32>
    %18 = math.rsqrt %17 : vector<34x1xf32>
    %19 = vector.broadcast %18 : vector<34x1xf32> to vector<34x32xf32>
    %20 = arith.mulf %15, %19 : vector<34x32xf32>
    %21 = vector.broadcast %1 : vector<1x32xf32> to vector<34x32xf32>
    %22 = arith.mulf %20, %21 : vector<34x32xf32>
    %23 = vector.broadcast %2 : vector<1x32xf32> to vector<34x32xf32>
    %24 = arith.addf %22, %23 : vector<34x32xf32>
    %c0_9 = arith.constant 0 : index
    %c0_10 = arith.constant 0 : index
    %25 = vector.load %arg3[%c0_9, %c0_10] : memref<32x96xf32, #tpu.memory_space<vmem>>, vector<32x96xf32>
    %cst_11 = arith.constant dense<0.000000e+00> : vector<34x96xf32>
    %26 = tpu.matmul %24, %25, %cst_11 {dimension_numbers = #tpu.dot_dimension_numbers<[1], [0], [0], [1], [0, 0, 1, 1], [], []>} : vector<34x32xf32>, vector<32x96xf32>, vector<34x96xf32> -> vector<34x96xf32>
    %27 = vector.extract_strided_slice %26 {offsets = [0, 0], sizes = [34, 32], strides = [1, 1]} : vector<34x96xf32> to vector<34x32xf32>
    %cst_12 = arith.constant 0.353553385 : f32
    %28 = vector.broadcast %cst_12 : f32 to vector<34x32xf32>
    %29 = arith.mulf %27, %28 : vector<34x32xf32>
    %30 = vector.extract_strided_slice %26 {offsets = [0, 32], sizes = [34, 32], strides = [1, 1]} : vector<34x96xf32> to vector<34x32xf32>
    %31 = vector.extract_strided_slice %26 {offsets = [0, 64], sizes = [34, 32], strides = [1, 1]} : vector<34x96xf32> to vector<34x32xf32>
    %32 = tpu.iota {dimensions = array<i32: 1>} : vector<1x16xi32>
    %33 = tpu.iota {dimensions = array<i32: 0>} : vector<16x16xi32>
    %34 = tpu.iota {dimensions = array<i32: 1>} : vector<16x16xi32>
    %35 = arith.cmpi slt, %33, %34 : vector<16x16xi32>
    %36 = arith.extui %35 : vector<16x16xi1> to vector<16x16xi32>
    %37 = arith.sitofp %36 : vector<16x16xi32> to vector<16x16xf32>
    %38 = tpu.iota {dimensions = array<i32: 0>} : vector<9x16xi32>
    %39 = tpu.iota {dimensions = array<i32: 0>} : vector<9x1xi32>
    %c0_i32 = arith.constant 0 : i32
    %40 = vector.broadcast %c0_i32 : i32 to vector<9x1xi32>
    %41 = arith.cmpi eq, %39, %40 : vector<9x1xi32>
    %42 = arith.extui %41 : vector<9x1xi1> to vector<9x1xi32>
    %43 = arith.sitofp %42 : vector<9x1xi32> to vector<9x1xf32>
    %44 = vector.extract_strided_slice %29 {offsets = [0, 0], sizes = [17, 32], strides = [1, 1]} : vector<34x32xf32> to vector<17x32xf32>
    %45 = vector.extract_strided_slice %30 {offsets = [0, 0], sizes = [17, 32], strides = [1, 1]} : vector<34x32xf32> to vector<17x32xf32>
    %46 = vector.extract_strided_slice %31 {offsets = [0, 0], sizes = [17, 32], strides = [1, 1]} : vector<34x32xf32> to vector<17x32xf32>
    %47 = vector.extract_strided_slice %44 {offsets = [0, 0], sizes = [17, 8], strides = [1, 1]} : vector<17x32xf32> to vector<17x8xf32>
    %48 = vector.extract_strided_slice %45 {offsets = [0, 0], sizes = [17, 8], strides = [1, 1]} : vector<17x32xf32> to vector<17x8xf32>
    %49 = vector.extract_strided_slice %46 {offsets = [0, 0], sizes = [17, 8], strides = [1, 1]} : vector<17x32xf32> to vector<17x8xf32>
    %cst_13 = arith.constant dense<0.000000e+00> : vector<17x17xf32>
    %50 = tpu.matmul %47, %48, %cst_13 {dimension_numbers = #tpu.dot_dimension_numbers<[1], [1], [0], [0], [0, 0, 1, 0], [], []>} : vector<17x8xf32>, vector<17x8xf32>, vector<17x17xf32> -> vector<17x17xf32>
    %cst_14 = arith.constant dense<0xFF800000> : vector<17xf32>
    %51 = vector.multi_reduction <maximumf>, %50, %cst_14 [1] : vector<17x17xf32> to vector<17xf32>
    %52 = vector.shape_cast %51 : vector<17xf32> to vector<17x1xf32>
    %53 = vector.broadcast %52 : vector<17x1xf32> to vector<17x17xf32>
    %54 = arith.subf %50, %53 : vector<17x17xf32>
    %55 = math.exp %54 : vector<17x17xf32>
    %cst_15 = arith.constant dense<0.000000e+00> : vector<17xf32>
    %56 = vector.multi_reduction <add>, %55, %cst_15 [1] : vector<17x17xf32> to vector<17xf32>
    %57 = vector.shape_cast %56 : vector<17xf32> to vector<17x1xf32>
    %cst_16 = arith.constant 1.000000e+00 : f32
    %58 = vector.broadcast %cst_16 : f32 to vector<17x1xf32>
    %59 = arith.divf %58, %57 : vector<17x1xf32>
    %cst_17 = arith.constant dense<0.000000e+00> : vector<17x8xf32>
    %60 = tpu.matmul %55, %49, %cst_17 {dimension_numbers = #tpu.dot_dimension_numbers<[1], [0], [0], [1], [0, 0, 1, 1], [], []>} : vector<17x17xf32>, vector<17x8xf32>, vector<17x8xf32> -> vector<17x8xf32>
    %61 = vector.broadcast %59 : vector<17x1xf32> to vector<17x8xf32>
    %62 = arith.mulf %60, %61 : vector<17x8xf32>
    %63 = vector.extract_strided_slice %55 {offsets = [0, 1], sizes = [1, 16], strides = [1, 1]} : vector<17x17xf32> to vector<1x16xf32>
    %64 = vector.extract_strided_slice %59 {offsets = [0, 0], sizes = [1, 1], strides = [1, 1]} : vector<17x1xf32> to vector<1x1xf32>
    %65 = vector.broadcast %64 : vector<1x1xf32> to vector<1x16xf32>
    %66 = arith.mulf %63, %65 : vector<1x16xf32>
    %67 = vector.extract_strided_slice %44 {offsets = [0, 8], sizes = [17, 8], strides = [1, 1]} : vector<17x32xf32> to vector<17x8xf32>
    %68 = vector.extract_strided_slice %45 {offsets = [0, 8], sizes = [17, 8], strides = [1, 1]} : vector<17x32xf32> to vector<17x8xf32>
    %69 = vector.extract_strided_slice %46 {offsets = [0, 8], sizes = [17, 8], strides = [1, 1]} : vector<17x32xf32> to vector<17x8xf32>
    %cst_18 = arith.constant dense<0.000000e+00> : vector<17x17xf32>
    %70 = tpu.matmul %67, %68, %cst_18 {dimension_numbers = #tpu.dot_dimension_numbers<[1], [1], [0], [0], [0, 0, 1, 0], [], []>} : vector<17x8xf32>, vector<17x8xf32>, vector<17x17xf32> -> vector<17x17xf32>
    %cst_19 = arith.constant dense<0xFF800000> : vector<17xf32>
    %71 = vector.multi_reduction <maximumf>, %70, %cst_19 [1] : vector<17x17xf32> to vector<17xf32>
    %72 = vector.shape_cast %71 : vector<17xf32> to vector<17x1xf32>
    %73 = vector.broadcast %72 : vector<17x1xf32> to vector<17x17xf32>
    %74 = arith.subf %70, %73 : vector<17x17xf32>
    %75 = math.exp %74 : vector<17x17xf32>
    %cst_20 = arith.constant dense<0.000000e+00> : vector<17xf32>
    %76 = vector.multi_reduction <add>, %75, %cst_20 [1] : vector<17x17xf32> to vector<17xf32>
    %77 = vector.shape_cast %76 : vector<17xf32> to vector<17x1xf32>
    %cst_21 = arith.constant 1.000000e+00 : f32
    %78 = vector.broadcast %cst_21 : f32 to vector<17x1xf32>
    %79 = arith.divf %78, %77 : vector<17x1xf32>
    %cst_22 = arith.constant dense<0.000000e+00> : vector<17x8xf32>
    %80 = tpu.matmul %75, %69, %cst_22 {dimension_numbers = #tpu.dot_dimension_numbers<[1], [0], [0], [1], [0, 0, 1, 1], [], []>} : vector<17x17xf32>, vector<17x8xf32>, vector<17x8xf32> -> vector<17x8xf32>
    %81 = vector.broadcast %79 : vector<17x1xf32> to vector<17x8xf32>
    %82 = arith.mulf %80, %81 : vector<17x8xf32>
    %83 = vector.extract_strided_slice %75 {offsets = [0, 1], sizes = [1, 16], strides = [1, 1]} : vector<17x17xf32> to vector<1x16xf32>
    %84 = vector.extract_strided_slice %79 {offsets = [0, 0], sizes = [1, 1], strides = [1, 1]} : vector<17x1xf32> to vector<1x1xf32>
    %85 = vector.broadcast %84 : vector<1x1xf32> to vector<1x16xf32>
    %86 = arith.mulf %83, %85 : vector<1x16xf32>
    %87 = arith.maximumf %66, %86 : vector<1x16xf32>
    %88 = vector.extract_strided_slice %44 {offsets = [0, 16], sizes = [17, 8], strides = [1, 1]} : vector<17x32xf32> to vector<17x8xf32>
    %89 = vector.extract_strided_slice %45 {offsets = [0, 16], sizes = [17, 8], strides = [1, 1]} : vector<17x32xf32> to vector<17x8xf32>
    %90 = vector.extract_strided_slice %46 {offsets = [0, 16], sizes = [17, 8], strides = [1, 1]} : vector<17x32xf32> to vector<17x8xf32>
    %cst_23 = arith.constant dense<0.000000e+00> : vector<17x17xf32>
    %91 = tpu.matmul %88, %89, %cst_23 {dimension_numbers = #tpu.dot_dimension_numbers<[1], [1], [0], [0], [0, 0, 1, 0], [], []>} : vector<17x8xf32>, vector<17x8xf32>, vector<17x17xf32> -> vector<17x17xf32>
    %cst_24 = arith.constant dense<0xFF800000> : vector<17xf32>
    %92 = vector.multi_reduction <maximumf>, %91, %cst_24 [1] : vector<17x17xf32> to vector<17xf32>
    %93 = vector.shape_cast %92 : vector<17xf32> to vector<17x1xf32>
    %94 = vector.broadcast %93 : vector<17x1xf32> to vector<17x17xf32>
    %95 = arith.subf %91, %94 : vector<17x17xf32>
    %96 = math.exp %95 : vector<17x17xf32>
    %cst_25 = arith.constant dense<0.000000e+00> : vector<17xf32>
    %97 = vector.multi_reduction <add>, %96, %cst_25 [1] : vector<17x17xf32> to vector<17xf32>
    %98 = vector.shape_cast %97 : vector<17xf32> to vector<17x1xf32>
    %cst_26 = arith.constant 1.000000e+00 : f32
    %99 = vector.broadcast %cst_26 : f32 to vector<17x1xf32>
    %100 = arith.divf %99, %98 : vector<17x1xf32>
    %cst_27 = arith.constant dense<0.000000e+00> : vector<17x8xf32>
    %101 = tpu.matmul %96, %90, %cst_27 {dimension_numbers = #tpu.dot_dimension_numbers<[1], [0], [0], [1], [0, 0, 1, 1], [], []>} : vector<17x17xf32>, vector<17x8xf32>, vector<17x8xf32> -> vector<17x8xf32>
    %102 = vector.broadcast %100 : vector<17x1xf32> to vector<17x8xf32>
    %103 = arith.mulf %101, %102 : vector<17x8xf32>
    %104 = vector.extract_strided_slice %96 {offsets = [0, 1], sizes = [1, 16], strides = [1, 1]} : vector<17x17xf32> to vector<1x16xf32>
    %105 = vector.extract_strided_slice %100 {offsets = [0, 0], sizes = [1, 1], strides = [1, 1]} : vector<17x1xf32> to vector<1x1xf32>
    %106 = vector.broadcast %105 : vector<1x1xf32> to vector<1x16xf32>
    %107 = arith.mulf %104, %106 : vector<1x16xf32>
    %108 = arith.maximumf %87, %107 : vector<1x16xf32>
    %109 = vector.extract_strided_slice %44 {offsets = [0, 24], sizes = [17, 8], strides = [1, 1]} : vector<17x32xf32> to vector<17x8xf32>
    %110 = vector.extract_strided_slice %45 {offsets = [0, 24], sizes = [17, 8], strides = [1, 1]} : vector<17x32xf32> to vector<17x8xf32>
    %111 = vector.extract_strided_slice %46 {offsets = [0, 24], sizes = [17, 8], strides = [1, 1]} : vector<17x32xf32> to vector<17x8xf32>
    %cst_28 = arith.constant dense<0.000000e+00> : vector<17x17xf32>
    %112 = tpu.matmul %109, %110, %cst_28 {dimension_numbers = #tpu.dot_dimension_numbers<[1], [1], [0], [0], [0, 0, 1, 0], [], []>} : vector<17x8xf32>, vector<17x8xf32>, vector<17x17xf32> -> vector<17x17xf32>
    %cst_29 = arith.constant dense<0xFF800000> : vector<17xf32>
    %113 = vector.multi_reduction <maximumf>, %112, %cst_29 [1] : vector<17x17xf32> to vector<17xf32>
    %114 = vector.shape_cast %113 : vector<17xf32> to vector<17x1xf32>
    %115 = vector.broadcast %114 : vector<17x1xf32> to vector<17x17xf32>
    %116 = arith.subf %112, %115 : vector<17x17xf32>
    %117 = math.exp %116 : vector<17x17xf32>
    %cst_30 = arith.constant dense<0.000000e+00> : vector<17xf32>
    %118 = vector.multi_reduction <add>, %117, %cst_30 [1] : vector<17x17xf32> to vector<17xf32>
    %119 = vector.shape_cast %118 : vector<17xf32> to vector<17x1xf32>
    %cst_31 = arith.constant 1.000000e+00 : f32
    %120 = vector.broadcast %cst_31 : f32 to vector<17x1xf32>
    %121 = arith.divf %120, %119 : vector<17x1xf32>
    %cst_32 = arith.constant dense<0.000000e+00> : vector<17x8xf32>
    %122 = tpu.matmul %117, %111, %cst_32 {dimension_numbers = #tpu.dot_dimension_numbers<[1], [0], [0], [1], [0, 0, 1, 1], [], []>} : vector<17x17xf32>, vector<17x8xf32>, vector<17x8xf32> -> vector<17x8xf32>
    %123 = vector.broadcast %121 : vector<17x1xf32> to vector<17x8xf32>
    %124 = arith.mulf %122, %123 : vector<17x8xf32>
    %125 = vector.extract_strided_slice %117 {offsets = [0, 1], sizes = [1, 16], strides = [1, 1]} : vector<17x17xf32> to vector<1x16xf32>
    %126 = vector.extract_strided_slice %121 {offsets = [0, 0], sizes = [1, 1], strides = [1, 1]} : vector<17x1xf32> to vector<1x1xf32>
    %127 = vector.broadcast %126 : vector<1x1xf32> to vector<1x16xf32>
    %128 = arith.mulf %125, %127 : vector<1x16xf32>
    %129 = arith.maximumf %108, %128 : vector<1x16xf32>
    %130 = tpu.concatenate %62, %82, %103, %124 in 1 : vector<17x8xf32>, vector<17x8xf32>, vector<17x8xf32>, vector<17x8xf32> -> vector<17x32xf32>
    %cst_33 = arith.constant 0.000000e+00 : f32
    %131 = vector.broadcast %cst_33 : f32 to vector<1x16xf32>
    %cst_34 = arith.constant dense<0xFF800000> : vector<1xf32>
    %132 = vector.multi_reduction <maximumf>, %129, %cst_34 [1] : vector<1x16xf32> to vector<1xf32>
    %133 = vector.shape_cast %132 : vector<1xf32> to vector<1x1xf32>
    %134 = vector.broadcast %133 : vector<1x1xf32> to vector<1x16xf32>
    %135 = arith.cmpf oge, %129, %134 : vector<1x16xf32>
    %c16_i32 = arith.constant 16 : i32
    %136 = vector.broadcast %c16_i32 : i32 to vector<1x16xi32>
    %137 = arith.select %135, %32, %136 : vector<1x16xi1>, vector<1x16xi32>
    %cst_35 = arith.constant dense<2147483647> : vector<1xi32>
    %138 = vector.multi_reduction <minsi>, %137, %cst_35 [1] : vector<1x16xi32> to vector<1xi32>
    %139 = vector.shape_cast %138 : vector<1xi32> to vector<1x1xi32>
    %140 = vector.broadcast %139 : vector<1x1xi32> to vector<1x16xi32>
    %141 = arith.cmpi eq, %32, %140 : vector<1x16xi32>
    %cst_36 = arith.constant 1.000000e+00 : f32
    %142 = vector.broadcast %cst_36 : f32 to vector<1x16xf32>
    %143 = arith.select %141, %142, %131 : vector<1x16xi1>, vector<1x16xf32>
    %cst_37 = arith.constant -1.000000e+00 : f32
    %144 = vector.broadcast %cst_37 : f32 to vector<1x16xf32>
    %145 = arith.select %141, %144, %129 : vector<1x16xi1>, vector<1x16xf32>
    %cst_38 = arith.constant dense<0xFF800000> : vector<1xf32>
    %146 = vector.multi_reduction <maximumf>, %145, %cst_38 [1] : vector<1x16xf32> to vector<1xf32>
    %147 = vector.shape_cast %146 : vector<1xf32> to vector<1x1xf32>
    %148 = vector.broadcast %147 : vector<1x1xf32> to vector<1x16xf32>
    %149 = arith.cmpf oge, %145, %148 : vector<1x16xf32>
    %c16_i32_39 = arith.constant 16 : i32
    %150 = vector.broadcast %c16_i32_39 : i32 to vector<1x16xi32>
    %151 = arith.select %149, %32, %150 : vector<1x16xi1>, vector<1x16xi32>
    %cst_40 = arith.constant dense<2147483647> : vector<1xi32>
    %152 = vector.multi_reduction <minsi>, %151, %cst_40 [1] : vector<1x16xi32> to vector<1xi32>
    %153 = vector.shape_cast %152 : vector<1xi32> to vector<1x1xi32>
    %154 = vector.broadcast %153 : vector<1x1xi32> to vector<1x16xi32>
    %155 = arith.cmpi eq, %32, %154 : vector<1x16xi32>
    %cst_41 = arith.constant 1.000000e+00 : f32
    %156 = vector.broadcast %cst_41 : f32 to vector<1x16xf32>
    %157 = arith.select %155, %156, %143 : vector<1x16xi1>, vector<1x16xf32>
    %cst_42 = arith.constant -1.000000e+00 : f32
    %158 = vector.broadcast %cst_42 : f32 to vector<1x16xf32>
    %159 = arith.select %155, %158, %145 : vector<1x16xi1>, vector<1x16xf32>
    %cst_43 = arith.constant dense<0xFF800000> : vector<1xf32>
    %160 = vector.multi_reduction <maximumf>, %159, %cst_43 [1] : vector<1x16xf32> to vector<1xf32>
    %161 = vector.shape_cast %160 : vector<1xf32> to vector<1x1xf32>
    %162 = vector.broadcast %161 : vector<1x1xf32> to vector<1x16xf32>
    %163 = arith.cmpf oge, %159, %162 : vector<1x16xf32>
    %c16_i32_44 = arith.constant 16 : i32
    %164 = vector.broadcast %c16_i32_44 : i32 to vector<1x16xi32>
    %165 = arith.select %163, %32, %164 : vector<1x16xi1>, vector<1x16xi32>
    %cst_45 = arith.constant dense<2147483647> : vector<1xi32>
    %166 = vector.multi_reduction <minsi>, %165, %cst_45 [1] : vector<1x16xi32> to vector<1xi32>
    %167 = vector.shape_cast %166 : vector<1xi32> to vector<1x1xi32>
    %168 = vector.broadcast %167 : vector<1x1xi32> to vector<1x16xi32>
    %169 = arith.cmpi eq, %32, %168 : vector<1x16xi32>
    %cst_46 = arith.constant 1.000000e+00 : f32
    %170 = vector.broadcast %cst_46 : f32 to vector<1x16xf32>
    %171 = arith.select %169, %170, %157 : vector<1x16xi1>, vector<1x16xf32>
    %cst_47 = arith.constant -1.000000e+00 : f32
    %172 = vector.broadcast %cst_47 : f32 to vector<1x16xf32>
    %173 = arith.select %169, %172, %159 : vector<1x16xi1>, vector<1x16xf32>
    %cst_48 = arith.constant dense<0xFF800000> : vector<1xf32>
    %174 = vector.multi_reduction <maximumf>, %173, %cst_48 [1] : vector<1x16xf32> to vector<1xf32>
    %175 = vector.shape_cast %174 : vector<1xf32> to vector<1x1xf32>
    %176 = vector.broadcast %175 : vector<1x1xf32> to vector<1x16xf32>
    %177 = arith.cmpf oge, %173, %176 : vector<1x16xf32>
    %c16_i32_49 = arith.constant 16 : i32
    %178 = vector.broadcast %c16_i32_49 : i32 to vector<1x16xi32>
    %179 = arith.select %177, %32, %178 : vector<1x16xi1>, vector<1x16xi32>
    %cst_50 = arith.constant dense<2147483647> : vector<1xi32>
    %180 = vector.multi_reduction <minsi>, %179, %cst_50 [1] : vector<1x16xi32> to vector<1xi32>
    %181 = vector.shape_cast %180 : vector<1xi32> to vector<1x1xi32>
    %182 = vector.broadcast %181 : vector<1x1xi32> to vector<1x16xi32>
    %183 = arith.cmpi eq, %32, %182 : vector<1x16xi32>
    %cst_51 = arith.constant 1.000000e+00 : f32
    %184 = vector.broadcast %cst_51 : f32 to vector<1x16xf32>
    %185 = arith.select %183, %184, %171 : vector<1x16xi1>, vector<1x16xf32>
    %cst_52 = arith.constant -1.000000e+00 : f32
    %186 = vector.broadcast %cst_52 : f32 to vector<1x16xf32>
    %187 = arith.select %183, %186, %173 : vector<1x16xi1>, vector<1x16xf32>
    %cst_53 = arith.constant dense<0xFF800000> : vector<1xf32>
    %188 = vector.multi_reduction <maximumf>, %187, %cst_53 [1] : vector<1x16xf32> to vector<1xf32>
    %189 = vector.shape_cast %188 : vector<1xf32> to vector<1x1xf32>
    %190 = vector.broadcast %189 : vector<1x1xf32> to vector<1x16xf32>
    %191 = arith.cmpf oge, %187, %190 : vector<1x16xf32>
    %c16_i32_54 = arith.constant 16 : i32
    %192 = vector.broadcast %c16_i32_54 : i32 to vector<1x16xi32>
    %193 = arith.select %191, %32, %192 : vector<1x16xi1>, vector<1x16xi32>
    %cst_55 = arith.constant dense<2147483647> : vector<1xi32>
    %194 = vector.multi_reduction <minsi>, %193, %cst_55 [1] : vector<1x16xi32> to vector<1xi32>
    %195 = vector.shape_cast %194 : vector<1xi32> to vector<1x1xi32>
    %196 = vector.broadcast %195 : vector<1x1xi32> to vector<1x16xi32>
    %197 = arith.cmpi eq, %32, %196 : vector<1x16xi32>
    %cst_56 = arith.constant 1.000000e+00 : f32
    %198 = vector.broadcast %cst_56 : f32 to vector<1x16xf32>
    %199 = arith.select %197, %198, %185 : vector<1x16xi1>, vector<1x16xf32>
    %cst_57 = arith.constant -1.000000e+00 : f32
    %200 = vector.broadcast %cst_57 : f32 to vector<1x16xf32>
    %201 = arith.select %197, %200, %187 : vector<1x16xi1>, vector<1x16xf32>
    %cst_58 = arith.constant dense<0xFF800000> : vector<1xf32>
    %202 = vector.multi_reduction <maximumf>, %201, %cst_58 [1] : vector<1x16xf32> to vector<1xf32>
    %203 = vector.shape_cast %202 : vector<1xf32> to vector<1x1xf32>
    %204 = vector.broadcast %203 : vector<1x1xf32> to vector<1x16xf32>
    %205 = arith.cmpf oge, %201, %204 : vector<1x16xf32>
    %c16_i32_59 = arith.constant 16 : i32
    %206 = vector.broadcast %c16_i32_59 : i32 to vector<1x16xi32>
    %207 = arith.select %205, %32, %206 : vector<1x16xi1>, vector<1x16xi32>
    %cst_60 = arith.constant dense<2147483647> : vector<1xi32>
    %208 = vector.multi_reduction <minsi>, %207, %cst_60 [1] : vector<1x16xi32> to vector<1xi32>
    %209 = vector.shape_cast %208 : vector<1xi32> to vector<1x1xi32>
    %210 = vector.broadcast %209 : vector<1x1xi32> to vector<1x16xi32>
    %211 = arith.cmpi eq, %32, %210 : vector<1x16xi32>
    %cst_61 = arith.constant 1.000000e+00 : f32
    %212 = vector.broadcast %cst_61 : f32 to vector<1x16xf32>
    %213 = arith.select %211, %212, %199 : vector<1x16xi1>, vector<1x16xf32>
    %cst_62 = arith.constant -1.000000e+00 : f32
    %214 = vector.broadcast %cst_62 : f32 to vector<1x16xf32>
    %215 = arith.select %211, %214, %201 : vector<1x16xi1>, vector<1x16xf32>
    %cst_63 = arith.constant dense<0xFF800000> : vector<1xf32>
    %216 = vector.multi_reduction <maximumf>, %215, %cst_63 [1] : vector<1x16xf32> to vector<1xf32>
    %217 = vector.shape_cast %216 : vector<1xf32> to vector<1x1xf32>
    %218 = vector.broadcast %217 : vector<1x1xf32> to vector<1x16xf32>
    %219 = arith.cmpf oge, %215, %218 : vector<1x16xf32>
    %c16_i32_64 = arith.constant 16 : i32
    %220 = vector.broadcast %c16_i32_64 : i32 to vector<1x16xi32>
    %221 = arith.select %219, %32, %220 : vector<1x16xi1>, vector<1x16xi32>
    %cst_65 = arith.constant dense<2147483647> : vector<1xi32>
    %222 = vector.multi_reduction <minsi>, %221, %cst_65 [1] : vector<1x16xi32> to vector<1xi32>
    %223 = vector.shape_cast %222 : vector<1xi32> to vector<1x1xi32>
    %224 = vector.broadcast %223 : vector<1x1xi32> to vector<1x16xi32>
    %225 = arith.cmpi eq, %32, %224 : vector<1x16xi32>
    %cst_66 = arith.constant 1.000000e+00 : f32
    %226 = vector.broadcast %cst_66 : f32 to vector<1x16xf32>
    %227 = arith.select %225, %226, %213 : vector<1x16xi1>, vector<1x16xf32>
    %cst_67 = arith.constant -1.000000e+00 : f32
    %228 = vector.broadcast %cst_67 : f32 to vector<1x16xf32>
    %229 = arith.select %225, %228, %215 : vector<1x16xi1>, vector<1x16xf32>
    %cst_68 = arith.constant dense<0xFF800000> : vector<1xf32>
    %230 = vector.multi_reduction <maximumf>, %229, %cst_68 [1] : vector<1x16xf32> to vector<1xf32>
    %231 = vector.shape_cast %230 : vector<1xf32> to vector<1x1xf32>
    %232 = vector.broadcast %231 : vector<1x1xf32> to vector<1x16xf32>
    %233 = arith.cmpf oge, %229, %232 : vector<1x16xf32>
    %c16_i32_69 = arith.constant 16 : i32
    %234 = vector.broadcast %c16_i32_69 : i32 to vector<1x16xi32>
    %235 = arith.select %233, %32, %234 : vector<1x16xi1>, vector<1x16xi32>
    %cst_70 = arith.constant dense<2147483647> : vector<1xi32>
    %236 = vector.multi_reduction <minsi>, %235, %cst_70 [1] : vector<1x16xi32> to vector<1xi32>
    %237 = vector.shape_cast %236 : vector<1xi32> to vector<1x1xi32>
    %238 = vector.broadcast %237 : vector<1x1xi32> to vector<1x16xi32>
    %239 = arith.cmpi eq, %32, %238 : vector<1x16xi32>
    %cst_71 = arith.constant 1.000000e+00 : f32
    %240 = vector.broadcast %cst_71 : f32 to vector<1x16xf32>
    %241 = arith.select %239, %240, %227 : vector<1x16xi1>, vector<1x16xf32>
    %cst_72 = arith.constant dense<0.000000e+00> : vector<1x16xf32>
    %242 = tpu.matmul %241, %37, %cst_72 {dimension_numbers = #tpu.dot_dimension_numbers<[1], [0], [0], [1], [0, 0, 1, 1], [], []>} : vector<1x16xf32>, vector<16x16xf32>, vector<1x16xf32> -> vector<1x16xf32>
    %243 = arith.fptosi %242 : vector<1x16xf32> to vector<1x16xi32>
    %244 = vector.shape_cast %241 : vector<1x16xf32> to vector<1x16xf32>
    %245 = vector.broadcast %244 : vector<1x16xf32> to vector<9x16xf32>
    %cst_73 = arith.constant 5.000000e-01 : f32
    %246 = vector.broadcast %cst_73 : f32 to vector<9x16xf32>
    %247 = arith.cmpf ogt, %245, %246 : vector<9x16xf32>
    %248 = vector.shape_cast %243 : vector<1x16xi32> to vector<1x16xi32>
    %249 = vector.broadcast %248 : vector<1x16xi32> to vector<9x16xi32>
    %c1_i32 = arith.constant 1 : i32
    %250 = vector.broadcast %c1_i32 : i32 to vector<9x16xi32>
    %251 = arith.addi %249, %250 : vector<9x16xi32>
    %252 = arith.cmpi eq, %251, %38 : vector<9x16xi32>
    %253 = arith.andi %252, %247 : vector<9x16xi1>
    %cst_74 = arith.constant 1.000000e+00 : f32
    %cst_75 = arith.constant 0.000000e+00 : f32
    %254 = vector.broadcast %cst_74 : f32 to vector<9x16xf32>
    %255 = vector.broadcast %cst_75 : f32 to vector<9x16xf32>
    %256 = arith.select %253, %254, %255 : vector<9x16xi1>, vector<9x16xf32>
    %257 = tpu.concatenate %43, %256 in 1 : vector<9x1xf32>, vector<9x16xf32> -> vector<9x17xf32>
    %258 = vector.extract_strided_slice %29 {offsets = [17, 0], sizes = [17, 32], strides = [1, 1]} : vector<34x32xf32> to vector<17x32xf32>
    %259 = vector.extract_strided_slice %30 {offsets = [17, 0], sizes = [17, 32], strides = [1, 1]} : vector<34x32xf32> to vector<17x32xf32>
    %260 = vector.extract_strided_slice %31 {offsets = [17, 0], sizes = [17, 32], strides = [1, 1]} : vector<34x32xf32> to vector<17x32xf32>
    %261 = vector.extract_strided_slice %258 {offsets = [0, 0], sizes = [17, 8], strides = [1, 1]} : vector<17x32xf32> to vector<17x8xf32>
    %262 = vector.extract_strided_slice %259 {offsets = [0, 0], sizes = [17, 8], strides = [1, 1]} : vector<17x32xf32> to vector<17x8xf32>
    %263 = vector.extract_strided_slice %260 {offsets = [0, 0], sizes = [17, 8], strides = [1, 1]} : vector<17x32xf32> to vector<17x8xf32>
    %cst_76 = arith.constant dense<0.000000e+00> : vector<17x17xf32>
    %264 = tpu.matmul %261, %262, %cst_76 {dimension_numbers = #tpu.dot_dimension_numbers<[1], [1], [0], [0], [0, 0, 1, 0], [], []>} : vector<17x8xf32>, vector<17x8xf32>, vector<17x17xf32> -> vector<17x17xf32>
    %cst_77 = arith.constant dense<0xFF800000> : vector<17xf32>
    %265 = vector.multi_reduction <maximumf>, %264, %cst_77 [1] : vector<17x17xf32> to vector<17xf32>
    %266 = vector.shape_cast %265 : vector<17xf32> to vector<17x1xf32>
    %267 = vector.broadcast %266 : vector<17x1xf32> to vector<17x17xf32>
    %268 = arith.subf %264, %267 : vector<17x17xf32>
    %269 = math.exp %268 : vector<17x17xf32>
    %cst_78 = arith.constant dense<0.000000e+00> : vector<17xf32>
    %270 = vector.multi_reduction <add>, %269, %cst_78 [1] : vector<17x17xf32> to vector<17xf32>
    %271 = vector.shape_cast %270 : vector<17xf32> to vector<17x1xf32>
    %cst_79 = arith.constant 1.000000e+00 : f32
    %272 = vector.broadcast %cst_79 : f32 to vector<17x1xf32>
    %273 = arith.divf %272, %271 : vector<17x1xf32>
    %cst_80 = arith.constant dense<0.000000e+00> : vector<17x8xf32>
    %274 = tpu.matmul %269, %263, %cst_80 {dimension_numbers = #tpu.dot_dimension_numbers<[1], [0], [0], [1], [0, 0, 1, 1], [], []>} : vector<17x17xf32>, vector<17x8xf32>, vector<17x8xf32> -> vector<17x8xf32>
    %275 = vector.broadcast %273 : vector<17x1xf32> to vector<17x8xf32>
    %276 = arith.mulf %274, %275 : vector<17x8xf32>
    %277 = vector.extract_strided_slice %269 {offsets = [0, 1], sizes = [1, 16], strides = [1, 1]} : vector<17x17xf32> to vector<1x16xf32>
    %278 = vector.extract_strided_slice %273 {offsets = [0, 0], sizes = [1, 1], strides = [1, 1]} : vector<17x1xf32> to vector<1x1xf32>
    %279 = vector.broadcast %278 : vector<1x1xf32> to vector<1x16xf32>
    %280 = arith.mulf %277, %279 : vector<1x16xf32>
    %281 = vector.extract_strided_slice %258 {offsets = [0, 8], sizes = [17, 8], strides = [1, 1]} : vector<17x32xf32> to vector<17x8xf32>
    %282 = vector.extract_strided_slice %259 {offsets = [0, 8], sizes = [17, 8], strides = [1, 1]} : vector<17x32xf32> to vector<17x8xf32>
    %283 = vector.extract_strided_slice %260 {offsets = [0, 8], sizes = [17, 8], strides = [1, 1]} : vector<17x32xf32> to vector<17x8xf32>
    %cst_81 = arith.constant dense<0.000000e+00> : vector<17x17xf32>
    %284 = tpu.matmul %281, %282, %cst_81 {dimension_numbers = #tpu.dot_dimension_numbers<[1], [1], [0], [0], [0, 0, 1, 0], [], []>} : vector<17x8xf32>, vector<17x8xf32>, vector<17x17xf32> -> vector<17x17xf32>
    %cst_82 = arith.constant dense<0xFF800000> : vector<17xf32>
    %285 = vector.multi_reduction <maximumf>, %284, %cst_82 [1] : vector<17x17xf32> to vector<17xf32>
    %286 = vector.shape_cast %285 : vector<17xf32> to vector<17x1xf32>
    %287 = vector.broadcast %286 : vector<17x1xf32> to vector<17x17xf32>
    %288 = arith.subf %284, %287 : vector<17x17xf32>
    %289 = math.exp %288 : vector<17x17xf32>
    %cst_83 = arith.constant dense<0.000000e+00> : vector<17xf32>
    %290 = vector.multi_reduction <add>, %289, %cst_83 [1] : vector<17x17xf32> to vector<17xf32>
    %291 = vector.shape_cast %290 : vector<17xf32> to vector<17x1xf32>
    %cst_84 = arith.constant 1.000000e+00 : f32
    %292 = vector.broadcast %cst_84 : f32 to vector<17x1xf32>
    %293 = arith.divf %292, %291 : vector<17x1xf32>
    %cst_85 = arith.constant dense<0.000000e+00> : vector<17x8xf32>
    %294 = tpu.matmul %289, %283, %cst_85 {dimension_numbers = #tpu.dot_dimension_numbers<[1], [0], [0], [1], [0, 0, 1, 1], [], []>} : vector<17x17xf32>, vector<17x8xf32>, vector<17x8xf32> -> vector<17x8xf32>
    %295 = vector.broadcast %293 : vector<17x1xf32> to vector<17x8xf32>
    %296 = arith.mulf %294, %295 : vector<17x8xf32>
    %297 = vector.extract_strided_slice %289 {offsets = [0, 1], sizes = [1, 16], strides = [1, 1]} : vector<17x17xf32> to vector<1x16xf32>
    %298 = vector.extract_strided_slice %293 {offsets = [0, 0], sizes = [1, 1], strides = [1, 1]} : vector<17x1xf32> to vector<1x1xf32>
    %299 = vector.broadcast %298 : vector<1x1xf32> to vector<1x16xf32>
    %300 = arith.mulf %297, %299 : vector<1x16xf32>
    %301 = arith.maximumf %280, %300 : vector<1x16xf32>
    %302 = vector.extract_strided_slice %258 {offsets = [0, 16], sizes = [17, 8], strides = [1, 1]} : vector<17x32xf32> to vector<17x8xf32>
    %303 = vector.extract_strided_slice %259 {offsets = [0, 16], sizes = [17, 8], strides = [1, 1]} : vector<17x32xf32> to vector<17x8xf32>
    %304 = vector.extract_strided_slice %260 {offsets = [0, 16], sizes = [17, 8], strides = [1, 1]} : vector<17x32xf32> to vector<17x8xf32>
    %cst_86 = arith.constant dense<0.000000e+00> : vector<17x17xf32>
    %305 = tpu.matmul %302, %303, %cst_86 {dimension_numbers = #tpu.dot_dimension_numbers<[1], [1], [0], [0], [0, 0, 1, 0], [], []>} : vector<17x8xf32>, vector<17x8xf32>, vector<17x17xf32> -> vector<17x17xf32>
    %cst_87 = arith.constant dense<0xFF800000> : vector<17xf32>
    %306 = vector.multi_reduction <maximumf>, %305, %cst_87 [1] : vector<17x17xf32> to vector<17xf32>
    %307 = vector.shape_cast %306 : vector<17xf32> to vector<17x1xf32>
    %308 = vector.broadcast %307 : vector<17x1xf32> to vector<17x17xf32>
    %309 = arith.subf %305, %308 : vector<17x17xf32>
    %310 = math.exp %309 : vector<17x17xf32>
    %cst_88 = arith.constant dense<0.000000e+00> : vector<17xf32>
    %311 = vector.multi_reduction <add>, %310, %cst_88 [1] : vector<17x17xf32> to vector<17xf32>
    %312 = vector.shape_cast %311 : vector<17xf32> to vector<17x1xf32>
    %cst_89 = arith.constant 1.000000e+00 : f32
    %313 = vector.broadcast %cst_89 : f32 to vector<17x1xf32>
    %314 = arith.divf %313, %312 : vector<17x1xf32>
    %cst_90 = arith.constant dense<0.000000e+00> : vector<17x8xf32>
    %315 = tpu.matmul %310, %304, %cst_90 {dimension_numbers = #tpu.dot_dimension_numbers<[1], [0], [0], [1], [0, 0, 1, 1], [], []>} : vector<17x17xf32>, vector<17x8xf32>, vector<17x8xf32> -> vector<17x8xf32>
    %316 = vector.broadcast %314 : vector<17x1xf32> to vector<17x8xf32>
    %317 = arith.mulf %315, %316 : vector<17x8xf32>
    %318 = vector.extract_strided_slice %310 {offsets = [0, 1], sizes = [1, 16], strides = [1, 1]} : vector<17x17xf32> to vector<1x16xf32>
    %319 = vector.extract_strided_slice %314 {offsets = [0, 0], sizes = [1, 1], strides = [1, 1]} : vector<17x1xf32> to vector<1x1xf32>
    %320 = vector.broadcast %319 : vector<1x1xf32> to vector<1x16xf32>
    %321 = arith.mulf %318, %320 : vector<1x16xf32>
    %322 = arith.maximumf %301, %321 : vector<1x16xf32>
    %323 = vector.extract_strided_slice %258 {offsets = [0, 24], sizes = [17, 8], strides = [1, 1]} : vector<17x32xf32> to vector<17x8xf32>
    %324 = vector.extract_strided_slice %259 {offsets = [0, 24], sizes = [17, 8], strides = [1, 1]} : vector<17x32xf32> to vector<17x8xf32>
    %325 = vector.extract_strided_slice %260 {offsets = [0, 24], sizes = [17, 8], strides = [1, 1]} : vector<17x32xf32> to vector<17x8xf32>
    %cst_91 = arith.constant dense<0.000000e+00> : vector<17x17xf32>
    %326 = tpu.matmul %323, %324, %cst_91 {dimension_numbers = #tpu.dot_dimension_numbers<[1], [1], [0], [0], [0, 0, 1, 0], [], []>} : vector<17x8xf32>, vector<17x8xf32>, vector<17x17xf32> -> vector<17x17xf32>
    %cst_92 = arith.constant dense<0xFF800000> : vector<17xf32>
    %327 = vector.multi_reduction <maximumf>, %326, %cst_92 [1] : vector<17x17xf32> to vector<17xf32>
    %328 = vector.shape_cast %327 : vector<17xf32> to vector<17x1xf32>
    %329 = vector.broadcast %328 : vector<17x1xf32> to vector<17x17xf32>
    %330 = arith.subf %326, %329 : vector<17x17xf32>
    %331 = math.exp %330 : vector<17x17xf32>
    %cst_93 = arith.constant dense<0.000000e+00> : vector<17xf32>
    %332 = vector.multi_reduction <add>, %331, %cst_93 [1] : vector<17x17xf32> to vector<17xf32>
    %333 = vector.shape_cast %332 : vector<17xf32> to vector<17x1xf32>
    %cst_94 = arith.constant 1.000000e+00 : f32
    %334 = vector.broadcast %cst_94 : f32 to vector<17x1xf32>
    %335 = arith.divf %334, %333 : vector<17x1xf32>
    %cst_95 = arith.constant dense<0.000000e+00> : vector<17x8xf32>
    %336 = tpu.matmul %331, %325, %cst_95 {dimension_numbers = #tpu.dot_dimension_numbers<[1], [0], [0], [1], [0, 0, 1, 1], [], []>} : vector<17x17xf32>, vector<17x8xf32>, vector<17x8xf32> -> vector<17x8xf32>
    %337 = vector.broadcast %335 : vector<17x1xf32> to vector<17x8xf32>
    %338 = arith.mulf %336, %337 : vector<17x8xf32>
    %339 = vector.extract_strided_slice %331 {offsets = [0, 1], sizes = [1, 16], strides = [1, 1]} : vector<17x17xf32> to vector<1x16xf32>
    %340 = vector.extract_strided_slice %335 {offsets = [0, 0], sizes = [1, 1], strides = [1, 1]} : vector<17x1xf32> to vector<1x1xf32>
    %341 = vector.broadcast %340 : vector<1x1xf32> to vector<1x16xf32>
    %342 = arith.mulf %339, %341 : vector<1x16xf32>
    %343 = arith.maximumf %322, %342 : vector<1x16xf32>
    %344 = tpu.concatenate %276, %296, %317, %338 in 1 : vector<17x8xf32>, vector<17x8xf32>, vector<17x8xf32>, vector<17x8xf32> -> vector<17x32xf32>
    %cst_96 = arith.constant 0.000000e+00 : f32
    %345 = vector.broadcast %cst_96 : f32 to vector<1x16xf32>
    %cst_97 = arith.constant dense<0xFF800000> : vector<1xf32>
    %346 = vector.multi_reduction <maximumf>, %343, %cst_97 [1] : vector<1x16xf32> to vector<1xf32>
    %347 = vector.shape_cast %346 : vector<1xf32> to vector<1x1xf32>
    %348 = vector.broadcast %347 : vector<1x1xf32> to vector<1x16xf32>
    %349 = arith.cmpf oge, %343, %348 : vector<1x16xf32>
    %c16_i32_98 = arith.constant 16 : i32
    %350 = vector.broadcast %c16_i32_98 : i32 to vector<1x16xi32>
    %351 = arith.select %349, %32, %350 : vector<1x16xi1>, vector<1x16xi32>
    %cst_99 = arith.constant dense<2147483647> : vector<1xi32>
    %352 = vector.multi_reduction <minsi>, %351, %cst_99 [1] : vector<1x16xi32> to vector<1xi32>
    %353 = vector.shape_cast %352 : vector<1xi32> to vector<1x1xi32>
    %354 = vector.broadcast %353 : vector<1x1xi32> to vector<1x16xi32>
    %355 = arith.cmpi eq, %32, %354 : vector<1x16xi32>
    %cst_100 = arith.constant 1.000000e+00 : f32
    %356 = vector.broadcast %cst_100 : f32 to vector<1x16xf32>
    %357 = arith.select %355, %356, %345 : vector<1x16xi1>, vector<1x16xf32>
    %cst_101 = arith.constant -1.000000e+00 : f32
    %358 = vector.broadcast %cst_101 : f32 to vector<1x16xf32>
    %359 = arith.select %355, %358, %343 : vector<1x16xi1>, vector<1x16xf32>
    %cst_102 = arith.constant dense<0xFF800000> : vector<1xf32>
    %360 = vector.multi_reduction <maximumf>, %359, %cst_102 [1] : vector<1x16xf32> to vector<1xf32>
    %361 = vector.shape_cast %360 : vector<1xf32> to vector<1x1xf32>
    %362 = vector.broadcast %361 : vector<1x1xf32> to vector<1x16xf32>
    %363 = arith.cmpf oge, %359, %362 : vector<1x16xf32>
    %c16_i32_103 = arith.constant 16 : i32
    %364 = vector.broadcast %c16_i32_103 : i32 to vector<1x16xi32>
    %365 = arith.select %363, %32, %364 : vector<1x16xi1>, vector<1x16xi32>
    %cst_104 = arith.constant dense<2147483647> : vector<1xi32>
    %366 = vector.multi_reduction <minsi>, %365, %cst_104 [1] : vector<1x16xi32> to vector<1xi32>
    %367 = vector.shape_cast %366 : vector<1xi32> to vector<1x1xi32>
    %368 = vector.broadcast %367 : vector<1x1xi32> to vector<1x16xi32>
    %369 = arith.cmpi eq, %32, %368 : vector<1x16xi32>
    %cst_105 = arith.constant 1.000000e+00 : f32
    %370 = vector.broadcast %cst_105 : f32 to vector<1x16xf32>
    %371 = arith.select %369, %370, %357 : vector<1x16xi1>, vector<1x16xf32>
    %cst_106 = arith.constant -1.000000e+00 : f32
    %372 = vector.broadcast %cst_106 : f32 to vector<1x16xf32>
    %373 = arith.select %369, %372, %359 : vector<1x16xi1>, vector<1x16xf32>
    %cst_107 = arith.constant dense<0xFF800000> : vector<1xf32>
    %374 = vector.multi_reduction <maximumf>, %373, %cst_107 [1] : vector<1x16xf32> to vector<1xf32>
    %375 = vector.shape_cast %374 : vector<1xf32> to vector<1x1xf32>
    %376 = vector.broadcast %375 : vector<1x1xf32> to vector<1x16xf32>
    %377 = arith.cmpf oge, %373, %376 : vector<1x16xf32>
    %c16_i32_108 = arith.constant 16 : i32
    %378 = vector.broadcast %c16_i32_108 : i32 to vector<1x16xi32>
    %379 = arith.select %377, %32, %378 : vector<1x16xi1>, vector<1x16xi32>
    %cst_109 = arith.constant dense<2147483647> : vector<1xi32>
    %380 = vector.multi_reduction <minsi>, %379, %cst_109 [1] : vector<1x16xi32> to vector<1xi32>
    %381 = vector.shape_cast %380 : vector<1xi32> to vector<1x1xi32>
    %382 = vector.broadcast %381 : vector<1x1xi32> to vector<1x16xi32>
    %383 = arith.cmpi eq, %32, %382 : vector<1x16xi32>
    %cst_110 = arith.constant 1.000000e+00 : f32
    %384 = vector.broadcast %cst_110 : f32 to vector<1x16xf32>
    %385 = arith.select %383, %384, %371 : vector<1x16xi1>, vector<1x16xf32>
    %cst_111 = arith.constant -1.000000e+00 : f32
    %386 = vector.broadcast %cst_111 : f32 to vector<1x16xf32>
    %387 = arith.select %383, %386, %373 : vector<1x16xi1>, vector<1x16xf32>
    %cst_112 = arith.constant dense<0xFF800000> : vector<1xf32>
    %388 = vector.multi_reduction <maximumf>, %387, %cst_112 [1] : vector<1x16xf32> to vector<1xf32>
    %389 = vector.shape_cast %388 : vector<1xf32> to vector<1x1xf32>
    %390 = vector.broadcast %389 : vector<1x1xf32> to vector<1x16xf32>
    %391 = arith.cmpf oge, %387, %390 : vector<1x16xf32>
    %c16_i32_113 = arith.constant 16 : i32
    %392 = vector.broadcast %c16_i32_113 : i32 to vector<1x16xi32>
    %393 = arith.select %391, %32, %392 : vector<1x16xi1>, vector<1x16xi32>
    %cst_114 = arith.constant dense<2147483647> : vector<1xi32>
    %394 = vector.multi_reduction <minsi>, %393, %cst_114 [1] : vector<1x16xi32> to vector<1xi32>
    %395 = vector.shape_cast %394 : vector<1xi32> to vector<1x1xi32>
    %396 = vector.broadcast %395 : vector<1x1xi32> to vector<1x16xi32>
    %397 = arith.cmpi eq, %32, %396 : vector<1x16xi32>
    %cst_115 = arith.constant 1.000000e+00 : f32
    %398 = vector.broadcast %cst_115 : f32 to vector<1x16xf32>
    %399 = arith.select %397, %398, %385 : vector<1x16xi1>, vector<1x16xf32>
    %cst_116 = arith.constant -1.000000e+00 : f32
    %400 = vector.broadcast %cst_116 : f32 to vector<1x16xf32>
    %401 = arith.select %397, %400, %387 : vector<1x16xi1>, vector<1x16xf32>
    %cst_117 = arith.constant dense<0xFF800000> : vector<1xf32>
    %402 = vector.multi_reduction <maximumf>, %401, %cst_117 [1] : vector<1x16xf32> to vector<1xf32>
    %403 = vector.shape_cast %402 : vector<1xf32> to vector<1x1xf32>
    %404 = vector.broadcast %403 : vector<1x1xf32> to vector<1x16xf32>
    %405 = arith.cmpf oge, %401, %404 : vector<1x16xf32>
    %c16_i32_118 = arith.constant 16 : i32
    %406 = vector.broadcast %c16_i32_118 : i32 to vector<1x16xi32>
    %407 = arith.select %405, %32, %406 : vector<1x16xi1>, vector<1x16xi32>
    %cst_119 = arith.constant dense<2147483647> : vector<1xi32>
    %408 = vector.multi_reduction <minsi>, %407, %cst_119 [1] : vector<1x16xi32> to vector<1xi32>
    %409 = vector.shape_cast %408 : vector<1xi32> to vector<1x1xi32>
    %410 = vector.broadcast %409 : vector<1x1xi32> to vector<1x16xi32>
    %411 = arith.cmpi eq, %32, %410 : vector<1x16xi32>
    %cst_120 = arith.constant 1.000000e+00 : f32
    %412 = vector.broadcast %cst_120 : f32 to vector<1x16xf32>
    %413 = arith.select %411, %412, %399 : vector<1x16xi1>, vector<1x16xf32>
    %cst_121 = arith.constant -1.000000e+00 : f32
    %414 = vector.broadcast %cst_121 : f32 to vector<1x16xf32>
    %415 = arith.select %411, %414, %401 : vector<1x16xi1>, vector<1x16xf32>
    %cst_122 = arith.constant dense<0xFF800000> : vector<1xf32>
    %416 = vector.multi_reduction <maximumf>, %415, %cst_122 [1] : vector<1x16xf32> to vector<1xf32>
    %417 = vector.shape_cast %416 : vector<1xf32> to vector<1x1xf32>
    %418 = vector.broadcast %417 : vector<1x1xf32> to vector<1x16xf32>
    %419 = arith.cmpf oge, %415, %418 : vector<1x16xf32>
    %c16_i32_123 = arith.constant 16 : i32
    %420 = vector.broadcast %c16_i32_123 : i32 to vector<1x16xi32>
    %421 = arith.select %419, %32, %420 : vector<1x16xi1>, vector<1x16xi32>
    %cst_124 = arith.constant dense<2147483647> : vector<1xi32>
    %422 = vector.multi_reduction <minsi>, %421, %cst_124 [1] : vector<1x16xi32> to vector<1xi32>
    %423 = vector.shape_cast %422 : vector<1xi32> to vector<1x1xi32>
    %424 = vector.broadcast %423 : vector<1x1xi32> to vector<1x16xi32>
    %425 = arith.cmpi eq, %32, %424 : vector<1x16xi32>
    %cst_125 = arith.constant 1.000000e+00 : f32
    %426 = vector.broadcast %cst_125 : f32 to vector<1x16xf32>
    %427 = arith.select %425, %426, %413 : vector<1x16xi1>, vector<1x16xf32>
    %cst_126 = arith.constant -1.000000e+00 : f32
    %428 = vector.broadcast %cst_126 : f32 to vector<1x16xf32>
    %429 = arith.select %425, %428, %415 : vector<1x16xi1>, vector<1x16xf32>
    %cst_127 = arith.constant dense<0xFF800000> : vector<1xf32>
    %430 = vector.multi_reduction <maximumf>, %429, %cst_127 [1] : vector<1x16xf32> to vector<1xf32>
    %431 = vector.shape_cast %430 : vector<1xf32> to vector<1x1xf32>
    %432 = vector.broadcast %431 : vector<1x1xf32> to vector<1x16xf32>
    %433 = arith.cmpf oge, %429, %432 : vector<1x16xf32>
    %c16_i32_128 = arith.constant 16 : i32
    %434 = vector.broadcast %c16_i32_128 : i32 to vector<1x16xi32>
    %435 = arith.select %433, %32, %434 : vector<1x16xi1>, vector<1x16xi32>
    %cst_129 = arith.constant dense<2147483647> : vector<1xi32>
    %436 = vector.multi_reduction <minsi>, %435, %cst_129 [1] : vector<1x16xi32> to vector<1xi32>
    %437 = vector.shape_cast %436 : vector<1xi32> to vector<1x1xi32>
    %438 = vector.broadcast %437 : vector<1x1xi32> to vector<1x16xi32>
    %439 = arith.cmpi eq, %32, %438 : vector<1x16xi32>
    %cst_130 = arith.constant 1.000000e+00 : f32
    %440 = vector.broadcast %cst_130 : f32 to vector<1x16xf32>
    %441 = arith.select %439, %440, %427 : vector<1x16xi1>, vector<1x16xf32>
    %cst_131 = arith.constant -1.000000e+00 : f32
    %442 = vector.broadcast %cst_131 : f32 to vector<1x16xf32>
    %443 = arith.select %439, %442, %429 : vector<1x16xi1>, vector<1x16xf32>
    %cst_132 = arith.constant dense<0xFF800000> : vector<1xf32>
    %444 = vector.multi_reduction <maximumf>, %443, %cst_132 [1] : vector<1x16xf32> to vector<1xf32>
    %445 = vector.shape_cast %444 : vector<1xf32> to vector<1x1xf32>
    %446 = vector.broadcast %445 : vector<1x1xf32> to vector<1x16xf32>
    %447 = arith.cmpf oge, %443, %446 : vector<1x16xf32>
    %c16_i32_133 = arith.constant 16 : i32
    %448 = vector.broadcast %c16_i32_133 : i32 to vector<1x16xi32>
    %449 = arith.select %447, %32, %448 : vector<1x16xi1>, vector<1x16xi32>
    %cst_134 = arith.constant dense<2147483647> : vector<1xi32>
    %450 = vector.multi_reduction <minsi>, %449, %cst_134 [1] : vector<1x16xi32> to vector<1xi32>
    %451 = vector.shape_cast %450 : vector<1xi32> to vector<1x1xi32>
    %452 = vector.broadcast %451 : vector<1x1xi32> to vector<1x16xi32>
    %453 = arith.cmpi eq, %32, %452 : vector<1x16xi32>
    %cst_135 = arith.constant 1.000000e+00 : f32
    %454 = vector.broadcast %cst_135 : f32 to vector<1x16xf32>
    %455 = arith.select %453, %454, %441 : vector<1x16xi1>, vector<1x16xf32>
    %cst_136 = arith.constant dense<0.000000e+00> : vector<1x16xf32>
    %456 = tpu.matmul %455, %37, %cst_136 {dimension_numbers = #tpu.dot_dimension_numbers<[1], [0], [0], [1], [0, 0, 1, 1], [], []>} : vector<1x16xf32>, vector<16x16xf32>, vector<1x16xf32> -> vector<1x16xf32>
    %457 = arith.fptosi %456 : vector<1x16xf32> to vector<1x16xi32>
    %458 = vector.shape_cast %455 : vector<1x16xf32> to vector<1x16xf32>
    %459 = vector.broadcast %458 : vector<1x16xf32> to vector<9x16xf32>
    %cst_137 = arith.constant 5.000000e-01 : f32
    %460 = vector.broadcast %cst_137 : f32 to vector<9x16xf32>
    %461 = arith.cmpf ogt, %459, %460 : vector<9x16xf32>
    %462 = vector.shape_cast %457 : vector<1x16xi32> to vector<1x16xi32>
    %463 = vector.broadcast %462 : vector<1x16xi32> to vector<9x16xi32>
    %c1_i32_138 = arith.constant 1 : i32
    %464 = vector.broadcast %c1_i32_138 : i32 to vector<9x16xi32>
    %465 = arith.addi %463, %464 : vector<9x16xi32>
    %466 = arith.cmpi eq, %465, %38 : vector<9x16xi32>
    %467 = arith.andi %466, %461 : vector<9x16xi1>
    %cst_139 = arith.constant 1.000000e+00 : f32
    %cst_140 = arith.constant 0.000000e+00 : f32
    %468 = vector.broadcast %cst_139 : f32 to vector<9x16xf32>
    %469 = vector.broadcast %cst_140 : f32 to vector<9x16xf32>
    %470 = arith.select %467, %468, %469 : vector<9x16xi1>, vector<9x16xf32>
    %471 = tpu.concatenate %43, %470 in 1 : vector<9x1xf32>, vector<9x16xf32> -> vector<9x17xf32>
    %472 = tpu.concatenate %130, %344 in 0 : vector<17x32xf32>, vector<17x32xf32> -> vector<34x32xf32>
    %c0_141 = arith.constant 0 : index
    %c0_142 = arith.constant 0 : index
    %473 = vector.load %arg4[%c0_141, %c0_142] : memref<32x32xf32, #tpu.memory_space<vmem>>, vector<32x32xf32>
    %cst_143 = arith.constant dense<0.000000e+00> : vector<34x32xf32>
    %474 = tpu.matmul %472, %473, %cst_143 {dimension_numbers = #tpu.dot_dimension_numbers<[1], [0], [0], [1], [0, 0, 1, 1], [], []>} : vector<34x32xf32>, vector<32x32xf32>, vector<34x32xf32> -> vector<34x32xf32>
    %c0_144 = arith.constant 0 : index
    %c0_145 = arith.constant 0 : index
    %475 = vector.load %arg5[%c0_144, %c0_145] : memref<1x32xf32, #tpu.memory_space<vmem>>, vector<1x32xf32>
    %476 = vector.broadcast %475 : vector<1x32xf32> to vector<34x32xf32>
    %477 = arith.addf %474, %476 : vector<34x32xf32>
    %478 = arith.addf %477, %0 : vector<34x32xf32>
    %479 = vector.extract_strided_slice %478 {offsets = [0, 0], sizes = [17, 32], strides = [1, 1]} : vector<34x32xf32> to vector<17x32xf32>
    %cst_146 = arith.constant dense<0.000000e+00> : vector<9x32xf32>
    %480 = tpu.matmul %257, %479, %cst_146 {dimension_numbers = #tpu.dot_dimension_numbers<[1], [0], [0], [1], [0, 0, 1, 1], [], []>} : vector<9x17xf32>, vector<17x32xf32>, vector<9x32xf32> -> vector<9x32xf32>
    %481 = vector.extract_strided_slice %478 {offsets = [17, 0], sizes = [17, 32], strides = [1, 1]} : vector<34x32xf32> to vector<17x32xf32>
    %cst_147 = arith.constant dense<0.000000e+00> : vector<9x32xf32>
    %482 = tpu.matmul %471, %481, %cst_147 {dimension_numbers = #tpu.dot_dimension_numbers<[1], [0], [0], [1], [0, 0, 1, 1], [], []>} : vector<9x17xf32>, vector<17x32xf32>, vector<9x32xf32> -> vector<9x32xf32>
    %483 = tpu.concatenate %480, %482 in 0 : vector<9x32xf32>, vector<9x32xf32> -> vector<18x32xf32>
    %c0_148 = arith.constant 0 : index
    %c0_149 = arith.constant 0 : index
    %484 = vector.load %arg6[%c0_148, %c0_149] : memref<1x32xf32, #tpu.memory_space<vmem>>, vector<1x32xf32>
    %c0_150 = arith.constant 0 : index
    %c0_151 = arith.constant 0 : index
    %485 = vector.load %arg7[%c0_150, %c0_151] : memref<1x32xf32, #tpu.memory_space<vmem>>, vector<1x32xf32>
    %cst_152 = arith.constant dense<0.000000e+00> : vector<18xf32>
    %486 = vector.multi_reduction <add>, %483, %cst_152 [1] : vector<18x32xf32> to vector<18xf32>
    %487 = vector.shape_cast %486 : vector<18xf32> to vector<18x1xf32>
    %cst_153 = arith.constant 3.200000e+01 : f32
    %488 = vector.broadcast %cst_153 : f32 to vector<18x1xf32>
    %489 = arith.divf %487, %488 : vector<18x1xf32>
    %490 = vector.broadcast %489 : vector<18x1xf32> to vector<18x32xf32>
    %491 = arith.subf %483, %490 : vector<18x32xf32>
    %492 = arith.mulf %491, %491 : vector<18x32xf32>
    %cst_154 = arith.constant dense<0.000000e+00> : vector<18xf32>
    %493 = vector.multi_reduction <add>, %492, %cst_154 [1] : vector<18x32xf32> to vector<18xf32>
    %494 = vector.shape_cast %493 : vector<18xf32> to vector<18x1xf32>
    %cst_155 = arith.constant 3.200000e+01 : f32
    %495 = vector.broadcast %cst_155 : f32 to vector<18x1xf32>
    %496 = arith.divf %494, %495 : vector<18x1xf32>
    %497 = vector.broadcast %489 : vector<18x1xf32> to vector<18x32xf32>
    %498 = arith.subf %483, %497 : vector<18x32xf32>
    %cst_156 = arith.constant 9.99999974E-6 : f32
    %499 = vector.broadcast %cst_156 : f32 to vector<18x1xf32>
    %500 = arith.addf %496, %499 : vector<18x1xf32>
    %501 = math.rsqrt %500 : vector<18x1xf32>
    %502 = vector.broadcast %501 : vector<18x1xf32> to vector<18x32xf32>
    %503 = arith.mulf %498, %502 : vector<18x32xf32>
    %504 = vector.broadcast %484 : vector<1x32xf32> to vector<18x32xf32>
    %505 = arith.mulf %503, %504 : vector<18x32xf32>
    %506 = vector.broadcast %485 : vector<1x32xf32> to vector<18x32xf32>
    %507 = arith.addf %505, %506 : vector<18x32xf32>
    %c0_157 = arith.constant 0 : index
    %c0_158 = arith.constant 0 : index
    %508 = vector.load %arg8[%c0_157, %c0_158] : memref<32x64xf32, #tpu.memory_space<vmem>>, vector<32x64xf32>
    %cst_159 = arith.constant dense<0.000000e+00> : vector<18x64xf32>
    %509 = tpu.matmul %507, %508, %cst_159 {dimension_numbers = #tpu.dot_dimension_numbers<[1], [0], [0], [1], [0, 0, 1, 1], [], []>} : vector<18x32xf32>, vector<32x64xf32>, vector<18x64xf32> -> vector<18x64xf32>
    %c0_160 = arith.constant 0 : index
    %c0_161 = arith.constant 0 : index
    %510 = vector.load %arg9[%c0_160, %c0_161] : memref<1x64xf32, #tpu.memory_space<vmem>>, vector<1x64xf32>
    %511 = vector.broadcast %510 : vector<1x64xf32> to vector<18x64xf32>
    %512 = arith.addf %509, %511 : vector<18x64xf32>
    %cst_162 = arith.constant 5.000000e-01 : f32
    %513 = vector.broadcast %cst_162 : f32 to vector<18x64xf32>
    %514 = arith.mulf %513, %512 : vector<18x64xf32>
    %cst_163 = arith.constant 0.707106769 : f32
    %515 = vector.broadcast %cst_163 : f32 to vector<18x64xf32>
    %516 = arith.mulf %512, %515 : vector<18x64xf32>
    %517 = math.erf %516 : vector<18x64xf32>
    %cst_164 = arith.constant 1.000000e+00 : f32
    %518 = vector.broadcast %cst_164 : f32 to vector<18x64xf32>
    %519 = arith.addf %518, %517 : vector<18x64xf32>
    %520 = arith.mulf %514, %519 : vector<18x64xf32>
    %c0_165 = arith.constant 0 : index
    %c0_166 = arith.constant 0 : index
    %521 = vector.load %arg10[%c0_165, %c0_166] : memref<64x32xf32, #tpu.memory_space<vmem>>, vector<64x32xf32>
    %cst_167 = arith.constant dense<0.000000e+00> : vector<18x32xf32>
    %522 = tpu.matmul %520, %521, %cst_167 {dimension_numbers = #tpu.dot_dimension_numbers<[1], [0], [0], [1], [0, 0, 1, 1], [], []>} : vector<18x64xf32>, vector<64x32xf32>, vector<18x32xf32> -> vector<18x32xf32>
    %c0_168 = arith.constant 0 : index
    %c0_169 = arith.constant 0 : index
    %523 = vector.load %arg11[%c0_168, %c0_169] : memref<1x32xf32, #tpu.memory_space<vmem>>, vector<1x32xf32>
    %524 = vector.broadcast %523 : vector<1x32xf32> to vector<18x32xf32>
    %525 = arith.addf %522, %524 : vector<18x32xf32>
    %526 = arith.addf %525, %483 : vector<18x32xf32>
    %c0_170 = arith.constant 0 : index
    %c0_171 = arith.constant 0 : index
    %527 = vector.load %arg14[%c0_170, %c0_171] : memref<18x32xf32, #tpu.memory_space<vmem>>, vector<18x32xf32>
    tpu.vector_store %arg14[%c0_170, %c0_171], %526 {strides = array<i32>} : memref<18x32xf32, #tpu.memory_space<vmem>>, vector<18x32xf32>,
    return
  }
}

module attributes {stable_mosaic.version = 11 : i64} {
  func.func @layer_kernel(%arg0: memref<18x32xf32, #tpu.memory_space<vmem>>, %arg1: memref<1x32xf32, #tpu.memory_space<vmem>>, %arg2: memref<1x32xf32, #tpu.memory_space<vmem>>, %arg3: memref<32x96xf32, #tpu.memory_space<vmem>>, %arg4: memref<32x32xf32, #tpu.memory_space<vmem>>, %arg5: memref<1x32xf32, #tpu.memory_space<vmem>>, %arg6: memref<1x32xf32, #tpu.memory_space<vmem>>, %arg7: memref<1x32xf32, #tpu.memory_space<vmem>>, %arg8: memref<32x64xf32, #tpu.memory_space<vmem>>, %arg9: memref<1x64xf32, #tpu.memory_space<vmem>>, %arg10: memref<64x32xf32, #tpu.memory_space<vmem>>, %arg11: memref<1x32xf32, #tpu.memory_space<vmem>>, %arg12: memref<1x32xf32, #tpu.memory_space<vmem>>, %arg13: memref<1x32xf32, #tpu.memory_space<vmem>>, %arg14: memref<10x32xf32, #tpu.memory_space<vmem>>) attributes {dimension_semantics = [], scalar_prefetch = 0 : i64, scratch_operands = 0 : i64, tpu.core_type = #tpu.core_type<tc>} {
    %c0 = arith.constant 0 : index
    %c0_0 = arith.constant 0 : index
    %0 = vector.load %arg0[%c0, %c0_0] : memref<18x32xf32, #tpu.memory_space<vmem>>, vector<18x32xf32>
    %c0_1 = arith.constant 0 : index
    %c0_2 = arith.constant 0 : index
    %1 = vector.load %arg1[%c0_1, %c0_2] : memref<1x32xf32, #tpu.memory_space<vmem>>, vector<1x32xf32>
    %c0_3 = arith.constant 0 : index
    %c0_4 = arith.constant 0 : index
    %2 = vector.load %arg2[%c0_3, %c0_4] : memref<1x32xf32, #tpu.memory_space<vmem>>, vector<1x32xf32>
    %cst = arith.constant dense<0.000000e+00> : vector<18xf32>
    %3 = vector.multi_reduction <add>, %0, %cst [1] : vector<18x32xf32> to vector<18xf32>
    %4 = vector.shape_cast %3 : vector<18xf32> to vector<18x1xf32>
    %cst_5 = arith.constant 3.200000e+01 : f32
    %5 = vector.broadcast %cst_5 : f32 to vector<18x1xf32>
    %6 = arith.divf %4, %5 : vector<18x1xf32>
    %7 = vector.broadcast %6 : vector<18x1xf32> to vector<18x32xf32>
    %8 = arith.subf %0, %7 : vector<18x32xf32>
    %9 = arith.mulf %8, %8 : vector<18x32xf32>
    %cst_6 = arith.constant dense<0.000000e+00> : vector<18xf32>
    %10 = vector.multi_reduction <add>, %9, %cst_6 [1] : vector<18x32xf32> to vector<18xf32>
    %11 = vector.shape_cast %10 : vector<18xf32> to vector<18x1xf32>
    %cst_7 = arith.constant 3.200000e+01 : f32
    %12 = vector.broadcast %cst_7 : f32 to vector<18x1xf32>
    %13 = arith.divf %11, %12 : vector<18x1xf32>
    %14 = vector.broadcast %6 : vector<18x1xf32> to vector<18x32xf32>
    %15 = arith.subf %0, %14 : vector<18x32xf32>
    %cst_8 = arith.constant 9.99999974E-6 : f32
    %16 = vector.broadcast %cst_8 : f32 to vector<18x1xf32>
    %17 = arith.addf %13, %16 : vector<18x1xf32>
    %18 = math.rsqrt %17 : vector<18x1xf32>
    %19 = vector.broadcast %18 : vector<18x1xf32> to vector<18x32xf32>
    %20 = arith.mulf %15, %19 : vector<18x32xf32>
    %21 = vector.broadcast %1 : vector<1x32xf32> to vector<18x32xf32>
    %22 = arith.mulf %20, %21 : vector<18x32xf32>
    %23 = vector.broadcast %2 : vector<1x32xf32> to vector<18x32xf32>
    %24 = arith.addf %22, %23 : vector<18x32xf32>
    %c0_9 = arith.constant 0 : index
    %c0_10 = arith.constant 0 : index
    %25 = vector.load %arg3[%c0_9, %c0_10] : memref<32x96xf32, #tpu.memory_space<vmem>>, vector<32x96xf32>
    %cst_11 = arith.constant dense<0.000000e+00> : vector<18x96xf32>
    %26 = tpu.matmul %24, %25, %cst_11 {dimension_numbers = #tpu.dot_dimension_numbers<[1], [0], [0], [1], [0, 0, 1, 1], [], []>} : vector<18x32xf32>, vector<32x96xf32>, vector<18x96xf32> -> vector<18x96xf32>
    %27 = vector.extract_strided_slice %26 {offsets = [0, 0], sizes = [18, 32], strides = [1, 1]} : vector<18x96xf32> to vector<18x32xf32>
    %cst_12 = arith.constant 0.353553385 : f32
    %28 = vector.broadcast %cst_12 : f32 to vector<18x32xf32>
    %29 = arith.mulf %27, %28 : vector<18x32xf32>
    %30 = vector.extract_strided_slice %26 {offsets = [0, 32], sizes = [18, 32], strides = [1, 1]} : vector<18x96xf32> to vector<18x32xf32>
    %31 = vector.extract_strided_slice %26 {offsets = [0, 64], sizes = [18, 32], strides = [1, 1]} : vector<18x96xf32> to vector<18x32xf32>
    %32 = tpu.iota {dimensions = array<i32: 1>} : vector<1x8xi32>
    %33 = tpu.iota {dimensions = array<i32: 0>} : vector<8x8xi32>
    %34 = tpu.iota {dimensions = array<i32: 1>} : vector<8x8xi32>
    %35 = arith.cmpi slt, %33, %34 : vector<8x8xi32>
    %36 = arith.extui %35 : vector<8x8xi1> to vector<8x8xi32>
    %37 = arith.sitofp %36 : vector<8x8xi32> to vector<8x8xf32>
    %38 = tpu.iota {dimensions = array<i32: 0>} : vector<5x8xi32>
    %39 = tpu.iota {dimensions = array<i32: 0>} : vector<5x1xi32>
    %c0_i32 = arith.constant 0 : i32
    %40 = vector.broadcast %c0_i32 : i32 to vector<5x1xi32>
    %41 = arith.cmpi eq, %39, %40 : vector<5x1xi32>
    %42 = arith.extui %41 : vector<5x1xi1> to vector<5x1xi32>
    %43 = arith.sitofp %42 : vector<5x1xi32> to vector<5x1xf32>
    %44 = vector.extract_strided_slice %29 {offsets = [0, 0], sizes = [9, 32], strides = [1, 1]} : vector<18x32xf32> to vector<9x32xf32>
    %45 = vector.extract_strided_slice %30 {offsets = [0, 0], sizes = [9, 32], strides = [1, 1]} : vector<18x32xf32> to vector<9x32xf32>
    %46 = vector.extract_strided_slice %31 {offsets = [0, 0], sizes = [9, 32], strides = [1, 1]} : vector<18x32xf32> to vector<9x32xf32>
    %47 = vector.extract_strided_slice %44 {offsets = [0, 0], sizes = [9, 8], strides = [1, 1]} : vector<9x32xf32> to vector<9x8xf32>
    %48 = vector.extract_strided_slice %45 {offsets = [0, 0], sizes = [9, 8], strides = [1, 1]} : vector<9x32xf32> to vector<9x8xf32>
    %49 = vector.extract_strided_slice %46 {offsets = [0, 0], sizes = [9, 8], strides = [1, 1]} : vector<9x32xf32> to vector<9x8xf32>
    %cst_13 = arith.constant dense<0.000000e+00> : vector<9x9xf32>
    %50 = tpu.matmul %47, %48, %cst_13 {dimension_numbers = #tpu.dot_dimension_numbers<[1], [1], [0], [0], [0, 0, 1, 0], [], []>} : vector<9x8xf32>, vector<9x8xf32>, vector<9x9xf32> -> vector<9x9xf32>
    %cst_14 = arith.constant dense<0xFF800000> : vector<9xf32>
    %51 = vector.multi_reduction <maximumf>, %50, %cst_14 [1] : vector<9x9xf32> to vector<9xf32>
    %52 = vector.shape_cast %51 : vector<9xf32> to vector<9x1xf32>
    %53 = vector.broadcast %52 : vector<9x1xf32> to vector<9x9xf32>
    %54 = arith.subf %50, %53 : vector<9x9xf32>
    %55 = math.exp %54 : vector<9x9xf32>
    %cst_15 = arith.constant dense<0.000000e+00> : vector<9xf32>
    %56 = vector.multi_reduction <add>, %55, %cst_15 [1] : vector<9x9xf32> to vector<9xf32>
    %57 = vector.shape_cast %56 : vector<9xf32> to vector<9x1xf32>
    %cst_16 = arith.constant 1.000000e+00 : f32
    %58 = vector.broadcast %cst_16 : f32 to vector<9x1xf32>
    %59 = arith.divf %58, %57 : vector<9x1xf32>
    %cst_17 = arith.constant dense<0.000000e+00> : vector<9x8xf32>
    %60 = tpu.matmul %55, %49, %cst_17 {dimension_numbers = #tpu.dot_dimension_numbers<[1], [0], [0], [1], [0, 0, 1, 1], [], []>} : vector<9x9xf32>, vector<9x8xf32>, vector<9x8xf32> -> vector<9x8xf32>
    %61 = vector.broadcast %59 : vector<9x1xf32> to vector<9x8xf32>
    %62 = arith.mulf %60, %61 : vector<9x8xf32>
    %63 = vector.extract_strided_slice %55 {offsets = [0, 1], sizes = [1, 8], strides = [1, 1]} : vector<9x9xf32> to vector<1x8xf32>
    %64 = vector.extract_strided_slice %59 {offsets = [0, 0], sizes = [1, 1], strides = [1, 1]} : vector<9x1xf32> to vector<1x1xf32>
    %65 = vector.broadcast %64 : vector<1x1xf32> to vector<1x8xf32>
    %66 = arith.mulf %63, %65 : vector<1x8xf32>
    %67 = vector.extract_strided_slice %44 {offsets = [0, 8], sizes = [9, 8], strides = [1, 1]} : vector<9x32xf32> to vector<9x8xf32>
    %68 = vector.extract_strided_slice %45 {offsets = [0, 8], sizes = [9, 8], strides = [1, 1]} : vector<9x32xf32> to vector<9x8xf32>
    %69 = vector.extract_strided_slice %46 {offsets = [0, 8], sizes = [9, 8], strides = [1, 1]} : vector<9x32xf32> to vector<9x8xf32>
    %cst_18 = arith.constant dense<0.000000e+00> : vector<9x9xf32>
    %70 = tpu.matmul %67, %68, %cst_18 {dimension_numbers = #tpu.dot_dimension_numbers<[1], [1], [0], [0], [0, 0, 1, 0], [], []>} : vector<9x8xf32>, vector<9x8xf32>, vector<9x9xf32> -> vector<9x9xf32>
    %cst_19 = arith.constant dense<0xFF800000> : vector<9xf32>
    %71 = vector.multi_reduction <maximumf>, %70, %cst_19 [1] : vector<9x9xf32> to vector<9xf32>
    %72 = vector.shape_cast %71 : vector<9xf32> to vector<9x1xf32>
    %73 = vector.broadcast %72 : vector<9x1xf32> to vector<9x9xf32>
    %74 = arith.subf %70, %73 : vector<9x9xf32>
    %75 = math.exp %74 : vector<9x9xf32>
    %cst_20 = arith.constant dense<0.000000e+00> : vector<9xf32>
    %76 = vector.multi_reduction <add>, %75, %cst_20 [1] : vector<9x9xf32> to vector<9xf32>
    %77 = vector.shape_cast %76 : vector<9xf32> to vector<9x1xf32>
    %cst_21 = arith.constant 1.000000e+00 : f32
    %78 = vector.broadcast %cst_21 : f32 to vector<9x1xf32>
    %79 = arith.divf %78, %77 : vector<9x1xf32>
    %cst_22 = arith.constant dense<0.000000e+00> : vector<9x8xf32>
    %80 = tpu.matmul %75, %69, %cst_22 {dimension_numbers = #tpu.dot_dimension_numbers<[1], [0], [0], [1], [0, 0, 1, 1], [], []>} : vector<9x9xf32>, vector<9x8xf32>, vector<9x8xf32> -> vector<9x8xf32>
    %81 = vector.broadcast %79 : vector<9x1xf32> to vector<9x8xf32>
    %82 = arith.mulf %80, %81 : vector<9x8xf32>
    %83 = vector.extract_strided_slice %75 {offsets = [0, 1], sizes = [1, 8], strides = [1, 1]} : vector<9x9xf32> to vector<1x8xf32>
    %84 = vector.extract_strided_slice %79 {offsets = [0, 0], sizes = [1, 1], strides = [1, 1]} : vector<9x1xf32> to vector<1x1xf32>
    %85 = vector.broadcast %84 : vector<1x1xf32> to vector<1x8xf32>
    %86 = arith.mulf %83, %85 : vector<1x8xf32>
    %87 = arith.maximumf %66, %86 : vector<1x8xf32>
    %88 = vector.extract_strided_slice %44 {offsets = [0, 16], sizes = [9, 8], strides = [1, 1]} : vector<9x32xf32> to vector<9x8xf32>
    %89 = vector.extract_strided_slice %45 {offsets = [0, 16], sizes = [9, 8], strides = [1, 1]} : vector<9x32xf32> to vector<9x8xf32>
    %90 = vector.extract_strided_slice %46 {offsets = [0, 16], sizes = [9, 8], strides = [1, 1]} : vector<9x32xf32> to vector<9x8xf32>
    %cst_23 = arith.constant dense<0.000000e+00> : vector<9x9xf32>
    %91 = tpu.matmul %88, %89, %cst_23 {dimension_numbers = #tpu.dot_dimension_numbers<[1], [1], [0], [0], [0, 0, 1, 0], [], []>} : vector<9x8xf32>, vector<9x8xf32>, vector<9x9xf32> -> vector<9x9xf32>
    %cst_24 = arith.constant dense<0xFF800000> : vector<9xf32>
    %92 = vector.multi_reduction <maximumf>, %91, %cst_24 [1] : vector<9x9xf32> to vector<9xf32>
    %93 = vector.shape_cast %92 : vector<9xf32> to vector<9x1xf32>
    %94 = vector.broadcast %93 : vector<9x1xf32> to vector<9x9xf32>
    %95 = arith.subf %91, %94 : vector<9x9xf32>
    %96 = math.exp %95 : vector<9x9xf32>
    %cst_25 = arith.constant dense<0.000000e+00> : vector<9xf32>
    %97 = vector.multi_reduction <add>, %96, %cst_25 [1] : vector<9x9xf32> to vector<9xf32>
    %98 = vector.shape_cast %97 : vector<9xf32> to vector<9x1xf32>
    %cst_26 = arith.constant 1.000000e+00 : f32
    %99 = vector.broadcast %cst_26 : f32 to vector<9x1xf32>
    %100 = arith.divf %99, %98 : vector<9x1xf32>
    %cst_27 = arith.constant dense<0.000000e+00> : vector<9x8xf32>
    %101 = tpu.matmul %96, %90, %cst_27 {dimension_numbers = #tpu.dot_dimension_numbers<[1], [0], [0], [1], [0, 0, 1, 1], [], []>} : vector<9x9xf32>, vector<9x8xf32>, vector<9x8xf32> -> vector<9x8xf32>
    %102 = vector.broadcast %100 : vector<9x1xf32> to vector<9x8xf32>
    %103 = arith.mulf %101, %102 : vector<9x8xf32>
    %104 = vector.extract_strided_slice %96 {offsets = [0, 1], sizes = [1, 8], strides = [1, 1]} : vector<9x9xf32> to vector<1x8xf32>
    %105 = vector.extract_strided_slice %100 {offsets = [0, 0], sizes = [1, 1], strides = [1, 1]} : vector<9x1xf32> to vector<1x1xf32>
    %106 = vector.broadcast %105 : vector<1x1xf32> to vector<1x8xf32>
    %107 = arith.mulf %104, %106 : vector<1x8xf32>
    %108 = arith.maximumf %87, %107 : vector<1x8xf32>
    %109 = vector.extract_strided_slice %44 {offsets = [0, 24], sizes = [9, 8], strides = [1, 1]} : vector<9x32xf32> to vector<9x8xf32>
    %110 = vector.extract_strided_slice %45 {offsets = [0, 24], sizes = [9, 8], strides = [1, 1]} : vector<9x32xf32> to vector<9x8xf32>
    %111 = vector.extract_strided_slice %46 {offsets = [0, 24], sizes = [9, 8], strides = [1, 1]} : vector<9x32xf32> to vector<9x8xf32>
    %cst_28 = arith.constant dense<0.000000e+00> : vector<9x9xf32>
    %112 = tpu.matmul %109, %110, %cst_28 {dimension_numbers = #tpu.dot_dimension_numbers<[1], [1], [0], [0], [0, 0, 1, 0], [], []>} : vector<9x8xf32>, vector<9x8xf32>, vector<9x9xf32> -> vector<9x9xf32>
    %cst_29 = arith.constant dense<0xFF800000> : vector<9xf32>
    %113 = vector.multi_reduction <maximumf>, %112, %cst_29 [1] : vector<9x9xf32> to vector<9xf32>
    %114 = vector.shape_cast %113 : vector<9xf32> to vector<9x1xf32>
    %115 = vector.broadcast %114 : vector<9x1xf32> to vector<9x9xf32>
    %116 = arith.subf %112, %115 : vector<9x9xf32>
    %117 = math.exp %116 : vector<9x9xf32>
    %cst_30 = arith.constant dense<0.000000e+00> : vector<9xf32>
    %118 = vector.multi_reduction <add>, %117, %cst_30 [1] : vector<9x9xf32> to vector<9xf32>
    %119 = vector.shape_cast %118 : vector<9xf32> to vector<9x1xf32>
    %cst_31 = arith.constant 1.000000e+00 : f32
    %120 = vector.broadcast %cst_31 : f32 to vector<9x1xf32>
    %121 = arith.divf %120, %119 : vector<9x1xf32>
    %cst_32 = arith.constant dense<0.000000e+00> : vector<9x8xf32>
    %122 = tpu.matmul %117, %111, %cst_32 {dimension_numbers = #tpu.dot_dimension_numbers<[1], [0], [0], [1], [0, 0, 1, 1], [], []>} : vector<9x9xf32>, vector<9x8xf32>, vector<9x8xf32> -> vector<9x8xf32>
    %123 = vector.broadcast %121 : vector<9x1xf32> to vector<9x8xf32>
    %124 = arith.mulf %122, %123 : vector<9x8xf32>
    %125 = vector.extract_strided_slice %117 {offsets = [0, 1], sizes = [1, 8], strides = [1, 1]} : vector<9x9xf32> to vector<1x8xf32>
    %126 = vector.extract_strided_slice %121 {offsets = [0, 0], sizes = [1, 1], strides = [1, 1]} : vector<9x1xf32> to vector<1x1xf32>
    %127 = vector.broadcast %126 : vector<1x1xf32> to vector<1x8xf32>
    %128 = arith.mulf %125, %127 : vector<1x8xf32>
    %129 = arith.maximumf %108, %128 : vector<1x8xf32>
    %130 = tpu.concatenate %62, %82, %103, %124 in 1 : vector<9x8xf32>, vector<9x8xf32>, vector<9x8xf32>, vector<9x8xf32> -> vector<9x32xf32>
    %cst_33 = arith.constant 0.000000e+00 : f32
    %131 = vector.broadcast %cst_33 : f32 to vector<1x8xf32>
    %cst_34 = arith.constant dense<0xFF800000> : vector<1xf32>
    %132 = vector.multi_reduction <maximumf>, %129, %cst_34 [1] : vector<1x8xf32> to vector<1xf32>
    %133 = vector.shape_cast %132 : vector<1xf32> to vector<1x1xf32>
    %134 = vector.broadcast %133 : vector<1x1xf32> to vector<1x8xf32>
    %135 = arith.cmpf oge, %129, %134 : vector<1x8xf32>
    %c8_i32 = arith.constant 8 : i32
    %136 = vector.broadcast %c8_i32 : i32 to vector<1x8xi32>
    %137 = arith.select %135, %32, %136 : vector<1x8xi1>, vector<1x8xi32>
    %cst_35 = arith.constant dense<2147483647> : vector<1xi32>
    %138 = vector.multi_reduction <minsi>, %137, %cst_35 [1] : vector<1x8xi32> to vector<1xi32>
    %139 = vector.shape_cast %138 : vector<1xi32> to vector<1x1xi32>
    %140 = vector.broadcast %139 : vector<1x1xi32> to vector<1x8xi32>
    %141 = arith.cmpi eq, %32, %140 : vector<1x8xi32>
    %cst_36 = arith.constant 1.000000e+00 : f32
    %142 = vector.broadcast %cst_36 : f32 to vector<1x8xf32>
    %143 = arith.select %141, %142, %131 : vector<1x8xi1>, vector<1x8xf32>
    %cst_37 = arith.constant -1.000000e+00 : f32
    %144 = vector.broadcast %cst_37 : f32 to vector<1x8xf32>
    %145 = arith.select %141, %144, %129 : vector<1x8xi1>, vector<1x8xf32>
    %cst_38 = arith.constant dense<0xFF800000> : vector<1xf32>
    %146 = vector.multi_reduction <maximumf>, %145, %cst_38 [1] : vector<1x8xf32> to vector<1xf32>
    %147 = vector.shape_cast %146 : vector<1xf32> to vector<1x1xf32>
    %148 = vector.broadcast %147 : vector<1x1xf32> to vector<1x8xf32>
    %149 = arith.cmpf oge, %145, %148 : vector<1x8xf32>
    %c8_i32_39 = arith.constant 8 : i32
    %150 = vector.broadcast %c8_i32_39 : i32 to vector<1x8xi32>
    %151 = arith.select %149, %32, %150 : vector<1x8xi1>, vector<1x8xi32>
    %cst_40 = arith.constant dense<2147483647> : vector<1xi32>
    %152 = vector.multi_reduction <minsi>, %151, %cst_40 [1] : vector<1x8xi32> to vector<1xi32>
    %153 = vector.shape_cast %152 : vector<1xi32> to vector<1x1xi32>
    %154 = vector.broadcast %153 : vector<1x1xi32> to vector<1x8xi32>
    %155 = arith.cmpi eq, %32, %154 : vector<1x8xi32>
    %cst_41 = arith.constant 1.000000e+00 : f32
    %156 = vector.broadcast %cst_41 : f32 to vector<1x8xf32>
    %157 = arith.select %155, %156, %143 : vector<1x8xi1>, vector<1x8xf32>
    %cst_42 = arith.constant -1.000000e+00 : f32
    %158 = vector.broadcast %cst_42 : f32 to vector<1x8xf32>
    %159 = arith.select %155, %158, %145 : vector<1x8xi1>, vector<1x8xf32>
    %cst_43 = arith.constant dense<0xFF800000> : vector<1xf32>
    %160 = vector.multi_reduction <maximumf>, %159, %cst_43 [1] : vector<1x8xf32> to vector<1xf32>
    %161 = vector.shape_cast %160 : vector<1xf32> to vector<1x1xf32>
    %162 = vector.broadcast %161 : vector<1x1xf32> to vector<1x8xf32>
    %163 = arith.cmpf oge, %159, %162 : vector<1x8xf32>
    %c8_i32_44 = arith.constant 8 : i32
    %164 = vector.broadcast %c8_i32_44 : i32 to vector<1x8xi32>
    %165 = arith.select %163, %32, %164 : vector<1x8xi1>, vector<1x8xi32>
    %cst_45 = arith.constant dense<2147483647> : vector<1xi32>
    %166 = vector.multi_reduction <minsi>, %165, %cst_45 [1] : vector<1x8xi32> to vector<1xi32>
    %167 = vector.shape_cast %166 : vector<1xi32> to vector<1x1xi32>
    %168 = vector.broadcast %167 : vector<1x1xi32> to vector<1x8xi32>
    %169 = arith.cmpi eq, %32, %168 : vector<1x8xi32>
    %cst_46 = arith.constant 1.000000e+00 : f32
    %170 = vector.broadcast %cst_46 : f32 to vector<1x8xf32>
    %171 = arith.select %169, %170, %157 : vector<1x8xi1>, vector<1x8xf32>
    %cst_47 = arith.constant -1.000000e+00 : f32
    %172 = vector.broadcast %cst_47 : f32 to vector<1x8xf32>
    %173 = arith.select %169, %172, %159 : vector<1x8xi1>, vector<1x8xf32>
    %cst_48 = arith.constant dense<0xFF800000> : vector<1xf32>
    %174 = vector.multi_reduction <maximumf>, %173, %cst_48 [1] : vector<1x8xf32> to vector<1xf32>
    %175 = vector.shape_cast %174 : vector<1xf32> to vector<1x1xf32>
    %176 = vector.broadcast %175 : vector<1x1xf32> to vector<1x8xf32>
    %177 = arith.cmpf oge, %173, %176 : vector<1x8xf32>
    %c8_i32_49 = arith.constant 8 : i32
    %178 = vector.broadcast %c8_i32_49 : i32 to vector<1x8xi32>
    %179 = arith.select %177, %32, %178 : vector<1x8xi1>, vector<1x8xi32>
    %cst_50 = arith.constant dense<2147483647> : vector<1xi32>
    %180 = vector.multi_reduction <minsi>, %179, %cst_50 [1] : vector<1x8xi32> to vector<1xi32>
    %181 = vector.shape_cast %180 : vector<1xi32> to vector<1x1xi32>
    %182 = vector.broadcast %181 : vector<1x1xi32> to vector<1x8xi32>
    %183 = arith.cmpi eq, %32, %182 : vector<1x8xi32>
    %cst_51 = arith.constant 1.000000e+00 : f32
    %184 = vector.broadcast %cst_51 : f32 to vector<1x8xf32>
    %185 = arith.select %183, %184, %171 : vector<1x8xi1>, vector<1x8xf32>
    %cst_52 = arith.constant dense<0.000000e+00> : vector<1x8xf32>
    %186 = tpu.matmul %185, %37, %cst_52 {dimension_numbers = #tpu.dot_dimension_numbers<[1], [0], [0], [1], [0, 0, 1, 1], [], []>} : vector<1x8xf32>, vector<8x8xf32>, vector<1x8xf32> -> vector<1x8xf32>
    %187 = arith.fptosi %186 : vector<1x8xf32> to vector<1x8xi32>
    %188 = vector.shape_cast %185 : vector<1x8xf32> to vector<1x8xf32>
    %189 = vector.broadcast %188 : vector<1x8xf32> to vector<5x8xf32>
    %cst_53 = arith.constant 5.000000e-01 : f32
    %190 = vector.broadcast %cst_53 : f32 to vector<5x8xf32>
    %191 = arith.cmpf ogt, %189, %190 : vector<5x8xf32>
    %192 = vector.shape_cast %187 : vector<1x8xi32> to vector<1x8xi32>
    %193 = vector.broadcast %192 : vector<1x8xi32> to vector<5x8xi32>
    %c1_i32 = arith.constant 1 : i32
    %194 = vector.broadcast %c1_i32 : i32 to vector<5x8xi32>
    %195 = arith.addi %193, %194 : vector<5x8xi32>
    %196 = arith.cmpi eq, %195, %38 : vector<5x8xi32>
    %197 = arith.andi %196, %191 : vector<5x8xi1>
    %cst_54 = arith.constant 1.000000e+00 : f32
    %cst_55 = arith.constant 0.000000e+00 : f32
    %198 = vector.broadcast %cst_54 : f32 to vector<5x8xf32>
    %199 = vector.broadcast %cst_55 : f32 to vector<5x8xf32>
    %200 = arith.select %197, %198, %199 : vector<5x8xi1>, vector<5x8xf32>
    %201 = tpu.concatenate %43, %200 in 1 : vector<5x1xf32>, vector<5x8xf32> -> vector<5x9xf32>
    %202 = vector.extract_strided_slice %29 {offsets = [9, 0], sizes = [9, 32], strides = [1, 1]} : vector<18x32xf32> to vector<9x32xf32>
    %203 = vector.extract_strided_slice %30 {offsets = [9, 0], sizes = [9, 32], strides = [1, 1]} : vector<18x32xf32> to vector<9x32xf32>
    %204 = vector.extract_strided_slice %31 {offsets = [9, 0], sizes = [9, 32], strides = [1, 1]} : vector<18x32xf32> to vector<9x32xf32>
    %205 = vector.extract_strided_slice %202 {offsets = [0, 0], sizes = [9, 8], strides = [1, 1]} : vector<9x32xf32> to vector<9x8xf32>
    %206 = vector.extract_strided_slice %203 {offsets = [0, 0], sizes = [9, 8], strides = [1, 1]} : vector<9x32xf32> to vector<9x8xf32>
    %207 = vector.extract_strided_slice %204 {offsets = [0, 0], sizes = [9, 8], strides = [1, 1]} : vector<9x32xf32> to vector<9x8xf32>
    %cst_56 = arith.constant dense<0.000000e+00> : vector<9x9xf32>
    %208 = tpu.matmul %205, %206, %cst_56 {dimension_numbers = #tpu.dot_dimension_numbers<[1], [1], [0], [0], [0, 0, 1, 0], [], []>} : vector<9x8xf32>, vector<9x8xf32>, vector<9x9xf32> -> vector<9x9xf32>
    %cst_57 = arith.constant dense<0xFF800000> : vector<9xf32>
    %209 = vector.multi_reduction <maximumf>, %208, %cst_57 [1] : vector<9x9xf32> to vector<9xf32>
    %210 = vector.shape_cast %209 : vector<9xf32> to vector<9x1xf32>
    %211 = vector.broadcast %210 : vector<9x1xf32> to vector<9x9xf32>
    %212 = arith.subf %208, %211 : vector<9x9xf32>
    %213 = math.exp %212 : vector<9x9xf32>
    %cst_58 = arith.constant dense<0.000000e+00> : vector<9xf32>
    %214 = vector.multi_reduction <add>, %213, %cst_58 [1] : vector<9x9xf32> to vector<9xf32>
    %215 = vector.shape_cast %214 : vector<9xf32> to vector<9x1xf32>
    %cst_59 = arith.constant 1.000000e+00 : f32
    %216 = vector.broadcast %cst_59 : f32 to vector<9x1xf32>
    %217 = arith.divf %216, %215 : vector<9x1xf32>
    %cst_60 = arith.constant dense<0.000000e+00> : vector<9x8xf32>
    %218 = tpu.matmul %213, %207, %cst_60 {dimension_numbers = #tpu.dot_dimension_numbers<[1], [0], [0], [1], [0, 0, 1, 1], [], []>} : vector<9x9xf32>, vector<9x8xf32>, vector<9x8xf32> -> vector<9x8xf32>
    %219 = vector.broadcast %217 : vector<9x1xf32> to vector<9x8xf32>
    %220 = arith.mulf %218, %219 : vector<9x8xf32>
    %221 = vector.extract_strided_slice %213 {offsets = [0, 1], sizes = [1, 8], strides = [1, 1]} : vector<9x9xf32> to vector<1x8xf32>
    %222 = vector.extract_strided_slice %217 {offsets = [0, 0], sizes = [1, 1], strides = [1, 1]} : vector<9x1xf32> to vector<1x1xf32>
    %223 = vector.broadcast %222 : vector<1x1xf32> to vector<1x8xf32>
    %224 = arith.mulf %221, %223 : vector<1x8xf32>
    %225 = vector.extract_strided_slice %202 {offsets = [0, 8], sizes = [9, 8], strides = [1, 1]} : vector<9x32xf32> to vector<9x8xf32>
    %226 = vector.extract_strided_slice %203 {offsets = [0, 8], sizes = [9, 8], strides = [1, 1]} : vector<9x32xf32> to vector<9x8xf32>
    %227 = vector.extract_strided_slice %204 {offsets = [0, 8], sizes = [9, 8], strides = [1, 1]} : vector<9x32xf32> to vector<9x8xf32>
    %cst_61 = arith.constant dense<0.000000e+00> : vector<9x9xf32>
    %228 = tpu.matmul %225, %226, %cst_61 {dimension_numbers = #tpu.dot_dimension_numbers<[1], [1], [0], [0], [0, 0, 1, 0], [], []>} : vector<9x8xf32>, vector<9x8xf32>, vector<9x9xf32> -> vector<9x9xf32>
    %cst_62 = arith.constant dense<0xFF800000> : vector<9xf32>
    %229 = vector.multi_reduction <maximumf>, %228, %cst_62 [1] : vector<9x9xf32> to vector<9xf32>
    %230 = vector.shape_cast %229 : vector<9xf32> to vector<9x1xf32>
    %231 = vector.broadcast %230 : vector<9x1xf32> to vector<9x9xf32>
    %232 = arith.subf %228, %231 : vector<9x9xf32>
    %233 = math.exp %232 : vector<9x9xf32>
    %cst_63 = arith.constant dense<0.000000e+00> : vector<9xf32>
    %234 = vector.multi_reduction <add>, %233, %cst_63 [1] : vector<9x9xf32> to vector<9xf32>
    %235 = vector.shape_cast %234 : vector<9xf32> to vector<9x1xf32>
    %cst_64 = arith.constant 1.000000e+00 : f32
    %236 = vector.broadcast %cst_64 : f32 to vector<9x1xf32>
    %237 = arith.divf %236, %235 : vector<9x1xf32>
    %cst_65 = arith.constant dense<0.000000e+00> : vector<9x8xf32>
    %238 = tpu.matmul %233, %227, %cst_65 {dimension_numbers = #tpu.dot_dimension_numbers<[1], [0], [0], [1], [0, 0, 1, 1], [], []>} : vector<9x9xf32>, vector<9x8xf32>, vector<9x8xf32> -> vector<9x8xf32>
    %239 = vector.broadcast %237 : vector<9x1xf32> to vector<9x8xf32>
    %240 = arith.mulf %238, %239 : vector<9x8xf32>
    %241 = vector.extract_strided_slice %233 {offsets = [0, 1], sizes = [1, 8], strides = [1, 1]} : vector<9x9xf32> to vector<1x8xf32>
    %242 = vector.extract_strided_slice %237 {offsets = [0, 0], sizes = [1, 1], strides = [1, 1]} : vector<9x1xf32> to vector<1x1xf32>
    %243 = vector.broadcast %242 : vector<1x1xf32> to vector<1x8xf32>
    %244 = arith.mulf %241, %243 : vector<1x8xf32>
    %245 = arith.maximumf %224, %244 : vector<1x8xf32>
    %246 = vector.extract_strided_slice %202 {offsets = [0, 16], sizes = [9, 8], strides = [1, 1]} : vector<9x32xf32> to vector<9x8xf32>
    %247 = vector.extract_strided_slice %203 {offsets = [0, 16], sizes = [9, 8], strides = [1, 1]} : vector<9x32xf32> to vector<9x8xf32>
    %248 = vector.extract_strided_slice %204 {offsets = [0, 16], sizes = [9, 8], strides = [1, 1]} : vector<9x32xf32> to vector<9x8xf32>
    %cst_66 = arith.constant dense<0.000000e+00> : vector<9x9xf32>
    %249 = tpu.matmul %246, %247, %cst_66 {dimension_numbers = #tpu.dot_dimension_numbers<[1], [1], [0], [0], [0, 0, 1, 0], [], []>} : vector<9x8xf32>, vector<9x8xf32>, vector<9x9xf32> -> vector<9x9xf32>
    %cst_67 = arith.constant dense<0xFF800000> : vector<9xf32>
    %250 = vector.multi_reduction <maximumf>, %249, %cst_67 [1] : vector<9x9xf32> to vector<9xf32>
    %251 = vector.shape_cast %250 : vector<9xf32> to vector<9x1xf32>
    %252 = vector.broadcast %251 : vector<9x1xf32> to vector<9x9xf32>
    %253 = arith.subf %249, %252 : vector<9x9xf32>
    %254 = math.exp %253 : vector<9x9xf32>
    %cst_68 = arith.constant dense<0.000000e+00> : vector<9xf32>
    %255 = vector.multi_reduction <add>, %254, %cst_68 [1] : vector<9x9xf32> to vector<9xf32>
    %256 = vector.shape_cast %255 : vector<9xf32> to vector<9x1xf32>
    %cst_69 = arith.constant 1.000000e+00 : f32
    %257 = vector.broadcast %cst_69 : f32 to vector<9x1xf32>
    %258 = arith.divf %257, %256 : vector<9x1xf32>
    %cst_70 = arith.constant dense<0.000000e+00> : vector<9x8xf32>
    %259 = tpu.matmul %254, %248, %cst_70 {dimension_numbers = #tpu.dot_dimension_numbers<[1], [0], [0], [1], [0, 0, 1, 1], [], []>} : vector<9x9xf32>, vector<9x8xf32>, vector<9x8xf32> -> vector<9x8xf32>
    %260 = vector.broadcast %258 : vector<9x1xf32> to vector<9x8xf32>
    %261 = arith.mulf %259, %260 : vector<9x8xf32>
    %262 = vector.extract_strided_slice %254 {offsets = [0, 1], sizes = [1, 8], strides = [1, 1]} : vector<9x9xf32> to vector<1x8xf32>
    %263 = vector.extract_strided_slice %258 {offsets = [0, 0], sizes = [1, 1], strides = [1, 1]} : vector<9x1xf32> to vector<1x1xf32>
    %264 = vector.broadcast %263 : vector<1x1xf32> to vector<1x8xf32>
    %265 = arith.mulf %262, %264 : vector<1x8xf32>
    %266 = arith.maximumf %245, %265 : vector<1x8xf32>
    %267 = vector.extract_strided_slice %202 {offsets = [0, 24], sizes = [9, 8], strides = [1, 1]} : vector<9x32xf32> to vector<9x8xf32>
    %268 = vector.extract_strided_slice %203 {offsets = [0, 24], sizes = [9, 8], strides = [1, 1]} : vector<9x32xf32> to vector<9x8xf32>
    %269 = vector.extract_strided_slice %204 {offsets = [0, 24], sizes = [9, 8], strides = [1, 1]} : vector<9x32xf32> to vector<9x8xf32>
    %cst_71 = arith.constant dense<0.000000e+00> : vector<9x9xf32>
    %270 = tpu.matmul %267, %268, %cst_71 {dimension_numbers = #tpu.dot_dimension_numbers<[1], [1], [0], [0], [0, 0, 1, 0], [], []>} : vector<9x8xf32>, vector<9x8xf32>, vector<9x9xf32> -> vector<9x9xf32>
    %cst_72 = arith.constant dense<0xFF800000> : vector<9xf32>
    %271 = vector.multi_reduction <maximumf>, %270, %cst_72 [1] : vector<9x9xf32> to vector<9xf32>
    %272 = vector.shape_cast %271 : vector<9xf32> to vector<9x1xf32>
    %273 = vector.broadcast %272 : vector<9x1xf32> to vector<9x9xf32>
    %274 = arith.subf %270, %273 : vector<9x9xf32>
    %275 = math.exp %274 : vector<9x9xf32>
    %cst_73 = arith.constant dense<0.000000e+00> : vector<9xf32>
    %276 = vector.multi_reduction <add>, %275, %cst_73 [1] : vector<9x9xf32> to vector<9xf32>
    %277 = vector.shape_cast %276 : vector<9xf32> to vector<9x1xf32>
    %cst_74 = arith.constant 1.000000e+00 : f32
    %278 = vector.broadcast %cst_74 : f32 to vector<9x1xf32>
    %279 = arith.divf %278, %277 : vector<9x1xf32>
    %cst_75 = arith.constant dense<0.000000e+00> : vector<9x8xf32>
    %280 = tpu.matmul %275, %269, %cst_75 {dimension_numbers = #tpu.dot_dimension_numbers<[1], [0], [0], [1], [0, 0, 1, 1], [], []>} : vector<9x9xf32>, vector<9x8xf32>, vector<9x8xf32> -> vector<9x8xf32>
    %281 = vector.broadcast %279 : vector<9x1xf32> to vector<9x8xf32>
    %282 = arith.mulf %280, %281 : vector<9x8xf32>
    %283 = vector.extract_strided_slice %275 {offsets = [0, 1], sizes = [1, 8], strides = [1, 1]} : vector<9x9xf32> to vector<1x8xf32>
    %284 = vector.extract_strided_slice %279 {offsets = [0, 0], sizes = [1, 1], strides = [1, 1]} : vector<9x1xf32> to vector<1x1xf32>
    %285 = vector.broadcast %284 : vector<1x1xf32> to vector<1x8xf32>
    %286 = arith.mulf %283, %285 : vector<1x8xf32>
    %287 = arith.maximumf %266, %286 : vector<1x8xf32>
    %288 = tpu.concatenate %220, %240, %261, %282 in 1 : vector<9x8xf32>, vector<9x8xf32>, vector<9x8xf32>, vector<9x8xf32> -> vector<9x32xf32>
    %cst_76 = arith.constant 0.000000e+00 : f32
    %289 = vector.broadcast %cst_76 : f32 to vector<1x8xf32>
    %cst_77 = arith.constant dense<0xFF800000> : vector<1xf32>
    %290 = vector.multi_reduction <maximumf>, %287, %cst_77 [1] : vector<1x8xf32> to vector<1xf32>
    %291 = vector.shape_cast %290 : vector<1xf32> to vector<1x1xf32>
    %292 = vector.broadcast %291 : vector<1x1xf32> to vector<1x8xf32>
    %293 = arith.cmpf oge, %287, %292 : vector<1x8xf32>
    %c8_i32_78 = arith.constant 8 : i32
    %294 = vector.broadcast %c8_i32_78 : i32 to vector<1x8xi32>
    %295 = arith.select %293, %32, %294 : vector<1x8xi1>, vector<1x8xi32>
    %cst_79 = arith.constant dense<2147483647> : vector<1xi32>
    %296 = vector.multi_reduction <minsi>, %295, %cst_79 [1] : vector<1x8xi32> to vector<1xi32>
    %297 = vector.shape_cast %296 : vector<1xi32> to vector<1x1xi32>
    %298 = vector.broadcast %297 : vector<1x1xi32> to vector<1x8xi32>
    %299 = arith.cmpi eq, %32, %298 : vector<1x8xi32>
    %cst_80 = arith.constant 1.000000e+00 : f32
    %300 = vector.broadcast %cst_80 : f32 to vector<1x8xf32>
    %301 = arith.select %299, %300, %289 : vector<1x8xi1>, vector<1x8xf32>
    %cst_81 = arith.constant -1.000000e+00 : f32
    %302 = vector.broadcast %cst_81 : f32 to vector<1x8xf32>
    %303 = arith.select %299, %302, %287 : vector<1x8xi1>, vector<1x8xf32>
    %cst_82 = arith.constant dense<0xFF800000> : vector<1xf32>
    %304 = vector.multi_reduction <maximumf>, %303, %cst_82 [1] : vector<1x8xf32> to vector<1xf32>
    %305 = vector.shape_cast %304 : vector<1xf32> to vector<1x1xf32>
    %306 = vector.broadcast %305 : vector<1x1xf32> to vector<1x8xf32>
    %307 = arith.cmpf oge, %303, %306 : vector<1x8xf32>
    %c8_i32_83 = arith.constant 8 : i32
    %308 = vector.broadcast %c8_i32_83 : i32 to vector<1x8xi32>
    %309 = arith.select %307, %32, %308 : vector<1x8xi1>, vector<1x8xi32>
    %cst_84 = arith.constant dense<2147483647> : vector<1xi32>
    %310 = vector.multi_reduction <minsi>, %309, %cst_84 [1] : vector<1x8xi32> to vector<1xi32>
    %311 = vector.shape_cast %310 : vector<1xi32> to vector<1x1xi32>
    %312 = vector.broadcast %311 : vector<1x1xi32> to vector<1x8xi32>
    %313 = arith.cmpi eq, %32, %312 : vector<1x8xi32>
    %cst_85 = arith.constant 1.000000e+00 : f32
    %314 = vector.broadcast %cst_85 : f32 to vector<1x8xf32>
    %315 = arith.select %313, %314, %301 : vector<1x8xi1>, vector<1x8xf32>
    %cst_86 = arith.constant -1.000000e+00 : f32
    %316 = vector.broadcast %cst_86 : f32 to vector<1x8xf32>
    %317 = arith.select %313, %316, %303 : vector<1x8xi1>, vector<1x8xf32>
    %cst_87 = arith.constant dense<0xFF800000> : vector<1xf32>
    %318 = vector.multi_reduction <maximumf>, %317, %cst_87 [1] : vector<1x8xf32> to vector<1xf32>
    %319 = vector.shape_cast %318 : vector<1xf32> to vector<1x1xf32>
    %320 = vector.broadcast %319 : vector<1x1xf32> to vector<1x8xf32>
    %321 = arith.cmpf oge, %317, %320 : vector<1x8xf32>
    %c8_i32_88 = arith.constant 8 : i32
    %322 = vector.broadcast %c8_i32_88 : i32 to vector<1x8xi32>
    %323 = arith.select %321, %32, %322 : vector<1x8xi1>, vector<1x8xi32>
    %cst_89 = arith.constant dense<2147483647> : vector<1xi32>
    %324 = vector.multi_reduction <minsi>, %323, %cst_89 [1] : vector<1x8xi32> to vector<1xi32>
    %325 = vector.shape_cast %324 : vector<1xi32> to vector<1x1xi32>
    %326 = vector.broadcast %325 : vector<1x1xi32> to vector<1x8xi32>
    %327 = arith.cmpi eq, %32, %326 : vector<1x8xi32>
    %cst_90 = arith.constant 1.000000e+00 : f32
    %328 = vector.broadcast %cst_90 : f32 to vector<1x8xf32>
    %329 = arith.select %327, %328, %315 : vector<1x8xi1>, vector<1x8xf32>
    %cst_91 = arith.constant -1.000000e+00 : f32
    %330 = vector.broadcast %cst_91 : f32 to vector<1x8xf32>
    %331 = arith.select %327, %330, %317 : vector<1x8xi1>, vector<1x8xf32>
    %cst_92 = arith.constant dense<0xFF800000> : vector<1xf32>
    %332 = vector.multi_reduction <maximumf>, %331, %cst_92 [1] : vector<1x8xf32> to vector<1xf32>
    %333 = vector.shape_cast %332 : vector<1xf32> to vector<1x1xf32>
    %334 = vector.broadcast %333 : vector<1x1xf32> to vector<1x8xf32>
    %335 = arith.cmpf oge, %331, %334 : vector<1x8xf32>
    %c8_i32_93 = arith.constant 8 : i32
    %336 = vector.broadcast %c8_i32_93 : i32 to vector<1x8xi32>
    %337 = arith.select %335, %32, %336 : vector<1x8xi1>, vector<1x8xi32>
    %cst_94 = arith.constant dense<2147483647> : vector<1xi32>
    %338 = vector.multi_reduction <minsi>, %337, %cst_94 [1] : vector<1x8xi32> to vector<1xi32>
    %339 = vector.shape_cast %338 : vector<1xi32> to vector<1x1xi32>
    %340 = vector.broadcast %339 : vector<1x1xi32> to vector<1x8xi32>
    %341 = arith.cmpi eq, %32, %340 : vector<1x8xi32>
    %cst_95 = arith.constant 1.000000e+00 : f32
    %342 = vector.broadcast %cst_95 : f32 to vector<1x8xf32>
    %343 = arith.select %341, %342, %329 : vector<1x8xi1>, vector<1x8xf32>
    %cst_96 = arith.constant dense<0.000000e+00> : vector<1x8xf32>
    %344 = tpu.matmul %343, %37, %cst_96 {dimension_numbers = #tpu.dot_dimension_numbers<[1], [0], [0], [1], [0, 0, 1, 1], [], []>} : vector<1x8xf32>, vector<8x8xf32>, vector<1x8xf32> -> vector<1x8xf32>
    %345 = arith.fptosi %344 : vector<1x8xf32> to vector<1x8xi32>
    %346 = vector.shape_cast %343 : vector<1x8xf32> to vector<1x8xf32>
    %347 = vector.broadcast %346 : vector<1x8xf32> to vector<5x8xf32>
    %cst_97 = arith.constant 5.000000e-01 : f32
    %348 = vector.broadcast %cst_97 : f32 to vector<5x8xf32>
    %349 = arith.cmpf ogt, %347, %348 : vector<5x8xf32>
    %350 = vector.shape_cast %345 : vector<1x8xi32> to vector<1x8xi32>
    %351 = vector.broadcast %350 : vector<1x8xi32> to vector<5x8xi32>
    %c1_i32_98 = arith.constant 1 : i32
    %352 = vector.broadcast %c1_i32_98 : i32 to vector<5x8xi32>
    %353 = arith.addi %351, %352 : vector<5x8xi32>
    %354 = arith.cmpi eq, %353, %38 : vector<5x8xi32>
    %355 = arith.andi %354, %349 : vector<5x8xi1>
    %cst_99 = arith.constant 1.000000e+00 : f32
    %cst_100 = arith.constant 0.000000e+00 : f32
    %356 = vector.broadcast %cst_99 : f32 to vector<5x8xf32>
    %357 = vector.broadcast %cst_100 : f32 to vector<5x8xf32>
    %358 = arith.select %355, %356, %357 : vector<5x8xi1>, vector<5x8xf32>
    %359 = tpu.concatenate %43, %358 in 1 : vector<5x1xf32>, vector<5x8xf32> -> vector<5x9xf32>
    %360 = tpu.concatenate %130, %288 in 0 : vector<9x32xf32>, vector<9x32xf32> -> vector<18x32xf32>
    %c0_101 = arith.constant 0 : index
    %c0_102 = arith.constant 0 : index
    %361 = vector.load %arg4[%c0_101, %c0_102] : memref<32x32xf32, #tpu.memory_space<vmem>>, vector<32x32xf32>
    %cst_103 = arith.constant dense<0.000000e+00> : vector<18x32xf32>
    %362 = tpu.matmul %360, %361, %cst_103 {dimension_numbers = #tpu.dot_dimension_numbers<[1], [0], [0], [1], [0, 0, 1, 1], [], []>} : vector<18x32xf32>, vector<32x32xf32>, vector<18x32xf32> -> vector<18x32xf32>
    %c0_104 = arith.constant 0 : index
    %c0_105 = arith.constant 0 : index
    %363 = vector.load %arg5[%c0_104, %c0_105] : memref<1x32xf32, #tpu.memory_space<vmem>>, vector<1x32xf32>
    %364 = vector.broadcast %363 : vector<1x32xf32> to vector<18x32xf32>
    %365 = arith.addf %362, %364 : vector<18x32xf32>
    %366 = arith.addf %365, %0 : vector<18x32xf32>
    %367 = vector.extract_strided_slice %366 {offsets = [0, 0], sizes = [9, 32], strides = [1, 1]} : vector<18x32xf32> to vector<9x32xf32>
    %cst_106 = arith.constant dense<0.000000e+00> : vector<5x32xf32>
    %368 = tpu.matmul %201, %367, %cst_106 {dimension_numbers = #tpu.dot_dimension_numbers<[1], [0], [0], [1], [0, 0, 1, 1], [], []>} : vector<5x9xf32>, vector<9x32xf32>, vector<5x32xf32> -> vector<5x32xf32>
    %369 = vector.extract_strided_slice %366 {offsets = [9, 0], sizes = [9, 32], strides = [1, 1]} : vector<18x32xf32> to vector<9x32xf32>
    %cst_107 = arith.constant dense<0.000000e+00> : vector<5x32xf32>
    %370 = tpu.matmul %359, %369, %cst_107 {dimension_numbers = #tpu.dot_dimension_numbers<[1], [0], [0], [1], [0, 0, 1, 1], [], []>} : vector<5x9xf32>, vector<9x32xf32>, vector<5x32xf32> -> vector<5x32xf32>
    %371 = tpu.concatenate %368, %370 in 0 : vector<5x32xf32>, vector<5x32xf32> -> vector<10x32xf32>
    %c0_108 = arith.constant 0 : index
    %c0_109 = arith.constant 0 : index
    %372 = vector.load %arg6[%c0_108, %c0_109] : memref<1x32xf32, #tpu.memory_space<vmem>>, vector<1x32xf32>
    %c0_110 = arith.constant 0 : index
    %c0_111 = arith.constant 0 : index
    %373 = vector.load %arg7[%c0_110, %c0_111] : memref<1x32xf32, #tpu.memory_space<vmem>>, vector<1x32xf32>
    %cst_112 = arith.constant dense<0.000000e+00> : vector<10xf32>
    %374 = vector.multi_reduction <add>, %371, %cst_112 [1] : vector<10x32xf32> to vector<10xf32>
    %375 = vector.shape_cast %374 : vector<10xf32> to vector<10x1xf32>
    %cst_113 = arith.constant 3.200000e+01 : f32
    %376 = vector.broadcast %cst_113 : f32 to vector<10x1xf32>
    %377 = arith.divf %375, %376 : vector<10x1xf32>
    %378 = vector.broadcast %377 : vector<10x1xf32> to vector<10x32xf32>
    %379 = arith.subf %371, %378 : vector<10x32xf32>
    %380 = arith.mulf %379, %379 : vector<10x32xf32>
    %cst_114 = arith.constant dense<0.000000e+00> : vector<10xf32>
    %381 = vector.multi_reduction <add>, %380, %cst_114 [1] : vector<10x32xf32> to vector<10xf32>
    %382 = vector.shape_cast %381 : vector<10xf32> to vector<10x1xf32>
    %cst_115 = arith.constant 3.200000e+01 : f32
    %383 = vector.broadcast %cst_115 : f32 to vector<10x1xf32>
    %384 = arith.divf %382, %383 : vector<10x1xf32>
    %385 = vector.broadcast %377 : vector<10x1xf32> to vector<10x32xf32>
    %386 = arith.subf %371, %385 : vector<10x32xf32>
    %cst_116 = arith.constant 9.99999974E-6 : f32
    %387 = vector.broadcast %cst_116 : f32 to vector<10x1xf32>
    %388 = arith.addf %384, %387 : vector<10x1xf32>
    %389 = math.rsqrt %388 : vector<10x1xf32>
    %390 = vector.broadcast %389 : vector<10x1xf32> to vector<10x32xf32>
    %391 = arith.mulf %386, %390 : vector<10x32xf32>
    %392 = vector.broadcast %372 : vector<1x32xf32> to vector<10x32xf32>
    %393 = arith.mulf %391, %392 : vector<10x32xf32>
    %394 = vector.broadcast %373 : vector<1x32xf32> to vector<10x32xf32>
    %395 = arith.addf %393, %394 : vector<10x32xf32>
    %c0_117 = arith.constant 0 : index
    %c0_118 = arith.constant 0 : index
    %396 = vector.load %arg8[%c0_117, %c0_118] : memref<32x64xf32, #tpu.memory_space<vmem>>, vector<32x64xf32>
    %cst_119 = arith.constant dense<0.000000e+00> : vector<10x64xf32>
    %397 = tpu.matmul %395, %396, %cst_119 {dimension_numbers = #tpu.dot_dimension_numbers<[1], [0], [0], [1], [0, 0, 1, 1], [], []>} : vector<10x32xf32>, vector<32x64xf32>, vector<10x64xf32> -> vector<10x64xf32>
    %c0_120 = arith.constant 0 : index
    %c0_121 = arith.constant 0 : index
    %398 = vector.load %arg9[%c0_120, %c0_121] : memref<1x64xf32, #tpu.memory_space<vmem>>, vector<1x64xf32>
    %399 = vector.broadcast %398 : vector<1x64xf32> to vector<10x64xf32>
    %400 = arith.addf %397, %399 : vector<10x64xf32>
    %cst_122 = arith.constant 5.000000e-01 : f32
    %401 = vector.broadcast %cst_122 : f32 to vector<10x64xf32>
    %402 = arith.mulf %401, %400 : vector<10x64xf32>
    %cst_123 = arith.constant 0.707106769 : f32
    %403 = vector.broadcast %cst_123 : f32 to vector<10x64xf32>
    %404 = arith.mulf %400, %403 : vector<10x64xf32>
    %405 = math.erf %404 : vector<10x64xf32>
    %cst_124 = arith.constant 1.000000e+00 : f32
    %406 = vector.broadcast %cst_124 : f32 to vector<10x64xf32>
    %407 = arith.addf %406, %405 : vector<10x64xf32>
    %408 = arith.mulf %402, %407 : vector<10x64xf32>
    %c0_125 = arith.constant 0 : index
    %c0_126 = arith.constant 0 : index
    %409 = vector.load %arg10[%c0_125, %c0_126] : memref<64x32xf32, #tpu.memory_space<vmem>>, vector<64x32xf32>
    %cst_127 = arith.constant dense<0.000000e+00> : vector<10x32xf32>
    %410 = tpu.matmul %408, %409, %cst_127 {dimension_numbers = #tpu.dot_dimension_numbers<[1], [0], [0], [1], [0, 0, 1, 1], [], []>} : vector<10x64xf32>, vector<64x32xf32>, vector<10x32xf32> -> vector<10x32xf32>
    %c0_128 = arith.constant 0 : index
    %c0_129 = arith.constant 0 : index
    %411 = vector.load %arg11[%c0_128, %c0_129] : memref<1x32xf32, #tpu.memory_space<vmem>>, vector<1x32xf32>
    %412 = vector.broadcast %411 : vector<1x32xf32> to vector<10x32xf32>
    %413 = arith.addf %410, %412 : vector<10x32xf32>
    %414 = arith.addf %413, %371 : vector<10x32xf32>
    %c0_130 = arith.constant 0 : index
    %c0_131 = arith.constant 0 : index
    %415 = vector.load %arg12[%c0_130, %c0_131] : memref<1x32xf32, #tpu.memory_space<vmem>>, vector<1x32xf32>
    %c0_132 = arith.constant 0 : index
    %c0_133 = arith.constant 0 : index
    %416 = vector.load %arg13[%c0_132, %c0_133] : memref<1x32xf32, #tpu.memory_space<vmem>>, vector<1x32xf32>
    %cst_134 = arith.constant dense<0.000000e+00> : vector<10xf32>
    %417 = vector.multi_reduction <add>, %414, %cst_134 [1] : vector<10x32xf32> to vector<10xf32>
    %418 = vector.shape_cast %417 : vector<10xf32> to vector<10x1xf32>
    %cst_135 = arith.constant 3.200000e+01 : f32
    %419 = vector.broadcast %cst_135 : f32 to vector<10x1xf32>
    %420 = arith.divf %418, %419 : vector<10x1xf32>
    %421 = vector.broadcast %420 : vector<10x1xf32> to vector<10x32xf32>
    %422 = arith.subf %414, %421 : vector<10x32xf32>
    %423 = arith.mulf %422, %422 : vector<10x32xf32>
    %cst_136 = arith.constant dense<0.000000e+00> : vector<10xf32>
    %424 = vector.multi_reduction <add>, %423, %cst_136 [1] : vector<10x32xf32> to vector<10xf32>
    %425 = vector.shape_cast %424 : vector<10xf32> to vector<10x1xf32>
    %cst_137 = arith.constant 3.200000e+01 : f32
    %426 = vector.broadcast %cst_137 : f32 to vector<10x1xf32>
    %427 = arith.divf %425, %426 : vector<10x1xf32>
    %428 = vector.broadcast %420 : vector<10x1xf32> to vector<10x32xf32>
    %429 = arith.subf %414, %428 : vector<10x32xf32>
    %cst_138 = arith.constant 9.99999974E-6 : f32
    %430 = vector.broadcast %cst_138 : f32 to vector<10x1xf32>
    %431 = arith.addf %427, %430 : vector<10x1xf32>
    %432 = math.rsqrt %431 : vector<10x1xf32>
    %433 = vector.broadcast %432 : vector<10x1xf32> to vector<10x32xf32>
    %434 = arith.mulf %429, %433 : vector<10x32xf32>
    %435 = vector.broadcast %415 : vector<1x32xf32> to vector<10x32xf32>
    %436 = arith.mulf %434, %435 : vector<10x32xf32>
    %437 = vector.broadcast %416 : vector<1x32xf32> to vector<10x32xf32>
    %438 = arith.addf %436, %437 : vector<10x32xf32>
    %c0_139 = arith.constant 0 : index
    %c0_140 = arith.constant 0 : index
    %439 = vector.load %arg14[%c0_139, %c0_140] : memref<10x32xf32, #tpu.memory_space<vmem>>, vector<10x32xf32>
    tpu.vector_store %arg14[%c0_139, %c0_140], %438 {strides = array<i32>} : memref<10x32xf32, #tpu.memory_space<vmem>>, vector<10x32xf32>,
    return
  }
}

</mosaic_0001>

<llo_original>
// kernel: transformer_topk_forward.3
$region0: #{transformer_topk_forward.3}
  #allocation0 [shape = 'u32[]', space=smem, size = 0x4, offset = 0x4, fixed_abs, tag = 'smem constant byte address 0x4 - core index']
  #allocation1 [shape = 'u32[144,128]{1,0:T(1,128)}', space=vmem, size = 0x12000, scoped, tag = 'internal scratch']
  %s0 = inlined_call_operand.vmem [shape: f32[18,32], index: 0, kind: input, shape index: {}]
  %s1 = inlined_call_operand.vmem [shape: f32[1,32], index: 1, kind: input, shape index: {}]
  %s2 = inlined_call_operand.vmem [shape: f32[1,32], index: 2, kind: input, shape index: {}]
  %s3 = inlined_call_operand.vmem [shape: f32[32,96], index: 3, kind: input, shape index: {}]
  %s4 = inlined_call_operand.vmem [shape: f32[32,32], index: 4, kind: input, shape index: {}]
  %s5 = inlined_call_operand.vmem [shape: f32[1,32], index: 5, kind: input, shape index: {}]
  %s6 = inlined_call_operand.vmem [shape: f32[1,32], index: 6, kind: input, shape index: {}]
  %s7 = inlined_call_operand.vmem [shape: f32[1,32], index: 7, kind: input, shape index: {}]
  %s8 = inlined_call_operand.vmem [shape: f32[32,64], index: 8, kind: input, shape index: {}]
  %s9 = inlined_call_operand.vmem [shape: f32[1,64], index: 9, kind: input, shape index: {}]
  %s10 = inlined_call_operand.vmem [shape: f32[64,32], index: 10, kind: input, shape index: {}]
  %s11 = inlined_call_operand.vmem [shape: f32[1,32], index: 11, kind: input, shape index: {}]
  %s12 = inlined_call_operand.vmem [shape: f32[1,32], index: 12, kind: input, shape index: {}]
  %s13 = inlined_call_operand.vmem [shape: f32[1,32], index: 13, kind: input, shape index: {}]
  %s14 = inlined_call_operand.vmem [shape: f32[10,32], index: 14, kind: output, shape index: {}]
  %s15 = sld [smem:[#allocation0]]
  $region66: #{transformer_topk_forward.3} parent=0
    _
  %s17 = ssub.s32 1, %s15
  %s18 = scalar_select 0, %s17, %s15
  // Predicated region
  $region2: #{transformer_topk_forward.3} parent=0 // pred_check
    _
  $region3: #{transformer_topk_forward.3} parent=0 // pred_check_branch
    %20 = sbr.rel (0) target = $region5
  $region4: #{transformer_topk_forward.3} parent=0 // pred_region
    _
  $region5: #{transformer_topk_forward.3} parent=0 // pred_fallthru
    _
  // Predicated region
  $region6: #{transformer_topk_forward.3} parent=0 // pred_check
    _
  $region7: #{transformer_topk_forward.3} parent=0 // pred_check_branch
    %22 = sbr.rel (0) target = $region9
  $region8: #{transformer_topk_forward.3} parent=0 // pred_region
    _
  $region9: #{transformer_topk_forward.3} parent=0 // pred_fallthru
    _
  // Predicated region
  $region10: #{transformer_topk_forward.3} parent=0 // pred_check
    _
  $region11: #{transformer_topk_forward.3} parent=0 // pred_check_branch
    %24 = sbr.rel (0) target = $region13
  $region12: #{transformer_topk_forward.3} parent=0 // pred_region
    _
  $region13: #{transformer_topk_forward.3} parent=0 // pred_fallthru
    _
  // Predicated region
  $region14: #{transformer_topk_forward.3} parent=0 // pred_check
    _
  $region15: #{transformer_topk_forward.3} parent=0 // pred_check_branch
    %26 = sbr.rel (0) target = $region17
  $region16: #{transformer_topk_forward.3} parent=0 // pred_region
    _
  $region17: #{transformer_topk_forward.3} parent=0 // pred_fallthru
    _
  // Predicated region
  $region18: #{transformer_topk_forward.3} parent=0 // pred_check
    _
  $region19: #{transformer_topk_forward.3} parent=0 // pred_check_branch
    %28 = sbr.rel (0) target = $region21
  $region20: #{transformer_topk_forward.3} parent=0 // pred_region
    _
  $region21: #{transformer_topk_forward.3} parent=0 // pred_fallthru
    _
  // Predicated region
  $region22: #{transformer_topk_forward.3} parent=0 // pred_check
    _
  $region23: #{transformer_topk_forward.3} parent=0 // pred_check_branch
    %30 = sbr.rel (0) target = $region25
  $region24: #{transformer_topk_forward.3} parent=0 // pred_region
    _
  $region25: #{transformer_topk_forward.3} parent=0 // pred_fallthru
    _
  // Predicated region
  $region26: #{transformer_topk_forward.3} parent=0 // pred_check
    _
  $region27: #{transformer_topk_forward.3} parent=0 // pred_check_branch
    %32 = sbr.rel (0) target = $region29
  $region28: #{transformer_topk_forward.3} parent=0 // pred_region
    _
  $region29: #{transformer_topk_forward.3} parent=0 // pred_fallthru
    _
  // Predicated region
  $region30: #{transformer_topk_forward.3} parent=0 // pred_check
    _
  $region31: #{transformer_topk_forward.3} parent=0 // pred_check_branch
    %34 = sbr.rel (0) target = $region33
  $region32: #{transformer_topk_forward.3} parent=0 // pred_region
    _
  $region33: #{transformer_topk_forward.3} parent=0 // pred_fallthru
    _
  // Predicated region
  $region34: #{transformer_topk_forward.3} parent=0 // pred_check
    _
  $region35: #{transformer_topk_forward.3} parent=0 // pred_check_branch
    %36 = sbr.rel (0) target = $region37
  $region36: #{transformer_topk_forward.3} parent=0 // pred_region
    _
  $region37: #{transformer_topk_forward.3} parent=0 // pred_fallthru
    _
  // Predicated region
  $region38: #{transformer_topk_forward.3} parent=0 // pred_check
    _
  $region39: #{transformer_topk_forward.3} parent=0 // pred_check_branch
    %38 = sbr.rel (0) target = $region41
  $region40: #{transformer_topk_forward.3} parent=0 // pred_region
    _
  $region41: #{transformer_topk_forward.3} parent=0 // pred_fallthru
    _
  // Predicated region
  $region42: #{transformer_topk_forward.3} parent=0 // pred_check
    _
  $region43: #{transformer_topk_forward.3} parent=0 // pred_check_branch
    %40 = sbr.rel (0) target = $region45
  $region44: #{transformer_topk_forward.3} parent=0 // pred_region
    _
  $region45: #{transformer_topk_forward.3} parent=0 // pred_fallthru
    _
  // Predicated region
  $region46: #{transformer_topk_forward.3} parent=0 // pred_check
    _
  $region47: #{transformer_topk_forward.3} parent=0 // pred_check_branch
    %42 = sbr.rel (0) target = $region49
  $region48: #{transformer_topk_forward.3} parent=0 // pred_region
    _
  $region49: #{transformer_topk_forward.3} parent=0 // pred_fallthru
    _
  // Predicated region
  $region50: #{transformer_topk_forward.3} parent=0 // pred_check
    _
  $region51: #{transformer_topk_forward.3} parent=0 // pred_check_branch
    %44 = sbr.rel (0) target = $region53
  $region52: #{transformer_topk_forward.3} parent=0 // pred_region
    _
  $region53: #{transformer_topk_forward.3} parent=0 // pred_fallthru
    _
  // Predicated region
  $region54: #{transformer_topk_forward.3} parent=0 // pred_check
    _
  $region55: #{transformer_topk_forward.3} parent=0 // pred_check_branch
    %46 = sbr.rel (0) target = $region57
  $region56: #{transformer_topk_forward.3} parent=0 // pred_region
    _
  $region57: #{transformer_topk_forward.3} parent=0 // pred_fallthru
    _
  %v47 = vld [vmem:[%s0] sm:$0xff]
  %v48 = vld [vmem:[%s0 + $0x8] sm:$0xff]
  %v49 = vld [vmem:[%s0 + $0x10] sm:$0x3]
  %v50 = vld [vmem:[%s1] sm:$0x1]
  %v51 = vld [vmem:[%s2] sm:$0x1]
  %vm52 = vcmask 261120
  %v53 = vsel %vm52, %v47, 0.0
  %54 = vadd.xlane.f32.xlu0 %v53
  %v55 = vpop.xlane.xlu0 %54
  %v56 = vsel %vm52, %v48, 0.0
  %57 = vadd.xlane.f32.xlu0 %v56
  %v58 = vpop.xlane.xlu0 %57
  %vm59 = vcmask 254976
  %v60 = vsel %vm59, %v49, 0.0
  %61 = vadd.xlane.f32.xlu0 %v60
  %v62 = vpop.xlane.xlu0 %61
  %v63 = vrcp.pop 32.0
  %v64 = vmul.f32 %v55, %v63
  %v65 = vmul.f32 %v58, %v63
  %v66 = vmul.f32 %v62, %v63
  %v67 = vsub.f32 %v47, %v64
  %v68 = vsub.f32 %v48, %v65
  %v69 = vsub.f32 %v49, %v66
  %v70 = vmul.f32 %v67, %v67
  %v71 = vmul.f32 %v68, %v68
  %v72 = vmul.f32 %v69, %v69
  %v73 = vsel %vm52, %v70, 0.0
  %74 = vadd.xlane.f32.xlu0 %v73
  %v75 = vpop.xlane.xlu0 %74
  %v76 = vsel %vm52, %v71, 0.0
  %77 = vadd.xlane.f32.xlu0 %v76
  %v78 = vpop.xlane.xlu0 %77
  %v79 = vsel %vm59, %v72, 0.0
  %80 = vadd.xlane.f32.xlu0 %v79
  %v81 = vpop.xlane.xlu0 %80
  %v82 = vmul.f32 %v75, %v63
  %v83 = vmul.f32 %v78, %v63
  %v84 = vmul.f32 %v81, %v63
  %v85 = vadd.f32 %v82, 1e-05
  %v86 = vadd.f32 %v83, 1e-05
  %v87 = vadd.f32 %v84, 1e-05
  %v88 = vrsqrt.pop %v85
  %v89 = vrsqrt.pop %v86
  %v90 = vrsqrt.pop %v87
  %v91 = vmul.f32 %v67, %v88
  %v92 = vmul.f32 %v68, %v89
  %v93 = vmul.f32 %v69, %v90
  %v95 = vlaneseq
  %v96 = vshrl.u32 %v95, 7
  %v97 = vsub.s32 0, %v96
  %v98 = vrot.slane %v50, %v97
  %v100 = vmul.f32 %v91, %v98
  %v101 = vmul.f32 %v92, %v98
  %v102 = vmul.f32 %v93, %v98
  %v104 = vlaneseq
  %v105 = vshrl.u32 %v104, 7
  %v106 = vsub.s32 0, %v105
  %v107 = vrot.slane %v51, %v106
  %v109 = vadd.f32 %v100, %v107
  %v110 = vadd.f32 %v101, %v107
  %v111 = vadd.f32 %v102, %v107
  %v112 = vld [vmem:[%s3] sm:$0xff]
  %v113 = vld [vmem:[%s3 + $0x8] sm:$0xff]
  %v114 = vld [vmem:[%s3 + $0x10] sm:$0xff]
  %v115 = vld [vmem:[%s3 + $0x18] sm:$0xff]
  %v117 = vsel %vm52, %v109, 0
  %v120 = vsel %vm52, %v110, 0
  %v123 = vsel %vm52, %v111, 0
  %125 = vmatprep.subr.mxu0 0.0
  %126 = vmatpush1.msra.mxu0 %v112
  %127 = vmatprep.subr.mxu0 0.0
  %128 = vmatpush1.msra.mxu0 %v113
  %129 = vmatprep.subr.mxu0 0.0
  %130 = vmatpush1.msra.mxu0 %v114
  %131 = vmatprep.subr.mxu0 0.0
  %132 = vmatpush1.msra.mxu0 %v115
  %133 = vmatprep.subr.mxu0 0.0
  %134 = vmatpush1.msra.mxu0 0.0
  %135 = vmatprep.subr.mxu0 0.0
  %136 = vmatpush1.msra.mxu0 0.0
  %137 = vmatprep.subr.mxu0 0.0
  %138 = vmatpush1.msra.mxu0 0.0
  %139 = vmatprep.subr.mxu0 0.0
  %140 = vmatpush1.msra.mxu0 0.0
  %141 = vmatprep.subr.mxu0 0.0
  %142 = vmatpush1.msra.mxu0 0.0
  %143 = vmatprep.subr.mxu0 0.0
  %144 = vmatpush1.msra.mxu0 0.0
  %145 = vmatprep.subr.mxu0 0.0
  %146 = vmatpush1.msra.mxu0 0.0
  %147 = vmatprep.subr.mxu0 0.0
  %148 = vmatpush1.msra.mxu0 0.0
  %149 = vmatprep.subr.mxu0 0.0
  %150 = vmatpush1.msra.mxu0 0.0
  %151 = vmatprep.subr.mxu0 0.0
  %152 = vmatpush1.msra.mxu0 0.0
  %153 = vmatprep.subr.mxu0 0.0
  %154 = vmatpush1.msra.mxu0 0.0
  %155 = vmatprep.subr.mxu0 0.0
  %156 = vmatpush1.msra.mxu0 0.0
  %157 = vmatprep.subr.mxu0 0.0
  %158 = vmatpush1.msra.mxu0 0.0
  %159 = vmatprep.subr.mxu0 0.0
  %160 = vmatpush1.msra.mxu0 0.0
  %161 = vmatprep.subr.mxu0 0.0
  %162 = vmatpush1.msra.mxu0 0.0
  %163 = vmatprep.subr.mxu0 0.0
  %164 = vmatpush1.msra.mxu0 0.0
  %165 = vmatprep.subr.mxu0 0.0
  %166 = vmatpush1.msra.mxu0 0.0
  %167 = vmatprep.subr.mxu0 0.0
  %168 = vmatpush1.msra.mxu0 0.0
  %169 = vmatprep.subr.mxu0 0.0
  %170 = vmatpush1.msra.mxu0 0.0
  %171 = vmatprep.subr.mxu0 0.0
  %172 = vmatpush1.msra.mxu0 0.0
  %173 = vmatprep.subr.mxu0 0.0
  %174 = vmatpush1.msra.mxu0 0.0
  %175 = vmatprep.subr.mxu0 0.0
  %176 = vmatpush1.msra.mxu0 0.0
  %177 = vmatprep.subr.mxu0 0.0
  %178 = vmatpush1.msra.mxu0 0.0
  %179 = vmatprep.subr.mxu0 0.0
  %180 = vmatpush1.msra.mxu0 0.0
  %181 = vmatprep.subr.mxu0 0.0
  %182 = vmatpush1.msra.mxu0 0.0
  %183 = vmatprep.subr.mxu0 0.0
  %184 = vmatpush1.msra.mxu0 0.0
  %185 = vmatprep.subr.mxu0 0.0
  %186 = vmatpush1.msra.mxu0 0.0
  %187 = vmatprep.subr.mxu0 0.0
  %188 = vmatpush1.msra.mxu0 0.0
  %189 = vmatprep.mubr.f32.mxu0 0.0
  %190 = vmatmul.mubr.f32.gmra.mrb[0].mxu0 %v117
  %v191 = vpop.f32.mrb[0].mxu0
  %v192 = vadd.f32 0.0, %v191
  %v193 = vpop.f32.mrb[0].mxu0
  %194 = vmatprep.mubr.f32.mxu0 0.0
  %195 = vmatmul.mubr.f32.gmra.mrb[0].mxu0 %v120
  %v196 = vpop.f32.mrb[0].mxu0
  %v197 = vadd.f32 0.0, %v196
  %v198 = vpop.f32.mrb[0].mxu0
  %199 = vmatprep.mubr.f32.mxu0 0.0
  %200 = vmatmul.mubr.f32.gmra.mrb[0].mxu0 %v123
  %v201 = vpop.f32.mrb[0].mxu0
  %v202 = vadd.f32 0.0, %v201
  %v203 = vpop.f32.mrb[0].mxu0
  %204 = vdwg.mxu0
  %v205 = vmul.f32 %v192, 0.35355338
  %v206 = vmul.f32 %v197, 0.35355338
  %v207 = vmul.f32 %v202, 0.35355338
  %v208 = vlaneseq
  %v209 = vand.u32 %v208, 127
  %v210 = vlaneseq
  %v211 = vshrl.u32 %v210, 7
  %vm212 = vcmp.lt.s32.totalorder %v211, %v209
  %v213 = vsel %vm212, 1, 0
  %v214 = vcvt.s32.f32 %v213
  %vm215 = vcmp.eq.s32.totalorder %v211, 0
  %v216 = vsel %vm215, 1, 0
  %v217 = vcvt.s32.f32 %v216
  %220 = vrot.lane.b32.xlu0 %v192, 96
  %v221 = vpop.permute.xlu0 %220
  %222 = vrot.lane.b32.xlu0 %v197, 96
  %v223 = vpop.permute.xlu0 %222
  %vm224 = vcmask 64512
  %v226 = vsel %vm224, %v205, 0
  %v229 = vsel %vm224, %v206, 0
  %v231 = vsel %vm224, %v221, 0
  %v233 = vsel %vm224, %v223, 0
  %235 = vmatprep.subr.mxu0 0.0
  %236 = vmatpush1.xpose.msra.mxu0 %v231
  %237 = vmatprep.subr.mxu0 0.0
  %238 = vmatpush1.xpose.msra.mxu0 %v233
  %239 = vmatprep.subr.mxu0 0.0
  %240 = vmatpush1.xpose.msra.mxu0 0.0
  %241 = vmatprep.subr.mxu0 0.0
  %242 = vmatpush1.xpose.msra.mxu0 0.0
  %243 = vmatprep.subr.mxu0 0.0
  %244 = vmatpush1.xpose.msra.mxu0 0.0
  %245 = vmatprep.subr.mxu0 0.0
  %246 = vmatpush1.xpose.msra.mxu0 0.0
  %247 = vmatprep.subr.mxu0 0.0
  %248 = vmatpush1.xpose.msra.mxu0 0.0
  %249 = vmatprep.subr.mxu0 0.0
  %250 = vmatpush1.xpose.msra.mxu0 0.0
  %251 = vmatprep.subr.mxu0 0.0
  %252 = vmatpush1.xpose.msra.mxu0 0.0
  %253 = vmatprep.subr.mxu0 0.0
  %254 = vmatpush1.xpose.msra.mxu0 0.0
  %255 = vmatprep.subr.mxu0 0.0
  %256 = vmatpush1.xpose.msra.mxu0 0.0
  %257 = vmatprep.subr.mxu0 0.0
  %258 = vmatpush1.xpose.msra.mxu0 0.0
  %259 = vmatprep.subr.mxu0 0.0
  %260 = vmatpush1.xpose.msra.mxu0 0.0
  %261 = vmatprep.subr.mxu0 0.0
  %262 = vmatpush1.xpose.msra.mxu0 0.0
  %263 = vmatprep.subr.mxu0 0.0
  %264 = vmatpush1.xpose.msra.mxu0 0.0
  %265 = vmatprep.subr.mxu0 0.0
  %266 = vmatpush1.xpose.msra.mxu0 0.0
  %267 = vmatprep.subr.mxu0 0.0
  %268 = vmatpush1.xpose.msra.mxu0 0.0
  %269 = vmatprep.subr.mxu0 0.0
  %270 = vmatpush1.xpose.msra.mxu0 0.0
  %271 = vmatprep.subr.mxu0 0.0
  %272 = vmatpush1.xpose.msra.mxu0 0.0
  %273 = vmatprep.subr.mxu0 0.0
  %274 = vmatpush1.xpose.msra.mxu0 0.0
  %275 = vmatprep.subr.mxu0 0.0
  %276 = vmatpush1.xpose.msra.mxu0 0.0
  %277 = vmatprep.subr.mxu0 0.0
  %278 = vmatpush1.xpose.msra.mxu0 0.0
  %279 = vmatprep.subr.mxu0 0.0
  %280 = vmatpush1.xpose.msra.mxu0 0.0
  %281 = vmatprep.subr.mxu0 0.0
  %282 = vmatpush1.xpose.msra.mxu0 0.0
  %283 = vmatprep.subr.mxu0 0.0
  %284 = vmatpush1.xpose.msra.mxu0 0.0
  %285 = vmatprep.subr.mxu0 0.0
  %286 = vmatpush1.xpose.msra.mxu0 0.0
  %287 = vmatprep.subr.mxu0 0.0
  %288 = vmatpush1.xpose.msra.mxu0 0.0
  %289 = vmatprep.subr.mxu0 0.0
  %290 = vmatpush1.xpose.msra.mxu0 0.0
  %291 = vmatprep.subr.mxu0 0.0
  %292 = vmatpush1.xpose.msra.mxu0 0.0
  %293 = vmatprep.subr.mxu0 0.0
  %294 = vmatpush1.xpose.msra.mxu0 0.0
  %295 = vmatprep.subr.mxu0 0.0
  %296 = vmatpush1.xpose.msra.mxu0 0.0
  %297 = vmatprep.subr.mxu0 0.0
  %298 = vmatpush1.xpose.msra.mxu0 0.0
  %299 = vmatprep.mubr.f32.mxu0 0.0
  %300 = vmatmul.mubr.f32.gmra.mrb[0].mxu0 %v226
  %v301 = vpop.f32.mrb[0].mxu0
  %v302 = vadd.f32 0.0, %v301
  %v303 = vpop.f32.mrb[0].mxu0
  %304 = vmatprep.mubr.f32.mxu0 0.0
  %305 = vmatmul.mubr.f32.gmra.mrb[0].mxu0 %v229
  %v306 = vpop.f32.mrb[0].mxu0
  %v307 = vadd.f32 0.0, %v306
  %v308 = vpop.f32.mrb[0].mxu0
  %309 = vdwg.mxu0
  %vm310 = vcmask 72704
  %v311 = vsel %vm310, %v302, -inf
  %312 = vmax.xlane.f32.xlu0 %v311
  %v313 = vpop.xlane.xlu0 %312
  %vm314 = vcmask 65536
  %v315 = vsel %vm314, %v307, -inf
  %316 = vmax.xlane.f32.xlu0 %v315
  %v317 = vpop.xlane.xlu0 %316
  %v318 = vsub.f32 %v302, %v313
  %v319 = vsub.f32 %v307, %v317
  %v320 = vmul.f32 %v318, 1.442695
  %v321 = vpow.pop %v320
  %v322 = vmul.f32 %v319, 1.442695
  %v323 = vpow.pop %v322
  %v324 = vsel %vm310, %v321, 0.0
  %325 = vadd.xlane.f32.xlu0 %v324
  %v326 = vpop.xlane.xlu0 %325
  %v327 = vsel %vm314, %v323, 0.0
  %328 = vadd.xlane.f32.xlu0 %v327
  %v329 = vpop.xlane.xlu0 %328
  %v330 = vrcp.pop %v326
  %v331 = vmul.f32 1.0, %v330
  %v332 = vrcp.pop %v329
  %v333 = vmul.f32 1.0, %v332
  %334 = vrot.lane.b32.xlu0 %v192, 64
  %v335 = vpop.permute.xlu0 %334
  %336 = vrot.lane.b32.xlu0 %v197, 64
  %v337 = vpop.permute.xlu0 %336
  %v340 = vsel %vm310, %v321, 0
  %v343 = vsel %vm310, %v323, 0
  %vm345 = vcmask 1040384
  %v346 = vsel %vm345, %v337, 0
  %348 = vmatprep.subr.mxu0 0.0
  %349 = vmatpush1.msra.mxu0 %v335
  %350 = vmatprep.subr.mxu0 0.0
  %351 = vmatpush1.msra.mxu0 %v346
  %352 = vmatprep.subr.mxu0 0.0
  %353 = vmatpush1.msra.mxu0 0.0
  %354 = vmatprep.subr.mxu0 0.0
  %355 = vmatpush1.msra.mxu0 0.0
  %356 = vmatprep.subr.mxu0 0.0
  %357 = vmatpush1.msra.mxu0 0.0
  %358 = vmatprep.subr.mxu0 0.0
  %359 = vmatpush1.msra.mxu0 0.0
  %360 = vmatprep.subr.mxu0 0.0
  %361 = vmatpush1.msra.mxu0 0.0
  %362 = vmatprep.subr.mxu0 0.0
  %363 = vmatpush1.msra.mxu0 0.0
  %364 = vmatprep.subr.mxu0 0.0
  %365 = vmatpush1.msra.mxu0 0.0
  %366 = vmatprep.subr.mxu0 0.0
  %367 = vmatpush1.msra.mxu0 0.0
  %368 = vmatprep.subr.mxu0 0.0
  %369 = vmatpush1.msra.mxu0 0.0
  %370 = vmatprep.subr.mxu0 0.0
  %371 = vmatpush1.msra.mxu0 0.0
  %372 = vmatprep.subr.mxu0 0.0
  %373 = vmatpush1.msra.mxu0 0.0
  %374 = vmatprep.subr.mxu0 0.0
  %375 = vmatpush1.msra.mxu0 0.0
  %376 = vmatprep.subr.mxu0 0.0
  %377 = vmatpush1.msra.mxu0 0.0
  %378 = vmatprep.subr.mxu0 0.0
  %379 = vmatpush1.msra.mxu0 0.0
  %380 = vmatprep.subr.mxu0 0.0
  %381 = vmatpush1.msra.mxu0 0.0
  %382 = vmatprep.subr.mxu0 0.0
  %383 = vmatpush1.msra.mxu0 0.0
  %384 = vmatprep.subr.mxu0 0.0
  %385 = vmatpush1.msra.mxu0 0.0
  %386 = vmatprep.subr.mxu0 0.0
  %387 = vmatpush1.msra.mxu0 0.0
  %388 = vmatprep.subr.mxu0 0.0
  %389 = vmatpush1.msra.mxu0 0.0
  %390 = vmatprep.subr.mxu0 0.0
  %391 = vmatpush1.msra.mxu0 0.0
  %392 = vmatprep.subr.mxu0 0.0
  %393 = vmatpush1.msra.mxu0 0.0
  %394 = vmatprep.subr.mxu0 0.0
  %395 = vmatpush1.msra.mxu0 0.0
  %396 = vmatprep.subr.mxu0 0.0
  %397 = vmatpush1.msra.mxu0 0.0
  %398 = vmatprep.subr.mxu0 0.0
  %399 = vmatpush1.msra.mxu0 0.0
  %400 = vmatprep.subr.mxu0 0.0
  %401 = vmatpush1.msra.mxu0 0.0
  %402 = vmatprep.subr.mxu0 0.0
  %403 = vmatpush1.msra.mxu0 0.0
  %404 = vmatprep.subr.mxu0 0.0
  %405 = vmatpush1.msra.mxu0 0.0
  %406 = vmatprep.subr.mxu0 0.0
  %407 = vmatpush1.msra.mxu0 0.0
  %408 = vmatprep.subr.mxu0 0.0
  %409 = vmatpush1.msra.mxu0 0.0
  %410 = vmatprep.subr.mxu0 0.0
  %411 = vmatpush1.msra.mxu0 0.0
  %412 = vmatprep.mubr.f32.mxu0 0.0
  %413 = vmatmul.mubr.f32.gmra.mrb[0].mxu0 %v340
  %v414 = vpop.f32.mrb[0].mxu0
  %v415 = vadd.f32 0.0, %v414
  %v416 = vpop.f32.mrb[0].mxu0
  %417 = vmatprep.mubr.f32.mxu0 0.0
  %418 = vmatmul.mubr.f32.gmra.mrb[0].mxu0 %v343
  %v419 = vpop.f32.mrb[0].mxu0
  %v420 = vadd.f32 0.0, %v419
  %v421 = vpop.f32.mrb[0].mxu0
  %422 = vdwg.mxu0
  %v423 = vmul.f32 %v415, %v331
  %v424 = vmul.f32 %v420, %v333
  %v425 = vmul.f32 %v321, %v331
  %426 = vrot.lane.b32.xlu0 %v205, 120
  %v427 = vpop.permute.xlu0 %426
  %428 = vrot.lane.b32.xlu0 %v206, 120
  %v429 = vpop.permute.xlu0 %428
  %430 = vrot.lane.b32.xlu0 %v192, 88
  %v431 = vpop.permute.xlu0 %430
  %432 = vrot.lane.b32.xlu0 %v197, 88
  %v433 = vpop.permute.xlu0 %432
  %v434 = vsel %vm224, %v427, 0
  %v436 = vsel %vm224, %v429, 0
  %v438 = vsel %vm224, %v431, 0
  %v440 = vsel %vm224, %v433, 0
  %442 = vmatprep.subr.mxu0 0.0
  %443 = vmatpush1.xpose.msra.mxu0 %v438
  %444 = vmatprep.subr.mxu0 0.0
  %445 = vmatpush1.xpose.msra.mxu0 %v440
  %446 = vmatprep.subr.mxu0 0.0
  %447 = vmatpush1.xpose.msra.mxu0 0.0
  %448 = vmatprep.subr.mxu0 0.0
  %449 = vmatpush1.xpose.msra.mxu0 0.0
  %450 = vmatprep.subr.mxu0 0.0
  %451 = vmatpush1.xpose.msra.mxu0 0.0
  %452 = vmatprep.subr.mxu0 0.0
  %453 = vmatpush1.xpose.msra.mxu0 0.0
  %454 = vmatprep.subr.mxu0 0.0
  %455 = vmatpush1.xpose.msra.mxu0 0.0
  %456 = vmatprep.subr.mxu0 0.0
  %457 = vmatpush1.xpose.msra.mxu0 0.0
  %458 = vmatprep.subr.mxu0 0.0
  %459 = vmatpush1.xpose.msra.mxu0 0.0
  %460 = vmatprep.subr.mxu0 0.0
  %461 = vmatpush1.xpose.msra.mxu0 0.0
  %462 = vmatprep.subr.mxu0 0.0
  %463 = vmatpush1.xpose.msra.mxu0 0.0
  %464 = vmatprep.subr.mxu0 0.0
  %465 = vmatpush1.xpose.msra.mxu0 0.0
  %466 = vmatprep.subr.mxu0 0.0
  %467 = vmatpush1.xpose.msra.mxu0 0.0
  %468 = vmatprep.subr.mxu0 0.0
  %469 = vmatpush1.xpose.msra.mxu0 0.0
  %470 = vmatprep.subr.mxu0 0.0
  %471 = vmatpush1.xpose.msra.mxu0 0.0
  %472 = vmatprep.subr.mxu0 0.0
  %473 = vmatpush1.xpose.msra.mxu0 0.0
  %474 = vmatprep.subr.mxu0 0.0
  %475 = vmatpush1.xpose.msra.mxu0 0.0
  %476 = vmatprep.subr.mxu0 0.0
  %477 = vmatpush1.xpose.msra.mxu0 0.0
  %478 = vmatprep.subr.mxu0 0.0
  %479 = vmatpush1.xpose.msra.mxu0 0.0
  %480 = vmatprep.subr.mxu0 0.0
  %481 = vmatpush1.xpose.msra.mxu0 0.0
  %482 = vmatprep.subr.mxu0 0.0
  %483 = vmatpush1.xpose.msra.mxu0 0.0
  %484 = vmatprep.subr.mxu0 0.0
  %485 = vmatpush1.xpose.msra.mxu0 0.0
  %486 = vmatprep.subr.mxu0 0.0
  %487 = vmatpush1.xpose.msra.mxu0 0.0
  %488 = vmatprep.subr.mxu0 0.0
  %489 = vmatpush1.xpose.msra.mxu0 0.0
  %490 = vmatprep.subr.mxu0 0.0
  %491 = vmatpush1.xpose.msra.mxu0 0.0
  %492 = vmatprep.subr.mxu0 0.0
  %493 = vmatpush1.xpose.msra.mxu0 0.0
  %494 = vmatprep.subr.mxu0 0.0
  %495 = vmatpush1.xpose.msra.mxu0 0.0
  %496 = vmatprep.subr.mxu0 0.0
  %497 = vmatpush1.xpose.msra.mxu0 0.0
  %498 = vmatprep.subr.mxu0 0.0
  %499 = vmatpush1.xpose.msra.mxu0 0.0
  %500 = vmatprep.subr.mxu0 0.0
  %501 = vmatpush1.xpose.msra.mxu0 0.0
  %502 = vmatprep.subr.mxu0 0.0
  %503 = vmatpush1.xpose.msra.mxu0 0.0
  %504 = vmatprep.subr.mxu0 0.0
  %505 = vmatpush1.xpose.msra.mxu0 0.0
  %506 = vmatprep.mubr.f32.mxu0 0.0
  %507 = vmatmul.mubr.f32.gmra.mrb[0].mxu0 %v434
  %v508 = vpop.f32.mrb[0].mxu0
  %v509 = vadd.f32 0.0, %v508
  %v510 = vpop.f32.mrb[0].mxu0
  %511 = vmatprep.mubr.f32.mxu0 0.0
  %512 = vmatmul.mubr.f32.gmra.mrb[0].mxu0 %v436
  %v513 = vpop.f32.mrb[0].mxu0
  %v514 = vadd.f32 0.0, %v513
  %v515 = vpop.f32.mrb[0].mxu0
  %516 = vdwg.mxu0
  %v517 = vsel %vm310, %v509, -inf
  %518 = vmax.xlane.f32.xlu0 %v517
  %v519 = vpop.xlane.xlu0 %518
  %v520 = vsel %vm314, %v514, -inf
  %521 = vmax.xlane.f32.xlu0 %v520
  %v522 = vpop.xlane.xlu0 %521
  %v523 = vsub.f32 %v509, %v519
  %v524 = vsub.f32 %v514, %v522
  %v525 = vmul.f32 %v523, 1.442695
  %v526 = vpow.pop %v525
  %v527 = vmul.f32 %v524, 1.442695
  %v528 = vpow.pop %v527
  %v529 = vsel %vm310, %v526, 0.0
  %530 = vadd.xlane.f32.xlu0 %v529
  %v531 = vpop.xlane.xlu0 %530
  %v532 = vsel %vm314, %v528, 0.0
  %533 = vadd.xlane.f32.xlu0 %v532
  %v534 = vpop.xlane.xlu0 %533
  %v535 = vrcp.pop %v531
  %v536 = vmul.f32 1.0, %v535
  %v537 = vrcp.pop %v534
  %v538 = vmul.f32 1.0, %v537
  %539 = vrot.lane.b32.xlu0 %v192, 56
  %v540 = vpop.permute.xlu0 %539
  %541 = vrot.lane.b32.xlu0 %v197, 56
  %v542 = vpop.permute.xlu0 %541
  %v545 = vsel %vm310, %v526, 0
  %v548 = vsel %vm310, %v528, 0
  %v550 = vsel %vm345, %v542, 0
  %552 = vmatprep.subr.mxu0 0.0
  %553 = vmatpush1.msra.mxu0 %v540
  %554 = vmatprep.subr.mxu0 0.0
  %555 = vmatpush1.msra.mxu0 %v550
  %556 = vmatprep.subr.mxu0 0.0
  %557 = vmatpush1.msra.mxu0 0.0
  %558 = vmatprep.subr.mxu0 0.0
  %559 = vmatpush1.msra.mxu0 0.0
  %560 = vmatprep.subr.mxu0 0.0
  %561 = vmatpush1.msra.mxu0 0.0
  %562 = vmatprep.subr.mxu0 0.0
  %563 = vmatpush1.msra.mxu0 0.0
  %564 = vmatprep.subr.mxu0 0.0
  %565 = vmatpush1.msra.mxu0 0.0
  %566 = vmatprep.subr.mxu0 0.0
  %567 = vmatpush1.msra.mxu0 0.0
  %568 = vmatprep.subr.mxu0 0.0
  %569 = vmatpush1.msra.mxu0 0.0
  %570 = vmatprep.subr.mxu0 0.0
  %571 = vmatpush1.msra.mxu0 0.0
  %572 = vmatprep.subr.mxu0 0.0
  %573 = vmatpush1.msra.mxu0 0.0
  %574 = vmatprep.subr.mxu0 0.0
  %575 = vmatpush1.msra.mxu0 0.0
  %576 = vmatprep.subr.mxu0 0.0
  %577 = vmatpush1.msra.mxu0 0.0
  %578 = vmatprep.subr.mxu0 0.0
  %579 = vmatpush1.msra.mxu0 0.0
  %580 = vmatprep.subr.mxu0 0.0
  %581 = vmatpush1.msra.mxu0 0.0
  %582 = vmatprep.subr.mxu0 0.0
  %583 = vmatpush1.msra.mxu0 0.0
  %584 = vmatprep.subr.mxu0 0.0
  %585 = vmatpush1.msra.mxu0 0.0
  %586 = vmatprep.subr.mxu0 0.0
  %587 = vmatpush1.msra.mxu0 0.0
  %588 = vmatprep.subr.mxu0 0.0
  %589 = vmatpush1.msra.mxu0 0.0
  %590 = vmatprep.subr.mxu0 0.0
  %591 = vmatpush1.msra.mxu0 0.0
  %592 = vmatprep.subr.mxu0 0.0
  %593 = vmatpush1.msra.mxu0 0.0
  %594 = vmatprep.subr.mxu0 0.0
  %595 = vmatpush1.msra.mxu0 0.0
  %596 = vmatprep.subr.mxu0 0.0
  %597 = vmatpush1.msra.mxu0 0.0
  %598 = vmatprep.subr.mxu0 0.0
  %599 = vmatpush1.msra.mxu0 0.0
  %600 = vmatprep.subr.mxu0 0.0
  %601 = vmatpush1.msra.mxu0 0.0
  %602 = vmatprep.subr.mxu0 0.0
  %603 = vmatpush1.msra.mxu0 0.0
  %604 = vmatprep.subr.mxu0 0.0
  %605 = vmatpush1.msra.mxu0 0.0
  %606 = vmatprep.subr.mxu0 0.0
  %607 = vmatpush1.msra.mxu0 0.0
  %608 = vmatprep.subr.mxu0 0.0
  %609 = vmatpush1.msra.mxu0 0.0
  %610 = vmatprep.subr.mxu0 0.0
  %611 = vmatpush1.msra.mxu0 0.0
  %612 = vmatprep.subr.mxu0 0.0
  %613 = vmatpush1.msra.mxu0 0.0
  %614 = vmatprep.subr.mxu0 0.0
  %615 = vmatpush1.msra.mxu0 0.0
  %616 = vmatprep.mubr.f32.mxu0 0.0
  %617 = vmatmul.mubr.f32.gmra.mrb[0].mxu0 %v545
  %v618 = vpop.f32.mrb[0].mxu0
  %v619 = vadd.f32 0.0, %v618
  %v620 = vpop.f32.mrb[0].mxu0
  %621 = vmatprep.mubr.f32.mxu0 0.0
  %622 = vmatmul.mubr.f32.gmra.mrb[0].mxu0 %v548
  %v623 = vpop.f32.mrb[0].mxu0
  %v624 = vadd.f32 0.0, %v623
  %v625 = vpop.f32.mrb[0].mxu0
  %626 = vdwg.mxu0
  %v627 = vmul.f32 %v619, %v536
  %v628 = vmul.f32 %v624, %v538
  %v629 = vmul.f32 %v526, %v536
  %v630 = vmax.f32 %v425, %v629
  %631 = vrot.lane.b32.xlu0 %v205, 112
  %v632 = vpop.permute.xlu0 %631
  %633 = vrot.lane.b32.xlu0 %v206, 112
  %v634 = vpop.permute.xlu0 %633
  %635 = vrot.lane.b32.xlu0 %v192, 80
  %v636 = vpop.permute.xlu0 %635
  %637 = vrot.lane.b32.xlu0 %v197, 80
  %v638 = vpop.permute.xlu0 %637
  %v639 = vsel %vm224, %v632, 0
  %v641 = vsel %vm224, %v634, 0
  %v643 = vsel %vm224, %v636, 0
  %v645 = vsel %vm224, %v638, 0
  %647 = vmatprep.subr.mxu0 0.0
  %648 = vmatpush1.xpose.msra.mxu0 %v643
  %649 = vmatprep.subr.mxu0 0.0
  %650 = vmatpush1.xpose.msra.mxu0 %v645
  %651 = vmatprep.subr.mxu0 0.0
  %652 = vmatpush1.xpose.msra.mxu0 0.0
  %653 = vmatprep.subr.mxu0 0.0
  %654 = vmatpush1.xpose.msra.mxu0 0.0
  %655 = vmatprep.subr.mxu0 0.0
  %656 = vmatpush1.xpose.msra.mxu0 0.0
  %657 = vmatprep.subr.mxu0 0.0
  %658 = vmatpush1.xpose.msra.mxu0 0.0
  %659 = vmatprep.subr.mxu0 0.0
  %660 = vmatpush1.xpose.msra.mxu0 0.0
  %661 = vmatprep.subr.mxu0 0.0
  %662 = vmatpush1.xpose.msra.mxu0 0.0
  %663 = vmatprep.subr.mxu0 0.0
  %664 = vmatpush1.xpose.msra.mxu0 0.0
  %665 = vmatprep.subr.mxu0 0.0
  %666 = vmatpush1.xpose.msra.mxu0 0.0
  %667 = vmatprep.subr.mxu0 0.0
  %668 = vmatpush1.xpose.msra.mxu0 0.0
  %669 = vmatprep.subr.mxu0 0.0
  %670 = vmatpush1.xpose.msra.mxu0 0.0
  %671 = vmatprep.subr.mxu0 0.0
  %672 = vmatpush1.xpose.msra.mxu0 0.0
  %673 = vmatprep.subr.mxu0 0.0
  %674 = vmatpush1.xpose.msra.mxu0 0.0
  %675 = vmatprep.subr.mxu0 0.0
  %676 = vmatpush1.xpose.msra.mxu0 0.0
  %677 = vmatprep.subr.mxu0 0.0
  %678 = vmatpush1.xpose.msra.mxu0 0.0
  %679 = vmatprep.subr.mxu0 0.0
  %680 = vmatpush1.xpose.msra.mxu0 0.0
  %681 = vmatprep.subr.mxu0 0.0
  %682 = vmatpush1.xpose.msra.mxu0 0.0
  %683 = vmatprep.subr.mxu0 0.0
  %684 = vmatpush1.xpose.msra.mxu0 0.0
  %685 = vmatprep.subr.mxu0 0.0
  %686 = vmatpush1.xpose.msra.mxu0 0.0
  %687 = vmatprep.subr.mxu0 0.0
  %688 = vmatpush1.xpose.msra.mxu0 0.0
  %689 = vmatprep.subr.mxu0 0.0
  %690 = vmatpush1.xpose.msra.mxu0 0.0
  %691 = vmatprep.subr.mxu0 0.0
  %692 = vmatpush1.xpose.msra.mxu0 0.0
  %693 = vmatprep.subr.mxu0 0.0
  %694 = vmatpush1.xpose.msra.mxu0 0.0
  %695 = vmatprep.subr.mxu0 0.0
  %696 = vmatpush1.xpose.msra.mxu0 0.0
  %697 = vmatprep.subr.mxu0 0.0
  %698 = vmatpush1.xpose.msra.mxu0 0.0
  %699 = vmatprep.subr.mxu0 0.0
  %700 = vmatpush1.xpose.msra.mxu0 0.0
  %701 = vmatprep.subr.mxu0 0.0
  %702 = vmatpush1.xpose.msra.mxu0 0.0
  %703 = vmatprep.subr.mxu0 0.0
  %704 = vmatpush1.xpose.msra.mxu0 0.0
  %705 = vmatprep.subr.mxu0 0.0
  %706 = vmatpush1.xpose.msra.mxu0 0.0
  %707 = vmatprep.subr.mxu0 0.0
  %708 = vmatpush1.xpose.msra.mxu0 0.0
  %709 = vmatprep.subr.mxu0 0.0
  %710 = vmatpush1.xpose.msra.mxu0 0.0
  %711 = vmatprep.mubr.f32.mxu0 0.0
  %712 = vmatmul.mubr.f32.gmra.mrb[0].mxu0 %v639
  %v713 = vpop.f32.mrb[0].mxu0
  %v714 = vadd.f32 0.0, %v713
  %v715 = vpop.f32.mrb[0].mxu0
  %716 = vmatprep.mubr.f32.mxu0 0.0
  %717 = vmatmul.mubr.f32.gmra.mrb[0].mxu0 %v641
  %v718 = vpop.f32.mrb[0].mxu0
  %v719 = vadd.f32 0.0, %v718
  %v720 = vpop.f32.mrb[0].mxu0
  %721 = vdwg.mxu0
  %v722 = vsel %vm310, %v714, -inf
  %723 = vmax.xlane.f32.xlu0 %v722
  %v724 = vpop.xlane.xlu0 %723
  %v725 = vsel %vm314, %v719, -inf
  %726 = vmax.xlane.f32.xlu0 %v725
  %v727 = vpop.xlane.xlu0 %726
  %v728 = vsub.f32 %v714, %v724
  %v729 = vsub.f32 %v719, %v727
  %v730 = vmul.f32 %v728, 1.442695
  %v731 = vpow.pop %v730
  %v732 = vmul.f32 %v729, 1.442695
  %v733 = vpow.pop %v732
  %v734 = vsel %vm310, %v731, 0.0
  %735 = vadd.xlane.f32.xlu0 %v734
  %v736 = vpop.xlane.xlu0 %735
  %v737 = vsel %vm314, %v733, 0.0
  %738 = vadd.xlane.f32.xlu0 %v737
  %v739 = vpop.xlane.xlu0 %738
  %v740 = vrcp.pop %v736
  %v741 = vmul.f32 1.0, %v740
  %v742 = vrcp.pop %v739
  %v743 = vmul.f32 1.0, %v742
  %744 = vrot.lane.b32.xlu0 %v192, 48
  %v745 = vpop.permute.xlu0 %744
  %746 = vrot.lane.b32.xlu0 %v197, 48
  %v747 = vpop.permute.xlu0 %746
  %v750 = vsel %vm310, %v731, 0
  %v753 = vsel %vm310, %v733, 0
  %v755 = vsel %vm345, %v747, 0
  %757 = vmatprep.subr.mxu0 0.0
  %758 = vmatpush1.msra.mxu0 %v745
  %759 = vmatprep.subr.mxu0 0.0
  %760 = vmatpush1.msra.mxu0 %v755
  %761 = vmatprep.subr.mxu0 0.0
  %762 = vmatpush1.msra.mxu0 0.0
  %763 = vmatprep.subr.mxu0 0.0
  %764 = vmatpush1.msra.mxu0 0.0
  %765 = vmatprep.subr.mxu0 0.0
  %766 = vmatpush1.msra.mxu0 0.0
  %767 = vmatprep.subr.mxu0 0.0
  %768 = vmatpush1.msra.mxu0 0.0
  %769 = vmatprep.subr.mxu0 0.0
  %770 = vmatpush1.msra.mxu0 0.0
  %771 = vmatprep.subr.mxu0 0.0
  %772 = vmatpush1.msra.mxu0 0.0
  %773 = vmatprep.subr.mxu0 0.0
  %774 = vmatpush1.msra.mxu0 0.0
  %775 = vmatprep.subr.mxu0 0.0
  %776 = vmatpush1.msra.mxu0 0.0
  %777 = vmatprep.subr.mxu0 0.0
  %778 = vmatpush1.msra.mxu0 0.0
  %779 = vmatprep.subr.mxu0 0.0
  %780 = vmatpush1.msra.mxu0 0.0
  %781 = vmatprep.subr.mxu0 0.0
  %782 = vmatpush1.msra.mxu0 0.0
  %783 = vmatprep.subr.mxu0 0.0
  %784 = vmatpush1.msra.mxu0 0.0
  %785 = vmatprep.subr.mxu0 0.0
  %786 = vmatpush1.msra.mxu0 0.0
  %787 = vmatprep.subr.mxu0 0.0
  %788 = vmatpush1.msra.mxu0 0.0
  %789 = vmatprep.subr.mxu0 0.0
  %790 = vmatpush1.msra.mxu0 0.0
  %791 = vmatprep.subr.mxu0 0.0
  %792 = vmatpush1.msra.mxu0 0.0
  %793 = vmatprep.subr.mxu0 0.0
  %794 = vmatpush1.msra.mxu0 0.0
  %795 = vmatprep.subr.mxu0 0.0
  %796 = vmatpush1.msra.mxu0 0.0
  %797 = vmatprep.subr.mxu0 0.0
  %798 = vmatpush1.msra.mxu0 0.0
  %799 = vmatprep.subr.mxu0 0.0
  %800 = vmatpush1.msra.mxu0 0.0
  %801 = vmatprep.subr.mxu0 0.0
  %802 = vmatpush1.msra.mxu0 0.0
  %803 = vmatprep.subr.mxu0 0.0
  %804 = vmatpush1.msra.mxu0 0.0
  %805 = vmatprep.subr.mxu0 0.0
  %806 = vmatpush1.msra.mxu0 0.0
  %807 = vmatprep.subr.mxu0 0.0
  %808 = vmatpush1.msra.mxu0 0.0
  %809 = vmatprep.subr.mxu0 0.0
  %810 = vmatpush1.msra.mxu0 0.0
  %811 = vmatprep.subr.mxu0 0.0
  %812 = vmatpush1.msra.mxu0 0.0
  %813 = vmatprep.subr.mxu0 0.0
  %814 = vmatpush1.msra.mxu0 0.0
  %815 = vmatprep.subr.mxu0 0.0
  %816 = vmatpush1.msra.mxu0 0.0
  %817 = vmatprep.subr.mxu0 0.0
  %818 = vmatpush1.msra.mxu0 0.0
  %819 = vmatprep.subr.mxu0 0.0
  %820 = vmatpush1.msra.mxu0 0.0
  %821 = vmatprep.mubr.f32.mxu0 0.0
  %822 = vmatmul.mubr.f32.gmra.mrb[0].mxu0 %v750
  %v823 = vpop.f32.mrb[0].mxu0
  %v824 = vadd.f32 0.0, %v823
  %v825 = vpop.f32.mrb[0].mxu0
  %826 = vmatprep.mubr.f32.mxu0 0.0
  %827 = vmatmul.mubr.f32.gmra.mrb[0].mxu0 %v753
  %v828 = vpop.f32.mrb[0].mxu0
  %v829 = vadd.f32 0.0, %v828
  %v830 = vpop.f32.mrb[0].mxu0
  %831 = vdwg.mxu0
  %v832 = vmul.f32 %v824, %v741
  %v833 = vmul.f32 %v829, %v743
  %v834 = vmul.f32 %v731, %v741
  %v835 = vmax.f32 %v630, %v834
  %836 = vrot.lane.b32.xlu0 %v205, 104
  %v837 = vpop.permute.xlu0 %836
  %838 = vrot.lane.b32.xlu0 %v206, 104
  %v839 = vpop.permute.xlu0 %838
  %840 = vrot.lane.b32.xlu0 %v192, 72
  %v841 = vpop.permute.xlu0 %840
  %842 = vrot.lane.b32.xlu0 %v197, 72
  %v843 = vpop.permute.xlu0 %842
  %v844 = vsel %vm224, %v837, 0
  %v846 = vsel %vm224, %v839, 0
  %v848 = vsel %vm224, %v841, 0
  %v850 = vsel %vm224, %v843, 0
  %852 = vmatprep.subr.mxu0 0.0
  %853 = vmatpush1.xpose.msra.mxu0 %v848
  %854 = vmatprep.subr.mxu0 0.0
  %855 = vmatpush1.xpose.msra.mxu0 %v850
  %856 = vmatprep.subr.mxu0 0.0
  %857 = vmatpush1.xpose.msra.mxu0 0.0
  %858 = vmatprep.subr.mxu0 0.0
  %859 = vmatpush1.xpose.msra.mxu0 0.0
  %860 = vmatprep.subr.mxu0 0.0
  %861 = vmatpush1.xpose.msra.mxu0 0.0
  %862 = vmatprep.subr.mxu0 0.0
  %863 = vmatpush1.xpose.msra.mxu0 0.0
  %864 = vmatprep.subr.mxu0 0.0
  %865 = vmatpush1.xpose.msra.mxu0 0.0
  %866 = vmatprep.subr.mxu0 0.0
  %867 = vmatpush1.xpose.msra.mxu0 0.0
  %868 = vmatprep.subr.mxu0 0.0
  %869 = vmatpush1.xpose.msra.mxu0 0.0
  %870 = vmatprep.subr.mxu0 0.0
  %871 = vmatpush1.xpose.msra.mxu0 0.0
  %872 = vmatprep.subr.mxu0 0.0
  %873 = vmatpush1.xpose.msra.mxu0 0.0
  %874 = vmatprep.subr.mxu0 0.0
  %875 = vmatpush1.xpose.msra.mxu0 0.0
  %876 = vmatprep.subr.mxu0 0.0
  %877 = vmatpush1.xpose.msra.mxu0 0.0
  %878 = vmatprep.subr.mxu0 0.0
  %879 = vmatpush1.xpose.msra.mxu0 0.0
  %880 = vmatprep.subr.mxu0 0.0
  %881 = vmatpush1.xpose.msra.mxu0 0.0
  %882 = vmatprep.subr.mxu0 0.0
  %883 = vmatpush1.xpose.msra.mxu0 0.0
  %884 = vmatprep.subr.mxu0 0.0
  %885 = vmatpush1.xpose.msra.mxu0 0.0
  %886 = vmatprep.subr.mxu0 0.0
  %887 = vmatpush1.xpose.msra.mxu0 0.0
  %888 = vmatprep.subr.mxu0 0.0
  %889 = vmatpush1.xpose.msra.mxu0 0.0
  %890 = vmatprep.subr.mxu0 0.0
  %891 = vmatpush1.xpose.msra.mxu0 0.0
  %892 = vmatprep.subr.mxu0 0.0
  %893 = vmatpush1.xpose.msra.mxu0 0.0
  %894 = vmatprep.subr.mxu0 0.0
  %895 = vmatpush1.xpose.msra.mxu0 0.0
  %896 = vmatprep.subr.mxu0 0.0
  %897 = vmatpush1.xpose.msra.mxu0 0.0
  %898 = vmatprep.subr.mxu0 0.0
  %899 = vmatpush1.xpose.msra.mxu0 0.0
  %900 = vmatprep.subr.mxu0 0.0
  %901 = vmatpush1.xpose.msra.mxu0 0.0
  %902 = vmatprep.subr.mxu0 0.0
  %903 = vmatpush1.xpose.msra.mxu0 0.0
  %904 = vmatprep.subr.mxu0 0.0
  %905 = vmatpush1.xpose.msra.mxu0 0.0
  %906 = vmatprep.subr.mxu0 0.0
  %907 = vmatpush1.xpose.msra.mxu0 0.0
  %908 = vmatprep.subr.mxu0 0.0
  %909 = vmatpush1.xpose.msra.mxu0 0.0
  %910 = vmatprep.subr.mxu0 0.0
  %911 = vmatpush1.xpose.msra.mxu0 0.0
  %912 = vmatprep.subr.mxu0 0.0
  %913 = vmatpush1.xpose.msra.mxu0 0.0
  %914 = vmatprep.subr.mxu0 0.0
  %915 = vmatpush1.xpose.msra.mxu0 0.0
  %916 = vmatprep.mubr.f32.mxu0 0.0
  %917 = vmatmul.mubr.f32.gmra.mrb[0].mxu0 %v844
  %v918 = vpop.f32.mrb[0].mxu0
  %v919 = vadd.f32 0.0, %v918
  %v920 = vpop.f32.mrb[0].mxu0
  %921 = vmatprep.mubr.f32.mxu0 0.0
  %922 = vmatmul.mubr.f32.gmra.mrb[0].mxu0 %v846
  %v923 = vpop.f32.mrb[0].mxu0
  %v924 = vadd.f32 0.0, %v923
  %v925 = vpop.f32.mrb[0].mxu0
  %926 = vdwg.mxu0
  %v927 = vsel %vm310, %v919, -inf
  %928 = vmax.xlane.f32.xlu0 %v927
  %v929 = vpop.xlane.xlu0 %928
  %v930 = vsel %vm314, %v924, -inf
  %931 = vmax.xlane.f32.xlu0 %v930
  %v932 = vpop.xlane.xlu0 %931
  %v933 = vsub.f32 %v919, %v929
  %v934 = vsub.f32 %v924, %v932
  %v935 = vmul.f32 %v933, 1.442695
  %v936 = vpow.pop %v935
  %v937 = vmul.f32 %v934, 1.442695
  %v938 = vpow.pop %v937
  %v939 = vsel %vm310, %v936, 0.0
  %940 = vadd.xlane.f32.xlu0 %v939
  %v941 = vpop.xlane.xlu0 %940
  %v942 = vsel %vm314, %v938, 0.0
  %943 = vadd.xlane.f32.xlu0 %v942
  %v944 = vpop.xlane.xlu0 %943
  %v945 = vrcp.pop %v941
  %v946 = vmul.f32 1.0, %v945
  %v947 = vrcp.pop %v944
  %v948 = vmul.f32 1.0, %v947
  %949 = vrot.lane.b32.xlu0 %v192, 40
  %v950 = vpop.permute.xlu0 %949
  %951 = vrot.lane.b32.xlu0 %v197, 40
  %v952 = vpop.permute.xlu0 %951
  %v955 = vsel %vm310, %v936, 0
  %v958 = vsel %vm310, %v938, 0
  %v960 = vsel %vm345, %v952, 0
  %962 = vmatprep.subr.mxu0 0.0
  %963 = vmatpush1.msra.mxu0 %v950
  %964 = vmatprep.subr.mxu0 0.0
  %965 = vmatpush1.msra.mxu0 %v960
  %966 = vmatprep.subr.mxu0 0.0
  %967 = vmatpush1.msra.mxu0 0.0
  %968 = vmatprep.subr.mxu0 0.0
  %969 = vmatpush1.msra.mxu0 0.0
  %970 = vmatprep.subr.mxu0 0.0
  %971 = vmatpush1.msra.mxu0 0.0
  %972 = vmatprep.subr.mxu0 0.0
  %973 = vmatpush1.msra.mxu0 0.0
  %974 = vmatprep.subr.mxu0 0.0
  %975 = vmatpush1.msra.mxu0 0.0
  %976 = vmatprep.subr.mxu0 0.0
  %977 = vmatpush1.msra.mxu0 0.0
  %978 = vmatprep.subr.mxu0 0.0
  %979 = vmatpush1.msra.mxu0 0.0
  %980 = vmatprep.subr.mxu0 0.0
  %981 = vmatpush1.msra.mxu0 0.0
  %982 = vmatprep.subr.mxu0 0.0
  %983 = vmatpush1.msra.mxu0 0.0
  %984 = vmatprep.subr.mxu0 0.0
  %985 = vmatpush1.msra.mxu0 0.0
  %986 = vmatprep.subr.mxu0 0.0
  %987 = vmatpush1.msra.mxu0 0.0
  %988 = vmatprep.subr.mxu0 0.0
  %989 = vmatpush1.msra.mxu0 0.0
  %990 = vmatprep.subr.mxu0 0.0
  %991 = vmatpush1.msra.mxu0 0.0
  %992 = vmatprep.subr.mxu0 0.0
  %993 = vmatpush1.msra.mxu0 0.0
  %994 = vmatprep.subr.mxu0 0.0
  %995 = vmatpush1.msra.mxu0 0.0
  %996 = vmatprep.subr.mxu0 0.0
  %997 = vmatpush1.msra.mxu0 0.0
  %998 = vmatprep.subr.mxu0 0.0
  %999 = vmatpush1.msra.mxu0 0.0
  %1000 = vmatprep.subr.mxu0 0.0
  %1001 = vmatpush1.msra.mxu0 0.0
  %1002 = vmatprep.subr.mxu0 0.0
  %1003 = vmatpush1.msra.mxu0 0.0
  %1004 = vmatprep.subr.mxu0 0.0
  %1005 = vmatpush1.msra.mxu0 0.0
  %1006 = vmatprep.subr.mxu0 0.0
  %1007 = vmatpush1.msra.mxu0 0.0
  %1008 = vmatprep.subr.mxu0 0.0
  %1009 = vmatpush1.msra.mxu0 0.0
  %1010 = vmatprep.subr.mxu0 0.0
  %1011 = vmatpush1.msra.mxu0 0.0
  %1012 = vmatprep.subr.mxu0 0.0
  %1013 = vmatpush1.msra.mxu0 0.0
  %1014 = vmatprep.subr.mxu0 0.0
  %1015 = vmatpush1.msra.mxu0 0.0
  %1016 = vmatprep.subr.mxu0 0.0
  %1017 = vmatpush1.msra.mxu0 0.0
  %1018 = vmatprep.subr.mxu0 0.0
  %1019 = vmatpush1.msra.mxu0 0.0
  %1020 = vmatprep.subr.mxu0 0.0
  %1021 = vmatpush1.msra.mxu0 0.0
  %1022 = vmatprep.subr.mxu0 0.0
  %1023 = vmatpush1.msra.mxu0 0.0
  %1024 = vmatprep.subr.mxu0 0.0
  %1025 = vmatpush1.msra.mxu0 0.0
  %1026 = vmatprep.mubr.f32.mxu0 0.0
  %1027 = vmatmul.mubr.f32.gmra.mrb[0].mxu0 %v955
  %v1028 = vpop.f32.mrb[0].mxu0
  %v1029 = vadd.f32 0.0, %v1028
  %v1030 = vpop.f32.mrb[0].mxu0
  %1031 = vmatprep.mubr.f32.mxu0 0.0
  %1032 = vmatmul.mubr.f32.gmra.mrb[0].mxu0 %v958
  %v1033 = vpop.f32.mrb[0].mxu0
  %v1034 = vadd.f32 0.0, %v1033
  %v1035 = vpop.f32.mrb[0].mxu0
  %1036 = vdwg.mxu0
  %v1037 = vmul.f32 %v1029, %v946
  %v1038 = vmul.f32 %v1034, %v948
  %v1039 = vmul.f32 %v936, %v946
  %v1040 = vmax.f32 %v835, %v1039
  %1043 = vrot.lane.b32.xlu0 %v627, 8
  %v1044 = vpop.permute.xlu0 %1043
  %1045 = vrot.lane.b32.xlu0 %v628, 8
  %v1046 = vpop.permute.xlu0 %1045
  %1051 = vrot.lane.b32.xlu0 %v832, 16
  %v1052 = vpop.permute.xlu0 %1051
  %1053 = vrot.lane.b32.xlu0 %v833, 16
  %v1054 = vpop.permute.xlu0 %1053
  %1059 = vrot.lane.b32.xlu0 %v1037, 24
  %v1060 = vpop.permute.xlu0 %1059
  %1061 = vrot.lane.b32.xlu0 %v1038, 24
  %v1062 = vpop.permute.xlu0 %1061
  %v1065 = vsel %vm224, %v423, %v1044
  %v1066 = vsel %vm224, %v424, %v1046
  %vm1067 = vcmask 130048
  %v1068 = vsel %vm1067, %v1065, %v1052
  %v1069 = vsel %vm1067, %v1066, %v1054
  %vm1070 = vcmask 195584
  %v1071 = vsel %vm1070, %v1068, %v1060
  %v1072 = vsel %vm1070, %v1069, %v1062
  %vm1073 = vcmask 65544
  %v1074 = vsel %vm1073, %v1040, -inf
  %1075 = vmax.xlane.f32.xlu0 %v1074
  %v1076 = vpop.xlane.xlu0 %1075
  %vm1077 = vcmp.ge.f32.partialorder %v1040, %v1076
  %1078 = vrot.lane.b32.xlu0 %v209, 1
  %v1079 = vpop.permute.xlu0 %1078
  %v1080 = vsel %vm1077, %v1079, 8
  %v1081 = vsel %vm1073, %v1080, 2147483647
  %v1082 = vand.u32 %v1081, 65535
  %v1083 = vshra.s32 %v1081, 16
  %v1084 = vcvt.s32.f32 %v1082
  %v1085 = vcvt.s32.f32 %v1083
  %1086 = vmin.xlane.f32.xlu0 %v1085
  %v1087 = vpop.xlane.xlu0 %1086
  %vm1088 = vcmp.eq.f32.partialorder %v1085, %v1087
  %v1089 = vsel %vm1088, %v1084, inf
  %1090 = vmin.xlane.f32.xlu0 %v1089
  %v1091 = vpop.xlane.xlu0 %1090
  %v1092 = vcvt.f32.s32 %v1091
  %v1093 = vcvt.f32.s32 %v1087
  %v1094 = vshll.u32 %v1093, 16
  %v1095 = vadd.s32 %v1094, %v1092
  %vm1096 = vcmp.eq.s32.totalorder %v209, %v1095
  %v1097 = vsel %vm1096, 1.0, 0.0
  %1099 = vrot.lane.b32.xlu0 %v1040, 127
  %v1100 = vpop.permute.xlu0 %1099
  %v1102 = vsel %vm1096, -1.0, %v1100
  %vm1103 = vcmask 57344
  %v1104 = vsel %vm1103, %v1102, -inf
  %1105 = vmax.xlane.f32.xlu0 %v1104
  %v1106 = vpop.xlane.xlu0 %1105
  %vm1107 = vcmp.ge.f32.partialorder %v1102, %v1106
  %v1108 = vsel %vm1107, %v209, 8
  %v1109 = vsel %vm1103, %v1108, 2147483647
  %v1110 = vand.u32 %v1109, 65535
  %v1111 = vshra.s32 %v1109, 16
  %v1112 = vcvt.s32.f32 %v1110
  %v1113 = vcvt.s32.f32 %v1111
  %1114 = vmin.xlane.f32.xlu0 %v1113
  %v1115 = vpop.xlane.xlu0 %1114
  %vm1116 = vcmp.eq.f32.partialorder %v1113, %v1115
  %v1117 = vsel %vm1116, %v1112, inf
  %1118 = vmin.xlane.f32.xlu0 %v1117
  %v1119 = vpop.xlane.xlu0 %1118
  %v1120 = vcvt.f32.s32 %v1119
  %v1121 = vcvt.f32.s32 %v1115
  %v1122 = vshll.u32 %v1121, 16
  %v1123 = vadd.s32 %v1122, %v1120
  %vm1124 = vcmp.eq.s32.totalorder %v209, %v1123
  %v1125 = vsel %vm1124, 1.0, %v1097
  %v1126 = vsel %vm1124, -1.0, %v1102
  %v1127 = vsel %vm1103, %v1126, -inf
  %1128 = vmax.xlane.f32.xlu0 %v1127
  %v1129 = vpop.xlane.xlu0 %1128
  %vm1130 = vcmp.ge.f32.partialorder %v1126, %v1129
  %v1131 = vsel %vm1130, %v209, 8
  %v1132 = vsel %vm1103, %v1131, 2147483647
  %v1133 = vand.u32 %v1132, 65535
  %v1134 = vshra.s32 %v1132, 16
  %v1135 = vcvt.s32.f32 %v1133
  %v1136 = vcvt.s32.f32 %v1134
  %1137 = vmin.xlane.f32.xlu0 %v1136
  %v1138 = vpop.xlane.xlu0 %1137
  %vm1139 = vcmp.eq.f32.partialorder %v1136, %v1138
  %v1140 = vsel %vm1139, %v1135, inf
  %1141 = vmin.xlane.f32.xlu0 %v1140
  %v1142 = vpop.xlane.xlu0 %1141
  %v1143 = vcvt.f32.s32 %v1142
  %v1144 = vcvt.f32.s32 %v1138
  %v1145 = vshll.u32 %v1144, 16
  %v1146 = vadd.s32 %v1145, %v1143
  %vm1147 = vcmp.eq.s32.totalorder %v209, %v1146
  %v1148 = vsel %vm1147, 1.0, %v1125
  %v1149 = vsel %vm1147, -1.0, %v1126
  %v1150 = vsel %vm1103, %v1149, -inf
  %1151 = vmax.xlane.f32.xlu0 %v1150
  %v1152 = vpop.xlane.xlu0 %1151
  %vm1153 = vcmp.ge.f32.partialorder %v1149, %v1152
  %v1154 = vsel %vm1153, %v209, 8
  %v1155 = vsel %vm1103, %v1154, 2147483647
  %v1156 = vand.u32 %v1155, 65535
  %v1157 = vshra.s32 %v1155, 16
  %v1158 = vcvt.s32.f32 %v1156
  %v1159 = vcvt.s32.f32 %v1157
  %1160 = vmin.xlane.f32.xlu0 %v1159
  %v1161 = vpop.xlane.xlu0 %1160
  %vm1162 = vcmp.eq.f32.partialorder %v1159, %v1161
  %v1163 = vsel %vm1162, %v1158, inf
  %1164 = vmin.xlane.f32.xlu0 %v1163
  %v1165 = vpop.xlane.xlu0 %1164
  %v1166 = vcvt.f32.s32 %v1165
  %v1167 = vcvt.f32.s32 %v1161
  %v1168 = vshll.u32 %v1167, 16
  %v1169 = vadd.s32 %v1168, %v1166
  %vm1170 = vcmp.eq.s32.totalorder %v209, %v1169
  %v1171 = vsel %vm1170, 1.0, %v1148
  %v1173 = vsel %vm224, %v1171, 0
  %1175 = vmatprep.subr.mxu0 0.0
  %1176 = vmatpush1.msra.mxu0 %v214
  %1177 = vmatprep.subr.mxu0 0.0
  %1178 = vmatpush1.msra.mxu0 0.0
  %1179 = vmatprep.subr.mxu0 0.0
  %1180 = vmatpush1.msra.mxu0 0.0
  %1181 = vmatprep.subr.mxu0 0.0
  %1182 = vmatpush1.msra.mxu0 0.0
  %1183 = vmatprep.subr.mxu0 0.0
  %1184 = vmatpush1.msra.mxu0 0.0
  %1185 = vmatprep.subr.mxu0 0.0
  %1186 = vmatpush1.msra.mxu0 0.0
  %1187 = vmatprep.subr.mxu0 0.0
  %1188 = vmatpush1.msra.mxu0 0.0
  %1189 = vmatprep.subr.mxu0 0.0
  %1190 = vmatpush1.msra.mxu0 0.0
  %1191 = vmatprep.subr.mxu0 0.0
  %1192 = vmatpush1.msra.mxu0 0.0
  %1193 = vmatprep.subr.mxu0 0.0
  %1194 = vmatpush1.msra.mxu0 0.0
  %1195 = vmatprep.subr.mxu0 0.0
  %1196 = vmatpush1.msra.mxu0 0.0
  %1197 = vmatprep.subr.mxu0 0.0
  %1198 = vmatpush1.msra.mxu0 0.0
  %1199 = vmatprep.subr.mxu0 0.0
  %1200 = vmatpush1.msra.mxu0 0.0
  %1201 = vmatprep.subr.mxu0 0.0
  %1202 = vmatpush1.msra.mxu0 0.0
  %1203 = vmatprep.subr.mxu0 0.0
  %1204 = vmatpush1.msra.mxu0 0.0
  %1205 = vmatprep.subr.mxu0 0.0
  %1206 = vmatpush1.msra.mxu0 0.0
  %1207 = vmatprep.subr.mxu0 0.0
  %1208 = vmatpush1.msra.mxu0 0.0
  %1209 = vmatprep.subr.mxu0 0.0
  %1210 = vmatpush1.msra.mxu0 0.0
  %1211 = vmatprep.subr.mxu0 0.0
  %1212 = vmatpush1.msra.mxu0 0.0
  %1213 = vmatprep.subr.mxu0 0.0
  %1214 = vmatpush1.msra.mxu0 0.0
  %1215 = vmatprep.subr.mxu0 0.0
  %1216 = vmatpush1.msra.mxu0 0.0
  %1217 = vmatprep.subr.mxu0 0.0
  %1218 = vmatpush1.msra.mxu0 0.0
  %1219 = vmatprep.subr.mxu0 0.0
  %1220 = vmatpush1.msra.mxu0 0.0
  %1221 = vmatprep.subr.mxu0 0.0
  %1222 = vmatpush1.msra.mxu0 0.0
  %1223 = vmatprep.subr.mxu0 0.0
  %1224 = vmatpush1.msra.mxu0 0.0
  %1225 = vmatprep.subr.mxu0 0.0
  %1226 = vmatpush1.msra.mxu0 0.0
  %1227 = vmatprep.subr.mxu0 0.0
  %1228 = vmatpush1.msra.mxu0 0.0
  %1229 = vmatprep.subr.mxu0 0.0
  %1230 = vmatpush1.msra.mxu0 0.0
  %1231 = vmatprep.subr.mxu0 0.0
  %1232 = vmatpush1.msra.mxu0 0.0
  %1233 = vmatprep.subr.mxu0 0.0
  %1234 = vmatpush1.msra.mxu0 0.0
  %1235 = vmatprep.subr.mxu0 0.0
  %1236 = vmatpush1.msra.mxu0 0.0
  %1237 = vmatprep.subr.mxu0 0.0
  %1238 = vmatpush1.msra.mxu0 0.0
  %1239 = vmatprep.mubr.f32.mxu0 0.0
  %1240 = vmatmul.mubr.f32.gmra.mrb[0].mxu0 %v1173
  %v1241 = vpop.f32.mrb[0].mxu0
  %v1242 = vadd.f32 0.0, %v1241
  %v1243 = vpop.f32.mrb[0].mxu0
  %1244 = vdwg.mxu0
  %v1245 = vcvt.f32.s32.to.zero.pseudo %v1242
  %v1246 = vlaneseq
  %v1247 = vshrl.u32 %v1246, 7
  %v1248 = vsub.s32 0, %v1247
  %v1249 = vrot.slane %v1171, %v1248
  %vm1250 = vcmp.gt.f32.partialorder %v1249, 0.5
  %v1251 = vlaneseq
  %v1252 = vshrl.u32 %v1251, 7
  %v1253 = vsub.s32 0, %v1252
  %v1254 = vrot.slane %v1245, %v1253
  %v1255 = vadd.s32 %v1254, 1
  %vm1256 = vcmp.eq.s32.totalorder %v1255, %v211
  %vm1257 = vmand %vm1256, %vm1250
  %v1258 = vsel %vm1257, 1.0, 0.0
  %1260 = vrot.lane.b32.xlu0 %v1258, 1
  %v1261 = vpop.permute.xlu0 %1260
  %vm1263 = vcmask 7168
  %v1264 = vsel %vm1263, %v217, %v1261
  %vm1266 = vcmask 1046528
  %v1267 = vrot.slane %v206, 1
  %v1268 = vrot.slane %v207, 1
  %v1269 = vsel %vm1266, %v1267, %v1268
  %v1271 = vrot.slane %v197, 1
  %v1272 = vrot.slane %v202, 1
  %v1273 = vsel %vm1266, %v1271, %v1272
  %1274 = vrot.lane.b32.xlu0 %v1273, 96
  %v1275 = vpop.permute.xlu0 %1274
  %1276 = vrot.lane.b32.xlu0 %v1272, 96
  %v1277 = vpop.permute.xlu0 %1276
  %v1278 = vsel %vm224, %v1269, 0
  %v1280 = vsel %vm224, %v1268, 0
  %v1282 = vsel %vm224, %v1275, 0
  %v1284 = vsel %vm224, %v1277, 0
  %1286 = vmatprep.subr.mxu0 0.0
  %1287 = vmatpush1.xpose.msra.mxu0 %v1282
  %1288 = vmatprep.subr.mxu0 0.0
  %1289 = vmatpush1.xpose.msra.mxu0 %v1284
  %1290 = vmatprep.subr.mxu0 0.0
  %1291 = vmatpush1.xpose.msra.mxu0 0.0
  %1292 = vmatprep.subr.mxu0 0.0
  %1293 = vmatpush1.xpose.msra.mxu0 0.0
  %1294 = vmatprep.subr.mxu0 0.0
  %1295 = vmatpush1.xpose.msra.mxu0 0.0
  %1296 = vmatprep.subr.mxu0 0.0
  %1297 = vmatpush1.xpose.msra.mxu0 0.0
  %1298 = vmatprep.subr.mxu0 0.0
  %1299 = vmatpush1.xpose.msra.mxu0 0.0
  %1300 = vmatprep.subr.mxu0 0.0
  %1301 = vmatpush1.xpose.msra.mxu0 0.0
  %1302 = vmatprep.subr.mxu0 0.0
  %1303 = vmatpush1.xpose.msra.mxu0 0.0
  %1304 = vmatprep.subr.mxu0 0.0
  %1305 = vmatpush1.xpose.msra.mxu0 0.0
  %1306 = vmatprep.subr.mxu0 0.0
  %1307 = vmatpush1.xpose.msra.mxu0 0.0
  %1308 = vmatprep.subr.mxu0 0.0
  %1309 = vmatpush1.xpose.msra.mxu0 0.0
  %1310 = vmatprep.subr.mxu0 0.0
  %1311 = vmatpush1.xpose.msra.mxu0 0.0
  %1312 = vmatprep.subr.mxu0 0.0
  %1313 = vmatpush1.xpose.msra.mxu0 0.0
  %1314 = vmatprep.subr.mxu0 0.0
  %1315 = vmatpush1.xpose.msra.mxu0 0.0
  %1316 = vmatprep.subr.mxu0 0.0
  %1317 = vmatpush1.xpose.msra.mxu0 0.0
  %1318 = vmatprep.subr.mxu0 0.0
  %1319 = vmatpush1.xpose.msra.mxu0 0.0
  %1320 = vmatprep.subr.mxu0 0.0
  %1321 = vmatpush1.xpose.msra.mxu0 0.0
  %1322 = vmatprep.subr.mxu0 0.0
  %1323 = vmatpush1.xpose.msra.mxu0 0.0
  %1324 = vmatprep.subr.mxu0 0.0
  %1325 = vmatpush1.xpose.msra.mxu0 0.0
  %1326 = vmatprep.subr.mxu0 0.0
  %1327 = vmatpush1.xpose.msra.mxu0 0.0
  %1328 = vmatprep.subr.mxu0 0.0
  %1329 = vmatpush1.xpose.msra.mxu0 0.0
  %1330 = vmatprep.subr.mxu0 0.0
  %1331 = vmatpush1.xpose.msra.mxu0 0.0
  %1332 = vmatprep.subr.mxu0 0.0
  %1333 = vmatpush1.xpose.msra.mxu0 0.0
  %1334 = vmatprep.subr.mxu0 0.0
  %1335 = vmatpush1.xpose.msra.mxu0 0.0
  %1336 = vmatprep.subr.mxu0 0.0
  %1337 = vmatpush1.xpose.msra.mxu0 0.0
  %1338 = vmatprep.subr.mxu0 0.0
  %1339 = vmatpush1.xpose.msra.mxu0 0.0
  %1340 = vmatprep.subr.mxu0 0.0
  %1341 = vmatpush1.xpose.msra.mxu0 0.0
  %1342 = vmatprep.subr.mxu0 0.0
  %1343 = vmatpush1.xpose.msra.mxu0 0.0
  %1344 = vmatprep.subr.mxu0 0.0
  %1345 = vmatpush1.xpose.msra.mxu0 0.0
  %1346 = vmatprep.subr.mxu0 0.0
  %1347 = vmatpush1.xpose.msra.mxu0 0.0
  %1348 = vmatprep.subr.mxu0 0.0
  %1349 = vmatpush1.xpose.msra.mxu0 0.0
  %1350 = vmatprep.mubr.f32.mxu0 0.0
  %1351 = vmatmul.mubr.f32.gmra.mrb[0].mxu0 %v1278
  %v1352 = vpop.f32.mrb[0].mxu0
  %v1353 = vadd.f32 0.0, %v1352
  %v1354 = vpop.f32.mrb[0].mxu0
  %1355 = vmatprep.mubr.f32.mxu0 0.0
  %1356 = vmatmul.mubr.f32.gmra.mrb[0].mxu0 %v1280
  %v1357 = vpop.f32.mrb[0].mxu0
  %v1358 = vadd.f32 0.0, %v1357
  %v1359 = vpop.f32.mrb[0].mxu0
  %1360 = vdwg.mxu0
  %v1361 = vsel %vm310, %v1353, -inf
  %1362 = vmax.xlane.f32.xlu0 %v1361
  %v1363 = vpop.xlane.xlu0 %1362
  %v1364 = vsel %vm314, %v1358, -inf
  %1365 = vmax.xlane.f32.xlu0 %v1364
  %v1366 = vpop.xlane.xlu0 %1365
  %v1367 = vsub.f32 %v1353, %v1363
  %v1368 = vsub.f32 %v1358, %v1366
  %v1369 = vmul.f32 %v1367, 1.442695
  %v1370 = vpow.pop %v1369
  %v1371 = vmul.f32 %v1368, 1.442695
  %v1372 = vpow.pop %v1371
  %v1373 = vsel %vm310, %v1370, 0.0
  %1374 = vadd.xlane.f32.xlu0 %v1373
  %v1375 = vpop.xlane.xlu0 %1374
  %v1376 = vsel %vm314, %v1372, 0.0
  %1377 = vadd.xlane.f32.xlu0 %v1376
  %v1378 = vpop.xlane.xlu0 %1377
  %v1379 = vrcp.pop %v1375
  %v1380 = vmul.f32 1.0, %v1379
  %v1381 = vrcp.pop %v1378
  %v1382 = vmul.f32 1.0, %v1381
  %1383 = vrot.lane.b32.xlu0 %v1273, 64
  %v1384 = vpop.permute.xlu0 %1383
  %1385 = vrot.lane.b32.xlu0 %v1272, 64
  %v1386 = vpop.permute.xlu0 %1385
  %v1389 = vsel %vm310, %v1370, 0
  %v1392 = vsel %vm310, %v1372, 0
  %v1394 = vsel %vm345, %v1386, 0
  %1396 = vmatprep.subr.mxu0 0.0
  %1397 = vmatpush1.msra.mxu0 %v1384
  %1398 = vmatprep.subr.mxu0 0.0
  %1399 = vmatpush1.msra.mxu0 %v1394
  %1400 = vmatprep.subr.mxu0 0.0
  %1401 = vmatpush1.msra.mxu0 0.0
  %1402 = vmatprep.subr.mxu0 0.0
  %1403 = vmatpush1.msra.mxu0 0.0
  %1404 = vmatprep.subr.mxu0 0.0
  %1405 = vmatpush1.msra.mxu0 0.0
  %1406 = vmatprep.subr.mxu0 0.0
  %1407 = vmatpush1.msra.mxu0 0.0
  %1408 = vmatprep.subr.mxu0 0.0
  %1409 = vmatpush1.msra.mxu0 0.0
  %1410 = vmatprep.subr.mxu0 0.0
  %1411 = vmatpush1.msra.mxu0 0.0
  %1412 = vmatprep.subr.mxu0 0.0
  %1413 = vmatpush1.msra.mxu0 0.0
  %1414 = vmatprep.subr.mxu0 0.0
  %1415 = vmatpush1.msra.mxu0 0.0
  %1416 = vmatprep.subr.mxu0 0.0
  %1417 = vmatpush1.msra.mxu0 0.0
  %1418 = vmatprep.subr.mxu0 0.0
  %1419 = vmatpush1.msra.mxu0 0.0
  %1420 = vmatprep.subr.mxu0 0.0
  %1421 = vmatpush1.msra.mxu0 0.0
  %1422 = vmatprep.subr.mxu0 0.0
  %1423 = vmatpush1.msra.mxu0 0.0
  %1424 = vmatprep.subr.mxu0 0.0
  %1425 = vmatpush1.msra.mxu0 0.0
  %1426 = vmatprep.subr.mxu0 0.0
  %1427 = vmatpush1.msra.mxu0 0.0
  %1428 = vmatprep.subr.mxu0 0.0
  %1429 = vmatpush1.msra.mxu0 0.0
  %1430 = vmatprep.subr.mxu0 0.0
  %1431 = vmatpush1.msra.mxu0 0.0
  %1432 = vmatprep.subr.mxu0 0.0
  %1433 = vmatpush1.msra.mxu0 0.0
  %1434 = vmatprep.subr.mxu0 0.0
  %1435 = vmatpush1.msra.mxu0 0.0
  %1436 = vmatprep.subr.mxu0 0.0
  %1437 = vmatpush1.msra.mxu0 0.0
  %1438 = vmatprep.subr.mxu0 0.0
  %1439 = vmatpush1.msra.mxu0 0.0
  %1440 = vmatprep.subr.mxu0 0.0
  %1441 = vmatpush1.msra.mxu0 0.0
  %1442 = vmatprep.subr.mxu0 0.0
  %1443 = vmatpush1.msra.mxu0 0.0
  %1444 = vmatprep.subr.mxu0 0.0
  %1445 = vmatpush1.msra.mxu0 0.0
  %1446 = vmatprep.subr.mxu0 0.0
  %1447 = vmatpush1.msra.mxu0 0.0
  %1448 = vmatprep.subr.mxu0 0.0
  %1449 = vmatpush1.msra.mxu0 0.0
  %1450 = vmatprep.subr.mxu0 0.0
  %1451 = vmatpush1.msra.mxu0 0.0
  %1452 = vmatprep.subr.mxu0 0.0
  %1453 = vmatpush1.msra.mxu0 0.0
  %1454 = vmatprep.subr.mxu0 0.0
  %1455 = vmatpush1.msra.mxu0 0.0
  %1456 = vmatprep.subr.mxu0 0.0
  %1457 = vmatpush1.msra.mxu0 0.0
  %1458 = vmatprep.subr.mxu0 0.0
  %1459 = vmatpush1.msra.mxu0 0.0
  %1460 = vmatprep.mubr.f32.mxu0 0.0
  %1461 = vmatmul.mubr.f32.gmra.mrb[0].mxu0 %v1389
  %v1462 = vpop.f32.mrb[0].mxu0
  %v1463 = vadd.f32 0.0, %v1462
  %v1464 = vpop.f32.mrb[0].mxu0
  %1465 = vmatprep.mubr.f32.mxu0 0.0
  %1466 = vmatmul.mubr.f32.gmra.mrb[0].mxu0 %v1392
  %v1467 = vpop.f32.mrb[0].mxu0
  %v1468 = vadd.f32 0.0, %v1467
  %v1469 = vpop.f32.mrb[0].mxu0
  %1470 = vdwg.mxu0
  %v1471 = vmul.f32 %v1463, %v1380
  %v1472 = vmul.f32 %v1468, %v1382
  %v1473 = vmul.f32 %v1370, %v1380
  %1474 = vrot.lane.b32.xlu0 %v1269, 120
  %v1475 = vpop.permute.xlu0 %1474
  %1476 = vrot.lane.b32.xlu0 %v1268, 120
  %v1477 = vpop.permute.xlu0 %1476
  %1478 = vrot.lane.b32.xlu0 %v1273, 88
  %v1479 = vpop.permute.xlu0 %1478
  %1480 = vrot.lane.b32.xlu0 %v1272, 88
  %v1481 = vpop.permute.xlu0 %1480
  %v1482 = vsel %vm224, %v1475, 0
  %v1484 = vsel %vm224, %v1477, 0
  %v1486 = vsel %vm224, %v1479, 0
  %v1488 = vsel %vm224, %v1481, 0
  %1490 = vmatprep.subr.mxu0 0.0
  %1491 = vmatpush1.xpose.msra.mxu0 %v1486
  %1492 = vmatprep.subr.mxu0 0.0
  %1493 = vmatpush1.xpose.msra.mxu0 %v1488
  %1494 = vmatprep.subr.mxu0 0.0
  %1495 = vmatpush1.xpose.msra.mxu0 0.0
  %1496 = vmatprep.subr.mxu0 0.0
  %1497 = vmatpush1.xpose.msra.mxu0 0.0
  %1498 = vmatprep.subr.mxu0 0.0
  %1499 = vmatpush1.xpose.msra.mxu0 0.0
  %1500 = vmatprep.subr.mxu0 0.0
  %1501 = vmatpush1.xpose.msra.mxu0 0.0
  %1502 = vmatprep.subr.mxu0 0.0
  %1503 = vmatpush1.xpose.msra.mxu0 0.0
  %1504 = vmatprep.subr.mxu0 0.0
  %1505 = vmatpush1.xpose.msra.mxu0 0.0
  %1506 = vmatprep.subr.mxu0 0.0
  %1507 = vmatpush1.xpose.msra.mxu0 0.0
  %1508 = vmatprep.subr.mxu0 0.0
  %1509 = vmatpush1.xpose.msra.mxu0 0.0
  %1510 = vmatprep.subr.mxu0 0.0
  %1511 = vmatpush1.xpose.msra.mxu0 0.0
  %1512 = vmatprep.subr.mxu0 0.0
  %1513 = vmatpush1.xpose.msra.mxu0 0.0
  %1514 = vmatprep.subr.mxu0 0.0
  %1515 = vmatpush1.xpose.msra.mxu0 0.0
  %1516 = vmatprep.subr.mxu0 0.0
  %1517 = vmatpush1.xpose.msra.mxu0 0.0
  %1518 = vmatprep.subr.mxu0 0.0
  %1519 = vmatpush1.xpose.msra.mxu0 0.0
  %1520 = vmatprep.subr.mxu0 0.0
  %1521 = vmatpush1.xpose.msra.mxu0 0.0
  %1522 = vmatprep.subr.mxu0 0.0
  %1523 = vmatpush1.xpose.msra.mxu0 0.0
  %1524 = vmatprep.subr.mxu0 0.0
  %1525 = vmatpush1.xpose.msra.mxu0 0.0
  %1526 = vmatprep.subr.mxu0 0.0
  %1527 = vmatpush1.xpose.msra.mxu0 0.0
  %1528 = vmatprep.subr.mxu0 0.0
  %1529 = vmatpush1.xpose.msra.mxu0 0.0
  %1530 = vmatprep.subr.mxu0 0.0
  %1531 = vmatpush1.xpose.msra.mxu0 0.0
  %1532 = vmatprep.subr.mxu0 0.0
  %1533 = vmatpush1.xpose.msra.mxu0 0.0
  %1534 = vmatprep.subr.mxu0 0.0
  %1535 = vmatpush1.xpose.msra.mxu0 0.0
  %1536 = vmatprep.subr.mxu0 0.0
  %1537 = vmatpush1.xpose.msra.mxu0 0.0
  %1538 = vmatprep.subr.mxu0 0.0
  %1539 = vmatpush1.xpose.msra.mxu0 0.0
  %1540 = vmatprep.subr.mxu0 0.0
  %1541 = vmatpush1.xpose.msra.mxu0 0.0
  %1542 = vmatprep.subr.mxu0 0.0
  %1543 = vmatpush1.xpose.msra.mxu0 0.0
  %1544 = vmatprep.subr.mxu0 0.0
  %1545 = vmatpush1.xpose.msra.mxu0 0.0
  %1546 = vmatprep.subr.mxu0 0.0
  %1547 = vmatpush1.xpose.msra.mxu0 0.0
  %1548 = vmatprep.subr.mxu0 0.0
  %1549 = vmatpush1.xpose.msra.mxu0 0.0
  %1550 = vmatprep.subr.mxu0 0.0
  %1551 = vmatpush1.xpose.msra.mxu0 0.0
  %1552 = vmatprep.subr.mxu0 0.0
  %1553 = vmatpush1.xpose.msra.mxu0 0.0
  %1554 = vmatprep.mubr.f32.mxu0 0.0
  %1555 = vmatmul.mubr.f32.gmra.mrb[0].mxu0 %v1482
  %v1556 = vpop.f32.mrb[0].mxu0
  %v1557 = vadd.f32 0.0, %v1556
  %v1558 = vpop.f32.mrb[0].mxu0
  %1559 = vmatprep.mubr.f32.mxu0 0.0
  %1560 = vmatmul.mubr.f32.gmra.mrb[0].mxu0 %v1484
  %v1561 = vpop.f32.mrb[0].mxu0
  %v1562 = vadd.f32 0.0, %v1561
  %v1563 = vpop.f32.mrb[0].mxu0
  %1564 = vdwg.mxu0
  %v1565 = vsel %vm310, %v1557, -inf
  %1566 = vmax.xlane.f32.xlu0 %v1565
  %v1567 = vpop.xlane.xlu0 %1566
  %v1568 = vsel %vm314, %v1562, -inf
  %1569 = vmax.xlane.f32.xlu0 %v1568
  %v1570 = vpop.xlane.xlu0 %1569
  %v1571 = vsub.f32 %v1557, %v1567
  %v1572 = vsub.f32 %v1562, %v1570
  %v1573 = vmul.f32 %v1571, 1.442695
  %v1574 = vpow.pop %v1573
  %v1575 = vmul.f32 %v1572, 1.442695
  %v1576 = vpow.pop %v1575
  %v1577 = vsel %vm310, %v1574, 0.0
  %1578 = vadd.xlane.f32.xlu0 %v1577
  %v1579 = vpop.xlane.xlu0 %1578
  %v1580 = vsel %vm314, %v1576, 0.0
  %1581 = vadd.xlane.f32.xlu0 %v1580
  %v1582 = vpop.xlane.xlu0 %1581
  %v1583 = vrcp.pop %v1579
  %v1584 = vmul.f32 1.0, %v1583
  %v1585 = vrcp.pop %v1582
  %v1586 = vmul.f32 1.0, %v1585
  %1587 = vrot.lane.b32.xlu0 %v1273, 56
  %v1588 = vpop.permute.xlu0 %1587
  %1589 = vrot.lane.b32.xlu0 %v1272, 56
  %v1590 = vpop.permute.xlu0 %1589
  %v1593 = vsel %vm310, %v1574, 0
  %v1596 = vsel %vm310, %v1576, 0
  %v1598 = vsel %vm345, %v1590, 0
  %1600 = vmatprep.subr.mxu0 0.0
  %1601 = vmatpush1.msra.mxu0 %v1588
  %1602 = vmatprep.subr.mxu0 0.0
  %1603 = vmatpush1.msra.mxu0 %v1598
  %1604 = vmatprep.subr.mxu0 0.0
  %1605 = vmatpush1.msra.mxu0 0.0
  %1606 = vmatprep.subr.mxu0 0.0
  %1607 = vmatpush1.msra.mxu0 0.0
  %1608 = vmatprep.subr.mxu0 0.0
  %1609 = vmatpush1.msra.mxu0 0.0
  %1610 = vmatprep.subr.mxu0 0.0
  %1611 = vmatpush1.msra.mxu0 0.0
  %1612 = vmatprep.subr.mxu0 0.0
  %1613 = vmatpush1.msra.mxu0 0.0
  %1614 = vmatprep.subr.mxu0 0.0
  %1615 = vmatpush1.msra.mxu0 0.0
  %1616 = vmatprep.subr.mxu0 0.0
  %1617 = vmatpush1.msra.mxu0 0.0
  %1618 = vmatprep.subr.mxu0 0.0
  %1619 = vmatpush1.msra.mxu0 0.0
  %1620 = vmatprep.subr.mxu0 0.0
  %1621 = vmatpush1.msra.mxu0 0.0
  %1622 = vmatprep.subr.mxu0 0.0
  %1623 = vmatpush1.msra.mxu0 0.0
  %1624 = vmatprep.subr.mxu0 0.0
  %1625 = vmatpush1.msra.mxu0 0.0
  %1626 = vmatprep.subr.mxu0 0.0
  %1627 = vmatpush1.msra.mxu0 0.0
  %1628 = vmatprep.subr.mxu0 0.0
  %1629 = vmatpush1.msra.mxu0 0.0
  %1630 = vmatprep.subr.mxu0 0.0
  %1631 = vmatpush1.msra.mxu0 0.0
  %1632 = vmatprep.subr.mxu0 0.0
  %1633 = vmatpush1.msra.mxu0 0.0
  %1634 = vmatprep.subr.mxu0 0.0
  %1635 = vmatpush1.msra.mxu0 0.0
  %1636 = vmatprep.subr.mxu0 0.0
  %1637 = vmatpush1.msra.mxu0 0.0
  %1638 = vmatprep.subr.mxu0 0.0
  %1639 = vmatpush1.msra.mxu0 0.0
  %1640 = vmatprep.subr.mxu0 0.0
  %1641 = vmatpush1.msra.mxu0 0.0
  %1642 = vmatprep.subr.mxu0 0.0
  %1643 = vmatpush1.msra.mxu0 0.0
  %1644 = vmatprep.subr.mxu0 0.0
  %1645 = vmatpush1.msra.mxu0 0.0
  %1646 = vmatprep.subr.mxu0 0.0
  %1647 = vmatpush1.msra.mxu0 0.0
  %1648 = vmatprep.subr.mxu0 0.0
  %1649 = vmatpush1.msra.mxu0 0.0
  %1650 = vmatprep.subr.mxu0 0.0
  %1651 = vmatpush1.msra.mxu0 0.0
  %1652 = vmatprep.subr.mxu0 0.0
  %1653 = vmatpush1.msra.mxu0 0.0
  %1654 = vmatprep.subr.mxu0 0.0
  %1655 = vmatpush1.msra.mxu0 0.0
  %1656 = vmatprep.subr.mxu0 0.0
  %1657 = vmatpush1.msra.mxu0 0.0
  %1658 = vmatprep.subr.mxu0 0.0
  %1659 = vmatpush1.msra.mxu0 0.0
  %1660 = vmatprep.subr.mxu0 0.0
  %1661 = vmatpush1.msra.mxu0 0.0
  %1662 = vmatprep.subr.mxu0 0.0
  %1663 = vmatpush1.msra.mxu0 0.0
  %1664 = vmatprep.mubr.f32.mxu0 0.0
  %1665 = vmatmul.mubr.f32.gmra.mrb[0].mxu0 %v1593
  %v1666 = vpop.f32.mrb[0].mxu0
  %v1667 = vadd.f32 0.0, %v1666
  %v1668 = vpop.f32.mrb[0].mxu0
  %1669 = vmatprep.mubr.f32.mxu0 0.0
  %1670 = vmatmul.mubr.f32.gmra.mrb[0].mxu0 %v1596
  %v1671 = vpop.f32.mrb[0].mxu0
  %v1672 = vadd.f32 0.0, %v1671
  %v1673 = vpop.f32.mrb[0].mxu0
  %1674 = vdwg.mxu0
  %v1675 = vmul.f32 %v1667, %v1584
  %v1676 = vmul.f32 %v1672, %v1586
  %v1677 = vmul.f32 %v1574, %v1584
  %v1678 = vmax.f32 %v1473, %v1677
  %1679 = vrot.lane.b32.xlu0 %v1269, 112
  %v1680 = vpop.permute.xlu0 %1679
  %1681 = vrot.lane.b32.xlu0 %v1268, 112
  %v1682 = vpop.permute.xlu0 %1681
  %1683 = vrot.lane.b32.xlu0 %v1273, 80
  %v1684 = vpop.permute.xlu0 %1683
  %1685 = vrot.lane.b32.xlu0 %v1272, 80
  %v1686 = vpop.permute.xlu0 %1685
  %v1687 = vsel %vm224, %v1680, 0
  %v1689 = vsel %vm224, %v1682, 0
  %v1691 = vsel %vm224, %v1684, 0
  %v1693 = vsel %vm224, %v1686, 0
  %1695 = vmatprep.subr.mxu0 0.0
  %1696 = vmatpush1.xpose.msra.mxu0 %v1691
  %1697 = vmatprep.subr.mxu0 0.0
  %1698 = vmatpush1.xpose.msra.mxu0 %v1693
  %1699 = vmatprep.subr.mxu0 0.0
  %1700 = vmatpush1.xpose.msra.mxu0 0.0
  %1701 = vmatprep.subr.mxu0 0.0
  %1702 = vmatpush1.xpose.msra.mxu0 0.0
  %1703 = vmatprep.subr.mxu0 0.0
  %1704 = vmatpush1.xpose.msra.mxu0 0.0
  %1705 = vmatprep.subr.mxu0 0.0
  %1706 = vmatpush1.xpose.msra.mxu0 0.0
  %1707 = vmatprep.subr.mxu0 0.0
  %1708 = vmatpush1.xpose.msra.mxu0 0.0
  %1709 = vmatprep.subr.mxu0 0.0
  %1710 = vmatpush1.xpose.msra.mxu0 0.0
  %1711 = vmatprep.subr.mxu0 0.0
  %1712 = vmatpush1.xpose.msra.mxu0 0.0
  %1713 = vmatprep.subr.mxu0 0.0
  %1714 = vmatpush1.xpose.msra.mxu0 0.0
  %1715 = vmatprep.subr.mxu0 0.0
  %1716 = vmatpush1.xpose.msra.mxu0 0.0
  %1717 = vmatprep.subr.mxu0 0.0
  %1718 = vmatpush1.xpose.msra.mxu0 0.0
  %1719 = vmatprep.subr.mxu0 0.0
  %1720 = vmatpush1.xpose.msra.mxu0 0.0
  %1721 = vmatprep.subr.mxu0 0.0
  %1722 = vmatpush1.xpose.msra.mxu0 0.0
  %1723 = vmatprep.subr.mxu0 0.0
  %1724 = vmatpush1.xpose.msra.mxu0 0.0
  %1725 = vmatprep.subr.mxu0 0.0
  %1726 = vmatpush1.xpose.msra.mxu0 0.0
  %1727 = vmatprep.subr.mxu0 0.0
  %1728 = vmatpush1.xpose.msra.mxu0 0.0
  %1729 = vmatprep.subr.mxu0 0.0
  %1730 = vmatpush1.xpose.msra.mxu0 0.0
  %1731 = vmatprep.subr.mxu0 0.0
  %1732 = vmatpush1.xpose.msra.mxu0 0.0
  %1733 = vmatprep.subr.mxu0 0.0
  %1734 = vmatpush1.xpose.msra.mxu0 0.0
  %1735 = vmatprep.subr.mxu0 0.0
  %1736 = vmatpush1.xpose.msra.mxu0 0.0
  %1737 = vmatprep.subr.mxu0 0.0
  %1738 = vmatpush1.xpose.msra.mxu0 0.0
  %1739 = vmatprep.subr.mxu0 0.0
  %1740 = vmatpush1.xpose.msra.mxu0 0.0
  %1741 = vmatprep.subr.mxu0 0.0
  %1742 = vmatpush1.xpose.msra.mxu0 0.0
  %1743 = vmatprep.subr.mxu0 0.0
  %1744 = vmatpush1.xpose.msra.mxu0 0.0
  %1745 = vmatprep.subr.mxu0 0.0
  %1746 = vmatpush1.xpose.msra.mxu0 0.0
  %1747 = vmatprep.subr.mxu0 0.0
  %1748 = vmatpush1.xpose.msra.mxu0 0.0
  %1749 = vmatprep.subr.mxu0 0.0
  %1750 = vmatpush1.xpose.msra.mxu0 0.0
  %1751 = vmatprep.subr.mxu0 0.0
  %1752 = vmatpush1.xpose.msra.mxu0 0.0
  %1753 = vmatprep.subr.mxu0 0.0
  %1754 = vmatpush1.xpose.msra.mxu0 0.0
  %1755 = vmatprep.subr.mxu0 0.0
  %1756 = vmatpush1.xpose.msra.mxu0 0.0
  %1757 = vmatprep.subr.mxu0 0.0
  %1758 = vmatpush1.xpose.msra.mxu0 0.0
  %1759 = vmatprep.mubr.f32.mxu0 0.0
  %1760 = vmatmul.mubr.f32.gmra.mrb[0].mxu0 %v1687
  %v1761 = vpop.f32.mrb[0].mxu0
  %v1762 = vadd.f32 0.0, %v1761
  %v1763 = vpop.f32.mrb[0].mxu0
  %1764 = vmatprep.mubr.f32.mxu0 0.0
  %1765 = vmatmul.mubr.f32.gmra.mrb[0].mxu0 %v1689
  %v1766 = vpop.f32.mrb[0].mxu0
  %v1767 = vadd.f32 0.0, %v1766
  %v1768 = vpop.f32.mrb[0].mxu0
  %1769 = vdwg.mxu0
  %v1770 = vsel %vm310, %v1762, -inf
  %1771 = vmax.xlane.f32.xlu0 %v1770
  %v1772 = vpop.xlane.xlu0 %1771
  %v1773 = vsel %vm314, %v1767, -inf
  %1774 = vmax.xlane.f32.xlu0 %v1773
  %v1775 = vpop.xlane.xlu0 %1774
  %v1776 = vsub.f32 %v1762, %v1772
  %v1777 = vsub.f32 %v1767, %v1775
  %v1778 = vmul.f32 %v1776, 1.442695
  %v1779 = vpow.pop %v1778
  %v1780 = vmul.f32 %v1777, 1.442695
  %v1781 = vpow.pop %v1780
  %v1782 = vsel %vm310, %v1779, 0.0
  %1783 = vadd.xlane.f32.xlu0 %v1782
  %v1784 = vpop.xlane.xlu0 %1783
  %v1785 = vsel %vm314, %v1781, 0.0
  %1786 = vadd.xlane.f32.xlu0 %v1785
  %v1787 = vpop.xlane.xlu0 %1786
  %v1788 = vrcp.pop %v1784
  %v1789 = vmul.f32 1.0, %v1788
  %v1790 = vrcp.pop %v1787
  %v1791 = vmul.f32 1.0, %v1790
  %1792 = vrot.lane.b32.xlu0 %v1273, 48
  %v1793 = vpop.permute.xlu0 %1792
  %1794 = vrot.lane.b32.xlu0 %v1272, 48
  %v1795 = vpop.permute.xlu0 %1794
  %v1798 = vsel %vm310, %v1779, 0
  %v1801 = vsel %vm310, %v1781, 0
  %v1803 = vsel %vm345, %v1795, 0
  %1805 = vmatprep.subr.mxu0 0.0
  %1806 = vmatpush1.msra.mxu0 %v1793
  %1807 = vmatprep.subr.mxu0 0.0
  %1808 = vmatpush1.msra.mxu0 %v1803
  %1809 = vmatprep.subr.mxu0 0.0
  %1810 = vmatpush1.msra.mxu0 0.0
  %1811 = vmatprep.subr.mxu0 0.0
  %1812 = vmatpush1.msra.mxu0 0.0
  %1813 = vmatprep.subr.mxu0 0.0
  %1814 = vmatpush1.msra.mxu0 0.0
  %1815 = vmatprep.subr.mxu0 0.0
  %1816 = vmatpush1.msra.mxu0 0.0
  %1817 = vmatprep.subr.mxu0 0.0
  %1818 = vmatpush1.msra.mxu0 0.0
  %1819 = vmatprep.subr.mxu0 0.0
  %1820 = vmatpush1.msra.mxu0 0.0
  %1821 = vmatprep.subr.mxu0 0.0
  %1822 = vmatpush1.msra.mxu0 0.0
  %1823 = vmatprep.subr.mxu0 0.0
  %1824 = vmatpush1.msra.mxu0 0.0
  %1825 = vmatprep.subr.mxu0 0.0
  %1826 = vmatpush1.msra.mxu0 0.0
  %1827 = vmatprep.subr.mxu0 0.0
  %1828 = vmatpush1.msra.mxu0 0.0
  %1829 = vmatprep.subr.mxu0 0.0
  %1830 = vmatpush1.msra.mxu0 0.0
  %1831 = vmatprep.subr.mxu0 0.0
  %1832 = vmatpush1.msra.mxu0 0.0
  %1833 = vmatprep.subr.mxu0 0.0
  %1834 = vmatpush1.msra.mxu0 0.0
  %1835 = vmatprep.subr.mxu0 0.0
  %1836 = vmatpush1.msra.mxu0 0.0
  %1837 = vmatprep.subr.mxu0 0.0
  %1838 = vmatpush1.msra.mxu0 0.0
  %1839 = vmatprep.subr.mxu0 0.0
  %1840 = vmatpush1.msra.mxu0 0.0
  %1841 = vmatprep.subr.mxu0 0.0
  %1842 = vmatpush1.msra.mxu0 0.0
  %1843 = vmatprep.subr.mxu0 0.0
  %1844 = vmatpush1.msra.mxu0 0.0
  %1845 = vmatprep.subr.mxu0 0.0
  %1846 = vmatpush1.msra.mxu0 0.0
  %1847 = vmatprep.subr.mxu0 0.0
  %1848 = vmatpush1.msra.mxu0 0.0
  %1849 = vmatprep.subr.mxu0 0.0
  %1850 = vmatpush1.msra.mxu0 0.0
  %1851 = vmatprep.subr.mxu0 0.0
  %1852 = vmatpush1.msra.mxu0 0.0
  %1853 = vmatprep.subr.mxu0 0.0
  %1854 = vmatpush1.msra.mxu0 0.0
  %1855 = vmatprep.subr.mxu0 0.0
  %1856 = vmatpush1.msra.mxu0 0.0
  %1857 = vmatprep.subr.mxu0 0.0
  %1858 = vmatpush1.msra.mxu0 0.0
  %1859 = vmatprep.subr.mxu0 0.0
  %1860 = vmatpush1.msra.mxu0 0.0
  %1861 = vmatprep.subr.mxu0 0.0
  %1862 = vmatpush1.msra.mxu0 0.0
  %1863 = vmatprep.subr.mxu0 0.0
  %1864 = vmatpush1.msra.mxu0 0.0
  %1865 = vmatprep.subr.mxu0 0.0
  %1866 = vmatpush1.msra.mxu0 0.0
  %1867 = vmatprep.subr.mxu0 0.0
  %1868 = vmatpush1.msra.mxu0 0.0
  %1869 = vmatprep.mubr.f32.mxu0 0.0
  %1870 = vmatmul.mubr.f32.gmra.mrb[0].mxu0 %v1798
  %v1871 = vpop.f32.mrb[0].mxu0
  %v1872 = vadd.f32 0.0, %v1871
  %v1873 = vpop.f32.mrb[0].mxu0
  %1874 = vmatprep.mubr.f32.mxu0 0.0
  %1875 = vmatmul.mubr.f32.gmra.mrb[0].mxu0 %v1801
  %v1876 = vpop.f32.mrb[0].mxu0
  %v1877 = vadd.f32 0.0, %v1876
  %v1878 = vpop.f32.mrb[0].mxu0
  %1879 = vdwg.mxu0
  %v1880 = vmul.f32 %v1872, %v1789
  %v1881 = vmul.f32 %v1877, %v1791
  %v1882 = vmul.f32 %v1779, %v1789
  %v1883 = vmax.f32 %v1678, %v1882
  %1884 = vrot.lane.b32.xlu0 %v1269, 104
  %v1885 = vpop.permute.xlu0 %1884
  %1886 = vrot.lane.b32.xlu0 %v1268, 104
  %v1887 = vpop.permute.xlu0 %1886
  %1888 = vrot.lane.b32.xlu0 %v1273, 72
  %v1889 = vpop.permute.xlu0 %1888
  %1890 = vrot.lane.b32.xlu0 %v1272, 72
  %v1891 = vpop.permute.xlu0 %1890
  %v1892 = vsel %vm224, %v1885, 0
  %v1894 = vsel %vm224, %v1887, 0
  %v1896 = vsel %vm224, %v1889, 0
  %v1898 = vsel %vm224, %v1891, 0
  %1900 = vmatprep.subr.mxu0 0.0
  %1901 = vmatpush1.xpose.msra.mxu0 %v1896
  %1902 = vmatprep.subr.mxu0 0.0
  %1903 = vmatpush1.xpose.msra.mxu0 %v1898
  %1904 = vmatprep.subr.mxu0 0.0
  %1905 = vmatpush1.xpose.msra.mxu0 0.0
  %1906 = vmatprep.subr.mxu0 0.0
  %1907 = vmatpush1.xpose.msra.mxu0 0.0
  %1908 = vmatprep.subr.mxu0 0.0
  %1909 = vmatpush1.xpose.msra.mxu0 0.0
  %1910 = vmatprep.subr.mxu0 0.0
  %1911 = vmatpush1.xpose.msra.mxu0 0.0
  %1912 = vmatprep.subr.mxu0 0.0
  %1913 = vmatpush1.xpose.msra.mxu0 0.0
  %1914 = vmatprep.subr.mxu0 0.0
  %1915 = vmatpush1.xpose.msra.mxu0 0.0
  %1916 = vmatprep.subr.mxu0 0.0
  %1917 = vmatpush1.xpose.msra.mxu0 0.0
  %1918 = vmatprep.subr.mxu0 0.0
  %1919 = vmatpush1.xpose.msra.mxu0 0.0
  %1920 = vmatprep.subr.mxu0 0.0
  %1921 = vmatpush1.xpose.msra.mxu0 0.0
  %1922 = vmatprep.subr.mxu0 0.0
  %1923 = vmatpush1.xpose.msra.mxu0 0.0
  %1924 = vmatprep.subr.mxu0 0.0
  %1925 = vmatpush1.xpose.msra.mxu0 0.0
  %1926 = vmatprep.subr.mxu0 0.0
  %1927 = vmatpush1.xpose.msra.mxu0 0.0
  %1928 = vmatprep.subr.mxu0 0.0
  %1929 = vmatpush1.xpose.msra.mxu0 0.0
  %1930 = vmatprep.subr.mxu0 0.0
  %1931 = vmatpush1.xpose.msra.mxu0 0.0
  %1932 = vmatprep.subr.mxu0 0.0
  %1933 = vmatpush1.xpose.msra.mxu0 0.0
  %1934 = vmatprep.subr.mxu0 0.0
  %1935 = vmatpush1.xpose.msra.mxu0 0.0
  %1936 = vmatprep.subr.mxu0 0.0
  %1937 = vmatpush1.xpose.msra.mxu0 0.0
  %1938 = vmatprep.subr.mxu0 0.0
  %1939 = vmatpush1.xpose.msra.mxu0 0.0
  %1940 = vmatprep.subr.mxu0 0.0
  %1941 = vmatpush1.xpose.msra.mxu0 0.0
  %1942 = vmatprep.subr.mxu0 0.0
  %1943 = vmatpush1.xpose.msra.mxu0 0.0
  %1944 = vmatprep.subr.mxu0 0.0
  %1945 = vmatpush1.xpose.msra.mxu0 0.0
  %1946 = vmatprep.subr.mxu0 0.0
  %1947 = vmatpush1.xpose.msra.mxu0 0.0
  %1948 = vmatprep.subr.mxu0 0.0
  %1949 = vmatpush1.xpose.msra.mxu0 0.0
  %1950 = vmatprep.subr.mxu0 0.0
  %1951 = vmatpush1.xpose.msra.mxu0 0.0
  %1952 = vmatprep.subr.mxu0 0.0
  %1953 = vmatpush1.xpose.msra.mxu0 0.0
  %1954 = vmatprep.subr.mxu0 0.0
  %1955 = vmatpush1.xpose.msra.mxu0 0.0
  %1956 = vmatprep.subr.mxu0 0.0
  %1957 = vmatpush1.xpose.msra.mxu0 0.0
  %1958 = vmatprep.subr.mxu0 0.0
  %1959 = vmatpush1.xpose.msra.mxu0 0.0
  %1960 = vmatprep.subr.mxu0 0.0
  %1961 = vmatpush1.xpose.msra.mxu0 0.0
  %1962 = vmatprep.subr.mxu0 0.0
  %1963 = vmatpush1.xpose.msra.mxu0 0.0
  %1964 = vmatprep.mubr.f32.mxu0 0.0
  %1965 = vmatmul.mubr.f32.gmra.mrb[0].mxu0 %v1892
  %v1966 = vpop.f32.mrb[0].mxu0
  %v1967 = vadd.f32 0.0, %v1966
  %v1968 = vpop.f32.mrb[0].mxu0
  %1969 = vmatprep.mubr.f32.mxu0 0.0
  %1970 = vmatmul.mubr.f32.gmra.mrb[0].mxu0 %v1894
  %v1971 = vpop.f32.mrb[0].mxu0
  %v1972 = vadd.f32 0.0, %v1971
  %v1973 = vpop.f32.mrb[0].mxu0
  %1974 = vdwg.mxu0
  %v1975 = vsel %vm310, %v1967, -inf
  %1976 = vmax.xlane.f32.xlu0 %v1975
  %v1977 = vpop.xlane.xlu0 %1976
  %v1978 = vsel %vm314, %v1972, -inf
  %1979 = vmax.xlane.f32.xlu0 %v1978
  %v1980 = vpop.xlane.xlu0 %1979
  %v1981 = vsub.f32 %v1967, %v1977
  %v1982 = vsub.f32 %v1972, %v1980
  %v1983 = vmul.f32 %v1981, 1.442695
  %v1984 = vpow.pop %v1983
  %v1985 = vmul.f32 %v1982, 1.442695
  %v1986 = vpow.pop %v1985
  %v1987 = vsel %vm310, %v1984, 0.0
  %1988 = vadd.xlane.f32.xlu0 %v1987
  %v1989 = vpop.xlane.xlu0 %1988
  %v1990 = vsel %vm314, %v1986, 0.0
  %1991 = vadd.xlane.f32.xlu0 %v1990
  %v1992 = vpop.xlane.xlu0 %1991
  %v1993 = vrcp.pop %v1989
  %v1994 = vmul.f32 1.0, %v1993
  %v1995 = vrcp.pop %v1992
  %v1996 = vmul.f32 1.0, %v1995
  %1997 = vrot.lane.b32.xlu0 %v1273, 40
  %v1998 = vpop.permute.xlu0 %1997
  %1999 = vrot.lane.b32.xlu0 %v1272, 40
  %v2000 = vpop.permute.xlu0 %1999
  %v2003 = vsel %vm310, %v1984, 0
  %v2006 = vsel %vm310, %v1986, 0
  %v2008 = vsel %vm345, %v2000, 0
  %2010 = vmatprep.subr.mxu0 0.0
  %2011 = vmatpush1.msra.mxu0 %v1998
  %2012 = vmatprep.subr.mxu0 0.0
  %2013 = vmatpush1.msra.mxu0 %v2008
  %2014 = vmatprep.subr.mxu0 0.0
  %2015 = vmatpush1.msra.mxu0 0.0
  %2016 = vmatprep.subr.mxu0 0.0
  %2017 = vmatpush1.msra.mxu0 0.0
  %2018 = vmatprep.subr.mxu0 0.0
  %2019 = vmatpush1.msra.mxu0 0.0
  %2020 = vmatprep.subr.mxu0 0.0
  %2021 = vmatpush1.msra.mxu0 0.0
  %2022 = vmatprep.subr.mxu0 0.0
  %2023 = vmatpush1.msra.mxu0 0.0
  %2024 = vmatprep.subr.mxu0 0.0
  %2025 = vmatpush1.msra.mxu0 0.0
  %2026 = vmatprep.subr.mxu0 0.0
  %2027 = vmatpush1.msra.mxu0 0.0
  %2028 = vmatprep.subr.mxu0 0.0
  %2029 = vmatpush1.msra.mxu0 0.0
  %2030 = vmatprep.subr.mxu0 0.0
  %2031 = vmatpush1.msra.mxu0 0.0
  %2032 = vmatprep.subr.mxu0 0.0
  %2033 = vmatpush1.msra.mxu0 0.0
  %2034 = vmatprep.subr.mxu0 0.0
  %2035 = vmatpush1.msra.mxu0 0.0
  %2036 = vmatprep.subr.mxu0 0.0
  %2037 = vmatpush1.msra.mxu0 0.0
  %2038 = vmatprep.subr.mxu0 0.0
  %2039 = vmatpush1.msra.mxu0 0.0
  %2040 = vmatprep.subr.mxu0 0.0
  %2041 = vmatpush1.msra.mxu0 0.0
  %2042 = vmatprep.subr.mxu0 0.0
  %2043 = vmatpush1.msra.mxu0 0.0
  %2044 = vmatprep.subr.mxu0 0.0
  %2045 = vmatpush1.msra.mxu0 0.0
  %2046 = vmatprep.subr.mxu0 0.0
  %2047 = vmatpush1.msra.mxu0 0.0
  %2048 = vmatprep.subr.mxu0 0.0
  %2049 = vmatpush1.msra.mxu0 0.0
  %2050 = vmatprep.subr.mxu0 0.0
  %2051 = vmatpush1.msra.mxu0 0.0
  %2052 = vmatprep.subr.mxu0 0.0
  %2053 = vmatpush1.msra.mxu0 0.0
  %2054 = vmatprep.subr.mxu0 0.0
  %2055 = vmatpush1.msra.mxu0 0.0
  %2056 = vmatprep.subr.mxu0 0.0
  %2057 = vmatpush1.msra.mxu0 0.0
  %2058 = vmatprep.subr.mxu0 0.0
  %2059 = vmatpush1.msra.mxu0 0.0
  %2060 = vmatprep.subr.mxu0 0.0
  %2061 = vmatpush1.msra.mxu0 0.0
  %2062 = vmatprep.subr.mxu0 0.0
  %2063 = vmatpush1.msra.mxu0 0.0
  %2064 = vmatprep.subr.mxu0 0.0
  %2065 = vmatpush1.msra.mxu0 0.0
  %2066 = vmatprep.subr.mxu0 0.0
  %2067 = vmatpush1.msra.mxu0 0.0
  %2068 = vmatprep.subr.mxu0 0.0
  %2069 = vmatpush1.msra.mxu0 0.0
  %2070 = vmatprep.subr.mxu0 0.0
  %2071 = vmatpush1.msra.mxu0 0.0
  %2072 = vmatprep.subr.mxu0 0.0
  %2073 = vmatpush1.msra.mxu0 0.0
  %2074 = vmatprep.mubr.f32.mxu0 0.0
  %2075 = vmatmul.mubr.f32.gmra.mrb[0].mxu0 %v2003
  %v2076 = vpop.f32.mrb[0].mxu0
  %v2077 = vadd.f32 0.0, %v2076
  %v2078 = vpop.f32.mrb[0].mxu0
  %2079 = vmatprep.mubr.f32.mxu0 0.0
  %2080 = vmatmul.mubr.f32.gmra.mrb[0].mxu0 %v2006
  %v2081 = vpop.f32.mrb[0].mxu0
  %v2082 = vadd.f32 0.0, %v2081
  %v2083 = vpop.f32.mrb[0].mxu0
  %2084 = vdwg.mxu0
  %v2085 = vmul.f32 %v2077, %v1994
  %v2086 = vmul.f32 %v2082, %v1996
  %v2087 = vmul.f32 %v1984, %v1994
  %v2088 = vmax.f32 %v1883, %v2087
  %2091 = vrot.lane.b32.xlu0 %v1675, 8
  %v2092 = vpop.permute.xlu0 %2091
  %2093 = vrot.lane.b32.xlu0 %v1676, 8
  %v2094 = vpop.permute.xlu0 %2093
  %2099 = vrot.lane.b32.xlu0 %v1880, 16
  %v2100 = vpop.permute.xlu0 %2099
  %2101 = vrot.lane.b32.xlu0 %v1881, 16
  %v2102 = vpop.permute.xlu0 %2101
  %2107 = vrot.lane.b32.xlu0 %v2085, 24
  %v2108 = vpop.permute.xlu0 %2107
  %2109 = vrot.lane.b32.xlu0 %v2086, 24
  %v2110 = vpop.permute.xlu0 %2109
  %v2113 = vsel %vm224, %v1471, %v2092
  %v2114 = vsel %vm224, %v1472, %v2094
  %v2115 = vsel %vm1067, %v2113, %v2100
  %v2116 = vsel %vm1067, %v2114, %v2102
  %v2117 = vsel %vm1070, %v2115, %v2108
  %v2118 = vsel %vm1070, %v2116, %v2110
  %v2119 = vsel %vm1073, %v2088, -inf
  %2120 = vmax.xlane.f32.xlu0 %v2119
  %v2121 = vpop.xlane.xlu0 %2120
  %vm2122 = vcmp.ge.f32.partialorder %v2088, %v2121
  %v2123 = vsel %vm2122, %v1079, 8
  %v2124 = vsel %vm1073, %v2123, 2147483647
  %v2125 = vand.u32 %v2124, 65535
  %v2126 = vshra.s32 %v2124, 16
  %v2127 = vcvt.s32.f32 %v2125
  %v2128 = vcvt.s32.f32 %v2126
  %2129 = vmin.xlane.f32.xlu0 %v2128
  %v2130 = vpop.xlane.xlu0 %2129
  %vm2131 = vcmp.eq.f32.partialorder %v2128, %v2130
  %v2132 = vsel %vm2131, %v2127, inf
  %2133 = vmin.xlane.f32.xlu0 %v2132
  %v2134 = vpop.xlane.xlu0 %2133
  %v2135 = vcvt.f32.s32 %v2134
  %v2136 = vcvt.f32.s32 %v2130
  %v2137 = vshll.u32 %v2136, 16
  %v2138 = vadd.s32 %v2137, %v2135
  %vm2139 = vcmp.eq.s32.totalorder %v209, %v2138
  %v2140 = vsel %vm2139, 1.0, 0.0
  %2142 = vrot.lane.b32.xlu0 %v2088, 127
  %v2143 = vpop.permute.xlu0 %2142
  %v2145 = vsel %vm2139, -1.0, %v2143
  %v2146 = vsel %vm1103, %v2145, -inf
  %2147 = vmax.xlane.f32.xlu0 %v2146
  %v2148 = vpop.xlane.xlu0 %2147
  %vm2149 = vcmp.ge.f32.partialorder %v2145, %v2148
  %v2150 = vsel %vm2149, %v209, 8
  %v2151 = vsel %vm1103, %v2150, 2147483647
  %v2152 = vand.u32 %v2151, 65535
  %v2153 = vshra.s32 %v2151, 16
  %v2154 = vcvt.s32.f32 %v2152
  %v2155 = vcvt.s32.f32 %v2153
  %2156 = vmin.xlane.f32.xlu0 %v2155
  %v2157 = vpop.xlane.xlu0 %2156
  %vm2158 = vcmp.eq.f32.partialorder %v2155, %v2157
  %v2159 = vsel %vm2158, %v2154, inf
  %2160 = vmin.xlane.f32.xlu0 %v2159
  %v2161 = vpop.xlane.xlu0 %2160
  %v2162 = vcvt.f32.s32 %v2161
  %v2163 = vcvt.f32.s32 %v2157
  %v2164 = vshll.u32 %v2163, 16
  %v2165 = vadd.s32 %v2164, %v2162
  %vm2166 = vcmp.eq.s32.totalorder %v209, %v2165
  %v2167 = vsel %vm2166, 1.0, %v2140
  %v2168 = vsel %vm2166, -1.0, %v2145
  %v2169 = vsel %vm1103, %v2168, -inf
  %2170 = vmax.xlane.f32.xlu0 %v2169
  %v2171 = vpop.xlane.xlu0 %2170
  %vm2172 = vcmp.ge.f32.partialorder %v2168, %v2171
  %v2173 = vsel %vm2172, %v209, 8
  %v2174 = vsel %vm1103, %v2173, 2147483647
  %v2175 = vand.u32 %v2174, 65535
  %v2176 = vshra.s32 %v2174, 16
  %v2177 = vcvt.s32.f32 %v2175
  %v2178 = vcvt.s32.f32 %v2176
  %2179 = vmin.xlane.f32.xlu0 %v2178
  %v2180 = vpop.xlane.xlu0 %2179
  %vm2181 = vcmp.eq.f32.partialorder %v2178, %v2180
  %v2182 = vsel %vm2181, %v2177, inf
  %2183 = vmin.xlane.f32.xlu0 %v2182
  %v2184 = vpop.xlane.xlu0 %2183
  %v2185 = vcvt.f32.s32 %v2184
  %v2186 = vcvt.f32.s32 %v2180
  %v2187 = vshll.u32 %v2186, 16
  %v2188 = vadd.s32 %v2187, %v2185
  %vm2189 = vcmp.eq.s32.totalorder %v209, %v2188
  %v2190 = vsel %vm2189, 1.0, %v2167
  %v2191 = vsel %vm2189, -1.0, %v2168
  %v2192 = vsel %vm1103, %v2191, -inf
  %2193 = vmax.xlane.f32.xlu0 %v2192
  %v2194 = vpop.xlane.xlu0 %2193
  %vm2195 = vcmp.ge.f32.partialorder %v2191, %v2194
  %v2196 = vsel %vm2195, %v209, 8
  %v2197 = vsel %vm1103, %v2196, 2147483647
  %v2198 = vand.u32 %v2197, 65535
  %v2199 = vshra.s32 %v2197, 16
  %v2200 = vcvt.s32.f32 %v2198
  %v2201 = vcvt.s32.f32 %v2199
  %2202 = vmin.xlane.f32.xlu0 %v2201
  %v2203 = vpop.xlane.xlu0 %2202
  %vm2204 = vcmp.eq.f32.partialorder %v2201, %v2203
  %v2205 = vsel %vm2204, %v2200, inf
  %2206 = vmin.xlane.f32.xlu0 %v2205
  %v2207 = vpop.xlane.xlu0 %2206
  %v2208 = vcvt.f32.s32 %v2207
  %v2209 = vcvt.f32.s32 %v2203
  %v2210 = vshll.u32 %v2209, 16
  %v2211 = vadd.s32 %v2210, %v2208
  %vm2212 = vcmp.eq.s32.totalorder %v209, %v2211
  %v2213 = vsel %vm2212, 1.0, %v2190
  %v2215 = vsel %vm224, %v2213, 0
  %2217 = vmatprep.subr.mxu0 0.0
  %2218 = vmatpush1.msra.mxu0 %v214
  %2219 = vmatprep.subr.mxu0 0.0
  %2220 = vmatpush1.msra.mxu0 0.0
  %2221 = vmatprep.subr.mxu0 0.0
  %2222 = vmatpush1.msra.mxu0 0.0
  %2223 = vmatprep.subr.mxu0 0.0
  %2224 = vmatpush1.msra.mxu0 0.0
  %2225 = vmatprep.subr.mxu0 0.0
  %2226 = vmatpush1.msra.mxu0 0.0
  %2227 = vmatprep.subr.mxu0 0.0
  %2228 = vmatpush1.msra.mxu0 0.0
  %2229 = vmatprep.subr.mxu0 0.0
  %2230 = vmatpush1.msra.mxu0 0.0
  %2231 = vmatprep.subr.mxu0 0.0
  %2232 = vmatpush1.msra.mxu0 0.0
  %2233 = vmatprep.subr.mxu0 0.0
  %2234 = vmatpush1.msra.mxu0 0.0
  %2235 = vmatprep.subr.mxu0 0.0
  %2236 = vmatpush1.msra.mxu0 0.0
  %2237 = vmatprep.subr.mxu0 0.0
  %2238 = vmatpush1.msra.mxu0 0.0
  %2239 = vmatprep.subr.mxu0 0.0
  %2240 = vmatpush1.msra.mxu0 0.0
  %2241 = vmatprep.subr.mxu0 0.0
  %2242 = vmatpush1.msra.mxu0 0.0
  %2243 = vmatprep.subr.mxu0 0.0
  %2244 = vmatpush1.msra.mxu0 0.0
  %2245 = vmatprep.subr.mxu0 0.0
  %2246 = vmatpush1.msra.mxu0 0.0
  %2247 = vmatprep.subr.mxu0 0.0
  %2248 = vmatpush1.msra.mxu0 0.0
  %2249 = vmatprep.subr.mxu0 0.0
  %2250 = vmatpush1.msra.mxu0 0.0
  %2251 = vmatprep.subr.mxu0 0.0
  %2252 = vmatpush1.msra.mxu0 0.0
  %2253 = vmatprep.subr.mxu0 0.0
  %2254 = vmatpush1.msra.mxu0 0.0
  %2255 = vmatprep.subr.mxu0 0.0
  %2256 = vmatpush1.msra.mxu0 0.0
  %2257 = vmatprep.subr.mxu0 0.0
  %2258 = vmatpush1.msra.mxu0 0.0
  %2259 = vmatprep.subr.mxu0 0.0
  %2260 = vmatpush1.msra.mxu0 0.0
  %2261 = vmatprep.subr.mxu0 0.0
  %2262 = vmatpush1.msra.mxu0 0.0
  %2263 = vmatprep.subr.mxu0 0.0
  %2264 = vmatpush1.msra.mxu0 0.0
  %2265 = vmatprep.subr.mxu0 0.0
  %2266 = vmatpush1.msra.mxu0 0.0
  %2267 = vmatprep.subr.mxu0 0.0
  %2268 = vmatpush1.msra.mxu0 0.0
  %2269 = vmatprep.subr.mxu0 0.0
  %2270 = vmatpush1.msra.mxu0 0.0
  %2271 = vmatprep.subr.mxu0 0.0
  %2272 = vmatpush1.msra.mxu0 0.0
  %2273 = vmatprep.subr.mxu0 0.0
  %2274 = vmatpush1.msra.mxu0 0.0
  %2275 = vmatprep.subr.mxu0 0.0
  %2276 = vmatpush1.msra.mxu0 0.0
  %2277 = vmatprep.subr.mxu0 0.0
  %2278 = vmatpush1.msra.mxu0 0.0
  %2279 = vmatprep.subr.mxu0 0.0
  %2280 = vmatpush1.msra.mxu0 0.0
  %2281 = vmatprep.mubr.f32.mxu0 0.0
  %2282 = vmatmul.mubr.f32.gmra.mrb[0].mxu0 %v2215
  %v2283 = vpop.f32.mrb[0].mxu0
  %v2284 = vadd.f32 0.0, %v2283
  %v2285 = vpop.f32.mrb[0].mxu0
  %2286 = vdwg.mxu0
  %v2287 = vcvt.f32.s32.to.zero.pseudo %v2284
  %v2288 = vlaneseq
  %v2289 = vshrl.u32 %v2288, 7
  %v2290 = vsub.s32 0, %v2289
  %v2291 = vrot.slane %v2213, %v2290
  %vm2292 = vcmp.gt.f32.partialorder %v2291, 0.5
  %v2293 = vlaneseq
  %v2294 = vshrl.u32 %v2293, 7
  %v2295 = vsub.s32 0, %v2294
  %v2296 = vrot.slane %v2287, %v2295
  %v2297 = vadd.s32 %v2296, 1
  %vm2298 = vcmp.eq.s32.totalorder %v2297, %v211
  %vm2299 = vmand %vm2298, %vm2292
  %v2300 = vsel %vm2299, 1.0, 0.0
  %2302 = vrot.lane.b32.xlu0 %v2300, 1
  %v2303 = vpop.permute.xlu0 %2302
  %v2305 = vsel %vm1263, %v217, %v2303
  %v2308 = vrot.slane %v2117, 7
  %v2309 = vrot.slane %v2118, 7
  %v2310 = vsel %vm345, %v2308, %v2309
  %v2312 = vsel %vm345, %v1072, %v2308
  %v2313 = vld [vmem:[%s4] sm:$0xff]
  %v2314 = vld [vmem:[%s4 + $0x8] sm:$0xff]
  %v2315 = vld [vmem:[%s4 + $0x10] sm:$0xff]
  %v2316 = vld [vmem:[%s4 + $0x18] sm:$0xff]
  %v2317 = vld [vmem:[%s5] sm:$0x1]
  %v2319 = vlaneseq
  %v2320 = vshrl.u32 %v2319, 7
  %v2321 = vsub.s32 0, %v2320
  %v2322 = vrot.slane %v2317, %v2321
  %v2325 = vsel %vm52, %v1071, 0
  %v2328 = vsel %vm52, %v2312, 0
  %v2330 = vsel %vm52, %v2310, 0
  %2332 = vmatprep.subr.mxu0 0.0
  %2333 = vmatpush1.msra.mxu0 %v2313
  %2334 = vmatprep.subr.mxu0 0.0
  %2335 = vmatpush1.msra.mxu0 %v2314
  %2336 = vmatprep.subr.mxu0 0.0
  %2337 = vmatpush1.msra.mxu0 %v2315
  %2338 = vmatprep.subr.mxu0 0.0
  %2339 = vmatpush1.msra.mxu0 %v2316
  %2340 = vmatprep.subr.mxu0 0.0
  %2341 = vmatpush1.msra.mxu0 0.0
  %2342 = vmatprep.subr.mxu0 0.0
  %2343 = vmatpush1.msra.mxu0 0.0
  %2344 = vmatprep.subr.mxu0 0.0
  %2345 = vmatpush1.msra.mxu0 0.0
  %2346 = vmatprep.subr.mxu0 0.0
  %2347 = vmatpush1.msra.mxu0 0.0
  %2348 = vmatprep.subr.mxu0 0.0
  %2349 = vmatpush1.msra.mxu0 0.0
  %2350 = vmatprep.subr.mxu0 0.0
  %2351 = vmatpush1.msra.mxu0 0.0
  %2352 = vmatprep.subr.mxu0 0.0
  %2353 = vmatpush1.msra.mxu0 0.0
  %2354 = vmatprep.subr.mxu0 0.0
  %2355 = vmatpush1.msra.mxu0 0.0
  %2356 = vmatprep.subr.mxu0 0.0
  %2357 = vmatpush1.msra.mxu0 0.0
  %2358 = vmatprep.subr.mxu0 0.0
  %2359 = vmatpush1.msra.mxu0 0.0
  %2360 = vmatprep.subr.mxu0 0.0
  %2361 = vmatpush1.msra.mxu0 0.0
  %2362 = vmatprep.subr.mxu0 0.0
  %2363 = vmatpush1.msra.mxu0 0.0
  %2364 = vmatprep.subr.mxu0 0.0
  %2365 = vmatpush1.msra.mxu0 0.0
  %2366 = vmatprep.subr.mxu0 0.0
  %2367 = vmatpush1.msra.mxu0 0.0
  %2368 = vmatprep.subr.mxu0 0.0
  %2369 = vmatpush1.msra.mxu0 0.0
  %2370 = vmatprep.subr.mxu0 0.0
  %2371 = vmatpush1.msra.mxu0 0.0
  %2372 = vmatprep.subr.mxu0 0.0
  %2373 = vmatpush1.msra.mxu0 0.0
  %2374 = vmatprep.subr.mxu0 0.0
  %2375 = vmatpush1.msra.mxu0 0.0
  %2376 = vmatprep.subr.mxu0 0.0
  %2377 = vmatpush1.msra.mxu0 0.0
  %2378 = vmatprep.subr.mxu0 0.0
  %2379 = vmatpush1.msra.mxu0 0.0
  %2380 = vmatprep.subr.mxu0 0.0
  %2381 = vmatpush1.msra.mxu0 0.0
  %2382 = vmatprep.subr.mxu0 0.0
  %2383 = vmatpush1.msra.mxu0 0.0
  %2384 = vmatprep.subr.mxu0 0.0
  %2385 = vmatpush1.msra.mxu0 0.0
  %2386 = vmatprep.subr.mxu0 0.0
  %2387 = vmatpush1.msra.mxu0 0.0
  %2388 = vmatprep.subr.mxu0 0.0
  %2389 = vmatpush1.msra.mxu0 0.0
  %2390 = vmatprep.subr.mxu0 0.0
  %2391 = vmatpush1.msra.mxu0 0.0
  %2392 = vmatprep.subr.mxu0 0.0
  %2393 = vmatpush1.msra.mxu0 0.0
  %2394 = vmatprep.subr.mxu0 0.0
  %2395 = vmatpush1.msra.mxu0 0.0
  %2396 = vmatprep.mubr.f32.mxu0 0.0
  %2397 = vmatmul.mubr.f32.gmra.mrb[0].mxu0 %v2325
  %v2398 = vpop.f32.mrb[0].mxu0
  %v2399 = vadd.f32 %v2322, %v2398
  %v2400 = vpop.f32.mrb[0].mxu0
  %2401 = vmatprep.mubr.f32.mxu0 0.0
  %2402 = vmatmul.mubr.f32.gmra.mrb[0].mxu0 %v2328
  %v2403 = vpop.f32.mrb[0].mxu0
  %v2404 = vadd.f32 %v2322, %v2403
  %v2405 = vpop.f32.mrb[0].mxu0
  %2406 = vmatprep.mubr.f32.mxu0 0.0
  %2407 = vmatmul.mubr.f32.gmra.mrb[0].mxu0 %v2330
  %v2408 = vpop.f32.mrb[0].mxu0
  %v2409 = vadd.f32 %v2322, %v2408
  %v2410 = vpop.f32.mrb[0].mxu0
  %2411 = vdwg.mxu0
  %v2412 = vadd.f32 %v2399, %v47
  %v2413 = vadd.f32 %v2404, %v48
  %v2414 = vadd.f32 %v2409, %v49
  %v2416 = vsel %vm310, %v1264, 0
  %v2419 = vsel %vm345, %v2413, 0
  %2421 = vmatprep.subr.mxu0 0.0
  %2422 = vmatpush1.msra.mxu0 %v2412
  %2423 = vmatprep.subr.mxu0 0.0
  %2424 = vmatpush1.msra.mxu0 %v2419
  %2425 = vmatprep.subr.mxu0 0.0
  %2426 = vmatpush1.msra.mxu0 0.0
  %2427 = vmatprep.subr.mxu0 0.0
  %2428 = vmatpush1.msra.mxu0 0.0
  %2429 = vmatprep.subr.mxu0 0.0
  %2430 = vmatpush1.msra.mxu0 0.0
  %2431 = vmatprep.subr.mxu0 0.0
  %2432 = vmatpush1.msra.mxu0 0.0
  %2433 = vmatprep.subr.mxu0 0.0
  %2434 = vmatpush1.msra.mxu0 0.0
  %2435 = vmatprep.subr.mxu0 0.0
  %2436 = vmatpush1.msra.mxu0 0.0
  %2437 = vmatprep.subr.mxu0 0.0
  %2438 = vmatpush1.msra.mxu0 0.0
  %2439 = vmatprep.subr.mxu0 0.0
  %2440 = vmatpush1.msra.mxu0 0.0
  %2441 = vmatprep.subr.mxu0 0.0
  %2442 = vmatpush1.msra.mxu0 0.0
  %2443 = vmatprep.subr.mxu0 0.0
  %2444 = vmatpush1.msra.mxu0 0.0
  %2445 = vmatprep.subr.mxu0 0.0
  %2446 = vmatpush1.msra.mxu0 0.0
  %2447 = vmatprep.subr.mxu0 0.0
  %2448 = vmatpush1.msra.mxu0 0.0
  %2449 = vmatprep.subr.mxu0 0.0
  %2450 = vmatpush1.msra.mxu0 0.0
  %2451 = vmatprep.subr.mxu0 0.0
  %2452 = vmatpush1.msra.mxu0 0.0
  %2453 = vmatprep.subr.mxu0 0.0
  %2454 = vmatpush1.msra.mxu0 0.0
  %2455 = vmatprep.subr.mxu0 0.0
  %2456 = vmatpush1.msra.mxu0 0.0
  %2457 = vmatprep.subr.mxu0 0.0
  %2458 = vmatpush1.msra.mxu0 0.0
  %2459 = vmatprep.subr.mxu0 0.0
  %2460 = vmatpush1.msra.mxu0 0.0
  %2461 = vmatprep.subr.mxu0 0.0
  %2462 = vmatpush1.msra.mxu0 0.0
  %2463 = vmatprep.subr.mxu0 0.0
  %2464 = vmatpush1.msra.mxu0 0.0
  %2465 = vmatprep.subr.mxu0 0.0
  %2466 = vmatpush1.msra.mxu0 0.0
  %2467 = vmatprep.subr.mxu0 0.0
  %2468 = vmatpush1.msra.mxu0 0.0
  %2469 = vmatprep.subr.mxu0 0.0
  %2470 = vmatpush1.msra.mxu0 0.0
  %2471 = vmatprep.subr.mxu0 0.0
  %2472 = vmatpush1.msra.mxu0 0.0
  %2473 = vmatprep.subr.mxu0 0.0
  %2474 = vmatpush1.msra.mxu0 0.0
  %2475 = vmatprep.subr.mxu0 0.0
  %2476 = vmatpush1.msra.mxu0 0.0
  %2477 = vmatprep.subr.mxu0 0.0
  %2478 = vmatpush1.msra.mxu0 0.0
  %2479 = vmatprep.subr.mxu0 0.0
  %2480 = vmatpush1.msra.mxu0 0.0
  %2481 = vmatprep.subr.mxu0 0.0
  %2482 = vmatpush1.msra.mxu0 0.0
  %2483 = vmatprep.subr.mxu0 0.0
  %2484 = vmatpush1.msra.mxu0 0.0
  %2485 = vmatprep.mubr.f32.mxu0 0.0
  %2486 = vmatmul.mubr.f32.gmra.mrb[0].mxu0 %v2416
  %v2487 = vpop.f32.mrb[0].mxu0
  %v2488 = vadd.f32 0.0, %v2487
  %v2489 = vpop.f32.mrb[0].mxu0
  %2490 = vdwg.mxu0
  %v2492 = vrot.slane %v2413, 1
  %v2493 = vrot.slane %v2414, 1
  %v2494 = vsel %vm1266, %v2492, %v2493
  %v2497 = vsel %vm310, %v2305, 0
  %v2499 = vsel %vm345, %v2493, 0
  %2501 = vmatprep.subr.mxu0 0.0
  %2502 = vmatpush1.msra.mxu0 %v2494
  %2503 = vmatprep.subr.mxu0 0.0
  %2504 = vmatpush1.msra.mxu0 %v2499
  %2505 = vmatprep.subr.mxu0 0.0
  %2506 = vmatpush1.msra.mxu0 0.0
  %2507 = vmatprep.subr.mxu0 0.0
  %2508 = vmatpush1.msra.mxu0 0.0
  %2509 = vmatprep.subr.mxu0 0.0
  %2510 = vmatpush1.msra.mxu0 0.0
  %2511 = vmatprep.subr.mxu0 0.0
  %2512 = vmatpush1.msra.mxu0 0.0
  %2513 = vmatprep.subr.mxu0 0.0
  %2514 = vmatpush1.msra.mxu0 0.0
  %2515 = vmatprep.subr.mxu0 0.0
  %2516 = vmatpush1.msra.mxu0 0.0
  %2517 = vmatprep.subr.mxu0 0.0
  %2518 = vmatpush1.msra.mxu0 0.0
  %2519 = vmatprep.subr.mxu0 0.0
  %2520 = vmatpush1.msra.mxu0 0.0
  %2521 = vmatprep.subr.mxu0 0.0
  %2522 = vmatpush1.msra.mxu0 0.0
  %2523 = vmatprep.subr.mxu0 0.0
  %2524 = vmatpush1.msra.mxu0 0.0
  %2525 = vmatprep.subr.mxu0 0.0
  %2526 = vmatpush1.msra.mxu0 0.0
  %2527 = vmatprep.subr.mxu0 0.0
  %2528 = vmatpush1.msra.mxu0 0.0
  %2529 = vmatprep.subr.mxu0 0.0
  %2530 = vmatpush1.msra.mxu0 0.0
  %2531 = vmatprep.subr.mxu0 0.0
  %2532 = vmatpush1.msra.mxu0 0.0
  %2533 = vmatprep.subr.mxu0 0.0
  %2534 = vmatpush1.msra.mxu0 0.0
  %2535 = vmatprep.subr.mxu0 0.0
  %2536 = vmatpush1.msra.mxu0 0.0
  %2537 = vmatprep.subr.mxu0 0.0
  %2538 = vmatpush1.msra.mxu0 0.0
  %2539 = vmatprep.subr.mxu0 0.0
  %2540 = vmatpush1.msra.mxu0 0.0
  %2541 = vmatprep.subr.mxu0 0.0
  %2542 = vmatpush1.msra.mxu0 0.0
  %2543 = vmatprep.subr.mxu0 0.0
  %2544 = vmatpush1.msra.mxu0 0.0
  %2545 = vmatprep.subr.mxu0 0.0
  %2546 = vmatpush1.msra.mxu0 0.0
  %2547 = vmatprep.subr.mxu0 0.0
  %2548 = vmatpush1.msra.mxu0 0.0
  %2549 = vmatprep.subr.mxu0 0.0
  %2550 = vmatpush1.msra.mxu0 0.0
  %2551 = vmatprep.subr.mxu0 0.0
  %2552 = vmatpush1.msra.mxu0 0.0
  %2553 = vmatprep.subr.mxu0 0.0
  %2554 = vmatpush1.msra.mxu0 0.0
  %2555 = vmatprep.subr.mxu0 0.0
  %2556 = vmatpush1.msra.mxu0 0.0
  %2557 = vmatprep.subr.mxu0 0.0
  %2558 = vmatpush1.msra.mxu0 0.0
  %2559 = vmatprep.subr.mxu0 0.0
  %2560 = vmatpush1.msra.mxu0 0.0
  %2561 = vmatprep.subr.mxu0 0.0
  %2562 = vmatpush1.msra.mxu0 0.0
  %2563 = vmatprep.subr.mxu0 0.0
  %2564 = vmatpush1.msra.mxu0 0.0
  %2565 = vmatprep.mubr.f32.mxu0 0.0
  %2566 = vmatmul.mubr.f32.gmra.mrb[0].mxu0 %v2497
  %v2567 = vpop.f32.mrb[0].mxu0
  %v2568 = vadd.f32 0.0, %v2567
  %v2569 = vpop.f32.mrb[0].mxu0
  %2570 = vdwg.mxu0
  %v2572 = vrot.slane %v2568, 3
  %vm2574 = vcmask 1044480
  %v2575 = vsel %vm2574, %v2488, %v2572
  %v2576 = vld [vmem:[%s6] sm:$0x1]
  %v2577 = vld [vmem:[%s7] sm:$0x1]
  %v2578 = vsel %vm52, %v2575, 0.0
  %2579 = vadd.xlane.f32.xlu0 %v2578
  %v2580 = vpop.xlane.xlu0 %2579
  %v2581 = vsel %vm59, %v2572, 0.0
  %2582 = vadd.xlane.f32.xlu0 %v2581
  %v2583 = vpop.xlane.xlu0 %2582
  %v2584 = vmul.f32 %v2580, %v63
  %v2585 = vmul.f32 %v2583, %v63
  %v2586 = vsub.f32 %v2575, %v2584
  %v2587 = vsub.f32 %v2572, %v2585
  %v2588 = vmul.f32 %v2586, %v2586
  %v2589 = vmul.f32 %v2587, %v2587
  %v2590 = vsel %vm52, %v2588, 0.0
  %2591 = vadd.xlane.f32.xlu0 %v2590
  %v2592 = vpop.xlane.xlu0 %2591
  %v2593 = vsel %vm59, %v2589, 0.0
  %2594 = vadd.xlane.f32.xlu0 %v2593
  %v2595 = vpop.xlane.xlu0 %2594
  %v2596 = vmul.f32 %v2592, %v63
  %v2597 = vmul.f32 %v2595, %v63
  %v2598 = vadd.f32 %v2596, 1e-05
  %v2599 = vadd.f32 %v2597, 1e-05
  %v2600 = vrsqrt.pop %v2598
  %v2601 = vrsqrt.pop %v2599
  %v2602 = vmul.f32 %v2586, %v2600
  %v2603 = vmul.f32 %v2587, %v2601
  %v2605 = vlaneseq
  %v2606 = vshrl.u32 %v2605, 7
  %v2607 = vsub.s32 0, %v2606
  %v2608 = vrot.slane %v2576, %v2607
  %v2610 = vmul.f32 %v2602, %v2608
  %v2611 = vmul.f32 %v2603, %v2608
  %v2613 = vlaneseq
  %v2614 = vshrl.u32 %v2613, 7
  %v2615 = vsub.s32 0, %v2614
  %v2616 = vrot.slane %v2577, %v2615
  %v2618 = vadd.f32 %v2610, %v2616
  %v2619 = vadd.f32 %v2611, %v2616
  %v2620 = vld [vmem:[%s8] sm:$0xff]
  %v2621 = vld [vmem:[%s8 + $0x8] sm:$0xff]
  %v2622 = vld [vmem:[%s8 + $0x10] sm:$0xff]
  %v2623 = vld [vmem:[%s8 + $0x18] sm:$0xff]
  %v2624 = vld [vmem:[%s9] sm:$0x1]
  %v2626 = vlaneseq
  %v2627 = vshrl.u32 %v2626, 7
  %v2628 = vsub.s32 0, %v2627
  %v2629 = vrot.slane %v2624, %v2628
  %v2632 = vsel %vm52, %v2618, 0
  %v2635 = vsel %vm52, %v2619, 0
  %2637 = vmatprep.subr.mxu0 0.0
  %2638 = vmatpush1.msra.mxu0 %v2620
  %2639 = vmatprep.subr.mxu0 0.0
  %2640 = vmatpush1.msra.mxu0 %v2621
  %2641 = vmatprep.subr.mxu0 0.0
  %2642 = vmatpush1.msra.mxu0 %v2622
  %2643 = vmatprep.subr.mxu0 0.0
  %2644 = vmatpush1.msra.mxu0 %v2623
  %2645 = vmatprep.subr.mxu0 0.0
  %2646 = vmatpush1.msra.mxu0 0.0
  %2647 = vmatprep.subr.mxu0 0.0
  %2648 = vmatpush1.msra.mxu0 0.0
  %2649 = vmatprep.subr.mxu0 0.0
  %2650 = vmatpush1.msra.mxu0 0.0
  %2651 = vmatprep.subr.mxu0 0.0
  %2652 = vmatpush1.msra.mxu0 0.0
  %2653 = vmatprep.subr.mxu0 0.0
  %2654 = vmatpush1.msra.mxu0 0.0
  %2655 = vmatprep.subr.mxu0 0.0
  %2656 = vmatpush1.msra.mxu0 0.0
  %2657 = vmatprep.subr.mxu0 0.0
  %2658 = vmatpush1.msra.mxu0 0.0
  %2659 = vmatprep.subr.mxu0 0.0
  %2660 = vmatpush1.msra.mxu0 0.0
  %2661 = vmatprep.subr.mxu0 0.0
  %2662 = vmatpush1.msra.mxu0 0.0
  %2663 = vmatprep.subr.mxu0 0.0
  %2664 = vmatpush1.msra.mxu0 0.0
  %2665 = vmatprep.subr.mxu0 0.0
  %2666 = vmatpush1.msra.mxu0 0.0
  %2667 = vmatprep.subr.mxu0 0.0
  %2668 = vmatpush1.msra.mxu0 0.0
  %2669 = vmatprep.subr.mxu0 0.0
  %2670 = vmatpush1.msra.mxu0 0.0
  %2671 = vmatprep.subr.mxu0 0.0
  %2672 = vmatpush1.msra.mxu0 0.0
  %2673 = vmatprep.subr.mxu0 0.0
  %2674 = vmatpush1.msra.mxu0 0.0
  %2675 = vmatprep.subr.mxu0 0.0
  %2676 = vmatpush1.msra.mxu0 0.0
  %2677 = vmatprep.subr.mxu0 0.0
  %2678 = vmatpush1.msra.mxu0 0.0
  %2679 = vmatprep.subr.mxu0 0.0
  %2680 = vmatpush1.msra.mxu0 0.0
  %2681 = vmatprep.subr.mxu0 0.0
  %2682 = vmatpush1.msra.mxu0 0.0
  %2683 = vmatprep.subr.mxu0 0.0
  %2684 = vmatpush1.msra.mxu0 0.0
  %2685 = vmatprep.subr.mxu0 0.0
  %2686 = vmatpush1.msra.mxu0 0.0
  %2687 = vmatprep.subr.mxu0 0.0
  %2688 = vmatpush1.msra.mxu0 0.0
  %2689 = vmatprep.subr.mxu0 0.0
  %2690 = vmatpush1.msra.mxu0 0.0
  %2691 = vmatprep.subr.mxu0 0.0
  %2692 = vmatpush1.msra.mxu0 0.0
  %2693 = vmatprep.subr.mxu0 0.0
  %2694 = vmatpush1.msra.mxu0 0.0
  %2695 = vmatprep.subr.mxu0 0.0
  %2696 = vmatpush1.msra.mxu0 0.0
  %2697 = vmatprep.subr.mxu0 0.0
  %2698 = vmatpush1.msra.mxu0 0.0
  %2699 = vmatprep.subr.mxu0 0.0
  %2700 = vmatpush1.msra.mxu0 0.0
  %2701 = vmatprep.mubr.f32.mxu0 0.0
  %2702 = vmatmul.mubr.f32.gmra.mrb[0].mxu0 %v2632
  %v2703 = vpop.f32.mrb[0].mxu0
  %v2704 = vadd.f32 %v2629, %v2703
  %v2705 = vpop.f32.mrb[0].mxu0
  %2706 = vmatprep.mubr.f32.mxu0 0.0
  %2707 = vmatmul.mubr.f32.gmra.mrb[0].mxu0 %v2635
  %v2708 = vpop.f32.mrb[0].mxu0
  %v2709 = vadd.f32 %v2629, %v2708
  %v2710 = vpop.f32.mrb[0].mxu0
  %2711 = vdwg.mxu0
  %v2712 = vmul.f32 %v2704, 0.5
  %v2713 = vmul.f32 %v2709, 0.5
  %v2714 = vmul.f32 %v2704, 0.70710677
  %v2715 = vmul.f32 %v2709, 0.70710677
  %v2716 = verf.f32.pop %v2714
  %v2717 = verf.f32.pop %v2715
  %v2718 = vadd.f32 %v2716, 1.0
  %v2719 = vadd.f32 %v2717, 1.0
  %v2720 = vmul.f32 %v2712, %v2718
  %v2721 = vmul.f32 %v2713, %v2719
  %v2722 = vld [vmem:[%s10] sm:$0xff]
  %v2723 = vld [vmem:[%s10 + $0x8] sm:$0xff]
  %v2724 = vld [vmem:[%s10 + $0x10] sm:$0xff]
  %v2725 = vld [vmem:[%s10 + $0x18] sm:$0xff]
  %v2726 = vld [vmem:[%s10 + $0x20] sm:$0xff]
  %v2727 = vld [vmem:[%s10 + $0x28] sm:$0xff]
  %v2728 = vld [vmem:[%s10 + $0x30] sm:$0xff]
  %v2729 = vld [vmem:[%s10 + $0x38] sm:$0xff]
  %v2730 = vld [vmem:[%s11] sm:$0x1]
  %v2732 = vlaneseq
  %v2733 = vshrl.u32 %v2732, 7
  %v2734 = vsub.s32 0, %v2733
  %v2735 = vrot.slane %v2730, %v2734
  %vm2737 = vcmask 523264
  %v2739 = vsel %vm2737, %v2720, 0
  %v2742 = vsel %vm2737, %v2721, 0
  %2744 = vmatprep.subr.mxu0 0.0
  %2745 = vmatpush1.msra.mxu0 %v2722
  %2746 = vmatprep.subr.mxu0 0.0
  %2747 = vmatpush1.msra.mxu0 %v2723
  %2748 = vmatprep.subr.mxu0 0.0
  %2749 = vmatpush1.msra.mxu0 %v2724
  %2750 = vmatprep.subr.mxu0 0.0
  %2751 = vmatpush1.msra.mxu0 %v2725
  %2752 = vmatprep.subr.mxu0 0.0
  %2753 = vmatpush1.msra.mxu0 %v2726
  %2754 = vmatprep.subr.mxu0 0.0
  %2755 = vmatpush1.msra.mxu0 %v2727
  %2756 = vmatprep.subr.mxu0 0.0
  %2757 = vmatpush1.msra.mxu0 %v2728
  %2758 = vmatprep.subr.mxu0 0.0
  %2759 = vmatpush1.msra.mxu0 %v2729
  %2760 = vmatprep.subr.mxu0 0.0
  %2761 = vmatpush1.msra.mxu0 0.0
  %2762 = vmatprep.subr.mxu0 0.0
  %2763 = vmatpush1.msra.mxu0 0.0
  %2764 = vmatprep.subr.mxu0 0.0
  %2765 = vmatpush1.msra.mxu0 0.0
  %2766 = vmatprep.subr.mxu0 0.0
  %2767 = vmatpush1.msra.mxu0 0.0
  %2768 = vmatprep.subr.mxu0 0.0
  %2769 = vmatpush1.msra.mxu0 0.0
  %2770 = vmatprep.subr.mxu0 0.0
  %2771 = vmatpush1.msra.mxu0 0.0
  %2772 = vmatprep.subr.mxu0 0.0
  %2773 = vmatpush1.msra.mxu0 0.0
  %2774 = vmatprep.subr.mxu0 0.0
  %2775 = vmatpush1.msra.mxu0 0.0
  %2776 = vmatprep.subr.mxu0 0.0
  %2777 = vmatpush1.msra.mxu0 0.0
  %2778 = vmatprep.subr.mxu0 0.0
  %2779 = vmatpush1.msra.mxu0 0.0
  %2780 = vmatprep.subr.mxu0 0.0
  %2781 = vmatpush1.msra.mxu0 0.0
  %2782 = vmatprep.subr.mxu0 0.0
  %2783 = vmatpush1.msra.mxu0 0.0
  %2784 = vmatprep.subr.mxu0 0.0
  %2785 = vmatpush1.msra.mxu0 0.0
  %2786 = vmatprep.subr.mxu0 0.0
  %2787 = vmatpush1.msra.mxu0 0.0
  %2788 = vmatprep.subr.mxu0 0.0
  %2789 = vmatpush1.msra.mxu0 0.0
  %2790 = vmatprep.subr.mxu0 0.0
  %2791 = vmatpush1.msra.mxu0 0.0
  %2792 = vmatprep.subr.mxu0 0.0
  %2793 = vmatpush1.msra.mxu0 0.0
  %2794 = vmatprep.subr.mxu0 0.0
  %2795 = vmatpush1.msra.mxu0 0.0
  %2796 = vmatprep.subr.mxu0 0.0
  %2797 = vmatpush1.msra.mxu0 0.0
  %2798 = vmatprep.subr.mxu0 0.0
  %2799 = vmatpush1.msra.mxu0 0.0
  %2800 = vmatprep.subr.mxu0 0.0
  %2801 = vmatpush1.msra.mxu0 0.0
  %2802 = vmatprep.subr.mxu0 0.0
  %2803 = vmatpush1.msra.mxu0 0.0
  %2804 = vmatprep.subr.mxu0 0.0
  %2805 = vmatpush1.msra.mxu0 0.0
  %2806 = vmatprep.subr.mxu0 0.0
  %2807 = vmatpush1.msra.mxu0 0.0
  %2808 = vmatprep.mubr.f32.mxu0 0.0
  %2809 = vmatmul.mubr.f32.gmra.mrb[0].mxu0 %v2739
  %v2810 = vpop.f32.mrb[0].mxu0
  %v2811 = vadd.f32 %v2735, %v2810
  %v2812 = vpop.f32.mrb[0].mxu0
  %2813 = vmatprep.mubr.f32.mxu0 0.0
  %2814 = vmatmul.mubr.f32.gmra.mrb[0].mxu0 %v2742
  %v2815 = vpop.f32.mrb[0].mxu0
  %v2816 = vadd.f32 %v2735, %v2815
  %v2817 = vpop.f32.mrb[0].mxu0
  %2818 = vdwg.mxu0
  %v2819 = vadd.f32 %v2811, %v2575
  %v2820 = vadd.f32 %v2816, %v2572
  %v2821 = vld [vmem:[%s12] sm:$0x1]
  %v2822 = vld [vmem:[%s13] sm:$0x1]
  %v2823 = vsel %vm52, %v2819, 0.0
  %2824 = vadd.xlane.f32.xlu0 %v2823
  %v2825 = vpop.xlane.xlu0 %2824
  %v2826 = vsel %vm59, %v2820, 0.0
  %2827 = vadd.xlane.f32.xlu0 %v2826
  %v2828 = vpop.xlane.xlu0 %2827
  %v2829 = vmul.f32 %v2825, %v63
  %v2830 = vmul.f32 %v2828, %v63
  %v2831 = vsub.f32 %v2819, %v2829
  %v2832 = vsub.f32 %v2820, %v2830
  %v2833 = vmul.f32 %v2831, %v2831
  %v2834 = vmul.f32 %v2832, %v2832
  %v2835 = vsel %vm52, %v2833, 0.0
  %2836 = vadd.xlane.f32.xlu0 %v2835
  %v2837 = vpop.xlane.xlu0 %2836
  %v2838 = vsel %vm59, %v2834, 0.0
  %2839 = vadd.xlane.f32.xlu0 %v2838
  %v2840 = vpop.xlane.xlu0 %2839
  %v2841 = vmul.f32 %v2837, %v63
  %v2842 = vmul.f32 %v2840, %v63
  %v2843 = vadd.f32 %v2841, 1e-05
  %v2844 = vadd.f32 %v2842, 1e-05
  %v2845 = vrsqrt.pop %v2843
  %v2846 = vrsqrt.pop %v2844
  %v2847 = vmul.f32 %v2831, %v2845
  %v2848 = vmul.f32 %v2832, %v2846
  %v2850 = vlaneseq
  %v2851 = vshrl.u32 %v2850, 7
  %v2852 = vsub.s32 0, %v2851
  %v2853 = vrot.slane %v2821, %v2852
  %v2855 = vmul.f32 %v2847, %v2853
  %v2856 = vmul.f32 %v2848, %v2853
  %v2858 = vlaneseq
  %v2859 = vshrl.u32 %v2858, 7
  %v2860 = vsub.s32 0, %v2859
  %v2861 = vrot.slane %v2822, %v2860
  %v2863 = vadd.f32 %v2855, %v2861
  %v2864 = vadd.f32 %v2856, %v2861
  %2865 = vst.msk [vmem:[%s14] sm:$0xff] %vm52, %v2863
  %2866 = vst.msk [vmem:[%s14 + $0x8] sm:$0x3] %vm59, %v2864
  // Predicated region
  $region58: #{transformer_topk_forward.3} parent=0 // pred_check
    _
  $region59: #{transformer_topk_forward.3} parent=0 // pred_check_branch
    %2868 = sbr.rel (0) target = $region61
  $region60: #{transformer_topk_forward.3} parent=0 // pred_region
    _
  $region61: #{transformer_topk_forward.3} parent=0 // pred_fallthru
    _
  // Predicated region
  $region62: #{transformer_topk_forward.3} parent=0 // pred_check
    _
  $region63: #{transformer_topk_forward.3} parent=0 // pred_check_branch
    %2870 = sbr.rel (0) target = $region65
  $region64: #{transformer_topk_forward.3} parent=0 // pred_region
    _
  $region65: #{transformer_topk_forward.3} parent=0 // pred_fallthru
    _

// kernel: transformer_topk_forward.2
$region0: #{transformer_topk_forward.2}
  #allocation0 [shape = 'u32[]', space=smem, size = 0x4, offset = 0x4, fixed_abs, tag = 'smem constant byte address 0x4 - core index']
  #allocation1 [shape = 'u32[144,128]{1,0:T(1,128)}', space=vmem, size = 0x12000, scoped, tag = 'internal scratch']
  %s0 = inlined_call_operand.vmem [shape: f32[34,32], index: 0, kind: input, shape index: {}]
  %s1 = inlined_call_operand.vmem [shape: f32[1,32], index: 1, kind: input, shape index: {}]
  %s2 = inlined_call_operand.vmem [shape: f32[1,32], index: 2, kind: input, shape index: {}]
  %s3 = inlined_call_operand.vmem [shape: f32[32,96], index: 3, kind: input, shape index: {}]
  %s4 = inlined_call_operand.vmem [shape: f32[32,32], index: 4, kind: input, shape index: {}]
  %s5 = inlined_call_operand.vmem [shape: f32[1,32], index: 5, kind: input, shape index: {}]
  %s6 = inlined_call_operand.vmem [shape: f32[1,32], index: 6, kind: input, shape index: {}]
  %s7 = inlined_call_operand.vmem [shape: f32[1,32], index: 7, kind: input, shape index: {}]
  %s8 = inlined_call_operand.vmem [shape: f32[32,64], index: 8, kind: input, shape index: {}]
  %s9 = inlined_call_operand.vmem [shape: f32[1,64], index: 9, kind: input, shape index: {}]
  %s10 = inlined_call_operand.vmem [shape: f32[64,32], index: 10, kind: input, shape index: {}]
  %s11 = inlined_call_operand.vmem [shape: f32[1,32], index: 11, kind: input, shape index: {}]
  %s12 = inlined_call_operand.vmem [shape: f32[1,32], index: 12, kind: input, shape index: {}]
  %s13 = inlined_call_operand.vmem [shape: f32[1,32], index: 13, kind: input, shape index: {}]
  %s14 = inlined_call_operand.vmem [shape: f32[18,32], index: 14, kind: output, shape index: {}]
  %s15 = sld [smem:[#allocation0]]
  $region66: #{transformer_topk_forward.2} parent=0
    _
  %s17 = ssub.s32 1, %s15
  %s18 = scalar_select 0, %s17, %s15
  // Predicated region
  $region2: #{transformer_topk_forward.2} parent=0 // pred_check
    _
  $region3: #{transformer_topk_forward.2} parent=0 // pred_check_branch
    %20 = sbr.rel (0) target = $region5
  $region4: #{transformer_topk_forward.2} parent=0 // pred_region
    _
  $region5: #{transformer_topk_forward.2} parent=0 // pred_fallthru
    _
  // Predicated region
  $region6: #{transformer_topk_forward.2} parent=0 // pred_check
    _
  $region7: #{transformer_topk_forward.2} parent=0 // pred_check_branch
    %22 = sbr.rel (0) target = $region9
  $region8: #{transformer_topk_forward.2} parent=0 // pred_region
    _
  $region9: #{transformer_topk_forward.2} parent=0 // pred_fallthru
    _
  // Predicated region
  $region10: #{transformer_topk_forward.2} parent=0 // pred_check
    _
  $region11: #{transformer_topk_forward.2} parent=0 // pred_check_branch
    %24 = sbr.rel (0) target = $region13
  $region12: #{transformer_topk_forward.2} parent=0 // pred_region
    _
  $region13: #{transformer_topk_forward.2} parent=0 // pred_fallthru
    _
  // Predicated region
  $region14: #{transformer_topk_forward.2} parent=0 // pred_check
    _
  $region15: #{transformer_topk_forward.2} parent=0 // pred_check_branch
    %26 = sbr.rel (0) target = $region17
  $region16: #{transformer_topk_forward.2} parent=0 // pred_region
    _
  $region17: #{transformer_topk_forward.2} parent=0 // pred_fallthru
    _
  // Predicated region
  $region18: #{transformer_topk_forward.2} parent=0 // pred_check
    _
  $region19: #{transformer_topk_forward.2} parent=0 // pred_check_branch
    %28 = sbr.rel (0) target = $region21
  $region20: #{transformer_topk_forward.2} parent=0 // pred_region
    _
  $region21: #{transformer_topk_forward.2} parent=0 // pred_fallthru
    _
  // Predicated region
  $region22: #{transformer_topk_forward.2} parent=0 // pred_check
    _
  $region23: #{transformer_topk_forward.2} parent=0 // pred_check_branch
    %30 = sbr.rel (0) target = $region25
  $region24: #{transformer_topk_forward.2} parent=0 // pred_region
    _
  $region25: #{transformer_topk_forward.2} parent=0 // pred_fallthru
    _
  // Predicated region
  $region26: #{transformer_topk_forward.2} parent=0 // pred_check
    _
  $region27: #{transformer_topk_forward.2} parent=0 // pred_check_branch
    %32 = sbr.rel (0) target = $region29
  $region28: #{transformer_topk_forward.2} parent=0 // pred_region
    _
  $region29: #{transformer_topk_forward.2} parent=0 // pred_fallthru
    _
  // Predicated region
  $region30: #{transformer_topk_forward.2} parent=0 // pred_check
    _
  $region31: #{transformer_topk_forward.2} parent=0 // pred_check_branch
    %34 = sbr.rel (0) target = $region33
  $region32: #{transformer_topk_forward.2} parent=0 // pred_region
    _
  $region33: #{transformer_topk_forward.2} parent=0 // pred_fallthru
    _
  // Predicated region
  $region34: #{transformer_topk_forward.2} parent=0 // pred_check
    _
  $region35: #{transformer_topk_forward.2} parent=0 // pred_check_branch
    %36 = sbr.rel (0) target = $region37
  $region36: #{transformer_topk_forward.2} parent=0 // pred_region
    _
  $region37: #{transformer_topk_forward.2} parent=0 // pred_fallthru
    _
  // Predicated region
  $region38: #{transformer_topk_forward.2} parent=0 // pred_check
    _
  $region39: #{transformer_topk_forward.2} parent=0 // pred_check_branch
    %38 = sbr.rel (0) target = $region41
  $region40: #{transformer_topk_forward.2} parent=0 // pred_region
    _
  $region41: #{transformer_topk_forward.2} parent=0 // pred_fallthru
    _
  // Predicated region
  $region42: #{transformer_topk_forward.2} parent=0 // pred_check
    _
  $region43: #{transformer_topk_forward.2} parent=0 // pred_check_branch
    %40 = sbr.rel (0) target = $region45
  $region44: #{transformer_topk_forward.2} parent=0 // pred_region
    _
  $region45: #{transformer_topk_forward.2} parent=0 // pred_fallthru
    _
  // Predicated region
  $region46: #{transformer_topk_forward.2} parent=0 // pred_check
    _
  $region47: #{transformer_topk_forward.2} parent=0 // pred_check_branch
    %42 = sbr.rel (0) target = $region49
  $region48: #{transformer_topk_forward.2} parent=0 // pred_region
    _
  $region49: #{transformer_topk_forward.2} parent=0 // pred_fallthru
    _
  // Predicated region
  $region50: #{transformer_topk_forward.2} parent=0 // pred_check
    _
  $region51: #{transformer_topk_forward.2} parent=0 // pred_check_branch
    %44 = sbr.rel (0) target = $region53
  $region52: #{transformer_topk_forward.2} parent=0 // pred_region
    _
  $region53: #{transformer_topk_forward.2} parent=0 // pred_fallthru
    _
  // Predicated region
  $region54: #{transformer_topk_forward.2} parent=0 // pred_check
    _
  $region55: #{transformer_topk_forward.2} parent=0 // pred_check_branch
    %46 = sbr.rel (0) target = $region57
  $region56: #{transformer_topk_forward.2} parent=0 // pred_region
    _
  $region57: #{transformer_topk_forward.2} parent=0 // pred_fallthru
    _
  %v47 = vld [vmem:[%s0] sm:$0xff]
  %v48 = vld [vmem:[%s0 + $0x8] sm:$0xff]
  %v49 = vld [vmem:[%s0 + $0x10] sm:$0xff]
  %v50 = vld [vmem:[%s0 + $0x18] sm:$0xff]
  %v51 = vld [vmem:[%s0 + $0x20] sm:$0x3]
  %v52 = vld [vmem:[%s1] sm:$0x1]
  %v53 = vld [vmem:[%s2] sm:$0x1]
  %vm54 = vcmask 261120
  %v55 = vsel %vm54, %v47, 0.0
  %56 = vadd.xlane.f32.xlu0 %v55
  %v57 = vpop.xlane.xlu0 %56
  %v58 = vsel %vm54, %v48, 0.0
  %59 = vadd.xlane.f32.xlu0 %v58
  %v60 = vpop.xlane.xlu0 %59
  %v61 = vsel %vm54, %v49, 0.0
  %62 = vadd.xlane.f32.xlu0 %v61
  %v63 = vpop.xlane.xlu0 %62
  %v64 = vsel %vm54, %v50, 0.0
  %65 = vadd.xlane.f32.xlu0 %v64
  %v66 = vpop.xlane.xlu0 %65
  %vm67 = vcmask 254976
  %v68 = vsel %vm67, %v51, 0.0
  %69 = vadd.xlane.f32.xlu0 %v68
  %v70 = vpop.xlane.xlu0 %69
  %v71 = vrcp.pop 32.0
  %v72 = vmul.f32 %v57, %v71
  %v73 = vmul.f32 %v60, %v71
  %v74 = vmul.f32 %v63, %v71
  %v75 = vmul.f32 %v66, %v71
  %v76 = vmul.f32 %v70, %v71
  %v77 = vsub.f32 %v47, %v72
  %v78 = vsub.f32 %v48, %v73
  %v79 = vsub.f32 %v49, %v74
  %v80 = vsub.f32 %v50, %v75
  %v81 = vsub.f32 %v51, %v76
  %v82 = vmul.f32 %v77, %v77
  %v83 = vmul.f32 %v78, %v78
  %v84 = vmul.f32 %v79, %v79
  %v85 = vmul.f32 %v80, %v80
  %v86 = vmul.f32 %v81, %v81
  %v87 = vsel %vm54, %v82, 0.0
  %88 = vadd.xlane.f32.xlu0 %v87
  %v89 = vpop.xlane.xlu0 %88
  %v90 = vsel %vm54, %v83, 0.0
  %91 = vadd.xlane.f32.xlu0 %v90
  %v92 = vpop.xlane.xlu0 %91
  %v93 = vsel %vm54, %v84, 0.0
  %94 = vadd.xlane.f32.xlu0 %v93
  %v95 = vpop.xlane.xlu0 %94
  %v96 = vsel %vm54, %v85, 0.0
  %97 = vadd.xlane.f32.xlu0 %v96
  %v98 = vpop.xlane.xlu0 %97
  %v99 = vsel %vm67, %v86, 0.0
  %100 = vadd.xlane.f32.xlu0 %v99
  %v101 = vpop.xlane.xlu0 %100
  %v102 = vmul.f32 %v89, %v71
  %v103 = vmul.f32 %v92, %v71
  %v104 = vmul.f32 %v95, %v71
  %v105 = vmul.f32 %v98, %v71
  %v106 = vmul.f32 %v101, %v71
  %v107 = vadd.f32 %v102, 1e-05
  %v108 = vadd.f32 %v103, 1e-05
  %v109 = vadd.f32 %v104, 1e-05
  %v110 = vadd.f32 %v105, 1e-05
  %v111 = vadd.f32 %v106, 1e-05
  %v112 = vrsqrt.pop %v107
  %v113 = vrsqrt.pop %v108
  %v114 = vrsqrt.pop %v109
  %v115 = vrsqrt.pop %v110
  %v116 = vrsqrt.pop %v111
  %v117 = vmul.f32 %v77, %v112
  %v118 = vmul.f32 %v78, %v113
  %v119 = vmul.f32 %v79, %v114
  %v120 = vmul.f32 %v80, %v115
  %v121 = vmul.f32 %v81, %v116
  %v123 = vlaneseq
  %v124 = vshrl.u32 %v123, 7
  %v125 = vsub.s32 0, %v124
  %v126 = vrot.slane %v52, %v125
  %v128 = vmul.f32 %v117, %v126
  %v129 = vmul.f32 %v118, %v126
  %v130 = vmul.f32 %v119, %v126
  %v131 = vmul.f32 %v120, %v126
  %v132 = vmul.f32 %v121, %v126
  %v134 = vlaneseq
  %v135 = vshrl.u32 %v134, 7
  %v136 = vsub.s32 0, %v135
  %v137 = vrot.slane %v53, %v136
  %v139 = vadd.f32 %v128, %v137
  %v140 = vadd.f32 %v129, %v137
  %v141 = vadd.f32 %v130, %v137
  %v142 = vadd.f32 %v131, %v137
  %v143 = vadd.f32 %v132, %v137
  %v144 = vld [vmem:[%s3] sm:$0xff]
  %v145 = vld [vmem:[%s3 + $0x8] sm:$0xff]
  %v146 = vld [vmem:[%s3 + $0x10] sm:$0xff]
  %v147 = vld [vmem:[%s3 + $0x18] sm:$0xff]
  %v149 = vsel %vm54, %v139, 0
  %v152 = vsel %vm54, %v140, 0
  %v155 = vsel %vm54, %v141, 0
  %v158 = vsel %vm54, %v142, 0
  %v161 = vsel %vm54, %v143, 0
  %163 = vmatprep.subr.mxu0 0.0
  %164 = vmatpush1.msra.mxu0 %v144
  %165 = vmatprep.subr.mxu0 0.0
  %166 = vmatpush1.msra.mxu0 %v145
  %167 = vmatprep.subr.mxu0 0.0
  %168 = vmatpush1.msra.mxu0 %v146
  %169 = vmatprep.subr.mxu0 0.0
  %170 = vmatpush1.msra.mxu0 %v147
  %171 = vmatprep.subr.mxu0 0.0
  %172 = vmatpush1.msra.mxu0 0.0
  %173 = vmatprep.subr.mxu0 0.0
  %174 = vmatpush1.msra.mxu0 0.0
  %175 = vmatprep.subr.mxu0 0.0
  %176 = vmatpush1.msra.mxu0 0.0
  %177 = vmatprep.subr.mxu0 0.0
  %178 = vmatpush1.msra.mxu0 0.0
  %179 = vmatprep.subr.mxu0 0.0
  %180 = vmatpush1.msra.mxu0 0.0
  %181 = vmatprep.subr.mxu0 0.0
  %182 = vmatpush1.msra.mxu0 0.0
  %183 = vmatprep.subr.mxu0 0.0
  %184 = vmatpush1.msra.mxu0 0.0
  %185 = vmatprep.subr.mxu0 0.0
  %186 = vmatpush1.msra.mxu0 0.0
  %187 = vmatprep.subr.mxu0 0.0
  %188 = vmatpush1.msra.mxu0 0.0
  %189 = vmatprep.subr.mxu0 0.0
  %190 = vmatpush1.msra.mxu0 0.0
  %191 = vmatprep.subr.mxu0 0.0
  %192 = vmatpush1.msra.mxu0 0.0
  %193 = vmatprep.subr.mxu0 0.0
  %194 = vmatpush1.msra.mxu0 0.0
  %195 = vmatprep.subr.mxu0 0.0
  %196 = vmatpush1.msra.mxu0 0.0
  %197 = vmatprep.subr.mxu0 0.0
  %198 = vmatpush1.msra.mxu0 0.0
  %199 = vmatprep.subr.mxu0 0.0
  %200 = vmatpush1.msra.mxu0 0.0
  %201 = vmatprep.subr.mxu0 0.0
  %202 = vmatpush1.msra.mxu0 0.0
  %203 = vmatprep.subr.mxu0 0.0
  %204 = vmatpush1.msra.mxu0 0.0
  %205 = vmatprep.subr.mxu0 0.0
  %206 = vmatpush1.msra.mxu0 0.0
  %207 = vmatprep.subr.mxu0 0.0
  %208 = vmatpush1.msra.mxu0 0.0
  %209 = vmatprep.subr.mxu0 0.0
  %210 = vmatpush1.msra.mxu0 0.0
  %211 = vmatprep.subr.mxu0 0.0
  %212 = vmatpush1.msra.mxu0 0.0
  %213 = vmatprep.subr.mxu0 0.0
  %214 = vmatpush1.msra.mxu0 0.0
  %215 = vmatprep.subr.mxu0 0.0
  %216 = vmatpush1.msra.mxu0 0.0
  %217 = vmatprep.subr.mxu0 0.0
  %218 = vmatpush1.msra.mxu0 0.0
  %219 = vmatprep.subr.mxu0 0.0
  %220 = vmatpush1.msra.mxu0 0.0
  %221 = vmatprep.subr.mxu0 0.0
  %222 = vmatpush1.msra.mxu0 0.0
  %223 = vmatprep.subr.mxu0 0.0
  %224 = vmatpush1.msra.mxu0 0.0
  %225 = vmatprep.subr.mxu0 0.0
  %226 = vmatpush1.msra.mxu0 0.0
  %227 = vmatprep.mubr.f32.mxu0 0.0
  %228 = vmatmul.mubr.f32.gmra.mrb[0].mxu0 %v149
  %v229 = vpop.f32.mrb[0].mxu0
  %v230 = vadd.f32 0.0, %v229
  %v231 = vpop.f32.mrb[0].mxu0
  %232 = vmatprep.mubr.f32.mxu0 0.0
  %233 = vmatmul.mubr.f32.gmra.mrb[0].mxu0 %v152
  %v234 = vpop.f32.mrb[0].mxu0
  %v235 = vadd.f32 0.0, %v234
  %v236 = vpop.f32.mrb[0].mxu0
  %237 = vmatprep.mubr.f32.mxu0 0.0
  %238 = vmatmul.mubr.f32.gmra.mrb[0].mxu0 %v155
  %v239 = vpop.f32.mrb[0].mxu0
  %v240 = vadd.f32 0.0, %v239
  %v241 = vpop.f32.mrb[0].mxu0
  %242 = vmatprep.mubr.f32.mxu0 0.0
  %243 = vmatmul.mubr.f32.gmra.mrb[0].mxu0 %v158
  %v244 = vpop.f32.mrb[0].mxu0
  %v245 = vadd.f32 0.0, %v244
  %v246 = vpop.f32.mrb[0].mxu0
  %247 = vmatprep.mubr.f32.mxu0 0.0
  %248 = vmatmul.mubr.f32.gmra.mrb[0].mxu0 %v161
  %v249 = vpop.f32.mrb[0].mxu0
  %v250 = vadd.f32 0.0, %v249
  %v251 = vpop.f32.mrb[0].mxu0
  %252 = vdwg.mxu0
  %v253 = vmul.f32 %v230, 0.35355338
  %v254 = vmul.f32 %v235, 0.35355338
  %v255 = vmul.f32 %v240, 0.35355338
  %v256 = vmul.f32 %v245, 0.35355338
  %v257 = vmul.f32 %v250, 0.35355338
  %v258 = vlaneseq
  %v259 = vand.u32 %v258, 127
  %v260 = vlaneseq
  %v261 = vshrl.u32 %v260, 7
  %v262 = vadd.s32 %v261, 8
  %vm263 = vcmp.lt.s32.totalorder %v261, %v259
  %vm264 = vcmp.lt.s32.totalorder %v262, %v259
  %v265 = vsel %vm263, 1, 0
  %v266 = vsel %vm264, 1, 0
  %v267 = vcvt.s32.f32 %v265
  %v268 = vcvt.s32.f32 %v266
  %vm269 = vcmp.eq.s32.totalorder %v261, 0
  %vm270 = vcmp.eq.s32.totalorder %v262, 0
  %v271 = vsel %vm269, 1, 0
  %v272 = vsel %vm270, 1, 0
  %v273 = vcvt.s32.f32 %v271
  %v274 = vcvt.s32.f32 %v272
  %278 = vrot.lane.b32.xlu0 %v230, 96
  %v279 = vpop.permute.xlu0 %278
  %280 = vrot.lane.b32.xlu0 %v235, 96
  %v281 = vpop.permute.xlu0 %280
  %282 = vrot.lane.b32.xlu0 %v240, 96
  %v283 = vpop.permute.xlu0 %282
  %vm284 = vcmask 64512
  %v286 = vsel %vm284, %v253, 0
  %v289 = vsel %vm284, %v254, 0
  %v292 = vsel %vm284, %v255, 0
  %v294 = vsel %vm284, %v279, 0
  %v296 = vsel %vm284, %v281, 0
  %v298 = vsel %vm284, %v283, 0
  %300 = vmatprep.subr.mxu0 0.0
  %301 = vmatpush1.xpose.msra.mxu0 %v294
  %302 = vmatprep.subr.mxu0 0.0
  %303 = vmatpush1.xpose.msra.mxu0 %v296
  %304 = vmatprep.subr.mxu0 0.0
  %305 = vmatpush1.xpose.msra.mxu0 %v298
  %306 = vmatprep.subr.mxu0 0.0
  %307 = vmatpush1.xpose.msra.mxu0 0.0
  %308 = vmatprep.subr.mxu0 0.0
  %309 = vmatpush1.xpose.msra.mxu0 0.0
  %310 = vmatprep.subr.mxu0 0.0
  %311 = vmatpush1.xpose.msra.mxu0 0.0
  %312 = vmatprep.subr.mxu0 0.0
  %313 = vmatpush1.xpose.msra.mxu0 0.0
  %314 = vmatprep.subr.mxu0 0.0
  %315 = vmatpush1.xpose.msra.mxu0 0.0
  %316 = vmatprep.subr.mxu0 0.0
  %317 = vmatpush1.xpose.msra.mxu0 0.0
  %318 = vmatprep.subr.mxu0 0.0
  %319 = vmatpush1.xpose.msra.mxu0 0.0
  %320 = vmatprep.subr.mxu0 0.0
  %321 = vmatpush1.xpose.msra.mxu0 0.0
  %322 = vmatprep.subr.mxu0 0.0
  %323 = vmatpush1.xpose.msra.mxu0 0.0
  %324 = vmatprep.subr.mxu0 0.0
  %325 = vmatpush1.xpose.msra.mxu0 0.0
  %326 = vmatprep.subr.mxu0 0.0
  %327 = vmatpush1.xpose.msra.mxu0 0.0
  %328 = vmatprep.subr.mxu0 0.0
  %329 = vmatpush1.xpose.msra.mxu0 0.0
  %330 = vmatprep.subr.mxu0 0.0
  %331 = vmatpush1.xpose.msra.mxu0 0.0
  %332 = vmatprep.subr.mxu0 0.0
  %333 = vmatpush1.xpose.msra.mxu0 0.0
  %334 = vmatprep.subr.mxu0 0.0
  %335 = vmatpush1.xpose.msra.mxu0 0.0
  %336 = vmatprep.subr.mxu0 0.0
  %337 = vmatpush1.xpose.msra.mxu0 0.0
  %338 = vmatprep.subr.mxu0 0.0
  %339 = vmatpush1.xpose.msra.mxu0 0.0
  %340 = vmatprep.subr.mxu0 0.0
  %341 = vmatpush1.xpose.msra.mxu0 0.0
  %342 = vmatprep.subr.mxu0 0.0
  %343 = vmatpush1.xpose.msra.mxu0 0.0
  %344 = vmatprep.subr.mxu0 0.0
  %345 = vmatpush1.xpose.msra.mxu0 0.0
  %346 = vmatprep.subr.mxu0 0.0
  %347 = vmatpush1.xpose.msra.mxu0 0.0
  %348 = vmatprep.subr.mxu0 0.0
  %349 = vmatpush1.xpose.msra.mxu0 0.0
  %350 = vmatprep.subr.mxu0 0.0
  %351 = vmatpush1.xpose.msra.mxu0 0.0
  %352 = vmatprep.subr.mxu0 0.0
  %353 = vmatpush1.xpose.msra.mxu0 0.0
  %354 = vmatprep.subr.mxu0 0.0
  %355 = vmatpush1.xpose.msra.mxu0 0.0
  %356 = vmatprep.subr.mxu0 0.0
  %357 = vmatpush1.xpose.msra.mxu0 0.0
  %358 = vmatprep.subr.mxu0 0.0
  %359 = vmatpush1.xpose.msra.mxu0 0.0
  %360 = vmatprep.subr.mxu0 0.0
  %361 = vmatpush1.xpose.msra.mxu0 0.0
  %362 = vmatprep.subr.mxu0 0.0
  %363 = vmatpush1.xpose.msra.mxu0 0.0
  %364 = vmatprep.mubr.f32.mxu0 0.0
  %365 = vmatmul.mubr.f32.gmra.mrb[0].mxu0 %v286
  %v366 = vpop.f32.mrb[0].mxu0
  %v367 = vadd.f32 0.0, %v366
  %v368 = vpop.f32.mrb[0].mxu0
  %369 = vmatprep.mubr.f32.mxu0 0.0
  %370 = vmatmul.mubr.f32.gmra.mrb[0].mxu0 %v289
  %v371 = vpop.f32.mrb[0].mxu0
  %v372 = vadd.f32 0.0, %v371
  %v373 = vpop.f32.mrb[0].mxu0
  %374 = vmatprep.mubr.f32.mxu0 0.0
  %375 = vmatmul.mubr.f32.gmra.mrb[0].mxu0 %v292
  %v376 = vpop.f32.mrb[0].mxu0
  %v377 = vadd.f32 0.0, %v376
  %v378 = vpop.f32.mrb[0].mxu0
  %379 = vdwg.mxu0
  %vm380 = vcmask 138240
  %v381 = vsel %vm380, %v367, -inf
  %382 = vmax.xlane.f32.xlu0 %v381
  %v383 = vpop.xlane.xlu0 %382
  %v384 = vsel %vm380, %v372, -inf
  %385 = vmax.xlane.f32.xlu0 %v384
  %v386 = vpop.xlane.xlu0 %385
  %vm387 = vcmask 131072
  %v388 = vsel %vm387, %v377, -inf
  %389 = vmax.xlane.f32.xlu0 %v388
  %v390 = vpop.xlane.xlu0 %389
  %v391 = vsub.f32 %v367, %v383
  %v392 = vsub.f32 %v372, %v386
  %v393 = vsub.f32 %v377, %v390
  %v394 = vmul.f32 %v391, 1.442695
  %v395 = vpow.pop %v394
  %v396 = vmul.f32 %v392, 1.442695
  %v397 = vpow.pop %v396
  %v398 = vmul.f32 %v393, 1.442695
  %v399 = vpow.pop %v398
  %v400 = vsel %vm380, %v395, 0.0
  %401 = vadd.xlane.f32.xlu0 %v400
  %v402 = vpop.xlane.xlu0 %401
  %v403 = vsel %vm380, %v397, 0.0
  %404 = vadd.xlane.f32.xlu0 %v403
  %v405 = vpop.xlane.xlu0 %404
  %v406 = vsel %vm387, %v399, 0.0
  %407 = vadd.xlane.f32.xlu0 %v406
  %v408 = vpop.xlane.xlu0 %407
  %v409 = vrcp.pop %v402
  %v410 = vmul.f32 1.0, %v409
  %v411 = vrcp.pop %v405
  %v412 = vmul.f32 1.0, %v411
  %v413 = vrcp.pop %v408
  %v414 = vmul.f32 1.0, %v413
  %415 = vrot.lane.b32.xlu0 %v230, 64
  %v416 = vpop.permute.xlu0 %415
  %417 = vrot.lane.b32.xlu0 %v235, 64
  %v418 = vpop.permute.xlu0 %417
  %419 = vrot.lane.b32.xlu0 %v240, 64
  %v420 = vpop.permute.xlu0 %419
  %v424 = vsel %vm380, %v395, 0
  %v427 = vsel %vm380, %v397, 0
  %v430 = vsel %vm380, %v399, 0
  %vm432 = vcmask 1040384
  %v433 = vsel %vm432, %v420, 0
  %435 = vmatprep.subr.mxu0 0.0
  %436 = vmatpush1.msra.mxu0 %v416
  %437 = vmatprep.subr.mxu0 0.0
  %438 = vmatpush1.msra.mxu0 %v418
  %439 = vmatprep.subr.mxu0 0.0
  %440 = vmatpush1.msra.mxu0 %v433
  %441 = vmatprep.subr.mxu0 0.0
  %442 = vmatpush1.msra.mxu0 0.0
  %443 = vmatprep.subr.mxu0 0.0
  %444 = vmatpush1.msra.mxu0 0.0
  %445 = vmatprep.subr.mxu0 0.0
  %446 = vmatpush1.msra.mxu0 0.0
  %447 = vmatprep.subr.mxu0 0.0
  %448 = vmatpush1.msra.mxu0 0.0
  %449 = vmatprep.subr.mxu0 0.0
  %450 = vmatpush1.msra.mxu0 0.0
  %451 = vmatprep.subr.mxu0 0.0
  %452 = vmatpush1.msra.mxu0 0.0
  %453 = vmatprep.subr.mxu0 0.0
  %454 = vmatpush1.msra.mxu0 0.0
  %455 = vmatprep.subr.mxu0 0.0
  %456 = vmatpush1.msra.mxu0 0.0
  %457 = vmatprep.subr.mxu0 0.0
  %458 = vmatpush1.msra.mxu0 0.0
  %459 = vmatprep.subr.mxu0 0.0
  %460 = vmatpush1.msra.mxu0 0.0
  %461 = vmatprep.subr.mxu0 0.0
  %462 = vmatpush1.msra.mxu0 0.0
  %463 = vmatprep.subr.mxu0 0.0
  %464 = vmatpush1.msra.mxu0 0.0
  %465 = vmatprep.subr.mxu0 0.0
  %466 = vmatpush1.msra.mxu0 0.0
  %467 = vmatprep.subr.mxu0 0.0
  %468 = vmatpush1.msra.mxu0 0.0
  %469 = vmatprep.subr.mxu0 0.0
  %470 = vmatpush1.msra.mxu0 0.0
  %471 = vmatprep.subr.mxu0 0.0
  %472 = vmatpush1.msra.mxu0 0.0
  %473 = vmatprep.subr.mxu0 0.0
  %474 = vmatpush1.msra.mxu0 0.0
  %475 = vmatprep.subr.mxu0 0.0
  %476 = vmatpush1.msra.mxu0 0.0
  %477 = vmatprep.subr.mxu0 0.0
  %478 = vmatpush1.msra.mxu0 0.0
  %479 = vmatprep.subr.mxu0 0.0
  %480 = vmatpush1.msra.mxu0 0.0
  %481 = vmatprep.subr.mxu0 0.0
  %482 = vmatpush1.msra.mxu0 0.0
  %483 = vmatprep.subr.mxu0 0.0
  %484 = vmatpush1.msra.mxu0 0.0
  %485 = vmatprep.subr.mxu0 0.0
  %486 = vmatpush1.msra.mxu0 0.0
  %487 = vmatprep.subr.mxu0 0.0
  %488 = vmatpush1.msra.mxu0 0.0
  %489 = vmatprep.subr.mxu0 0.0
  %490 = vmatpush1.msra.mxu0 0.0
  %491 = vmatprep.subr.mxu0 0.0
  %492 = vmatpush1.msra.mxu0 0.0
  %493 = vmatprep.subr.mxu0 0.0
  %494 = vmatpush1.msra.mxu0 0.0
  %495 = vmatprep.subr.mxu0 0.0
  %496 = vmatpush1.msra.mxu0 0.0
  %497 = vmatprep.subr.mxu0 0.0
  %498 = vmatpush1.msra.mxu0 0.0
  %499 = vmatprep.mubr.f32.mxu0 0.0
  %500 = vmatmul.mubr.f32.gmra.mrb[0].mxu0 %v424
  %v501 = vpop.f32.mrb[0].mxu0
  %v502 = vadd.f32 0.0, %v501
  %v503 = vpop.f32.mrb[0].mxu0
  %504 = vmatprep.mubr.f32.mxu0 0.0
  %505 = vmatmul.mubr.f32.gmra.mrb[0].mxu0 %v427
  %v506 = vpop.f32.mrb[0].mxu0
  %v507 = vadd.f32 0.0, %v506
  %v508 = vpop.f32.mrb[0].mxu0
  %509 = vmatprep.mubr.f32.mxu0 0.0
  %510 = vmatmul.mubr.f32.gmra.mrb[0].mxu0 %v430
  %v511 = vpop.f32.mrb[0].mxu0
  %v512 = vadd.f32 0.0, %v511
  %v513 = vpop.f32.mrb[0].mxu0
  %514 = vdwg.mxu0
  %v515 = vmul.f32 %v502, %v410
  %v516 = vmul.f32 %v507, %v412
  %v517 = vmul.f32 %v512, %v414
  %v518 = vmul.f32 %v395, %v410
  %519 = vrot.lane.b32.xlu0 %v253, 120
  %v520 = vpop.permute.xlu0 %519
  %521 = vrot.lane.b32.xlu0 %v254, 120
  %v522 = vpop.permute.xlu0 %521
  %523 = vrot.lane.b32.xlu0 %v255, 120
  %v524 = vpop.permute.xlu0 %523
  %525 = vrot.lane.b32.xlu0 %v230, 88
  %v526 = vpop.permute.xlu0 %525
  %527 = vrot.lane.b32.xlu0 %v235, 88
  %v528 = vpop.permute.xlu0 %527
  %529 = vrot.lane.b32.xlu0 %v240, 88
  %v530 = vpop.permute.xlu0 %529
  %v531 = vsel %vm284, %v520, 0
  %v533 = vsel %vm284, %v522, 0
  %v535 = vsel %vm284, %v524, 0
  %v537 = vsel %vm284, %v526, 0
  %v539 = vsel %vm284, %v528, 0
  %v541 = vsel %vm284, %v530, 0
  %543 = vmatprep.subr.mxu0 0.0
  %544 = vmatpush1.xpose.msra.mxu0 %v537
  %545 = vmatprep.subr.mxu0 0.0
  %546 = vmatpush1.xpose.msra.mxu0 %v539
  %547 = vmatprep.subr.mxu0 0.0
  %548 = vmatpush1.xpose.msra.mxu0 %v541
  %549 = vmatprep.subr.mxu0 0.0
  %550 = vmatpush1.xpose.msra.mxu0 0.0
  %551 = vmatprep.subr.mxu0 0.0
  %552 = vmatpush1.xpose.msra.mxu0 0.0
  %553 = vmatprep.subr.mxu0 0.0
  %554 = vmatpush1.xpose.msra.mxu0 0.0
  %555 = vmatprep.subr.mxu0 0.0
  %556 = vmatpush1.xpose.msra.mxu0 0.0
  %557 = vmatprep.subr.mxu0 0.0
  %558 = vmatpush1.xpose.msra.mxu0 0.0
  %559 = vmatprep.subr.mxu0 0.0
  %560 = vmatpush1.xpose.msra.mxu0 0.0
  %561 = vmatprep.subr.mxu0 0.0
  %562 = vmatpush1.xpose.msra.mxu0 0.0
  %563 = vmatprep.subr.mxu0 0.0
  %564 = vmatpush1.xpose.msra.mxu0 0.0
  %565 = vmatprep.subr.mxu0 0.0
  %566 = vmatpush1.xpose.msra.mxu0 0.0
  %567 = vmatprep.subr.mxu0 0.0
  %568 = vmatpush1.xpose.msra.mxu0 0.0
  %569 = vmatprep.subr.mxu0 0.0
  %570 = vmatpush1.xpose.msra.mxu0 0.0
  %571 = vmatprep.subr.mxu0 0.0
  %572 = vmatpush1.xpose.msra.mxu0 0.0
  %573 = vmatprep.subr.mxu0 0.0
  %574 = vmatpush1.xpose.msra.mxu0 0.0
  %575 = vmatprep.subr.mxu0 0.0
  %576 = vmatpush1.xpose.msra.mxu0 0.0
  %577 = vmatprep.subr.mxu0 0.0
  %578 = vmatpush1.xpose.msra.mxu0 0.0
  %579 = vmatprep.subr.mxu0 0.0
  %580 = vmatpush1.xpose.msra.mxu0 0.0
  %581 = vmatprep.subr.mxu0 0.0
  %582 = vmatpush1.xpose.msra.mxu0 0.0
  %583 = vmatprep.subr.mxu0 0.0
  %584 = vmatpush1.xpose.msra.mxu0 0.0
  %585 = vmatprep.subr.mxu0 0.0
  %586 = vmatpush1.xpose.msra.mxu0 0.0
  %587 = vmatprep.subr.mxu0 0.0
  %588 = vmatpush1.xpose.msra.mxu0 0.0
  %589 = vmatprep.subr.mxu0 0.0
  %590 = vmatpush1.xpose.msra.mxu0 0.0
  %591 = vmatprep.subr.mxu0 0.0
  %592 = vmatpush1.xpose.msra.mxu0 0.0
  %593 = vmatprep.subr.mxu0 0.0
  %594 = vmatpush1.xpose.msra.mxu0 0.0
  %595 = vmatprep.subr.mxu0 0.0
  %596 = vmatpush1.xpose.msra.mxu0 0.0
  %597 = vmatprep.subr.mxu0 0.0
  %598 = vmatpush1.xpose.msra.mxu0 0.0
  %599 = vmatprep.subr.mxu0 0.0
  %600 = vmatpush1.xpose.msra.mxu0 0.0
  %601 = vmatprep.subr.mxu0 0.0
  %602 = vmatpush1.xpose.msra.mxu0 0.0
  %603 = vmatprep.subr.mxu0 0.0
  %604 = vmatpush1.xpose.msra.mxu0 0.0
  %605 = vmatprep.subr.mxu0 0.0
  %606 = vmatpush1.xpose.msra.mxu0 0.0
  %607 = vmatprep.mubr.f32.mxu0 0.0
  %608 = vmatmul.mubr.f32.gmra.mrb[0].mxu0 %v531
  %v609 = vpop.f32.mrb[0].mxu0
  %v610 = vadd.f32 0.0, %v609
  %v611 = vpop.f32.mrb[0].mxu0
  %612 = vmatprep.mubr.f32.mxu0 0.0
  %613 = vmatmul.mubr.f32.gmra.mrb[0].mxu0 %v533
  %v614 = vpop.f32.mrb[0].mxu0
  %v615 = vadd.f32 0.0, %v614
  %v616 = vpop.f32.mrb[0].mxu0
  %617 = vmatprep.mubr.f32.mxu0 0.0
  %618 = vmatmul.mubr.f32.gmra.mrb[0].mxu0 %v535
  %v619 = vpop.f32.mrb[0].mxu0
  %v620 = vadd.f32 0.0, %v619
  %v621 = vpop.f32.mrb[0].mxu0
  %622 = vdwg.mxu0
  %v623 = vsel %vm380, %v610, -inf
  %624 = vmax.xlane.f32.xlu0 %v623
  %v625 = vpop.xlane.xlu0 %624
  %v626 = vsel %vm380, %v615, -inf
  %627 = vmax.xlane.f32.xlu0 %v626
  %v628 = vpop.xlane.xlu0 %627
  %v629 = vsel %vm387, %v620, -inf
  %630 = vmax.xlane.f32.xlu0 %v629
  %v631 = vpop.xlane.xlu0 %630
  %v632 = vsub.f32 %v610, %v625
  %v633 = vsub.f32 %v615, %v628
  %v634 = vsub.f32 %v620, %v631
  %v635 = vmul.f32 %v632, 1.442695
  %v636 = vpow.pop %v635
  %v637 = vmul.f32 %v633, 1.442695
  %v638 = vpow.pop %v637
  %v639 = vmul.f32 %v634, 1.442695
  %v640 = vpow.pop %v639
  %v641 = vsel %vm380, %v636, 0.0
  %642 = vadd.xlane.f32.xlu0 %v641
  %v643 = vpop.xlane.xlu0 %642
  %v644 = vsel %vm380, %v638, 0.0
  %645 = vadd.xlane.f32.xlu0 %v644
  %v646 = vpop.xlane.xlu0 %645
  %v647 = vsel %vm387, %v640, 0.0
  %648 = vadd.xlane.f32.xlu0 %v647
  %v649 = vpop.xlane.xlu0 %648
  %v650 = vrcp.pop %v643
  %v651 = vmul.f32 1.0, %v650
  %v652 = vrcp.pop %v646
  %v653 = vmul.f32 1.0, %v652
  %v654 = vrcp.pop %v649
  %v655 = vmul.f32 1.0, %v654
  %656 = vrot.lane.b32.xlu0 %v230, 56
  %v657 = vpop.permute.xlu0 %656
  %658 = vrot.lane.b32.xlu0 %v235, 56
  %v659 = vpop.permute.xlu0 %658
  %660 = vrot.lane.b32.xlu0 %v240, 56
  %v661 = vpop.permute.xlu0 %660
  %v665 = vsel %vm380, %v636, 0
  %v668 = vsel %vm380, %v638, 0
  %v671 = vsel %vm380, %v640, 0
  %v673 = vsel %vm432, %v661, 0
  %675 = vmatprep.subr.mxu0 0.0
  %676 = vmatpush1.msra.mxu0 %v657
  %677 = vmatprep.subr.mxu0 0.0
  %678 = vmatpush1.msra.mxu0 %v659
  %679 = vmatprep.subr.mxu0 0.0
  %680 = vmatpush1.msra.mxu0 %v673
  %681 = vmatprep.subr.mxu0 0.0
  %682 = vmatpush1.msra.mxu0 0.0
  %683 = vmatprep.subr.mxu0 0.0
  %684 = vmatpush1.msra.mxu0 0.0
  %685 = vmatprep.subr.mxu0 0.0
  %686 = vmatpush1.msra.mxu0 0.0
  %687 = vmatprep.subr.mxu0 0.0
  %688 = vmatpush1.msra.mxu0 0.0
  %689 = vmatprep.subr.mxu0 0.0
  %690 = vmatpush1.msra.mxu0 0.0
  %691 = vmatprep.subr.mxu0 0.0
  %692 = vmatpush1.msra.mxu0 0.0
  %693 = vmatprep.subr.mxu0 0.0
  %694 = vmatpush1.msra.mxu0 0.0
  %695 = vmatprep.subr.mxu0 0.0
  %696 = vmatpush1.msra.mxu0 0.0
  %697 = vmatprep.subr.mxu0 0.0
  %698 = vmatpush1.msra.mxu0 0.0
  %699 = vmatprep.subr.mxu0 0.0
  %700 = vmatpush1.msra.mxu0 0.0
  %701 = vmatprep.subr.mxu0 0.0
  %702 = vmatpush1.msra.mxu0 0.0
  %703 = vmatprep.subr.mxu0 0.0
  %704 = vmatpush1.msra.mxu0 0.0
  %705 = vmatprep.subr.mxu0 0.0
  %706 = vmatpush1.msra.mxu0 0.0
  %707 = vmatprep.subr.mxu0 0.0
  %708 = vmatpush1.msra.mxu0 0.0
  %709 = vmatprep.subr.mxu0 0.0
  %710 = vmatpush1.msra.mxu0 0.0
  %711 = vmatprep.subr.mxu0 0.0
  %712 = vmatpush1.msra.mxu0 0.0
  %713 = vmatprep.subr.mxu0 0.0
  %714 = vmatpush1.msra.mxu0 0.0
  %715 = vmatprep.subr.mxu0 0.0
  %716 = vmatpush1.msra.mxu0 0.0
  %717 = vmatprep.subr.mxu0 0.0
  %718 = vmatpush1.msra.mxu0 0.0
  %719 = vmatprep.subr.mxu0 0.0
  %720 = vmatpush1.msra.mxu0 0.0
  %721 = vmatprep.subr.mxu0 0.0
  %722 = vmatpush1.msra.mxu0 0.0
  %723 = vmatprep.subr.mxu0 0.0
  %724 = vmatpush1.msra.mxu0 0.0
  %725 = vmatprep.subr.mxu0 0.0
  %726 = vmatpush1.msra.mxu0 0.0
  %727 = vmatprep.subr.mxu0 0.0
  %728 = vmatpush1.msra.mxu0 0.0
  %729 = vmatprep.subr.mxu0 0.0
  %730 = vmatpush1.msra.mxu0 0.0
  %731 = vmatprep.subr.mxu0 0.0
  %732 = vmatpush1.msra.mxu0 0.0
  %733 = vmatprep.subr.mxu0 0.0
  %734 = vmatpush1.msra.mxu0 0.0
  %735 = vmatprep.subr.mxu0 0.0
  %736 = vmatpush1.msra.mxu0 0.0
  %737 = vmatprep.subr.mxu0 0.0
  %738 = vmatpush1.msra.mxu0 0.0
  %739 = vmatprep.mubr.f32.mxu0 0.0
  %740 = vmatmul.mubr.f32.gmra.mrb[0].mxu0 %v665
  %v741 = vpop.f32.mrb[0].mxu0
  %v742 = vadd.f32 0.0, %v741
  %v743 = vpop.f32.mrb[0].mxu0
  %744 = vmatprep.mubr.f32.mxu0 0.0
  %745 = vmatmul.mubr.f32.gmra.mrb[0].mxu0 %v668
  %v746 = vpop.f32.mrb[0].mxu0
  %v747 = vadd.f32 0.0, %v746
  %v748 = vpop.f32.mrb[0].mxu0
  %749 = vmatprep.mubr.f32.mxu0 0.0
  %750 = vmatmul.mubr.f32.gmra.mrb[0].mxu0 %v671
  %v751 = vpop.f32.mrb[0].mxu0
  %v752 = vadd.f32 0.0, %v751
  %v753 = vpop.f32.mrb[0].mxu0
  %754 = vdwg.mxu0
  %v755 = vmul.f32 %v742, %v651
  %v756 = vmul.f32 %v747, %v653
  %v757 = vmul.f32 %v752, %v655
  %v758 = vmul.f32 %v636, %v651
  %v759 = vmax.f32 %v518, %v758
  %760 = vrot.lane.b32.xlu0 %v253, 112
  %v761 = vpop.permute.xlu0 %760
  %762 = vrot.lane.b32.xlu0 %v254, 112
  %v763 = vpop.permute.xlu0 %762
  %764 = vrot.lane.b32.xlu0 %v255, 112
  %v765 = vpop.permute.xlu0 %764
  %766 = vrot.lane.b32.xlu0 %v230, 80
  %v767 = vpop.permute.xlu0 %766
  %768 = vrot.lane.b32.xlu0 %v235, 80
  %v769 = vpop.permute.xlu0 %768
  %770 = vrot.lane.b32.xlu0 %v240, 80
  %v771 = vpop.permute.xlu0 %770
  %v772 = vsel %vm284, %v761, 0
  %v774 = vsel %vm284, %v763, 0
  %v776 = vsel %vm284, %v765, 0
  %v778 = vsel %vm284, %v767, 0
  %v780 = vsel %vm284, %v769, 0
  %v782 = vsel %vm284, %v771, 0
  %784 = vmatprep.subr.mxu0 0.0
  %785 = vmatpush1.xpose.msra.mxu0 %v778
  %786 = vmatprep.subr.mxu0 0.0
  %787 = vmatpush1.xpose.msra.mxu0 %v780
  %788 = vmatprep.subr.mxu0 0.0
  %789 = vmatpush1.xpose.msra.mxu0 %v782
  %790 = vmatprep.subr.mxu0 0.0
  %791 = vmatpush1.xpose.msra.mxu0 0.0
  %792 = vmatprep.subr.mxu0 0.0
  %793 = vmatpush1.xpose.msra.mxu0 0.0
  %794 = vmatprep.subr.mxu0 0.0
  %795 = vmatpush1.xpose.msra.mxu0 0.0
  %796 = vmatprep.subr.mxu0 0.0
  %797 = vmatpush1.xpose.msra.mxu0 0.0
  %798 = vmatprep.subr.mxu0 0.0
  %799 = vmatpush1.xpose.msra.mxu0 0.0
  %800 = vmatprep.subr.mxu0 0.0
  %801 = vmatpush1.xpose.msra.mxu0 0.0
  %802 = vmatprep.subr.mxu0 0.0
  %803 = vmatpush1.xpose.msra.mxu0 0.0
  %804 = vmatprep.subr.mxu0 0.0
  %805 = vmatpush1.xpose.msra.mxu0 0.0
  %806 = vmatprep.subr.mxu0 0.0
  %807 = vmatpush1.xpose.msra.mxu0 0.0
  %808 = vmatprep.subr.mxu0 0.0
  %809 = vmatpush1.xpose.msra.mxu0 0.0
  %810 = vmatprep.subr.mxu0 0.0
  %811 = vmatpush1.xpose.msra.mxu0 0.0
  %812 = vmatprep.subr.mxu0 0.0
  %813 = vmatpush1.xpose.msra.mxu0 0.0
  %814 = vmatprep.subr.mxu0 0.0
  %815 = vmatpush1.xpose.msra.mxu0 0.0
  %816 = vmatprep.subr.mxu0 0.0
  %817 = vmatpush1.xpose.msra.mxu0 0.0
  %818 = vmatprep.subr.mxu0 0.0
  %819 = vmatpush1.xpose.msra.mxu0 0.0
  %820 = vmatprep.subr.mxu0 0.0
  %821 = vmatpush1.xpose.msra.mxu0 0.0
  %822 = vmatprep.subr.mxu0 0.0
  %823 = vmatpush1.xpose.msra.mxu0 0.0
  %824 = vmatprep.subr.mxu0 0.0
  %825 = vmatpush1.xpose.msra.mxu0 0.0
  %826 = vmatprep.subr.mxu0 0.0
  %827 = vmatpush1.xpose.msra.mxu0 0.0
  %828 = vmatprep.subr.mxu0 0.0
  %829 = vmatpush1.xpose.msra.mxu0 0.0
  %830 = vmatprep.subr.mxu0 0.0
  %831 = vmatpush1.xpose.msra.mxu0 0.0
  %832 = vmatprep.subr.mxu0 0.0
  %833 = vmatpush1.xpose.msra.mxu0 0.0
  %834 = vmatprep.subr.mxu0 0.0
  %835 = vmatpush1.xpose.msra.mxu0 0.0
  %836 = vmatprep.subr.mxu0 0.0
  %837 = vmatpush1.xpose.msra.mxu0 0.0
  %838 = vmatprep.subr.mxu0 0.0
  %839 = vmatpush1.xpose.msra.mxu0 0.0
  %840 = vmatprep.subr.mxu0 0.0
  %841 = vmatpush1.xpose.msra.mxu0 0.0
  %842 = vmatprep.subr.mxu0 0.0
  %843 = vmatpush1.xpose.msra.mxu0 0.0
  %844 = vmatprep.subr.mxu0 0.0
  %845 = vmatpush1.xpose.msra.mxu0 0.0
  %846 = vmatprep.subr.mxu0 0.0
  %847 = vmatpush1.xpose.msra.mxu0 0.0
  %848 = vmatprep.mubr.f32.mxu0 0.0
  %849 = vmatmul.mubr.f32.gmra.mrb[0].mxu0 %v772
  %v850 = vpop.f32.mrb[0].mxu0
  %v851 = vadd.f32 0.0, %v850
  %v852 = vpop.f32.mrb[0].mxu0
  %853 = vmatprep.mubr.f32.mxu0 0.0
  %854 = vmatmul.mubr.f32.gmra.mrb[0].mxu0 %v774
  %v855 = vpop.f32.mrb[0].mxu0
  %v856 = vadd.f32 0.0, %v855
  %v857 = vpop.f32.mrb[0].mxu0
  %858 = vmatprep.mubr.f32.mxu0 0.0
  %859 = vmatmul.mubr.f32.gmra.mrb[0].mxu0 %v776
  %v860 = vpop.f32.mrb[0].mxu0
  %v861 = vadd.f32 0.0, %v860
  %v862 = vpop.f32.mrb[0].mxu0
  %863 = vdwg.mxu0
  %v864 = vsel %vm380, %v851, -inf
  %865 = vmax.xlane.f32.xlu0 %v864
  %v866 = vpop.xlane.xlu0 %865
  %v867 = vsel %vm380, %v856, -inf
  %868 = vmax.xlane.f32.xlu0 %v867
  %v869 = vpop.xlane.xlu0 %868
  %v870 = vsel %vm387, %v861, -inf
  %871 = vmax.xlane.f32.xlu0 %v870
  %v872 = vpop.xlane.xlu0 %871
  %v873 = vsub.f32 %v851, %v866
  %v874 = vsub.f32 %v856, %v869
  %v875 = vsub.f32 %v861, %v872
  %v876 = vmul.f32 %v873, 1.442695
  %v877 = vpow.pop %v876
  %v878 = vmul.f32 %v874, 1.442695
  %v879 = vpow.pop %v878
  %v880 = vmul.f32 %v875, 1.442695
  %v881 = vpow.pop %v880
  %v882 = vsel %vm380, %v877, 0.0
  %883 = vadd.xlane.f32.xlu0 %v882
  %v884 = vpop.xlane.xlu0 %883
  %v885 = vsel %vm380, %v879, 0.0
  %886 = vadd.xlane.f32.xlu0 %v885
  %v887 = vpop.xlane.xlu0 %886
  %v888 = vsel %vm387, %v881, 0.0
  %889 = vadd.xlane.f32.xlu0 %v888
  %v890 = vpop.xlane.xlu0 %889
  %v891 = vrcp.pop %v884
  %v892 = vmul.f32 1.0, %v891
  %v893 = vrcp.pop %v887
  %v894 = vmul.f32 1.0, %v893
  %v895 = vrcp.pop %v890
  %v896 = vmul.f32 1.0, %v895
  %897 = vrot.lane.b32.xlu0 %v230, 48
  %v898 = vpop.permute.xlu0 %897
  %899 = vrot.lane.b32.xlu0 %v235, 48
  %v900 = vpop.permute.xlu0 %899
  %901 = vrot.lane.b32.xlu0 %v240, 48
  %v902 = vpop.permute.xlu0 %901
  %v906 = vsel %vm380, %v877, 0
  %v909 = vsel %vm380, %v879, 0
  %v912 = vsel %vm380, %v881, 0
  %v914 = vsel %vm432, %v902, 0
  %916 = vmatprep.subr.mxu0 0.0
  %917 = vmatpush1.msra.mxu0 %v898
  %918 = vmatprep.subr.mxu0 0.0
  %919 = vmatpush1.msra.mxu0 %v900
  %920 = vmatprep.subr.mxu0 0.0
  %921 = vmatpush1.msra.mxu0 %v914
  %922 = vmatprep.subr.mxu0 0.0
  %923 = vmatpush1.msra.mxu0 0.0
  %924 = vmatprep.subr.mxu0 0.0
  %925 = vmatpush1.msra.mxu0 0.0
  %926 = vmatprep.subr.mxu0 0.0
  %927 = vmatpush1.msra.mxu0 0.0
  %928 = vmatprep.subr.mxu0 0.0
  %929 = vmatpush1.msra.mxu0 0.0
  %930 = vmatprep.subr.mxu0 0.0
  %931 = vmatpush1.msra.mxu0 0.0
  %932 = vmatprep.subr.mxu0 0.0
  %933 = vmatpush1.msra.mxu0 0.0
  %934 = vmatprep.subr.mxu0 0.0
  %935 = vmatpush1.msra.mxu0 0.0
  %936 = vmatprep.subr.mxu0 0.0
  %937 = vmatpush1.msra.mxu0 0.0
  %938 = vmatprep.subr.mxu0 0.0
  %939 = vmatpush1.msra.mxu0 0.0
  %940 = vmatprep.subr.mxu0 0.0
  %941 = vmatpush1.msra.mxu0 0.0
  %942 = vmatprep.subr.mxu0 0.0
  %943 = vmatpush1.msra.mxu0 0.0
  %944 = vmatprep.subr.mxu0 0.0
  %945 = vmatpush1.msra.mxu0 0.0
  %946 = vmatprep.subr.mxu0 0.0
  %947 = vmatpush1.msra.mxu0 0.0
  %948 = vmatprep.subr.mxu0 0.0
  %949 = vmatpush1.msra.mxu0 0.0
  %950 = vmatprep.subr.mxu0 0.0
  %951 = vmatpush1.msra.mxu0 0.0
  %952 = vmatprep.subr.mxu0 0.0
  %953 = vmatpush1.msra.mxu0 0.0
  %954 = vmatprep.subr.mxu0 0.0
  %955 = vmatpush1.msra.mxu0 0.0
  %956 = vmatprep.subr.mxu0 0.0
  %957 = vmatpush1.msra.mxu0 0.0
  %958 = vmatprep.subr.mxu0 0.0
  %959 = vmatpush1.msra.mxu0 0.0
  %960 = vmatprep.subr.mxu0 0.0
  %961 = vmatpush1.msra.mxu0 0.0
  %962 = vmatprep.subr.mxu0 0.0
  %963 = vmatpush1.msra.mxu0 0.0
  %964 = vmatprep.subr.mxu0 0.0
  %965 = vmatpush1.msra.mxu0 0.0
  %966 = vmatprep.subr.mxu0 0.0
  %967 = vmatpush1.msra.mxu0 0.0
  %968 = vmatprep.subr.mxu0 0.0
  %969 = vmatpush1.msra.mxu0 0.0
  %970 = vmatprep.subr.mxu0 0.0
  %971 = vmatpush1.msra.mxu0 0.0
  %972 = vmatprep.subr.mxu0 0.0
  %973 = vmatpush1.msra.mxu0 0.0
  %974 = vmatprep.subr.mxu0 0.0
  %975 = vmatpush1.msra.mxu0 0.0
  %976 = vmatprep.subr.mxu0 0.0
  %977 = vmatpush1.msra.mxu0 0.0
  %978 = vmatprep.subr.mxu0 0.0
  %979 = vmatpush1.msra.mxu0 0.0
  %980 = vmatprep.mubr.f32.mxu0 0.0
  %981 = vmatmul.mubr.f32.gmra.mrb[0].mxu0 %v906
  %v982 = vpop.f32.mrb[0].mxu0
  %v983 = vadd.f32 0.0, %v982
  %v984 = vpop.f32.mrb[0].mxu0
  %985 = vmatprep.mubr.f32.mxu0 0.0
  %986 = vmatmul.mubr.f32.gmra.mrb[0].mxu0 %v909
  %v987 = vpop.f32.mrb[0].mxu0
  %v988 = vadd.f32 0.0, %v987
  %v989 = vpop.f32.mrb[0].mxu0
  %990 = vmatprep.mubr.f32.mxu0 0.0
  %991 = vmatmul.mubr.f32.gmra.mrb[0].mxu0 %v912
  %v992 = vpop.f32.mrb[0].mxu0
  %v993 = vadd.f32 0.0, %v992
  %v994 = vpop.f32.mrb[0].mxu0
  %995 = vdwg.mxu0
  %v996 = vmul.f32 %v983, %v892
  %v997 = vmul.f32 %v988, %v894
  %v998 = vmul.f32 %v993, %v896
  %v999 = vmul.f32 %v877, %v892
  %v1000 = vmax.f32 %v759, %v999
  %1001 = vrot.lane.b32.xlu0 %v253, 104
  %v1002 = vpop.permute.xlu0 %1001
  %1003 = vrot.lane.b32.xlu0 %v254, 104
  %v1004 = vpop.permute.xlu0 %1003
  %1005 = vrot.lane.b32.xlu0 %v255, 104
  %v1006 = vpop.permute.xlu0 %1005
  %1007 = vrot.lane.b32.xlu0 %v230, 72
  %v1008 = vpop.permute.xlu0 %1007
  %1009 = vrot.lane.b32.xlu0 %v235, 72
  %v1010 = vpop.permute.xlu0 %1009
  %1011 = vrot.lane.b32.xlu0 %v240, 72
  %v1012 = vpop.permute.xlu0 %1011
  %v1013 = vsel %vm284, %v1002, 0
  %v1015 = vsel %vm284, %v1004, 0
  %v1017 = vsel %vm284, %v1006, 0
  %v1019 = vsel %vm284, %v1008, 0
  %v1021 = vsel %vm284, %v1010, 0
  %v1023 = vsel %vm284, %v1012, 0
  %1025 = vmatprep.subr.mxu0 0.0
  %1026 = vmatpush1.xpose.msra.mxu0 %v1019
  %1027 = vmatprep.subr.mxu0 0.0
  %1028 = vmatpush1.xpose.msra.mxu0 %v1021
  %1029 = vmatprep.subr.mxu0 0.0
  %1030 = vmatpush1.xpose.msra.mxu0 %v1023
  %1031 = vmatprep.subr.mxu0 0.0
  %1032 = vmatpush1.xpose.msra.mxu0 0.0
  %1033 = vmatprep.subr.mxu0 0.0
  %1034 = vmatpush1.xpose.msra.mxu0 0.0
  %1035 = vmatprep.subr.mxu0 0.0
  %1036 = vmatpush1.xpose.msra.mxu0 0.0
  %1037 = vmatprep.subr.mxu0 0.0
  %1038 = vmatpush1.xpose.msra.mxu0 0.0
  %1039 = vmatprep.subr.mxu0 0.0
  %1040 = vmatpush1.xpose.msra.mxu0 0.0
  %1041 = vmatprep.subr.mxu0 0.0
  %1042 = vmatpush1.xpose.msra.mxu0 0.0
  %1043 = vmatprep.subr.mxu0 0.0
  %1044 = vmatpush1.xpose.msra.mxu0 0.0
  %1045 = vmatprep.subr.mxu0 0.0
  %1046 = vmatpush1.xpose.msra.mxu0 0.0
  %1047 = vmatprep.subr.mxu0 0.0
  %1048 = vmatpush1.xpose.msra.mxu0 0.0
  %1049 = vmatprep.subr.mxu0 0.0
  %1050 = vmatpush1.xpose.msra.mxu0 0.0
  %1051 = vmatprep.subr.mxu0 0.0
  %1052 = vmatpush1.xpose.msra.mxu0 0.0
  %1053 = vmatprep.subr.mxu0 0.0
  %1054 = vmatpush1.xpose.msra.mxu0 0.0
  %1055 = vmatprep.subr.mxu0 0.0
  %1056 = vmatpush1.xpose.msra.mxu0 0.0
  %1057 = vmatprep.subr.mxu0 0.0
  %1058 = vmatpush1.xpose.msra.mxu0 0.0
  %1059 = vmatprep.subr.mxu0 0.0
  %1060 = vmatpush1.xpose.msra.mxu0 0.0
  %1061 = vmatprep.subr.mxu0 0.0
  %1062 = vmatpush1.xpose.msra.mxu0 0.0
  %1063 = vmatprep.subr.mxu0 0.0
  %1064 = vmatpush1.xpose.msra.mxu0 0.0
  %1065 = vmatprep.subr.mxu0 0.0
  %1066 = vmatpush1.xpose.msra.mxu0 0.0
  %1067 = vmatprep.subr.mxu0 0.0
  %1068 = vmatpush1.xpose.msra.mxu0 0.0
  %1069 = vmatprep.subr.mxu0 0.0
  %1070 = vmatpush1.xpose.msra.mxu0 0.0
  %1071 = vmatprep.subr.mxu0 0.0
  %1072 = vmatpush1.xpose.msra.mxu0 0.0
  %1073 = vmatprep.subr.mxu0 0.0
  %1074 = vmatpush1.xpose.msra.mxu0 0.0
  %1075 = vmatprep.subr.mxu0 0.0
  %1076 = vmatpush1.xpose.msra.mxu0 0.0
  %1077 = vmatprep.subr.mxu0 0.0
  %1078 = vmatpush1.xpose.msra.mxu0 0.0
  %1079 = vmatprep.subr.mxu0 0.0
  %1080 = vmatpush1.xpose.msra.mxu0 0.0
  %1081 = vmatprep.subr.mxu0 0.0
  %1082 = vmatpush1.xpose.msra.mxu0 0.0
  %1083 = vmatprep.subr.mxu0 0.0
  %1084 = vmatpush1.xpose.msra.mxu0 0.0
  %1085 = vmatprep.subr.mxu0 0.0
  %1086 = vmatpush1.xpose.msra.mxu0 0.0
  %1087 = vmatprep.subr.mxu0 0.0
  %1088 = vmatpush1.xpose.msra.mxu0 0.0
  %1089 = vmatprep.mubr.f32.mxu0 0.0
  %1090 = vmatmul.mubr.f32.gmra.mrb[0].mxu0 %v1013
  %v1091 = vpop.f32.mrb[0].mxu0
  %v1092 = vadd.f32 0.0, %v1091
  %v1093 = vpop.f32.mrb[0].mxu0
  %1094 = vmatprep.mubr.f32.mxu0 0.0
  %1095 = vmatmul.mubr.f32.gmra.mrb[0].mxu0 %v1015
  %v1096 = vpop.f32.mrb[0].mxu0
  %v1097 = vadd.f32 0.0, %v1096
  %v1098 = vpop.f32.mrb[0].mxu0
  %1099 = vmatprep.mubr.f32.mxu0 0.0
  %1100 = vmatmul.mubr.f32.gmra.mrb[0].mxu0 %v1017
  %v1101 = vpop.f32.mrb[0].mxu0
  %v1102 = vadd.f32 0.0, %v1101
  %v1103 = vpop.f32.mrb[0].mxu0
  %1104 = vdwg.mxu0
  %v1105 = vsel %vm380, %v1092, -inf
  %1106 = vmax.xlane.f32.xlu0 %v1105
  %v1107 = vpop.xlane.xlu0 %1106
  %v1108 = vsel %vm380, %v1097, -inf
  %1109 = vmax.xlane.f32.xlu0 %v1108
  %v1110 = vpop.xlane.xlu0 %1109
  %v1111 = vsel %vm387, %v1102, -inf
  %1112 = vmax.xlane.f32.xlu0 %v1111
  %v1113 = vpop.xlane.xlu0 %1112
  %v1114 = vsub.f32 %v1092, %v1107
  %v1115 = vsub.f32 %v1097, %v1110
  %v1116 = vsub.f32 %v1102, %v1113
  %v1117 = vmul.f32 %v1114, 1.442695
  %v1118 = vpow.pop %v1117
  %v1119 = vmul.f32 %v1115, 1.442695
  %v1120 = vpow.pop %v1119
  %v1121 = vmul.f32 %v1116, 1.442695
  %v1122 = vpow.pop %v1121
  %v1123 = vsel %vm380, %v1118, 0.0
  %1124 = vadd.xlane.f32.xlu0 %v1123
  %v1125 = vpop.xlane.xlu0 %1124
  %v1126 = vsel %vm380, %v1120, 0.0
  %1127 = vadd.xlane.f32.xlu0 %v1126
  %v1128 = vpop.xlane.xlu0 %1127
  %v1129 = vsel %vm387, %v1122, 0.0
  %1130 = vadd.xlane.f32.xlu0 %v1129
  %v1131 = vpop.xlane.xlu0 %1130
  %v1132 = vrcp.pop %v1125
  %v1133 = vmul.f32 1.0, %v1132
  %v1134 = vrcp.pop %v1128
  %v1135 = vmul.f32 1.0, %v1134
  %v1136 = vrcp.pop %v1131
  %v1137 = vmul.f32 1.0, %v1136
  %1138 = vrot.lane.b32.xlu0 %v230, 40
  %v1139 = vpop.permute.xlu0 %1138
  %1140 = vrot.lane.b32.xlu0 %v235, 40
  %v1141 = vpop.permute.xlu0 %1140
  %1142 = vrot.lane.b32.xlu0 %v240, 40
  %v1143 = vpop.permute.xlu0 %1142
  %v1147 = vsel %vm380, %v1118, 0
  %v1150 = vsel %vm380, %v1120, 0
  %v1153 = vsel %vm380, %v1122, 0
  %v1155 = vsel %vm432, %v1143, 0
  %1157 = vmatprep.subr.mxu0 0.0
  %1158 = vmatpush1.msra.mxu0 %v1139
  %1159 = vmatprep.subr.mxu0 0.0
  %1160 = vmatpush1.msra.mxu0 %v1141
  %1161 = vmatprep.subr.mxu0 0.0
  %1162 = vmatpush1.msra.mxu0 %v1155
  %1163 = vmatprep.subr.mxu0 0.0
  %1164 = vmatpush1.msra.mxu0 0.0
  %1165 = vmatprep.subr.mxu0 0.0
  %1166 = vmatpush1.msra.mxu0 0.0
  %1167 = vmatprep.subr.mxu0 0.0
  %1168 = vmatpush1.msra.mxu0 0.0
  %1169 = vmatprep.subr.mxu0 0.0
  %1170 = vmatpush1.msra.mxu0 0.0
  %1171 = vmatprep.subr.mxu0 0.0
  %1172 = vmatpush1.msra.mxu0 0.0
  %1173 = vmatprep.subr.mxu0 0.0
  %1174 = vmatpush1.msra.mxu0 0.0
  %1175 = vmatprep.subr.mxu0 0.0
  %1176 = vmatpush1.msra.mxu0 0.0
  %1177 = vmatprep.subr.mxu0 0.0
  %1178 = vmatpush1.msra.mxu0 0.0
  %1179 = vmatprep.subr.mxu0 0.0
  %1180 = vmatpush1.msra.mxu0 0.0
  %1181 = vmatprep.subr.mxu0 0.0
  %1182 = vmatpush1.msra.mxu0 0.0
  %1183 = vmatprep.subr.mxu0 0.0
  %1184 = vmatpush1.msra.mxu0 0.0
  %1185 = vmatprep.subr.mxu0 0.0
  %1186 = vmatpush1.msra.mxu0 0.0
  %1187 = vmatprep.subr.mxu0 0.0
  %1188 = vmatpush1.msra.mxu0 0.0
  %1189 = vmatprep.subr.mxu0 0.0
  %1190 = vmatpush1.msra.mxu0 0.0
  %1191 = vmatprep.subr.mxu0 0.0
  %1192 = vmatpush1.msra.mxu0 0.0
  %1193 = vmatprep.subr.mxu0 0.0
  %1194 = vmatpush1.msra.mxu0 0.0
  %1195 = vmatprep.subr.mxu0 0.0
  %1196 = vmatpush1.msra.mxu0 0.0
  %1197 = vmatprep.subr.mxu0 0.0
  %1198 = vmatpush1.msra.mxu0 0.0
  %1199 = vmatprep.subr.mxu0 0.0
  %1200 = vmatpush1.msra.mxu0 0.0
  %1201 = vmatprep.subr.mxu0 0.0
  %1202 = vmatpush1.msra.mxu0 0.0
  %1203 = vmatprep.subr.mxu0 0.0
  %1204 = vmatpush1.msra.mxu0 0.0
  %1205 = vmatprep.subr.mxu0 0.0
  %1206 = vmatpush1.msra.mxu0 0.0
  %1207 = vmatprep.subr.mxu0 0.0
  %1208 = vmatpush1.msra.mxu0 0.0
  %1209 = vmatprep.subr.mxu0 0.0
  %1210 = vmatpush1.msra.mxu0 0.0
  %1211 = vmatprep.subr.mxu0 0.0
  %1212 = vmatpush1.msra.mxu0 0.0
  %1213 = vmatprep.subr.mxu0 0.0
  %1214 = vmatpush1.msra.mxu0 0.0
  %1215 = vmatprep.subr.mxu0 0.0
  %1216 = vmatpush1.msra.mxu0 0.0
  %1217 = vmatprep.subr.mxu0 0.0
  %1218 = vmatpush1.msra.mxu0 0.0
  %1219 = vmatprep.subr.mxu0 0.0
  %1220 = vmatpush1.msra.mxu0 0.0
  %1221 = vmatprep.mubr.f32.mxu0 0.0
  %1222 = vmatmul.mubr.f32.gmra.mrb[0].mxu0 %v1147
  %v1223 = vpop.f32.mrb[0].mxu0
  %v1224 = vadd.f32 0.0, %v1223
  %v1225 = vpop.f32.mrb[0].mxu0
  %1226 = vmatprep.mubr.f32.mxu0 0.0
  %1227 = vmatmul.mubr.f32.gmra.mrb[0].mxu0 %v1150
  %v1228 = vpop.f32.mrb[0].mxu0
  %v1229 = vadd.f32 0.0, %v1228
  %v1230 = vpop.f32.mrb[0].mxu0
  %1231 = vmatprep.mubr.f32.mxu0 0.0
  %1232 = vmatmul.mubr.f32.gmra.mrb[0].mxu0 %v1153
  %v1233 = vpop.f32.mrb[0].mxu0
  %v1234 = vadd.f32 0.0, %v1233
  %v1235 = vpop.f32.mrb[0].mxu0
  %1236 = vdwg.mxu0
  %v1237 = vmul.f32 %v1224, %v1133
  %v1238 = vmul.f32 %v1229, %v1135
  %v1239 = vmul.f32 %v1234, %v1137
  %v1240 = vmul.f32 %v1118, %v1133
  %v1241 = vmax.f32 %v1000, %v1240
  %1245 = vrot.lane.b32.xlu0 %v755, 8
  %v1246 = vpop.permute.xlu0 %1245
  %1247 = vrot.lane.b32.xlu0 %v756, 8
  %v1248 = vpop.permute.xlu0 %1247
  %1249 = vrot.lane.b32.xlu0 %v757, 8
  %v1250 = vpop.permute.xlu0 %1249
  %1257 = vrot.lane.b32.xlu0 %v996, 16
  %v1258 = vpop.permute.xlu0 %1257
  %1259 = vrot.lane.b32.xlu0 %v997, 16
  %v1260 = vpop.permute.xlu0 %1259
  %1261 = vrot.lane.b32.xlu0 %v998, 16
  %v1262 = vpop.permute.xlu0 %1261
  %1269 = vrot.lane.b32.xlu0 %v1237, 24
  %v1270 = vpop.permute.xlu0 %1269
  %1271 = vrot.lane.b32.xlu0 %v1238, 24
  %v1272 = vpop.permute.xlu0 %1271
  %1273 = vrot.lane.b32.xlu0 %v1239, 24
  %v1274 = vpop.permute.xlu0 %1273
  %v1278 = vsel %vm284, %v515, %v1246
  %v1279 = vsel %vm284, %v516, %v1248
  %v1280 = vsel %vm284, %v517, %v1250
  %vm1281 = vcmask 130048
  %v1282 = vsel %vm1281, %v1278, %v1258
  %v1283 = vsel %vm1281, %v1279, %v1260
  %v1284 = vsel %vm1281, %v1280, %v1262
  %vm1285 = vcmask 195584
  %v1286 = vsel %vm1285, %v1282, %v1270
  %v1287 = vsel %vm1285, %v1283, %v1272
  %v1288 = vsel %vm1285, %v1284, %v1274
  %vm1289 = vcmask 131080
  %v1290 = vsel %vm1289, %v1241, -inf
  %1291 = vmax.xlane.f32.xlu0 %v1290
  %v1292 = vpop.xlane.xlu0 %1291
  %vm1293 = vcmp.ge.f32.partialorder %v1241, %v1292
  %1294 = vrot.lane.b32.xlu0 %v259, 1
  %v1295 = vpop.permute.xlu0 %1294
  %v1296 = vsel %vm1293, %v1295, 16
  %v1297 = vsel %vm1289, %v1296, 2147483647
  %v1298 = vand.u32 %v1297, 65535
  %v1299 = vshra.s32 %v1297, 16
  %v1300 = vcvt.s32.f32 %v1298
  %v1301 = vcvt.s32.f32 %v1299
  %1302 = vmin.xlane.f32.xlu0 %v1301
  %v1303 = vpop.xlane.xlu0 %1302
  %vm1304 = vcmp.eq.f32.partialorder %v1301, %v1303
  %v1305 = vsel %vm1304, %v1300, inf
  %1306 = vmin.xlane.f32.xlu0 %v1305
  %v1307 = vpop.xlane.xlu0 %1306
  %v1308 = vcvt.f32.s32 %v1307
  %v1309 = vcvt.f32.s32 %v1303
  %v1310 = vshll.u32 %v1309, 16
  %v1311 = vadd.s32 %v1310, %v1308
  %vm1312 = vcmp.eq.s32.totalorder %v259, %v1311
  %v1313 = vsel %vm1312, 1.0, 0.0
  %1315 = vrot.lane.b32.xlu0 %v1241, 127
  %v1316 = vpop.permute.xlu0 %1315
  %v1318 = vsel %vm1312, -1.0, %v1316
  %vm1319 = vcmask 122880
  %v1320 = vsel %vm1319, %v1318, -inf
  %1321 = vmax.xlane.f32.xlu0 %v1320
  %v1322 = vpop.xlane.xlu0 %1321
  %vm1323 = vcmp.ge.f32.partialorder %v1318, %v1322
  %v1324 = vsel %vm1323, %v259, 16
  %v1325 = vsel %vm1319, %v1324, 2147483647
  %v1326 = vand.u32 %v1325, 65535
  %v1327 = vshra.s32 %v1325, 16
  %v1328 = vcvt.s32.f32 %v1326
  %v1329 = vcvt.s32.f32 %v1327
  %1330 = vmin.xlane.f32.xlu0 %v1329
  %v1331 = vpop.xlane.xlu0 %1330
  %vm1332 = vcmp.eq.f32.partialorder %v1329, %v1331
  %v1333 = vsel %vm1332, %v1328, inf
  %1334 = vmin.xlane.f32.xlu0 %v1333
  %v1335 = vpop.xlane.xlu0 %1334
  %v1336 = vcvt.f32.s32 %v1335
  %v1337 = vcvt.f32.s32 %v1331
  %v1338 = vshll.u32 %v1337, 16
  %v1339 = vadd.s32 %v1338, %v1336
  %vm1340 = vcmp.eq.s32.totalorder %v259, %v1339
  %v1341 = vsel %vm1340, 1.0, %v1313
  %v1342 = vsel %vm1340, -1.0, %v1318
  %v1343 = vsel %vm1319, %v1342, -inf
  %1344 = vmax.xlane.f32.xlu0 %v1343
  %v1345 = vpop.xlane.xlu0 %1344
  %vm1346 = vcmp.ge.f32.partialorder %v1342, %v1345
  %v1347 = vsel %vm1346, %v259, 16
  %v1348 = vsel %vm1319, %v1347, 2147483647
  %v1349 = vand.u32 %v1348, 65535
  %v1350 = vshra.s32 %v1348, 16
  %v1351 = vcvt.s32.f32 %v1349
  %v1352 = vcvt.s32.f32 %v1350
  %1353 = vmin.xlane.f32.xlu0 %v1352
  %v1354 = vpop.xlane.xlu0 %1353
  %vm1355 = vcmp.eq.f32.partialorder %v1352, %v1354
  %v1356 = vsel %vm1355, %v1351, inf
  %1357 = vmin.xlane.f32.xlu0 %v1356
  %v1358 = vpop.xlane.xlu0 %1357
  %v1359 = vcvt.f32.s32 %v1358
  %v1360 = vcvt.f32.s32 %v1354
  %v1361 = vshll.u32 %v1360, 16
  %v1362 = vadd.s32 %v1361, %v1359
  %vm1363 = vcmp.eq.s32.totalorder %v259, %v1362
  %v1364 = vsel %vm1363, 1.0, %v1341
  %v1365 = vsel %vm1363, -1.0, %v1342
  %v1366 = vsel %vm1319, %v1365, -inf
  %1367 = vmax.xlane.f32.xlu0 %v1366
  %v1368 = vpop.xlane.xlu0 %1367
  %vm1369 = vcmp.ge.f32.partialorder %v1365, %v1368
  %v1370 = vsel %vm1369, %v259, 16
  %v1371 = vsel %vm1319, %v1370, 2147483647
  %v1372 = vand.u32 %v1371, 65535
  %v1373 = vshra.s32 %v1371, 16
  %v1374 = vcvt.s32.f32 %v1372
  %v1375 = vcvt.s32.f32 %v1373
  %1376 = vmin.xlane.f32.xlu0 %v1375
  %v1377 = vpop.xlane.xlu0 %1376
  %vm1378 = vcmp.eq.f32.partialorder %v1375, %v1377
  %v1379 = vsel %vm1378, %v1374, inf
  %1380 = vmin.xlane.f32.xlu0 %v1379
  %v1381 = vpop.xlane.xlu0 %1380
  %v1382 = vcvt.f32.s32 %v1381
  %v1383 = vcvt.f32.s32 %v1377
  %v1384 = vshll.u32 %v1383, 16
  %v1385 = vadd.s32 %v1384, %v1382
  %vm1386 = vcmp.eq.s32.totalorder %v259, %v1385
  %v1387 = vsel %vm1386, 1.0, %v1364
  %v1388 = vsel %vm1386, -1.0, %v1365
  %v1389 = vsel %vm1319, %v1388, -inf
  %1390 = vmax.xlane.f32.xlu0 %v1389
  %v1391 = vpop.xlane.xlu0 %1390
  %vm1392 = vcmp.ge.f32.partialorder %v1388, %v1391
  %v1393 = vsel %vm1392, %v259, 16
  %v1394 = vsel %vm1319, %v1393, 2147483647
  %v1395 = vand.u32 %v1394, 65535
  %v1396 = vshra.s32 %v1394, 16
  %v1397 = vcvt.s32.f32 %v1395
  %v1398 = vcvt.s32.f32 %v1396
  %1399 = vmin.xlane.f32.xlu0 %v1398
  %v1400 = vpop.xlane.xlu0 %1399
  %vm1401 = vcmp.eq.f32.partialorder %v1398, %v1400
  %v1402 = vsel %vm1401, %v1397, inf
  %1403 = vmin.xlane.f32.xlu0 %v1402
  %v1404 = vpop.xlane.xlu0 %1403
  %v1405 = vcvt.f32.s32 %v1404
  %v1406 = vcvt.f32.s32 %v1400
  %v1407 = vshll.u32 %v1406, 16
  %v1408 = vadd.s32 %v1407, %v1405
  %vm1409 = vcmp.eq.s32.totalorder %v259, %v1408
  %v1410 = vsel %vm1409, 1.0, %v1387
  %v1411 = vsel %vm1409, -1.0, %v1388
  %v1412 = vsel %vm1319, %v1411, -inf
  %1413 = vmax.xlane.f32.xlu0 %v1412
  %v1414 = vpop.xlane.xlu0 %1413
  %vm1415 = vcmp.ge.f32.partialorder %v1411, %v1414
  %v1416 = vsel %vm1415, %v259, 16
  %v1417 = vsel %vm1319, %v1416, 2147483647
  %v1418 = vand.u32 %v1417, 65535
  %v1419 = vshra.s32 %v1417, 16
  %v1420 = vcvt.s32.f32 %v1418
  %v1421 = vcvt.s32.f32 %v1419
  %1422 = vmin.xlane.f32.xlu0 %v1421
  %v1423 = vpop.xlane.xlu0 %1422
  %vm1424 = vcmp.eq.f32.partialorder %v1421, %v1423
  %v1425 = vsel %vm1424, %v1420, inf
  %1426 = vmin.xlane.f32.xlu0 %v1425
  %v1427 = vpop.xlane.xlu0 %1426
  %v1428 = vcvt.f32.s32 %v1427
  %v1429 = vcvt.f32.s32 %v1423
  %v1430 = vshll.u32 %v1429, 16
  %v1431 = vadd.s32 %v1430, %v1428
  %vm1432 = vcmp.eq.s32.totalorder %v259, %v1431
  %v1433 = vsel %vm1432, 1.0, %v1410
  %v1434 = vsel %vm1432, -1.0, %v1411
  %v1435 = vsel %vm1319, %v1434, -inf
  %1436 = vmax.xlane.f32.xlu0 %v1435
  %v1437 = vpop.xlane.xlu0 %1436
  %vm1438 = vcmp.ge.f32.partialorder %v1434, %v1437
  %v1439 = vsel %vm1438, %v259, 16
  %v1440 = vsel %vm1319, %v1439, 2147483647
  %v1441 = vand.u32 %v1440, 65535
  %v1442 = vshra.s32 %v1440, 16
  %v1443 = vcvt.s32.f32 %v1441
  %v1444 = vcvt.s32.f32 %v1442
  %1445 = vmin.xlane.f32.xlu0 %v1444
  %v1446 = vpop.xlane.xlu0 %1445
  %vm1447 = vcmp.eq.f32.partialorder %v1444, %v1446
  %v1448 = vsel %vm1447, %v1443, inf
  %1449 = vmin.xlane.f32.xlu0 %v1448
  %v1450 = vpop.xlane.xlu0 %1449
  %v1451 = vcvt.f32.s32 %v1450
  %v1452 = vcvt.f32.s32 %v1446
  %v1453 = vshll.u32 %v1452, 16
  %v1454 = vadd.s32 %v1453, %v1451
  %vm1455 = vcmp.eq.s32.totalorder %v259, %v1454
  %v1456 = vsel %vm1455, 1.0, %v1433
  %v1457 = vsel %vm1455, -1.0, %v1434
  %v1458 = vsel %vm1319, %v1457, -inf
  %1459 = vmax.xlane.f32.xlu0 %v1458
  %v1460 = vpop.xlane.xlu0 %1459
  %vm1461 = vcmp.ge.f32.partialorder %v1457, %v1460
  %v1462 = vsel %vm1461, %v259, 16
  %v1463 = vsel %vm1319, %v1462, 2147483647
  %v1464 = vand.u32 %v1463, 65535
  %v1465 = vshra.s32 %v1463, 16
  %v1466 = vcvt.s32.f32 %v1464
  %v1467 = vcvt.s32.f32 %v1465
  %1468 = vmin.xlane.f32.xlu0 %v1467
  %v1469 = vpop.xlane.xlu0 %1468
  %vm1470 = vcmp.eq.f32.partialorder %v1467, %v1469
  %v1471 = vsel %vm1470, %v1466, inf
  %1472 = vmin.xlane.f32.xlu0 %v1471
  %v1473 = vpop.xlane.xlu0 %1472
  %v1474 = vcvt.f32.s32 %v1473
  %v1475 = vcvt.f32.s32 %v1469
  %v1476 = vshll.u32 %v1475, 16
  %v1477 = vadd.s32 %v1476, %v1474
  %vm1478 = vcmp.eq.s32.totalorder %v259, %v1477
  %v1479 = vsel %vm1478, 1.0, %v1456
  %v1481 = vsel %vm1281, %v1479, 0
  %1483 = vmatprep.subr.mxu0 0.0
  %1484 = vmatpush1.msra.mxu0 %v267
  %1485 = vmatprep.subr.mxu0 0.0
  %1486 = vmatpush1.msra.mxu0 %v268
  %1487 = vmatprep.subr.mxu0 0.0
  %1488 = vmatpush1.msra.mxu0 0.0
  %1489 = vmatprep.subr.mxu0 0.0
  %1490 = vmatpush1.msra.mxu0 0.0
  %1491 = vmatprep.subr.mxu0 0.0
  %1492 = vmatpush1.msra.mxu0 0.0
  %1493 = vmatprep.subr.mxu0 0.0
  %1494 = vmatpush1.msra.mxu0 0.0
  %1495 = vmatprep.subr.mxu0 0.0
  %1496 = vmatpush1.msra.mxu0 0.0
  %1497 = vmatprep.subr.mxu0 0.0
  %1498 = vmatpush1.msra.mxu0 0.0
  %1499 = vmatprep.subr.mxu0 0.0
  %1500 = vmatpush1.msra.mxu0 0.0
  %1501 = vmatprep.subr.mxu0 0.0
  %1502 = vmatpush1.msra.mxu0 0.0
  %1503 = vmatprep.subr.mxu0 0.0
  %1504 = vmatpush1.msra.mxu0 0.0
  %1505 = vmatprep.subr.mxu0 0.0
  %1506 = vmatpush1.msra.mxu0 0.0
  %1507 = vmatprep.subr.mxu0 0.0
  %1508 = vmatpush1.msra.mxu0 0.0
  %1509 = vmatprep.subr.mxu0 0.0
  %1510 = vmatpush1.msra.mxu0 0.0
  %1511 = vmatprep.subr.mxu0 0.0
  %1512 = vmatpush1.msra.mxu0 0.0
  %1513 = vmatprep.subr.mxu0 0.0
  %1514 = vmatpush1.msra.mxu0 0.0
  %1515 = vmatprep.subr.mxu0 0.0
  %1516 = vmatpush1.msra.mxu0 0.0
  %1517 = vmatprep.subr.mxu0 0.0
  %1518 = vmatpush1.msra.mxu0 0.0
  %1519 = vmatprep.subr.mxu0 0.0
  %1520 = vmatpush1.msra.mxu0 0.0
  %1521 = vmatprep.subr.mxu0 0.0
  %1522 = vmatpush1.msra.mxu0 0.0
  %1523 = vmatprep.subr.mxu0 0.0
  %1524 = vmatpush1.msra.mxu0 0.0
  %1525 = vmatprep.subr.mxu0 0.0
  %1526 = vmatpush1.msra.mxu0 0.0
  %1527 = vmatprep.subr.mxu0 0.0
  %1528 = vmatpush1.msra.mxu0 0.0
  %1529 = vmatprep.subr.mxu0 0.0
  %1530 = vmatpush1.msra.mxu0 0.0
  %1531 = vmatprep.subr.mxu0 0.0
  %1532 = vmatpush1.msra.mxu0 0.0
  %1533 = vmatprep.subr.mxu0 0.0
  %1534 = vmatpush1.msra.mxu0 0.0
  %1535 = vmatprep.subr.mxu0 0.0
  %1536 = vmatpush1.msra.mxu0 0.0
  %1537 = vmatprep.subr.mxu0 0.0
  %1538 = vmatpush1.msra.mxu0 0.0
  %1539 = vmatprep.subr.mxu0 0.0
  %1540 = vmatpush1.msra.mxu0 0.0
  %1541 = vmatprep.subr.mxu0 0.0
  %1542 = vmatpush1.msra.mxu0 0.0
  %1543 = vmatprep.subr.mxu0 0.0
  %1544 = vmatpush1.msra.mxu0 0.0
  %1545 = vmatprep.subr.mxu0 0.0
  %1546 = vmatpush1.msra.mxu0 0.0
  %1547 = vmatprep.mubr.f32.mxu0 0.0
  %1548 = vmatmul.mubr.f32.gmra.mrb[0].mxu0 %v1481
  %v1549 = vpop.f32.mrb[0].mxu0
  %v1550 = vadd.f32 0.0, %v1549
  %v1551 = vpop.f32.mrb[0].mxu0
  %1552 = vdwg.mxu0
  %v1553 = vcvt.f32.s32.to.zero.pseudo %v1550
  %v1554 = vlaneseq
  %v1555 = vshrl.u32 %v1554, 7
  %v1556 = vsub.s32 0, %v1555
  %v1557 = vrot.slane %v1479, %v1556
  %vm1558 = vcmp.gt.f32.partialorder %v1557, 0.5
  %v1559 = vlaneseq
  %v1560 = vshrl.u32 %v1559, 7
  %v1561 = vsub.s32 0, %v1560
  %v1562 = vrot.slane %v1553, %v1561
  %v1563 = vadd.s32 %v1562, 1
  %vm1564 = vcmp.eq.s32.totalorder %v1563, %v261
  %vm1565 = vcmp.eq.s32.totalorder %v1563, %v262
  %vm1566 = vmand %vm1564, %vm1558
  %vm1567 = vmand %vm1565, %vm1558
  %v1568 = vsel %vm1566, 1.0, 0.0
  %v1569 = vsel %vm1567, 1.0, 0.0
  %1572 = vrot.lane.b32.xlu0 %v1568, 1
  %v1573 = vpop.permute.xlu0 %1572
  %1574 = vrot.lane.b32.xlu0 %v1569, 1
  %v1575 = vpop.permute.xlu0 %1574
  %vm1578 = vcmask 7168
  %v1579 = vsel %vm1578, %v273, %v1573
  %v1580 = vsel %vm1578, %v274, %v1575
  %vm1583 = vcmask 1046528
  %v1584 = vrot.slane %v255, 1
  %v1585 = vrot.slane %v256, 1
  %v1586 = vsel %vm1583, %v1584, %v1585
  %v1587 = vrot.slane %v257, 1
  %v1588 = vsel %vm1583, %v1585, %v1587
  %v1591 = vrot.slane %v240, 1
  %v1592 = vrot.slane %v245, 1
  %v1593 = vsel %vm1583, %v1591, %v1592
  %v1594 = vrot.slane %v250, 1
  %v1595 = vsel %vm1583, %v1592, %v1594
  %1596 = vrot.lane.b32.xlu0 %v1593, 96
  %v1597 = vpop.permute.xlu0 %1596
  %1598 = vrot.lane.b32.xlu0 %v1595, 96
  %v1599 = vpop.permute.xlu0 %1598
  %1600 = vrot.lane.b32.xlu0 %v1594, 96
  %v1601 = vpop.permute.xlu0 %1600
  %v1602 = vsel %vm284, %v1586, 0
  %v1604 = vsel %vm284, %v1588, 0
  %v1606 = vsel %vm284, %v1587, 0
  %v1608 = vsel %vm284, %v1597, 0
  %v1610 = vsel %vm284, %v1599, 0
  %v1612 = vsel %vm284, %v1601, 0
  %1614 = vmatprep.subr.mxu0 0.0
  %1615 = vmatpush1.xpose.msra.mxu0 %v1608
  %1616 = vmatprep.subr.mxu0 0.0
  %1617 = vmatpush1.xpose.msra.mxu0 %v1610
  %1618 = vmatprep.subr.mxu0 0.0
  %1619 = vmatpush1.xpose.msra.mxu0 %v1612
  %1620 = vmatprep.subr.mxu0 0.0
  %1621 = vmatpush1.xpose.msra.mxu0 0.0
  %1622 = vmatprep.subr.mxu0 0.0
  %1623 = vmatpush1.xpose.msra.mxu0 0.0
  %1624 = vmatprep.subr.mxu0 0.0
  %1625 = vmatpush1.xpose.msra.mxu0 0.0
  %1626 = vmatprep.subr.mxu0 0.0
  %1627 = vmatpush1.xpose.msra.mxu0 0.0
  %1628 = vmatprep.subr.mxu0 0.0
  %1629 = vmatpush1.xpose.msra.mxu0 0.0
  %1630 = vmatprep.subr.mxu0 0.0
  %1631 = vmatpush1.xpose.msra.mxu0 0.0
  %1632 = vmatprep.subr.mxu0 0.0
  %1633 = vmatpush1.xpose.msra.mxu0 0.0
  %1634 = vmatprep.subr.mxu0 0.0
  %1635 = vmatpush1.xpose.msra.mxu0 0.0
  %1636 = vmatprep.subr.mxu0 0.0
  %1637 = vmatpush1.xpose.msra.mxu0 0.0
  %1638 = vmatprep.subr.mxu0 0.0
  %1639 = vmatpush1.xpose.msra.mxu0 0.0
  %1640 = vmatprep.subr.mxu0 0.0
  %1641 = vmatpush1.xpose.msra.mxu0 0.0
  %1642 = vmatprep.subr.mxu0 0.0
  %1643 = vmatpush1.xpose.msra.mxu0 0.0
  %1644 = vmatprep.subr.mxu0 0.0
  %1645 = vmatpush1.xpose.msra.mxu0 0.0
  %1646 = vmatprep.subr.mxu0 0.0
  %1647 = vmatpush1.xpose.msra.mxu0 0.0
  %1648 = vmatprep.subr.mxu0 0.0
  %1649 = vmatpush1.xpose.msra.mxu0 0.0
  %1650 = vmatprep.subr.mxu0 0.0
  %1651 = vmatpush1.xpose.msra.mxu0 0.0
  %1652 = vmatprep.subr.mxu0 0.0
  %1653 = vmatpush1.xpose.msra.mxu0 0.0
  %1654 = vmatprep.subr.mxu0 0.0
  %1655 = vmatpush1.xpose.msra.mxu0 0.0
  %1656 = vmatprep.subr.mxu0 0.0
  %1657 = vmatpush1.xpose.msra.mxu0 0.0
  %1658 = vmatprep.subr.mxu0 0.0
  %1659 = vmatpush1.xpose.msra.mxu0 0.0
  %1660 = vmatprep.subr.mxu0 0.0
  %1661 = vmatpush1.xpose.msra.mxu0 0.0
  %1662 = vmatprep.subr.mxu0 0.0
  %1663 = vmatpush1.xpose.msra.mxu0 0.0
  %1664 = vmatprep.subr.mxu0 0.0
  %1665 = vmatpush1.xpose.msra.mxu0 0.0
  %1666 = vmatprep.subr.mxu0 0.0
  %1667 = vmatpush1.xpose.msra.mxu0 0.0
  %1668 = vmatprep.subr.mxu0 0.0
  %1669 = vmatpush1.xpose.msra.mxu0 0.0
  %1670 = vmatprep.subr.mxu0 0.0
  %1671 = vmatpush1.xpose.msra.mxu0 0.0
  %1672 = vmatprep.subr.mxu0 0.0
  %1673 = vmatpush1.xpose.msra.mxu0 0.0
  %1674 = vmatprep.subr.mxu0 0.0
  %1675 = vmatpush1.xpose.msra.mxu0 0.0
  %1676 = vmatprep.subr.mxu0 0.0
  %1677 = vmatpush1.xpose.msra.mxu0 0.0
  %1678 = vmatprep.mubr.f32.mxu0 0.0
  %1679 = vmatmul.mubr.f32.gmra.mrb[0].mxu0 %v1602
  %v1680 = vpop.f32.mrb[0].mxu0
  %v1681 = vadd.f32 0.0, %v1680
  %v1682 = vpop.f32.mrb[0].mxu0
  %1683 = vmatprep.mubr.f32.mxu0 0.0
  %1684 = vmatmul.mubr.f32.gmra.mrb[0].mxu0 %v1604
  %v1685 = vpop.f32.mrb[0].mxu0
  %v1686 = vadd.f32 0.0, %v1685
  %v1687 = vpop.f32.mrb[0].mxu0
  %1688 = vmatprep.mubr.f32.mxu0 0.0
  %1689 = vmatmul.mubr.f32.gmra.mrb[0].mxu0 %v1606
  %v1690 = vpop.f32.mrb[0].mxu0
  %v1691 = vadd.f32 0.0, %v1690
  %v1692 = vpop.f32.mrb[0].mxu0
  %1693 = vdwg.mxu0
  %v1694 = vsel %vm380, %v1681, -inf
  %1695 = vmax.xlane.f32.xlu0 %v1694
  %v1696 = vpop.xlane.xlu0 %1695
  %v1697 = vsel %vm380, %v1686, -inf
  %1698 = vmax.xlane.f32.xlu0 %v1697
  %v1699 = vpop.xlane.xlu0 %1698
  %v1700 = vsel %vm387, %v1691, -inf
  %1701 = vmax.xlane.f32.xlu0 %v1700
  %v1702 = vpop.xlane.xlu0 %1701
  %v1703 = vsub.f32 %v1681, %v1696
  %v1704 = vsub.f32 %v1686, %v1699
  %v1705 = vsub.f32 %v1691, %v1702
  %v1706 = vmul.f32 %v1703, 1.442695
  %v1707 = vpow.pop %v1706
  %v1708 = vmul.f32 %v1704, 1.442695
  %v1709 = vpow.pop %v1708
  %v1710 = vmul.f32 %v1705, 1.442695
  %v1711 = vpow.pop %v1710
  %v1712 = vsel %vm380, %v1707, 0.0
  %1713 = vadd.xlane.f32.xlu0 %v1712
  %v1714 = vpop.xlane.xlu0 %1713
  %v1715 = vsel %vm380, %v1709, 0.0
  %1716 = vadd.xlane.f32.xlu0 %v1715
  %v1717 = vpop.xlane.xlu0 %1716
  %v1718 = vsel %vm387, %v1711, 0.0
  %1719 = vadd.xlane.f32.xlu0 %v1718
  %v1720 = vpop.xlane.xlu0 %1719
  %v1721 = vrcp.pop %v1714
  %v1722 = vmul.f32 1.0, %v1721
  %v1723 = vrcp.pop %v1717
  %v1724 = vmul.f32 1.0, %v1723
  %v1725 = vrcp.pop %v1720
  %v1726 = vmul.f32 1.0, %v1725
  %1727 = vrot.lane.b32.xlu0 %v1593, 64
  %v1728 = vpop.permute.xlu0 %1727
  %1729 = vrot.lane.b32.xlu0 %v1595, 64
  %v1730 = vpop.permute.xlu0 %1729
  %1731 = vrot.lane.b32.xlu0 %v1594, 64
  %v1732 = vpop.permute.xlu0 %1731
  %v1736 = vsel %vm380, %v1707, 0
  %v1739 = vsel %vm380, %v1709, 0
  %v1742 = vsel %vm380, %v1711, 0
  %v1744 = vsel %vm432, %v1732, 0
  %1746 = vmatprep.subr.mxu0 0.0
  %1747 = vmatpush1.msra.mxu0 %v1728
  %1748 = vmatprep.subr.mxu0 0.0
  %1749 = vmatpush1.msra.mxu0 %v1730
  %1750 = vmatprep.subr.mxu0 0.0
  %1751 = vmatpush1.msra.mxu0 %v1744
  %1752 = vmatprep.subr.mxu0 0.0
  %1753 = vmatpush1.msra.mxu0 0.0
  %1754 = vmatprep.subr.mxu0 0.0
  %1755 = vmatpush1.msra.mxu0 0.0
  %1756 = vmatprep.subr.mxu0 0.0
  %1757 = vmatpush1.msra.mxu0 0.0
  %1758 = vmatprep.subr.mxu0 0.0
  %1759 = vmatpush1.msra.mxu0 0.0
  %1760 = vmatprep.subr.mxu0 0.0
  %1761 = vmatpush1.msra.mxu0 0.0
  %1762 = vmatprep.subr.mxu0 0.0
  %1763 = vmatpush1.msra.mxu0 0.0
  %1764 = vmatprep.subr.mxu0 0.0
  %1765 = vmatpush1.msra.mxu0 0.0
  %1766 = vmatprep.subr.mxu0 0.0
  %1767 = vmatpush1.msra.mxu0 0.0
  %1768 = vmatprep.subr.mxu0 0.0
  %1769 = vmatpush1.msra.mxu0 0.0
  %1770 = vmatprep.subr.mxu0 0.0
  %1771 = vmatpush1.msra.mxu0 0.0
  %1772 = vmatprep.subr.mxu0 0.0
  %1773 = vmatpush1.msra.mxu0 0.0
  %1774 = vmatprep.subr.mxu0 0.0
  %1775 = vmatpush1.msra.mxu0 0.0
  %1776 = vmatprep.subr.mxu0 0.0
  %1777 = vmatpush1.msra.mxu0 0.0
  %1778 = vmatprep.subr.mxu0 0.0
  %1779 = vmatpush1.msra.mxu0 0.0
  %1780 = vmatprep.subr.mxu0 0.0
  %1781 = vmatpush1.msra.mxu0 0.0
  %1782 = vmatprep.subr.mxu0 0.0
  %1783 = vmatpush1.msra.mxu0 0.0
  %1784 = vmatprep.subr.mxu0 0.0
  %1785 = vmatpush1.msra.mxu0 0.0
  %1786 = vmatprep.subr.mxu0 0.0
  %1787 = vmatpush1.msra.mxu0 0.0
  %1788 = vmatprep.subr.mxu0 0.0
  %1789 = vmatpush1.msra.mxu0 0.0
  %1790 = vmatprep.subr.mxu0 0.0
  %1791 = vmatpush1.msra.mxu0 0.0
  %1792 = vmatprep.subr.mxu0 0.0
  %1793 = vmatpush1.msra.mxu0 0.0
  %1794 = vmatprep.subr.mxu0 0.0
  %1795 = vmatpush1.msra.mxu0 0.0
  %1796 = vmatprep.subr.mxu0 0.0
  %1797 = vmatpush1.msra.mxu0 0.0
  %1798 = vmatprep.subr.mxu0 0.0
  %1799 = vmatpush1.msra.mxu0 0.0
  %1800 = vmatprep.subr.mxu0 0.0
  %1801 = vmatpush1.msra.mxu0 0.0
  %1802 = vmatprep.subr.mxu0 0.0
  %1803 = vmatpush1.msra.mxu0 0.0
  %1804 = vmatprep.subr.mxu0 0.0
  %1805 = vmatpush1.msra.mxu0 0.0
  %1806 = vmatprep.subr.mxu0 0.0
  %1807 = vmatpush1.msra.mxu0 0.0
  %1808 = vmatprep.subr.mxu0 0.0
  %1809 = vmatpush1.msra.mxu0 0.0
  %1810 = vmatprep.mubr.f32.mxu0 0.0
  %1811 = vmatmul.mubr.f32.gmra.mrb[0].mxu0 %v1736
  %v1812 = vpop.f32.mrb[0].mxu0
  %v1813 = vadd.f32 0.0, %v1812
  %v1814 = vpop.f32.mrb[0].mxu0
  %1815 = vmatprep.mubr.f32.mxu0 0.0
  %1816 = vmatmul.mubr.f32.gmra.mrb[0].mxu0 %v1739
  %v1817 = vpop.f32.mrb[0].mxu0
  %v1818 = vadd.f32 0.0, %v1817
  %v1819 = vpop.f32.mrb[0].mxu0
  %1820 = vmatprep.mubr.f32.mxu0 0.0
  %1821 = vmatmul.mubr.f32.gmra.mrb[0].mxu0 %v1742
  %v1822 = vpop.f32.mrb[0].mxu0
  %v1823 = vadd.f32 0.0, %v1822
  %v1824 = vpop.f32.mrb[0].mxu0
  %1825 = vdwg.mxu0
  %v1826 = vmul.f32 %v1813, %v1722
  %v1827 = vmul.f32 %v1818, %v1724
  %v1828 = vmul.f32 %v1823, %v1726
  %v1829 = vmul.f32 %v1707, %v1722
  %1830 = vrot.lane.b32.xlu0 %v1586, 120
  %v1831 = vpop.permute.xlu0 %1830
  %1832 = vrot.lane.b32.xlu0 %v1588, 120
  %v1833 = vpop.permute.xlu0 %1832
  %1834 = vrot.lane.b32.xlu0 %v1587, 120
  %v1835 = vpop.permute.xlu0 %1834
  %1836 = vrot.lane.b32.xlu0 %v1593, 88
  %v1837 = vpop.permute.xlu0 %1836
  %1838 = vrot.lane.b32.xlu0 %v1595, 88
  %v1839 = vpop.permute.xlu0 %1838
  %1840 = vrot.lane.b32.xlu0 %v1594, 88
  %v1841 = vpop.permute.xlu0 %1840
  %v1842 = vsel %vm284, %v1831, 0
  %v1844 = vsel %vm284, %v1833, 0
  %v1846 = vsel %vm284, %v1835, 0
  %v1848 = vsel %vm284, %v1837, 0
  %v1850 = vsel %vm284, %v1839, 0
  %v1852 = vsel %vm284, %v1841, 0
  %1854 = vmatprep.subr.mxu0 0.0
  %1855 = vmatpush1.xpose.msra.mxu0 %v1848
  %1856 = vmatprep.subr.mxu0 0.0
  %1857 = vmatpush1.xpose.msra.mxu0 %v1850
  %1858 = vmatprep.subr.mxu0 0.0
  %1859 = vmatpush1.xpose.msra.mxu0 %v1852
  %1860 = vmatprep.subr.mxu0 0.0
  %1861 = vmatpush1.xpose.msra.mxu0 0.0
  %1862 = vmatprep.subr.mxu0 0.0
  %1863 = vmatpush1.xpose.msra.mxu0 0.0
  %1864 = vmatprep.subr.mxu0 0.0
  %1865 = vmatpush1.xpose.msra.mxu0 0.0
  %1866 = vmatprep.subr.mxu0 0.0
  %1867 = vmatpush1.xpose.msra.mxu0 0.0
  %1868 = vmatprep.subr.mxu0 0.0
  %1869 = vmatpush1.xpose.msra.mxu0 0.0
  %1870 = vmatprep.subr.mxu0 0.0
  %1871 = vmatpush1.xpose.msra.mxu0 0.0
  %1872 = vmatprep.subr.mxu0 0.0
  %1873 = vmatpush1.xpose.msra.mxu0 0.0
  %1874 = vmatprep.subr.mxu0 0.0
  %1875 = vmatpush1.xpose.msra.mxu0 0.0
  %1876 = vmatprep.subr.mxu0 0.0
  %1877 = vmatpush1.xpose.msra.mxu0 0.0
  %1878 = vmatprep.subr.mxu0 0.0
  %1879 = vmatpush1.xpose.msra.mxu0 0.0
  %1880 = vmatprep.subr.mxu0 0.0
  %1881 = vmatpush1.xpose.msra.mxu0 0.0
  %1882 = vmatprep.subr.mxu0 0.0
  %1883 = vmatpush1.xpose.msra.mxu0 0.0
  %1884 = vmatprep.subr.mxu0 0.0
  %1885 = vmatpush1.xpose.msra.mxu0 0.0
  %1886 = vmatprep.subr.mxu0 0.0
  %1887 = vmatpush1.xpose.msra.mxu0 0.0
  %1888 = vmatprep.subr.mxu0 0.0
  %1889 = vmatpush1.xpose.msra.mxu0 0.0
  %1890 = vmatprep.subr.mxu0 0.0
  %1891 = vmatpush1.xpose.msra.mxu0 0.0
  %1892 = vmatprep.subr.mxu0 0.0
  %1893 = vmatpush1.xpose.msra.mxu0 0.0
  %1894 = vmatprep.subr.mxu0 0.0
  %1895 = vmatpush1.xpose.msra.mxu0 0.0
  %1896 = vmatprep.subr.mxu0 0.0
  %1897 = vmatpush1.xpose.msra.mxu0 0.0
  %1898 = vmatprep.subr.mxu0 0.0
  %1899 = vmatpush1.xpose.msra.mxu0 0.0
  %1900 = vmatprep.subr.mxu0 0.0
  %1901 = vmatpush1.xpose.msra.mxu0 0.0
  %1902 = vmatprep.subr.mxu0 0.0
  %1903 = vmatpush1.xpose.msra.mxu0 0.0
  %1904 = vmatprep.subr.mxu0 0.0
  %1905 = vmatpush1.xpose.msra.mxu0 0.0
  %1906 = vmatprep.subr.mxu0 0.0
  %1907 = vmatpush1.xpose.msra.mxu0 0.0
  %1908 = vmatprep.subr.mxu0 0.0
  %1909 = vmatpush1.xpose.msra.mxu0 0.0
  %1910 = vmatprep.subr.mxu0 0.0
  %1911 = vmatpush1.xpose.msra.mxu0 0.0
  %1912 = vmatprep.subr.mxu0 0.0
  %1913 = vmatpush1.xpose.msra.mxu0 0.0
  %1914 = vmatprep.subr.mxu0 0.0
  %1915 = vmatpush1.xpose.msra.mxu0 0.0
  %1916 = vmatprep.subr.mxu0 0.0
  %1917 = vmatpush1.xpose.msra.mxu0 0.0
  %1918 = vmatprep.mubr.f32.mxu0 0.0
  %1919 = vmatmul.mubr.f32.gmra.mrb[0].mxu0 %v1842
  %v1920 = vpop.f32.mrb[0].mxu0
  %v1921 = vadd.f32 0.0, %v1920
  %v1922 = vpop.f32.mrb[0].mxu0
  %1923 = vmatprep.mubr.f32.mxu0 0.0
  %1924 = vmatmul.mubr.f32.gmra.mrb[0].mxu0 %v1844
  %v1925 = vpop.f32.mrb[0].mxu0
  %v1926 = vadd.f32 0.0, %v1925
  %v1927 = vpop.f32.mrb[0].mxu0
  %1928 = vmatprep.mubr.f32.mxu0 0.0
  %1929 = vmatmul.mubr.f32.gmra.mrb[0].mxu0 %v1846
  %v1930 = vpop.f32.mrb[0].mxu0
  %v1931 = vadd.f32 0.0, %v1930
  %v1932 = vpop.f32.mrb[0].mxu0
  %1933 = vdwg.mxu0
  %v1934 = vsel %vm380, %v1921, -inf
  %1935 = vmax.xlane.f32.xlu0 %v1934
  %v1936 = vpop.xlane.xlu0 %1935
  %v1937 = vsel %vm380, %v1926, -inf
  %1938 = vmax.xlane.f32.xlu0 %v1937
  %v1939 = vpop.xlane.xlu0 %1938
  %v1940 = vsel %vm387, %v1931, -inf
  %1941 = vmax.xlane.f32.xlu0 %v1940
  %v1942 = vpop.xlane.xlu0 %1941
  %v1943 = vsub.f32 %v1921, %v1936
  %v1944 = vsub.f32 %v1926, %v1939
  %v1945 = vsub.f32 %v1931, %v1942
  %v1946 = vmul.f32 %v1943, 1.442695
  %v1947 = vpow.pop %v1946
  %v1948 = vmul.f32 %v1944, 1.442695
  %v1949 = vpow.pop %v1948
  %v1950 = vmul.f32 %v1945, 1.442695
  %v1951 = vpow.pop %v1950
  %v1952 = vsel %vm380, %v1947, 0.0
  %1953 = vadd.xlane.f32.xlu0 %v1952
  %v1954 = vpop.xlane.xlu0 %1953
  %v1955 = vsel %vm380, %v1949, 0.0
  %1956 = vadd.xlane.f32.xlu0 %v1955
  %v1957 = vpop.xlane.xlu0 %1956
  %v1958 = vsel %vm387, %v1951, 0.0
  %1959 = vadd.xlane.f32.xlu0 %v1958
  %v1960 = vpop.xlane.xlu0 %1959
  %v1961 = vrcp.pop %v1954
  %v1962 = vmul.f32 1.0, %v1961
  %v1963 = vrcp.pop %v1957
  %v1964 = vmul.f32 1.0, %v1963
  %v1965 = vrcp.pop %v1960
  %v1966 = vmul.f32 1.0, %v1965
  %1967 = vrot.lane.b32.xlu0 %v1593, 56
  %v1968 = vpop.permute.xlu0 %1967
  %1969 = vrot.lane.b32.xlu0 %v1595, 56
  %v1970 = vpop.permute.xlu0 %1969
  %1971 = vrot.lane.b32.xlu0 %v1594, 56
  %v1972 = vpop.permute.xlu0 %1971
  %v1976 = vsel %vm380, %v1947, 0
  %v1979 = vsel %vm380, %v1949, 0
  %v1982 = vsel %vm380, %v1951, 0
  %v1984 = vsel %vm432, %v1972, 0
  %1986 = vmatprep.subr.mxu0 0.0
  %1987 = vmatpush1.msra.mxu0 %v1968
  %1988 = vmatprep.subr.mxu0 0.0
  %1989 = vmatpush1.msra.mxu0 %v1970
  %1990 = vmatprep.subr.mxu0 0.0
  %1991 = vmatpush1.msra.mxu0 %v1984
  %1992 = vmatprep.subr.mxu0 0.0
  %1993 = vmatpush1.msra.mxu0 0.0
  %1994 = vmatprep.subr.mxu0 0.0
  %1995 = vmatpush1.msra.mxu0 0.0
  %1996 = vmatprep.subr.mxu0 0.0
  %1997 = vmatpush1.msra.mxu0 0.0
  %1998 = vmatprep.subr.mxu0 0.0
  %1999 = vmatpush1.msra.mxu0 0.0
  %2000 = vmatprep.subr.mxu0 0.0
  %2001 = vmatpush1.msra.mxu0 0.0
  %2002 = vmatprep.subr.mxu0 0.0
  %2003 = vmatpush1.msra.mxu0 0.0
  %2004 = vmatprep.subr.mxu0 0.0
  %2005 = vmatpush1.msra.mxu0 0.0
  %2006 = vmatprep.subr.mxu0 0.0
  %2007 = vmatpush1.msra.mxu0 0.0
  %2008 = vmatprep.subr.mxu0 0.0
  %2009 = vmatpush1.msra.mxu0 0.0
  %2010 = vmatprep.subr.mxu0 0.0
  %2011 = vmatpush1.msra.mxu0 0.0
  %2012 = vmatprep.subr.mxu0 0.0
  %2013 = vmatpush1.msra.mxu0 0.0
  %2014 = vmatprep.subr.mxu0 0.0
  %2015 = vmatpush1.msra.mxu0 0.0
  %2016 = vmatprep.subr.mxu0 0.0
  %2017 = vmatpush1.msra.mxu0 0.0
  %2018 = vmatprep.subr.mxu0 0.0
  %2019 = vmatpush1.msra.mxu0 0.0
  %2020 = vmatprep.subr.mxu0 0.0
  %2021 = vmatpush1.msra.mxu0 0.0
  %2022 = vmatprep.subr.mxu0 0.0
  %2023 = vmatpush1.msra.mxu0 0.0
  %2024 = vmatprep.subr.mxu0 0.0
  %2025 = vmatpush1.msra.mxu0 0.0
  %2026 = vmatprep.subr.mxu0 0.0
  %2027 = vmatpush1.msra.mxu0 0.0
  %2028 = vmatprep.subr.mxu0 0.0
  %2029 = vmatpush1.msra.mxu0 0.0
  %2030 = vmatprep.subr.mxu0 0.0
  %2031 = vmatpush1.msra.mxu0 0.0
  %2032 = vmatprep.subr.mxu0 0.0
  %2033 = vmatpush1.msra.mxu0 0.0
  %2034 = vmatprep.subr.mxu0 0.0
  %2035 = vmatpush1.msra.mxu0 0.0
  %2036 = vmatprep.subr.mxu0 0.0
  %2037 = vmatpush1.msra.mxu0 0.0
  %2038 = vmatprep.subr.mxu0 0.0
  %2039 = vmatpush1.msra.mxu0 0.0
  %2040 = vmatprep.subr.mxu0 0.0
  %2041 = vmatpush1.msra.mxu0 0.0
  %2042 = vmatprep.subr.mxu0 0.0
  %2043 = vmatpush1.msra.mxu0 0.0
  %2044 = vmatprep.subr.mxu0 0.0
  %2045 = vmatpush1.msra.mxu0 0.0
  %2046 = vmatprep.subr.mxu0 0.0
  %2047 = vmatpush1.msra.mxu0 0.0
  %2048 = vmatprep.subr.mxu0 0.0
  %2049 = vmatpush1.msra.mxu0 0.0
  %2050 = vmatprep.mubr.f32.mxu0 0.0
  %2051 = vmatmul.mubr.f32.gmra.mrb[0].mxu0 %v1976
  %v2052 = vpop.f32.mrb[0].mxu0
  %v2053 = vadd.f32 0.0, %v2052
  %v2054 = vpop.f32.mrb[0].mxu0
  %2055 = vmatprep.mubr.f32.mxu0 0.0
  %2056 = vmatmul.mubr.f32.gmra.mrb[0].mxu0 %v1979
  %v2057 = vpop.f32.mrb[0].mxu0
  %v2058 = vadd.f32 0.0, %v2057
  %v2059 = vpop.f32.mrb[0].mxu0
  %2060 = vmatprep.mubr.f32.mxu0 0.0
  %2061 = vmatmul.mubr.f32.gmra.mrb[0].mxu0 %v1982
  %v2062 = vpop.f32.mrb[0].mxu0
  %v2063 = vadd.f32 0.0, %v2062
  %v2064 = vpop.f32.mrb[0].mxu0
  %2065 = vdwg.mxu0
  %v2066 = vmul.f32 %v2053, %v1962
  %v2067 = vmul.f32 %v2058, %v1964
  %v2068 = vmul.f32 %v2063, %v1966
  %v2069 = vmul.f32 %v1947, %v1962
  %v2070 = vmax.f32 %v1829, %v2069
  %2071 = vrot.lane.b32.xlu0 %v1586, 112
  %v2072 = vpop.permute.xlu0 %2071
  %2073 = vrot.lane.b32.xlu0 %v1588, 112
  %v2074 = vpop.permute.xlu0 %2073
  %2075 = vrot.lane.b32.xlu0 %v1587, 112
  %v2076 = vpop.permute.xlu0 %2075
  %2077 = vrot.lane.b32.xlu0 %v1593, 80
  %v2078 = vpop.permute.xlu0 %2077
  %2079 = vrot.lane.b32.xlu0 %v1595, 80
  %v2080 = vpop.permute.xlu0 %2079
  %2081 = vrot.lane.b32.xlu0 %v1594, 80
  %v2082 = vpop.permute.xlu0 %2081
  %v2083 = vsel %vm284, %v2072, 0
  %v2085 = vsel %vm284, %v2074, 0
  %v2087 = vsel %vm284, %v2076, 0
  %v2089 = vsel %vm284, %v2078, 0
  %v2091 = vsel %vm284, %v2080, 0
  %v2093 = vsel %vm284, %v2082, 0
  %2095 = vmatprep.subr.mxu0 0.0
  %2096 = vmatpush1.xpose.msra.mxu0 %v2089
  %2097 = vmatprep.subr.mxu0 0.0
  %2098 = vmatpush1.xpose.msra.mxu0 %v2091
  %2099 = vmatprep.subr.mxu0 0.0
  %2100 = vmatpush1.xpose.msra.mxu0 %v2093
  %2101 = vmatprep.subr.mxu0 0.0
  %2102 = vmatpush1.xpose.msra.mxu0 0.0
  %2103 = vmatprep.subr.mxu0 0.0
  %2104 = vmatpush1.xpose.msra.mxu0 0.0
  %2105 = vmatprep.subr.mxu0 0.0
  %2106 = vmatpush1.xpose.msra.mxu0 0.0
  %2107 = vmatprep.subr.mxu0 0.0
  %2108 = vmatpush1.xpose.msra.mxu0 0.0
  %2109 = vmatprep.subr.mxu0 0.0
  %2110 = vmatpush1.xpose.msra.mxu0 0.0
  %2111 = vmatprep.subr.mxu0 0.0
  %2112 = vmatpush1.xpose.msra.mxu0 0.0
  %2113 = vmatprep.subr.mxu0 0.0
  %2114 = vmatpush1.xpose.msra.mxu0 0.0
  %2115 = vmatprep.subr.mxu0 0.0
  %2116 = vmatpush1.xpose.msra.mxu0 0.0
  %2117 = vmatprep.subr.mxu0 0.0
  %2118 = vmatpush1.xpose.msra.mxu0 0.0
  %2119 = vmatprep.subr.mxu0 0.0
  %2120 = vmatpush1.xpose.msra.mxu0 0.0
  %2121 = vmatprep.subr.mxu0 0.0
  %2122 = vmatpush1.xpose.msra.mxu0 0.0
  %2123 = vmatprep.subr.mxu0 0.0
  %2124 = vmatpush1.xpose.msra.mxu0 0.0
  %2125 = vmatprep.subr.mxu0 0.0
  %2126 = vmatpush1.xpose.msra.mxu0 0.0
  %2127 = vmatprep.subr.mxu0 0.0
  %2128 = vmatpush1.xpose.msra.mxu0 0.0
  %2129 = vmatprep.subr.mxu0 0.0
  %2130 = vmatpush1.xpose.msra.mxu0 0.0
  %2131 = vmatprep.subr.mxu0 0.0
  %2132 = vmatpush1.xpose.msra.mxu0 0.0
  %2133 = vmatprep.subr.mxu0 0.0
  %2134 = vmatpush1.xpose.msra.mxu0 0.0
  %2135 = vmatprep.subr.mxu0 0.0
  %2136 = vmatpush1.xpose.msra.mxu0 0.0
  %2137 = vmatprep.subr.mxu0 0.0
  %2138 = vmatpush1.xpose.msra.mxu0 0.0
  %2139 = vmatprep.subr.mxu0 0.0
  %2140 = vmatpush1.xpose.msra.mxu0 0.0
  %2141 = vmatprep.subr.mxu0 0.0
  %2142 = vmatpush1.xpose.msra.mxu0 0.0
  %2143 = vmatprep.subr.mxu0 0.0
  %2144 = vmatpush1.xpose.msra.mxu0 0.0
  %2145 = vmatprep.subr.mxu0 0.0
  %2146 = vmatpush1.xpose.msra.mxu0 0.0
  %2147 = vmatprep.subr.mxu0 0.0
  %2148 = vmatpush1.xpose.msra.mxu0 0.0
  %2149 = vmatprep.subr.mxu0 0.0
  %2150 = vmatpush1.xpose.msra.mxu0 0.0
  %2151 = vmatprep.subr.mxu0 0.0
  %2152 = vmatpush1.xpose.msra.mxu0 0.0
  %2153 = vmatprep.subr.mxu0 0.0
  %2154 = vmatpush1.xpose.msra.mxu0 0.0
  %2155 = vmatprep.subr.mxu0 0.0
  %2156 = vmatpush1.xpose.msra.mxu0 0.0
  %2157 = vmatprep.subr.mxu0 0.0
  %2158 = vmatpush1.xpose.msra.mxu0 0.0
  %2159 = vmatprep.mubr.f32.mxu0 0.0
  %2160 = vmatmul.mubr.f32.gmra.mrb[0].mxu0 %v2083
  %v2161 = vpop.f32.mrb[0].mxu0
  %v2162 = vadd.f32 0.0, %v2161
  %v2163 = vpop.f32.mrb[0].mxu0
  %2164 = vmatprep.mubr.f32.mxu0 0.0
  %2165 = vmatmul.mubr.f32.gmra.mrb[0].mxu0 %v2085
  %v2166 = vpop.f32.mrb[0].mxu0
  %v2167 = vadd.f32 0.0, %v2166
  %v2168 = vpop.f32.mrb[0].mxu0
  %2169 = vmatprep.mubr.f32.mxu0 0.0
  %2170 = vmatmul.mubr.f32.gmra.mrb[0].mxu0 %v2087
  %v2171 = vpop.f32.mrb[0].mxu0
  %v2172 = vadd.f32 0.0, %v2171
  %v2173 = vpop.f32.mrb[0].mxu0
  %2174 = vdwg.mxu0
  %v2175 = vsel %vm380, %v2162, -inf
  %2176 = vmax.xlane.f32.xlu0 %v2175
  %v2177 = vpop.xlane.xlu0 %2176
  %v2178 = vsel %vm380, %v2167, -inf
  %2179 = vmax.xlane.f32.xlu0 %v2178
  %v2180 = vpop.xlane.xlu0 %2179
  %v2181 = vsel %vm387, %v2172, -inf
  %2182 = vmax.xlane.f32.xlu0 %v2181
  %v2183 = vpop.xlane.xlu0 %2182
  %v2184 = vsub.f32 %v2162, %v2177
  %v2185 = vsub.f32 %v2167, %v2180
  %v2186 = vsub.f32 %v2172, %v2183
  %v2187 = vmul.f32 %v2184, 1.442695
  %v2188 = vpow.pop %v2187
  %v2189 = vmul.f32 %v2185, 1.442695
  %v2190 = vpow.pop %v2189
  %v2191 = vmul.f32 %v2186, 1.442695
  %v2192 = vpow.pop %v2191
  %v2193 = vsel %vm380, %v2188, 0.0
  %2194 = vadd.xlane.f32.xlu0 %v2193
  %v2195 = vpop.xlane.xlu0 %2194
  %v2196 = vsel %vm380, %v2190, 0.0
  %2197 = vadd.xlane.f32.xlu0 %v2196
  %v2198 = vpop.xlane.xlu0 %2197
  %v2199 = vsel %vm387, %v2192, 0.0
  %2200 = vadd.xlane.f32.xlu0 %v2199
  %v2201 = vpop.xlane.xlu0 %2200
  %v2202 = vrcp.pop %v2195
  %v2203 = vmul.f32 1.0, %v2202
  %v2204 = vrcp.pop %v2198
  %v2205 = vmul.f32 1.0, %v2204
  %v2206 = vrcp.pop %v2201
  %v2207 = vmul.f32 1.0, %v2206
  %2208 = vrot.lane.b32.xlu0 %v1593, 48
  %v2209 = vpop.permute.xlu0 %2208
  %2210 = vrot.lane.b32.xlu0 %v1595, 48
  %v2211 = vpop.permute.xlu0 %2210
  %2212 = vrot.lane.b32.xlu0 %v1594, 48
  %v2213 = vpop.permute.xlu0 %2212
  %v2217 = vsel %vm380, %v2188, 0
  %v2220 = vsel %vm380, %v2190, 0
  %v2223 = vsel %vm380, %v2192, 0
  %v2225 = vsel %vm432, %v2213, 0
  %2227 = vmatprep.subr.mxu0 0.0
  %2228 = vmatpush1.msra.mxu0 %v2209
  %2229 = vmatprep.subr.mxu0 0.0
  %2230 = vmatpush1.msra.mxu0 %v2211
  %2231 = vmatprep.subr.mxu0 0.0
  %2232 = vmatpush1.msra.mxu0 %v2225
  %2233 = vmatprep.subr.mxu0 0.0
  %2234 = vmatpush1.msra.mxu0 0.0
  %2235 = vmatprep.subr.mxu0 0.0
  %2236 = vmatpush1.msra.mxu0 0.0
  %2237 = vmatprep.subr.mxu0 0.0
  %2238 = vmatpush1.msra.mxu0 0.0
  %2239 = vmatprep.subr.mxu0 0.0
  %2240 = vmatpush1.msra.mxu0 0.0
  %2241 = vmatprep.subr.mxu0 0.0
  %2242 = vmatpush1.msra.mxu0 0.0
  %2243 = vmatprep.subr.mxu0 0.0
  %2244 = vmatpush1.msra.mxu0 0.0
  %2245 = vmatprep.subr.mxu0 0.0
  %2246 = vmatpush1.msra.mxu0 0.0
  %2247 = vmatprep.subr.mxu0 0.0
  %2248 = vmatpush1.msra.mxu0 0.0
  %2249 = vmatprep.subr.mxu0 0.0
  %2250 = vmatpush1.msra.mxu0 0.0
  %2251 = vmatprep.subr.mxu0 0.0
  %2252 = vmatpush1.msra.mxu0 0.0
  %2253 = vmatprep.subr.mxu0 0.0
  %2254 = vmatpush1.msra.mxu0 0.0
  %2255 = vmatprep.subr.mxu0 0.0
  %2256 = vmatpush1.msra.mxu0 0.0
  %2257 = vmatprep.subr.mxu0 0.0
  %2258 = vmatpush1.msra.mxu0 0.0
  %2259 = vmatprep.subr.mxu0 0.0
  %2260 = vmatpush1.msra.mxu0 0.0
  %2261 = vmatprep.subr.mxu0 0.0
  %2262 = vmatpush1.msra.mxu0 0.0
  %2263 = vmatprep.subr.mxu0 0.0
  %2264 = vmatpush1.msra.mxu0 0.0
  %2265 = vmatprep.subr.mxu0 0.0
  %2266 = vmatpush1.msra.mxu0 0.0
  %2267 = vmatprep.subr.mxu0 0.0
  %2268 = vmatpush1.msra.mxu0 0.0
  %2269 = vmatprep.subr.mxu0 0.0
  %2270 = vmatpush1.msra.mxu0 0.0
  %2271 = vmatprep.subr.mxu0 0.0
  %2272 = vmatpush1.msra.mxu0 0.0
  %2273 = vmatprep.subr.mxu0 0.0
  %2274 = vmatpush1.msra.mxu0 0.0
  %2275 = vmatprep.subr.mxu0 0.0
  %2276 = vmatpush1.msra.mxu0 0.0
  %2277 = vmatprep.subr.mxu0 0.0
  %2278 = vmatpush1.msra.mxu0 0.0
  %2279 = vmatprep.subr.mxu0 0.0
  %2280 = vmatpush1.msra.mxu0 0.0
  %2281 = vmatprep.subr.mxu0 0.0
  %2282 = vmatpush1.msra.mxu0 0.0
  %2283 = vmatprep.subr.mxu0 0.0
  %2284 = vmatpush1.msra.mxu0 0.0
  %2285 = vmatprep.subr.mxu0 0.0
  %2286 = vmatpush1.msra.mxu0 0.0
  %2287 = vmatprep.subr.mxu0 0.0
  %2288 = vmatpush1.msra.mxu0 0.0
  %2289 = vmatprep.subr.mxu0 0.0
  %2290 = vmatpush1.msra.mxu0 0.0
  %2291 = vmatprep.mubr.f32.mxu0 0.0
  %2292 = vmatmul.mubr.f32.gmra.mrb[0].mxu0 %v2217
  %v2293 = vpop.f32.mrb[0].mxu0
  %v2294 = vadd.f32 0.0, %v2293
  %v2295 = vpop.f32.mrb[0].mxu0
  %2296 = vmatprep.mubr.f32.mxu0 0.0
  %2297 = vmatmul.mubr.f32.gmra.mrb[0].mxu0 %v2220
  %v2298 = vpop.f32.mrb[0].mxu0
  %v2299 = vadd.f32 0.0, %v2298
  %v2300 = vpop.f32.mrb[0].mxu0
  %2301 = vmatprep.mubr.f32.mxu0 0.0
  %2302 = vmatmul.mubr.f32.gmra.mrb[0].mxu0 %v2223
  %v2303 = vpop.f32.mrb[0].mxu0
  %v2304 = vadd.f32 0.0, %v2303
  %v2305 = vpop.f32.mrb[0].mxu0
  %2306 = vdwg.mxu0
  %v2307 = vmul.f32 %v2294, %v2203
  %v2308 = vmul.f32 %v2299, %v2205
  %v2309 = vmul.f32 %v2304, %v2207
  %v2310 = vmul.f32 %v2188, %v2203
  %v2311 = vmax.f32 %v2070, %v2310
  %2312 = vrot.lane.b32.xlu0 %v1586, 104
  %v2313 = vpop.permute.xlu0 %2312
  %2314 = vrot.lane.b32.xlu0 %v1588, 104
  %v2315 = vpop.permute.xlu0 %2314
  %2316 = vrot.lane.b32.xlu0 %v1587, 104
  %v2317 = vpop.permute.xlu0 %2316
  %2318 = vrot.lane.b32.xlu0 %v1593, 72
  %v2319 = vpop.permute.xlu0 %2318
  %2320 = vrot.lane.b32.xlu0 %v1595, 72
  %v2321 = vpop.permute.xlu0 %2320
  %2322 = vrot.lane.b32.xlu0 %v1594, 72
  %v2323 = vpop.permute.xlu0 %2322
  %v2324 = vsel %vm284, %v2313, 0
  %v2326 = vsel %vm284, %v2315, 0
  %v2328 = vsel %vm284, %v2317, 0
  %v2330 = vsel %vm284, %v2319, 0
  %v2332 = vsel %vm284, %v2321, 0
  %v2334 = vsel %vm284, %v2323, 0
  %2336 = vmatprep.subr.mxu0 0.0
  %2337 = vmatpush1.xpose.msra.mxu0 %v2330
  %2338 = vmatprep.subr.mxu0 0.0
  %2339 = vmatpush1.xpose.msra.mxu0 %v2332
  %2340 = vmatprep.subr.mxu0 0.0
  %2341 = vmatpush1.xpose.msra.mxu0 %v2334
  %2342 = vmatprep.subr.mxu0 0.0
  %2343 = vmatpush1.xpose.msra.mxu0 0.0
  %2344 = vmatprep.subr.mxu0 0.0
  %2345 = vmatpush1.xpose.msra.mxu0 0.0
  %2346 = vmatprep.subr.mxu0 0.0
  %2347 = vmatpush1.xpose.msra.mxu0 0.0
  %2348 = vmatprep.subr.mxu0 0.0
  %2349 = vmatpush1.xpose.msra.mxu0 0.0
  %2350 = vmatprep.subr.mxu0 0.0
  %2351 = vmatpush1.xpose.msra.mxu0 0.0
  %2352 = vmatprep.subr.mxu0 0.0
  %2353 = vmatpush1.xpose.msra.mxu0 0.0
  %2354 = vmatprep.subr.mxu0 0.0
  %2355 = vmatpush1.xpose.msra.mxu0 0.0
  %2356 = vmatprep.subr.mxu0 0.0
  %2357 = vmatpush1.xpose.msra.mxu0 0.0
  %2358 = vmatprep.subr.mxu0 0.0
  %2359 = vmatpush1.xpose.msra.mxu0 0.0
  %2360 = vmatprep.subr.mxu0 0.0
  %2361 = vmatpush1.xpose.msra.mxu0 0.0
  %2362 = vmatprep.subr.mxu0 0.0
  %2363 = vmatpush1.xpose.msra.mxu0 0.0
  %2364 = vmatprep.subr.mxu0 0.0
  %2365 = vmatpush1.xpose.msra.mxu0 0.0
  %2366 = vmatprep.subr.mxu0 0.0
  %2367 = vmatpush1.xpose.msra.mxu0 0.0
  %2368 = vmatprep.subr.mxu0 0.0
  %2369 = vmatpush1.xpose.msra.mxu0 0.0
  %2370 = vmatprep.subr.mxu0 0.0
  %2371 = vmatpush1.xpose.msra.mxu0 0.0
  %2372 = vmatprep.subr.mxu0 0.0
  %2373 = vmatpush1.xpose.msra.mxu0 0.0
  %2374 = vmatprep.subr.mxu0 0.0
  %2375 = vmatpush1.xpose.msra.mxu0 0.0
  %2376 = vmatprep.subr.mxu0 0.0
  %2377 = vmatpush1.xpose.msra.mxu0 0.0
  %2378 = vmatprep.subr.mxu0 0.0
  %2379 = vmatpush1.xpose.msra.mxu0 0.0
  %2380 = vmatprep.subr.mxu0 0.0
  %2381 = vmatpush1.xpose.msra.mxu0 0.0
  %2382 = vmatprep.subr.mxu0 0.0
  %2383 = vmatpush1.xpose.msra.mxu0 0.0
  %2384 = vmatprep.subr.mxu0 0.0
  %2385 = vmatpush1.xpose.msra.mxu0 0.0
  %2386 = vmatprep.subr.mxu0 0.0
  %2387 = vmatpush1.xpose.msra.mxu0 0.0
  %2388 = vmatprep.subr.mxu0 0.0
  %2389 = vmatpush1.xpose.msra.mxu0 0.0
  %2390 = vmatprep.subr.mxu0 0.0
  %2391 = vmatpush1.xpose.msra.mxu0 0.0
  %2392 = vmatprep.subr.mxu0 0.0
  %2393 = vmatpush1.xpose.msra.mxu0 0.0
  %2394 = vmatprep.subr.mxu0 0.0
  %2395 = vmatpush1.xpose.msra.mxu0 0.0
  %2396 = vmatprep.subr.mxu0 0.0
  %2397 = vmatpush1.xpose.msra.mxu0 0.0
  %2398 = vmatprep.subr.mxu0 0.0
  %2399 = vmatpush1.xpose.msra.mxu0 0.0
  %2400 = vmatprep.mubr.f32.mxu0 0.0
  %2401 = vmatmul.mubr.f32.gmra.mrb[0].mxu0 %v2324
  %v2402 = vpop.f32.mrb[0].mxu0
  %v2403 = vadd.f32 0.0, %v2402
  %v2404 = vpop.f32.mrb[0].mxu0
  %2405 = vmatprep.mubr.f32.mxu0 0.0
  %2406 = vmatmul.mubr.f32.gmra.mrb[0].mxu0 %v2326
  %v2407 = vpop.f32.mrb[0].mxu0
  %v2408 = vadd.f32 0.0, %v2407
  %v2409 = vpop.f32.mrb[0].mxu0
  %2410 = vmatprep.mubr.f32.mxu0 0.0
  %2411 = vmatmul.mubr.f32.gmra.mrb[0].mxu0 %v2328
  %v2412 = vpop.f32.mrb[0].mxu0
  %v2413 = vadd.f32 0.0, %v2412
  %v2414 = vpop.f32.mrb[0].mxu0
  %2415 = vdwg.mxu0
  %v2416 = vsel %vm380, %v2403, -inf
  %2417 = vmax.xlane.f32.xlu0 %v2416
  %v2418 = vpop.xlane.xlu0 %2417
  %v2419 = vsel %vm380, %v2408, -inf
  %2420 = vmax.xlane.f32.xlu0 %v2419
  %v2421 = vpop.xlane.xlu0 %2420
  %v2422 = vsel %vm387, %v2413, -inf
  %2423 = vmax.xlane.f32.xlu0 %v2422
  %v2424 = vpop.xlane.xlu0 %2423
  %v2425 = vsub.f32 %v2403, %v2418
  %v2426 = vsub.f32 %v2408, %v2421
  %v2427 = vsub.f32 %v2413, %v2424
  %v2428 = vmul.f32 %v2425, 1.442695
  %v2429 = vpow.pop %v2428
  %v2430 = vmul.f32 %v2426, 1.442695
  %v2431 = vpow.pop %v2430
  %v2432 = vmul.f32 %v2427, 1.442695
  %v2433 = vpow.pop %v2432
  %v2434 = vsel %vm380, %v2429, 0.0
  %2435 = vadd.xlane.f32.xlu0 %v2434
  %v2436 = vpop.xlane.xlu0 %2435
  %v2437 = vsel %vm380, %v2431, 0.0
  %2438 = vadd.xlane.f32.xlu0 %v2437
  %v2439 = vpop.xlane.xlu0 %2438
  %v2440 = vsel %vm387, %v2433, 0.0
  %2441 = vadd.xlane.f32.xlu0 %v2440
  %v2442 = vpop.xlane.xlu0 %2441
  %v2443 = vrcp.pop %v2436
  %v2444 = vmul.f32 1.0, %v2443
  %v2445 = vrcp.pop %v2439
  %v2446 = vmul.f32 1.0, %v2445
  %v2447 = vrcp.pop %v2442
  %v2448 = vmul.f32 1.0, %v2447
  %2449 = vrot.lane.b32.xlu0 %v1593, 40
  %v2450 = vpop.permute.xlu0 %2449
  %2451 = vrot.lane.b32.xlu0 %v1595, 40
  %v2452 = vpop.permute.xlu0 %2451
  %2453 = vrot.lane.b32.xlu0 %v1594, 40
  %v2454 = vpop.permute.xlu0 %2453
  %v2458 = vsel %vm380, %v2429, 0
  %v2461 = vsel %vm380, %v2431, 0
  %v2464 = vsel %vm380, %v2433, 0
  %v2466 = vsel %vm432, %v2454, 0
  %2468 = vmatprep.subr.mxu0 0.0
  %2469 = vmatpush1.msra.mxu0 %v2450
  %2470 = vmatprep.subr.mxu0 0.0
  %2471 = vmatpush1.msra.mxu0 %v2452
  %2472 = vmatprep.subr.mxu0 0.0
  %2473 = vmatpush1.msra.mxu0 %v2466
  %2474 = vmatprep.subr.mxu0 0.0
  %2475 = vmatpush1.msra.mxu0 0.0
  %2476 = vmatprep.subr.mxu0 0.0
  %2477 = vmatpush1.msra.mxu0 0.0
  %2478 = vmatprep.subr.mxu0 0.0
  %2479 = vmatpush1.msra.mxu0 0.0
  %2480 = vmatprep.subr.mxu0 0.0
  %2481 = vmatpush1.msra.mxu0 0.0
  %2482 = vmatprep.subr.mxu0 0.0
  %2483 = vmatpush1.msra.mxu0 0.0
  %2484 = vmatprep.subr.mxu0 0.0
  %2485 = vmatpush1.msra.mxu0 0.0
  %2486 = vmatprep.subr.mxu0 0.0
  %2487 = vmatpush1.msra.mxu0 0.0
  %2488 = vmatprep.subr.mxu0 0.0
  %2489 = vmatpush1.msra.mxu0 0.0
  %2490 = vmatprep.subr.mxu0 0.0
  %2491 = vmatpush1.msra.mxu0 0.0
  %2492 = vmatprep.subr.mxu0 0.0
  %2493 = vmatpush1.msra.mxu0 0.0
  %2494 = vmatprep.subr.mxu0 0.0
  %2495 = vmatpush1.msra.mxu0 0.0
  %2496 = vmatprep.subr.mxu0 0.0
  %2497 = vmatpush1.msra.mxu0 0.0
  %2498 = vmatprep.subr.mxu0 0.0
  %2499 = vmatpush1.msra.mxu0 0.0
  %2500 = vmatprep.subr.mxu0 0.0
  %2501 = vmatpush1.msra.mxu0 0.0
  %2502 = vmatprep.subr.mxu0 0.0
  %2503 = vmatpush1.msra.mxu0 0.0
  %2504 = vmatprep.subr.mxu0 0.0
  %2505 = vmatpush1.msra.mxu0 0.0
  %2506 = vmatprep.subr.mxu0 0.0
  %2507 = vmatpush1.msra.mxu0 0.0
  %2508 = vmatprep.subr.mxu0 0.0
  %2509 = vmatpush1.msra.mxu0 0.0
  %2510 = vmatprep.subr.mxu0 0.0
  %2511 = vmatpush1.msra.mxu0 0.0
  %2512 = vmatprep.subr.mxu0 0.0
  %2513 = vmatpush1.msra.mxu0 0.0
  %2514 = vmatprep.subr.mxu0 0.0
  %2515 = vmatpush1.msra.mxu0 0.0
  %2516 = vmatprep.subr.mxu0 0.0
  %2517 = vmatpush1.msra.mxu0 0.0
  %2518 = vmatprep.subr.mxu0 0.0
  %2519 = vmatpush1.msra.mxu0 0.0
  %2520 = vmatprep.subr.mxu0 0.0
  %2521 = vmatpush1.msra.mxu0 0.0
  %2522 = vmatprep.subr.mxu0 0.0
  %2523 = vmatpush1.msra.mxu0 0.0
  %2524 = vmatprep.subr.mxu0 0.0
  %2525 = vmatpush1.msra.mxu0 0.0
  %2526 = vmatprep.subr.mxu0 0.0
  %2527 = vmatpush1.msra.mxu0 0.0
  %2528 = vmatprep.subr.mxu0 0.0
  %2529 = vmatpush1.msra.mxu0 0.0
  %2530 = vmatprep.subr.mxu0 0.0
  %2531 = vmatpush1.msra.mxu0 0.0
  %2532 = vmatprep.mubr.f32.mxu0 0.0
  %2533 = vmatmul.mubr.f32.gmra.mrb[0].mxu0 %v2458
  %v2534 = vpop.f32.mrb[0].mxu0
  %v2535 = vadd.f32 0.0, %v2534
  %v2536 = vpop.f32.mrb[0].mxu0
  %2537 = vmatprep.mubr.f32.mxu0 0.0
  %2538 = vmatmul.mubr.f32.gmra.mrb[0].mxu0 %v2461
  %v2539 = vpop.f32.mrb[0].mxu0
  %v2540 = vadd.f32 0.0, %v2539
  %v2541 = vpop.f32.mrb[0].mxu0
  %2542 = vmatprep.mubr.f32.mxu0 0.0
  %2543 = vmatmul.mubr.f32.gmra.mrb[0].mxu0 %v2464
  %v2544 = vpop.f32.mrb[0].mxu0
  %v2545 = vadd.f32 0.0, %v2544
  %v2546 = vpop.f32.mrb[0].mxu0
  %2547 = vdwg.mxu0
  %v2548 = vmul.f32 %v2535, %v2444
  %v2549 = vmul.f32 %v2540, %v2446
  %v2550 = vmul.f32 %v2545, %v2448
  %v2551 = vmul.f32 %v2429, %v2444
  %v2552 = vmax.f32 %v2311, %v2551
  %2556 = vrot.lane.b32.xlu0 %v2066, 8
  %v2557 = vpop.permute.xlu0 %2556
  %2558 = vrot.lane.b32.xlu0 %v2067, 8
  %v2559 = vpop.permute.xlu0 %2558
  %2560 = vrot.lane.b32.xlu0 %v2068, 8
  %v2561 = vpop.permute.xlu0 %2560
  %2568 = vrot.lane.b32.xlu0 %v2307, 16
  %v2569 = vpop.permute.xlu0 %2568
  %2570 = vrot.lane.b32.xlu0 %v2308, 16
  %v2571 = vpop.permute.xlu0 %2570
  %2572 = vrot.lane.b32.xlu0 %v2309, 16
  %v2573 = vpop.permute.xlu0 %2572
  %2580 = vrot.lane.b32.xlu0 %v2548, 24
  %v2581 = vpop.permute.xlu0 %2580
  %2582 = vrot.lane.b32.xlu0 %v2549, 24
  %v2583 = vpop.permute.xlu0 %2582
  %2584 = vrot.lane.b32.xlu0 %v2550, 24
  %v2585 = vpop.permute.xlu0 %2584
  %v2589 = vsel %vm284, %v1826, %v2557
  %v2590 = vsel %vm284, %v1827, %v2559
  %v2591 = vsel %vm284, %v1828, %v2561
  %v2592 = vsel %vm1281, %v2589, %v2569
  %v2593 = vsel %vm1281, %v2590, %v2571
  %v2594 = vsel %vm1281, %v2591, %v2573
  %v2595 = vsel %vm1285, %v2592, %v2581
  %v2596 = vsel %vm1285, %v2593, %v2583
  %v2597 = vsel %vm1285, %v2594, %v2585
  %v2598 = vsel %vm1289, %v2552, -inf
  %2599 = vmax.xlane.f32.xlu0 %v2598
  %v2600 = vpop.xlane.xlu0 %2599
  %vm2601 = vcmp.ge.f32.partialorder %v2552, %v2600
  %v2602 = vsel %vm2601, %v1295, 16
  %v2603 = vsel %vm1289, %v2602, 2147483647
  %v2604 = vand.u32 %v2603, 65535
  %v2605 = vshra.s32 %v2603, 16
  %v2606 = vcvt.s32.f32 %v2604
  %v2607 = vcvt.s32.f32 %v2605
  %2608 = vmin.xlane.f32.xlu0 %v2607
  %v2609 = vpop.xlane.xlu0 %2608
  %vm2610 = vcmp.eq.f32.partialorder %v2607, %v2609
  %v2611 = vsel %vm2610, %v2606, inf
  %2612 = vmin.xlane.f32.xlu0 %v2611
  %v2613 = vpop.xlane.xlu0 %2612
  %v2614 = vcvt.f32.s32 %v2613
  %v2615 = vcvt.f32.s32 %v2609
  %v2616 = vshll.u32 %v2615, 16
  %v2617 = vadd.s32 %v2616, %v2614
  %vm2618 = vcmp.eq.s32.totalorder %v259, %v2617
  %v2619 = vsel %vm2618, 1.0, 0.0
  %2621 = vrot.lane.b32.xlu0 %v2552, 127
  %v2622 = vpop.permute.xlu0 %2621
  %v2624 = vsel %vm2618, -1.0, %v2622
  %v2625 = vsel %vm1319, %v2624, -inf
  %2626 = vmax.xlane.f32.xlu0 %v2625
  %v2627 = vpop.xlane.xlu0 %2626
  %vm2628 = vcmp.ge.f32.partialorder %v2624, %v2627
  %v2629 = vsel %vm2628, %v259, 16
  %v2630 = vsel %vm1319, %v2629, 2147483647
  %v2631 = vand.u32 %v2630, 65535
  %v2632 = vshra.s32 %v2630, 16
  %v2633 = vcvt.s32.f32 %v2631
  %v2634 = vcvt.s32.f32 %v2632
  %2635 = vmin.xlane.f32.xlu0 %v2634
  %v2636 = vpop.xlane.xlu0 %2635
  %vm2637 = vcmp.eq.f32.partialorder %v2634, %v2636
  %v2638 = vsel %vm2637, %v2633, inf
  %2639 = vmin.xlane.f32.xlu0 %v2638
  %v2640 = vpop.xlane.xlu0 %2639
  %v2641 = vcvt.f32.s32 %v2640
  %v2642 = vcvt.f32.s32 %v2636
  %v2643 = vshll.u32 %v2642, 16
  %v2644 = vadd.s32 %v2643, %v2641
  %vm2645 = vcmp.eq.s32.totalorder %v259, %v2644
  %v2646 = vsel %vm2645, 1.0, %v2619
  %v2647 = vsel %vm2645, -1.0, %v2624
  %v2648 = vsel %vm1319, %v2647, -inf
  %2649 = vmax.xlane.f32.xlu0 %v2648
  %v2650 = vpop.xlane.xlu0 %2649
  %vm2651 = vcmp.ge.f32.partialorder %v2647, %v2650
  %v2652 = vsel %vm2651, %v259, 16
  %v2653 = vsel %vm1319, %v2652, 2147483647
  %v2654 = vand.u32 %v2653, 65535
  %v2655 = vshra.s32 %v2653, 16
  %v2656 = vcvt.s32.f32 %v2654
  %v2657 = vcvt.s32.f32 %v2655
  %2658 = vmin.xlane.f32.xlu0 %v2657
  %v2659 = vpop.xlane.xlu0 %2658
  %vm2660 = vcmp.eq.f32.partialorder %v2657, %v2659
  %v2661 = vsel %vm2660, %v2656, inf
  %2662 = vmin.xlane.f32.xlu0 %v2661
  %v2663 = vpop.xlane.xlu0 %2662
  %v2664 = vcvt.f32.s32 %v2663
  %v2665 = vcvt.f32.s32 %v2659
  %v2666 = vshll.u32 %v2665, 16
  %v2667 = vadd.s32 %v2666, %v2664
  %vm2668 = vcmp.eq.s32.totalorder %v259, %v2667
  %v2669 = vsel %vm2668, 1.0, %v2646
  %v2670 = vsel %vm2668, -1.0, %v2647
  %v2671 = vsel %vm1319, %v2670, -inf
  %2672 = vmax.xlane.f32.xlu0 %v2671
  %v2673 = vpop.xlane.xlu0 %2672
  %vm2674 = vcmp.ge.f32.partialorder %v2670, %v2673
  %v2675 = vsel %vm2674, %v259, 16
  %v2676 = vsel %vm1319, %v2675, 2147483647
  %v2677 = vand.u32 %v2676, 65535
  %v2678 = vshra.s32 %v2676, 16
  %v2679 = vcvt.s32.f32 %v2677
  %v2680 = vcvt.s32.f32 %v2678
  %2681 = vmin.xlane.f32.xlu0 %v2680
  %v2682 = vpop.xlane.xlu0 %2681
  %vm2683 = vcmp.eq.f32.partialorder %v2680, %v2682
  %v2684 = vsel %vm2683, %v2679, inf
  %2685 = vmin.xlane.f32.xlu0 %v2684
  %v2686 = vpop.xlane.xlu0 %2685
  %v2687 = vcvt.f32.s32 %v2686
  %v2688 = vcvt.f32.s32 %v2682
  %v2689 = vshll.u32 %v2688, 16
  %v2690 = vadd.s32 %v2689, %v2687
  %vm2691 = vcmp.eq.s32.totalorder %v259, %v2690
  %v2692 = vsel %vm2691, 1.0, %v2669
  %v2693 = vsel %vm2691, -1.0, %v2670
  %v2694 = vsel %vm1319, %v2693, -inf
  %2695 = vmax.xlane.f32.xlu0 %v2694
  %v2696 = vpop.xlane.xlu0 %2695
  %vm2697 = vcmp.ge.f32.partialorder %v2693, %v2696
  %v2698 = vsel %vm2697, %v259, 16
  %v2699 = vsel %vm1319, %v2698, 2147483647
  %v2700 = vand.u32 %v2699, 65535
  %v2701 = vshra.s32 %v2699, 16
  %v2702 = vcvt.s32.f32 %v2700
  %v2703 = vcvt.s32.f32 %v2701
  %2704 = vmin.xlane.f32.xlu0 %v2703
  %v2705 = vpop.xlane.xlu0 %2704
  %vm2706 = vcmp.eq.f32.partialorder %v2703, %v2705
  %v2707 = vsel %vm2706, %v2702, inf
  %2708 = vmin.xlane.f32.xlu0 %v2707
  %v2709 = vpop.xlane.xlu0 %2708
  %v2710 = vcvt.f32.s32 %v2709
  %v2711 = vcvt.f32.s32 %v2705
  %v2712 = vshll.u32 %v2711, 16
  %v2713 = vadd.s32 %v2712, %v2710
  %vm2714 = vcmp.eq.s32.totalorder %v259, %v2713
  %v2715 = vsel %vm2714, 1.0, %v2692
  %v2716 = vsel %vm2714, -1.0, %v2693
  %v2717 = vsel %vm1319, %v2716, -inf
  %2718 = vmax.xlane.f32.xlu0 %v2717
  %v2719 = vpop.xlane.xlu0 %2718
  %vm2720 = vcmp.ge.f32.partialorder %v2716, %v2719
  %v2721 = vsel %vm2720, %v259, 16
  %v2722 = vsel %vm1319, %v2721, 2147483647
  %v2723 = vand.u32 %v2722, 65535
  %v2724 = vshra.s32 %v2722, 16
  %v2725 = vcvt.s32.f32 %v2723
  %v2726 = vcvt.s32.f32 %v2724
  %2727 = vmin.xlane.f32.xlu0 %v2726
  %v2728 = vpop.xlane.xlu0 %2727
  %vm2729 = vcmp.eq.f32.partialorder %v2726, %v2728
  %v2730 = vsel %vm2729, %v2725, inf
  %2731 = vmin.xlane.f32.xlu0 %v2730
  %v2732 = vpop.xlane.xlu0 %2731
  %v2733 = vcvt.f32.s32 %v2732
  %v2734 = vcvt.f32.s32 %v2728
  %v2735 = vshll.u32 %v2734, 16
  %v2736 = vadd.s32 %v2735, %v2733
  %vm2737 = vcmp.eq.s32.totalorder %v259, %v2736
  %v2738 = vsel %vm2737, 1.0, %v2715
  %v2739 = vsel %vm2737, -1.0, %v2716
  %v2740 = vsel %vm1319, %v2739, -inf
  %2741 = vmax.xlane.f32.xlu0 %v2740
  %v2742 = vpop.xlane.xlu0 %2741
  %vm2743 = vcmp.ge.f32.partialorder %v2739, %v2742
  %v2744 = vsel %vm2743, %v259, 16
  %v2745 = vsel %vm1319, %v2744, 2147483647
  %v2746 = vand.u32 %v2745, 65535
  %v2747 = vshra.s32 %v2745, 16
  %v2748 = vcvt.s32.f32 %v2746
  %v2749 = vcvt.s32.f32 %v2747
  %2750 = vmin.xlane.f32.xlu0 %v2749
  %v2751 = vpop.xlane.xlu0 %2750
  %vm2752 = vcmp.eq.f32.partialorder %v2749, %v2751
  %v2753 = vsel %vm2752, %v2748, inf
  %2754 = vmin.xlane.f32.xlu0 %v2753
  %v2755 = vpop.xlane.xlu0 %2754
  %v2756 = vcvt.f32.s32 %v2755
  %v2757 = vcvt.f32.s32 %v2751
  %v2758 = vshll.u32 %v2757, 16
  %v2759 = vadd.s32 %v2758, %v2756
  %vm2760 = vcmp.eq.s32.totalorder %v259, %v2759
  %v2761 = vsel %vm2760, 1.0, %v2738
  %v2762 = vsel %vm2760, -1.0, %v2739
  %v2763 = vsel %vm1319, %v2762, -inf
  %2764 = vmax.xlane.f32.xlu0 %v2763
  %v2765 = vpop.xlane.xlu0 %2764
  %vm2766 = vcmp.ge.f32.partialorder %v2762, %v2765
  %v2767 = vsel %vm2766, %v259, 16
  %v2768 = vsel %vm1319, %v2767, 2147483647
  %v2769 = vand.u32 %v2768, 65535
  %v2770 = vshra.s32 %v2768, 16
  %v2771 = vcvt.s32.f32 %v2769
  %v2772 = vcvt.s32.f32 %v2770
  %2773 = vmin.xlane.f32.xlu0 %v2772
  %v2774 = vpop.xlane.xlu0 %2773
  %vm2775 = vcmp.eq.f32.partialorder %v2772, %v2774
  %v2776 = vsel %vm2775, %v2771, inf
  %2777 = vmin.xlane.f32.xlu0 %v2776
  %v2778 = vpop.xlane.xlu0 %2777
  %v2779 = vcvt.f32.s32 %v2778
  %v2780 = vcvt.f32.s32 %v2774
  %v2781 = vshll.u32 %v2780, 16
  %v2782 = vadd.s32 %v2781, %v2779
  %vm2783 = vcmp.eq.s32.totalorder %v259, %v2782
  %v2784 = vsel %vm2783, 1.0, %v2761
  %v2786 = vsel %vm1281, %v2784, 0
  %2788 = vmatprep.subr.mxu0 0.0
  %2789 = vmatpush1.msra.mxu0 %v267
  %2790 = vmatprep.subr.mxu0 0.0
  %2791 = vmatpush1.msra.mxu0 %v268
  %2792 = vmatprep.subr.mxu0 0.0
  %2793 = vmatpush1.msra.mxu0 0.0
  %2794 = vmatprep.subr.mxu0 0.0
  %2795 = vmatpush1.msra.mxu0 0.0
  %2796 = vmatprep.subr.mxu0 0.0
  %2797 = vmatpush1.msra.mxu0 0.0
  %2798 = vmatprep.subr.mxu0 0.0
  %2799 = vmatpush1.msra.mxu0 0.0
  %2800 = vmatprep.subr.mxu0 0.0
  %2801 = vmatpush1.msra.mxu0 0.0
  %2802 = vmatprep.subr.mxu0 0.0
  %2803 = vmatpush1.msra.mxu0 0.0
  %2804 = vmatprep.subr.mxu0 0.0
  %2805 = vmatpush1.msra.mxu0 0.0
  %2806 = vmatprep.subr.mxu0 0.0
  %2807 = vmatpush1.msra.mxu0 0.0
  %2808 = vmatprep.subr.mxu0 0.0
  %2809 = vmatpush1.msra.mxu0 0.0
  %2810 = vmatprep.subr.mxu0 0.0
  %2811 = vmatpush1.msra.mxu0 0.0
  %2812 = vmatprep.subr.mxu0 0.0
  %2813 = vmatpush1.msra.mxu0 0.0
  %2814 = vmatprep.subr.mxu0 0.0
  %2815 = vmatpush1.msra.mxu0 0.0
  %2816 = vmatprep.subr.mxu0 0.0
  %2817 = vmatpush1.msra.mxu0 0.0
  %2818 = vmatprep.subr.mxu0 0.0
  %2819 = vmatpush1.msra.mxu0 0.0
  %2820 = vmatprep.subr.mxu0 0.0
  %2821 = vmatpush1.msra.mxu0 0.0
  %2822 = vmatprep.subr.mxu0 0.0
  %2823 = vmatpush1.msra.mxu0 0.0
  %2824 = vmatprep.subr.mxu0 0.0
  %2825 = vmatpush1.msra.mxu0 0.0
  %2826 = vmatprep.subr.mxu0 0.0
  %2827 = vmatpush1.msra.mxu0 0.0
  %2828 = vmatprep.subr.mxu0 0.0
  %2829 = vmatpush1.msra.mxu0 0.0
  %2830 = vmatprep.subr.mxu0 0.0
  %2831 = vmatpush1.msra.mxu0 0.0
  %2832 = vmatprep.subr.mxu0 0.0
  %2833 = vmatpush1.msra.mxu0 0.0
  %2834 = vmatprep.subr.mxu0 0.0
  %2835 = vmatpush1.msra.mxu0 0.0
  %2836 = vmatprep.subr.mxu0 0.0
  %2837 = vmatpush1.msra.mxu0 0.0
  %2838 = vmatprep.subr.mxu0 0.0
  %2839 = vmatpush1.msra.mxu0 0.0
  %2840 = vmatprep.subr.mxu0 0.0
  %2841 = vmatpush1.msra.mxu0 0.0
  %2842 = vmatprep.subr.mxu0 0.0
  %2843 = vmatpush1.msra.mxu0 0.0
  %2844 = vmatprep.subr.mxu0 0.0
  %2845 = vmatpush1.msra.mxu0 0.0
  %2846 = vmatprep.subr.mxu0 0.0
  %2847 = vmatpush1.msra.mxu0 0.0
  %2848 = vmatprep.subr.mxu0 0.0
  %2849 = vmatpush1.msra.mxu0 0.0
  %2850 = vmatprep.subr.mxu0 0.0
  %2851 = vmatpush1.msra.mxu0 0.0
  %2852 = vmatprep.mubr.f32.mxu0 0.0
  %2853 = vmatmul.mubr.f32.gmra.mrb[0].mxu0 %v2786
  %v2854 = vpop.f32.mrb[0].mxu0
  %v2855 = vadd.f32 0.0, %v2854
  %v2856 = vpop.f32.mrb[0].mxu0
  %2857 = vdwg.mxu0
  %v2858 = vcvt.f32.s32.to.zero.pseudo %v2855
  %v2859 = vlaneseq
  %v2860 = vshrl.u32 %v2859, 7
  %v2861 = vsub.s32 0, %v2860
  %v2862 = vrot.slane %v2784, %v2861
  %vm2863 = vcmp.gt.f32.partialorder %v2862, 0.5
  %v2864 = vlaneseq
  %v2865 = vshrl.u32 %v2864, 7
  %v2866 = vsub.s32 0, %v2865
  %v2867 = vrot.slane %v2858, %v2866
  %v2868 = vadd.s32 %v2867, 1
  %vm2869 = vcmp.eq.s32.totalorder %v2868, %v261
  %vm2870 = vcmp.eq.s32.totalorder %v2868, %v262
  %vm2871 = vmand %vm2869, %vm2863
  %vm2872 = vmand %vm2870, %vm2863
  %v2873 = vsel %vm2871, 1.0, 0.0
  %v2874 = vsel %vm2872, 1.0, 0.0
  %2877 = vrot.lane.b32.xlu0 %v2873, 1
  %v2878 = vpop.permute.xlu0 %2877
  %2879 = vrot.lane.b32.xlu0 %v2874, 1
  %v2880 = vpop.permute.xlu0 %2879
  %v2883 = vsel %vm1578, %v273, %v2878
  %v2884 = vsel %vm1578, %v274, %v2880
  %v2888 = vrot.slane %v2595, 7
  %v2889 = vrot.slane %v2596, 7
  %v2890 = vsel %vm432, %v2888, %v2889
  %v2891 = vrot.slane %v2597, 7
  %v2892 = vsel %vm432, %v2889, %v2891
  %v2894 = vsel %vm432, %v1288, %v2888
  %v2895 = vld [vmem:[%s4] sm:$0xff]
  %v2896 = vld [vmem:[%s4 + $0x8] sm:$0xff]
  %v2897 = vld [vmem:[%s4 + $0x10] sm:$0xff]
  %v2898 = vld [vmem:[%s4 + $0x18] sm:$0xff]
  %v2899 = vld [vmem:[%s5] sm:$0x1]
  %v2901 = vlaneseq
  %v2902 = vshrl.u32 %v2901, 7
  %v2903 = vsub.s32 0, %v2902
  %v2904 = vrot.slane %v2899, %v2903
  %v2907 = vsel %vm54, %v1286, 0
  %v2910 = vsel %vm54, %v1287, 0
  %v2913 = vsel %vm54, %v2894, 0
  %v2915 = vsel %vm54, %v2890, 0
  %v2917 = vsel %vm54, %v2892, 0
  %2919 = vmatprep.subr.mxu0 0.0
  %2920 = vmatpush1.msra.mxu0 %v2895
  %2921 = vmatprep.subr.mxu0 0.0
  %2922 = vmatpush1.msra.mxu0 %v2896
  %2923 = vmatprep.subr.mxu0 0.0
  %2924 = vmatpush1.msra.mxu0 %v2897
  %2925 = vmatprep.subr.mxu0 0.0
  %2926 = vmatpush1.msra.mxu0 %v2898
  %2927 = vmatprep.subr.mxu0 0.0
  %2928 = vmatpush1.msra.mxu0 0.0
  %2929 = vmatprep.subr.mxu0 0.0
  %2930 = vmatpush1.msra.mxu0 0.0
  %2931 = vmatprep.subr.mxu0 0.0
  %2932 = vmatpush1.msra.mxu0 0.0
  %2933 = vmatprep.subr.mxu0 0.0
  %2934 = vmatpush1.msra.mxu0 0.0
  %2935 = vmatprep.subr.mxu0 0.0
  %2936 = vmatpush1.msra.mxu0 0.0
  %2937 = vmatprep.subr.mxu0 0.0
  %2938 = vmatpush1.msra.mxu0 0.0
  %2939 = vmatprep.subr.mxu0 0.0
  %2940 = vmatpush1.msra.mxu0 0.0
  %2941 = vmatprep.subr.mxu0 0.0
  %2942 = vmatpush1.msra.mxu0 0.0
  %2943 = vmatprep.subr.mxu0 0.0
  %2944 = vmatpush1.msra.mxu0 0.0
  %2945 = vmatprep.subr.mxu0 0.0
  %2946 = vmatpush1.msra.mxu0 0.0
  %2947 = vmatprep.subr.mxu0 0.0
  %2948 = vmatpush1.msra.mxu0 0.0
  %2949 = vmatprep.subr.mxu0 0.0
  %2950 = vmatpush1.msra.mxu0 0.0
  %2951 = vmatprep.subr.mxu0 0.0
  %2952 = vmatpush1.msra.mxu0 0.0
  %2953 = vmatprep.subr.mxu0 0.0
  %2954 = vmatpush1.msra.mxu0 0.0
  %2955 = vmatprep.subr.mxu0 0.0
  %2956 = vmatpush1.msra.mxu0 0.0
  %2957 = vmatprep.subr.mxu0 0.0
  %2958 = vmatpush1.msra.mxu0 0.0
  %2959 = vmatprep.subr.mxu0 0.0
  %2960 = vmatpush1.msra.mxu0 0.0
  %2961 = vmatprep.subr.mxu0 0.0
  %2962 = vmatpush1.msra.mxu0 0.0
  %2963 = vmatprep.subr.mxu0 0.0
  %2964 = vmatpush1.msra.mxu0 0.0
  %2965 = vmatprep.subr.mxu0 0.0
  %2966 = vmatpush1.msra.mxu0 0.0
  %2967 = vmatprep.subr.mxu0 0.0
  %2968 = vmatpush1.msra.mxu0 0.0
  %2969 = vmatprep.subr.mxu0 0.0
  %2970 = vmatpush1.msra.mxu0 0.0
  %2971 = vmatprep.subr.mxu0 0.0
  %2972 = vmatpush1.msra.mxu0 0.0
  %2973 = vmatprep.subr.mxu0 0.0
  %2974 = vmatpush1.msra.mxu0 0.0
  %2975 = vmatprep.subr.mxu0 0.0
  %2976 = vmatpush1.msra.mxu0 0.0
  %2977 = vmatprep.subr.mxu0 0.0
  %2978 = vmatpush1.msra.mxu0 0.0
  %2979 = vmatprep.subr.mxu0 0.0
  %2980 = vmatpush1.msra.mxu0 0.0
  %2981 = vmatprep.subr.mxu0 0.0
  %2982 = vmatpush1.msra.mxu0 0.0
  %2983 = vmatprep.mubr.f32.mxu0 0.0
  %2984 = vmatmul.mubr.f32.gmra.mrb[0].mxu0 %v2907
  %v2985 = vpop.f32.mrb[0].mxu0
  %v2986 = vadd.f32 %v2904, %v2985
  %v2987 = vpop.f32.mrb[0].mxu0
  %2988 = vmatprep.mubr.f32.mxu0 0.0
  %2989 = vmatmul.mubr.f32.gmra.mrb[0].mxu0 %v2910
  %v2990 = vpop.f32.mrb[0].mxu0
  %v2991 = vadd.f32 %v2904, %v2990
  %v2992 = vpop.f32.mrb[0].mxu0
  %2993 = vmatprep.mubr.f32.mxu0 0.0
  %2994 = vmatmul.mubr.f32.gmra.mrb[0].mxu0 %v2913
  %v2995 = vpop.f32.mrb[0].mxu0
  %v2996 = vadd.f32 %v2904, %v2995
  %v2997 = vpop.f32.mrb[0].mxu0
  %2998 = vmatprep.mubr.f32.mxu0 0.0
  %2999 = vmatmul.mubr.f32.gmra.mrb[0].mxu0 %v2915
  %v3000 = vpop.f32.mrb[0].mxu0
  %v3001 = vadd.f32 %v2904, %v3000
  %v3002 = vpop.f32.mrb[0].mxu0
  %3003 = vmatprep.mubr.f32.mxu0 0.0
  %3004 = vmatmul.mubr.f32.gmra.mrb[0].mxu0 %v2917
  %v3005 = vpop.f32.mrb[0].mxu0
  %v3006 = vadd.f32 %v2904, %v3005
  %v3007 = vpop.f32.mrb[0].mxu0
  %3008 = vdwg.mxu0
  %v3009 = vadd.f32 %v2986, %v47
  %v3010 = vadd.f32 %v2991, %v48
  %v3011 = vadd.f32 %v2996, %v49
  %v3012 = vadd.f32 %v3001, %v50
  %v3013 = vadd.f32 %v3006, %v51
  %v3015 = vsel %vm380, %v1579, 0
  %v3018 = vsel %vm380, %v1580, 0
  %v3021 = vsel %vm432, %v3011, 0
  %3023 = vmatprep.subr.mxu0 0.0
  %3024 = vmatpush1.msra.mxu0 %v3009
  %3025 = vmatprep.subr.mxu0 0.0
  %3026 = vmatpush1.msra.mxu0 %v3010
  %3027 = vmatprep.subr.mxu0 0.0
  %3028 = vmatpush1.msra.mxu0 %v3021
  %3029 = vmatprep.subr.mxu0 0.0
  %3030 = vmatpush1.msra.mxu0 0.0
  %3031 = vmatprep.subr.mxu0 0.0
  %3032 = vmatpush1.msra.mxu0 0.0
  %3033 = vmatprep.subr.mxu0 0.0
  %3034 = vmatpush1.msra.mxu0 0.0
  %3035 = vmatprep.subr.mxu0 0.0
  %3036 = vmatpush1.msra.mxu0 0.0
  %3037 = vmatprep.subr.mxu0 0.0
  %3038 = vmatpush1.msra.mxu0 0.0
  %3039 = vmatprep.subr.mxu0 0.0
  %3040 = vmatpush1.msra.mxu0 0.0
  %3041 = vmatprep.subr.mxu0 0.0
  %3042 = vmatpush1.msra.mxu0 0.0
  %3043 = vmatprep.subr.mxu0 0.0
  %3044 = vmatpush1.msra.mxu0 0.0
  %3045 = vmatprep.subr.mxu0 0.0
  %3046 = vmatpush1.msra.mxu0 0.0
  %3047 = vmatprep.subr.mxu0 0.0
  %3048 = vmatpush1.msra.mxu0 0.0
  %3049 = vmatprep.subr.mxu0 0.0
  %3050 = vmatpush1.msra.mxu0 0.0
  %3051 = vmatprep.subr.mxu0 0.0
  %3052 = vmatpush1.msra.mxu0 0.0
  %3053 = vmatprep.subr.mxu0 0.0
  %3054 = vmatpush1.msra.mxu0 0.0
  %3055 = vmatprep.subr.mxu0 0.0
  %3056 = vmatpush1.msra.mxu0 0.0
  %3057 = vmatprep.subr.mxu0 0.0
  %3058 = vmatpush1.msra.mxu0 0.0
  %3059 = vmatprep.subr.mxu0 0.0
  %3060 = vmatpush1.msra.mxu0 0.0
  %3061 = vmatprep.subr.mxu0 0.0
  %3062 = vmatpush1.msra.mxu0 0.0
  %3063 = vmatprep.subr.mxu0 0.0
  %3064 = vmatpush1.msra.mxu0 0.0
  %3065 = vmatprep.subr.mxu0 0.0
  %3066 = vmatpush1.msra.mxu0 0.0
  %3067 = vmatprep.subr.mxu0 0.0
  %3068 = vmatpush1.msra.mxu0 0.0
  %3069 = vmatprep.subr.mxu0 0.0
  %3070 = vmatpush1.msra.mxu0 0.0
  %3071 = vmatprep.subr.mxu0 0.0
  %3072 = vmatpush1.msra.mxu0 0.0
  %3073 = vmatprep.subr.mxu0 0.0
  %3074 = vmatpush1.msra.mxu0 0.0
  %3075 = vmatprep.subr.mxu0 0.0
  %3076 = vmatpush1.msra.mxu0 0.0
  %3077 = vmatprep.subr.mxu0 0.0
  %3078 = vmatpush1.msra.mxu0 0.0
  %3079 = vmatprep.subr.mxu0 0.0
  %3080 = vmatpush1.msra.mxu0 0.0
  %3081 = vmatprep.subr.mxu0 0.0
  %3082 = vmatpush1.msra.mxu0 0.0
  %3083 = vmatprep.subr.mxu0 0.0
  %3084 = vmatpush1.msra.mxu0 0.0
  %3085 = vmatprep.subr.mxu0 0.0
  %3086 = vmatpush1.msra.mxu0 0.0
  %3087 = vmatprep.mubr.f32.mxu0 0.0
  %3088 = vmatmul.mubr.f32.gmra.mrb[0].mxu0 %v3015
  %v3089 = vpop.f32.mrb[0].mxu0
  %v3090 = vadd.f32 0.0, %v3089
  %v3091 = vpop.f32.mrb[0].mxu0
  %3092 = vmatprep.mubr.f32.mxu0 0.0
  %3093 = vmatmul.mubr.f32.gmra.mrb[0].mxu0 %v3018
  %v3094 = vpop.f32.mrb[0].mxu0
  %v3095 = vadd.f32 0.0, %v3094
  %v3096 = vpop.f32.mrb[0].mxu0
  %3097 = vdwg.mxu0
  %v3100 = vrot.slane %v3011, 1
  %v3101 = vrot.slane %v3012, 1
  %v3102 = vsel %vm1583, %v3100, %v3101
  %v3103 = vrot.slane %v3013, 1
  %v3104 = vsel %vm1583, %v3101, %v3103
  %v3108 = vsel %vm380, %v2883, 0
  %v3111 = vsel %vm380, %v2884, 0
  %v3113 = vsel %vm432, %v3103, 0
  %3115 = vmatprep.subr.mxu0 0.0
  %3116 = vmatpush1.msra.mxu0 %v3102
  %3117 = vmatprep.subr.mxu0 0.0
  %3118 = vmatpush1.msra.mxu0 %v3104
  %3119 = vmatprep.subr.mxu0 0.0
  %3120 = vmatpush1.msra.mxu0 %v3113
  %3121 = vmatprep.subr.mxu0 0.0
  %3122 = vmatpush1.msra.mxu0 0.0
  %3123 = vmatprep.subr.mxu0 0.0
  %3124 = vmatpush1.msra.mxu0 0.0
  %3125 = vmatprep.subr.mxu0 0.0
  %3126 = vmatpush1.msra.mxu0 0.0
  %3127 = vmatprep.subr.mxu0 0.0
  %3128 = vmatpush1.msra.mxu0 0.0
  %3129 = vmatprep.subr.mxu0 0.0
  %3130 = vmatpush1.msra.mxu0 0.0
  %3131 = vmatprep.subr.mxu0 0.0
  %3132 = vmatpush1.msra.mxu0 0.0
  %3133 = vmatprep.subr.mxu0 0.0
  %3134 = vmatpush1.msra.mxu0 0.0
  %3135 = vmatprep.subr.mxu0 0.0
  %3136 = vmatpush1.msra.mxu0 0.0
  %3137 = vmatprep.subr.mxu0 0.0
  %3138 = vmatpush1.msra.mxu0 0.0
  %3139 = vmatprep.subr.mxu0 0.0
  %3140 = vmatpush1.msra.mxu0 0.0
  %3141 = vmatprep.subr.mxu0 0.0
  %3142 = vmatpush1.msra.mxu0 0.0
  %3143 = vmatprep.subr.mxu0 0.0
  %3144 = vmatpush1.msra.mxu0 0.0
  %3145 = vmatprep.subr.mxu0 0.0
  %3146 = vmatpush1.msra.mxu0 0.0
  %3147 = vmatprep.subr.mxu0 0.0
  %3148 = vmatpush1.msra.mxu0 0.0
  %3149 = vmatprep.subr.mxu0 0.0
  %3150 = vmatpush1.msra.mxu0 0.0
  %3151 = vmatprep.subr.mxu0 0.0
  %3152 = vmatpush1.msra.mxu0 0.0
  %3153 = vmatprep.subr.mxu0 0.0
  %3154 = vmatpush1.msra.mxu0 0.0
  %3155 = vmatprep.subr.mxu0 0.0
  %3156 = vmatpush1.msra.mxu0 0.0
  %3157 = vmatprep.subr.mxu0 0.0
  %3158 = vmatpush1.msra.mxu0 0.0
  %3159 = vmatprep.subr.mxu0 0.0
  %3160 = vmatpush1.msra.mxu0 0.0
  %3161 = vmatprep.subr.mxu0 0.0
  %3162 = vmatpush1.msra.mxu0 0.0
  %3163 = vmatprep.subr.mxu0 0.0
  %3164 = vmatpush1.msra.mxu0 0.0
  %3165 = vmatprep.subr.mxu0 0.0
  %3166 = vmatpush1.msra.mxu0 0.0
  %3167 = vmatprep.subr.mxu0 0.0
  %3168 = vmatpush1.msra.mxu0 0.0
  %3169 = vmatprep.subr.mxu0 0.0
  %3170 = vmatpush1.msra.mxu0 0.0
  %3171 = vmatprep.subr.mxu0 0.0
  %3172 = vmatpush1.msra.mxu0 0.0
  %3173 = vmatprep.subr.mxu0 0.0
  %3174 = vmatpush1.msra.mxu0 0.0
  %3175 = vmatprep.subr.mxu0 0.0
  %3176 = vmatpush1.msra.mxu0 0.0
  %3177 = vmatprep.subr.mxu0 0.0
  %3178 = vmatpush1.msra.mxu0 0.0
  %3179 = vmatprep.mubr.f32.mxu0 0.0
  %3180 = vmatmul.mubr.f32.gmra.mrb[0].mxu0 %v3108
  %v3181 = vpop.f32.mrb[0].mxu0
  %v3182 = vadd.f32 0.0, %v3181
  %v3183 = vpop.f32.mrb[0].mxu0
  %3184 = vmatprep.mubr.f32.mxu0 0.0
  %3185 = vmatmul.mubr.f32.gmra.mrb[0].mxu0 %v3111
  %v3186 = vpop.f32.mrb[0].mxu0
  %v3187 = vadd.f32 0.0, %v3186
  %v3188 = vpop.f32.mrb[0].mxu0
  %3189 = vdwg.mxu0
  %v3192 = vrot.slane %v3182, 7
  %v3193 = vrot.slane %v3187, 7
  %v3194 = vsel %vm432, %v3192, %v3193
  %v3197 = vsel %vm432, %v3095, %v3192
  %v3198 = vld [vmem:[%s6] sm:$0x1]
  %v3199 = vld [vmem:[%s7] sm:$0x1]
  %v3200 = vsel %vm54, %v3090, 0.0
  %3201 = vadd.xlane.f32.xlu0 %v3200
  %v3202 = vpop.xlane.xlu0 %3201
  %v3203 = vsel %vm54, %v3197, 0.0
  %3204 = vadd.xlane.f32.xlu0 %v3203
  %v3205 = vpop.xlane.xlu0 %3204
  %v3206 = vsel %vm67, %v3194, 0.0
  %3207 = vadd.xlane.f32.xlu0 %v3206
  %v3208 = vpop.xlane.xlu0 %3207
  %v3209 = vmul.f32 %v3202, %v71
  %v3210 = vmul.f32 %v3205, %v71
  %v3211 = vmul.f32 %v3208, %v71
  %v3212 = vsub.f32 %v3090, %v3209
  %v3213 = vsub.f32 %v3197, %v3210
  %v3214 = vsub.f32 %v3194, %v3211
  %v3215 = vmul.f32 %v3212, %v3212
  %v3216 = vmul.f32 %v3213, %v3213
  %v3217 = vmul.f32 %v3214, %v3214
  %v3218 = vsel %vm54, %v3215, 0.0
  %3219 = vadd.xlane.f32.xlu0 %v3218
  %v3220 = vpop.xlane.xlu0 %3219
  %v3221 = vsel %vm54, %v3216, 0.0
  %3222 = vadd.xlane.f32.xlu0 %v3221
  %v3223 = vpop.xlane.xlu0 %3222
  %v3224 = vsel %vm67, %v3217, 0.0
  %3225 = vadd.xlane.f32.xlu0 %v3224
  %v3226 = vpop.xlane.xlu0 %3225
  %v3227 = vmul.f32 %v3220, %v71
  %v3228 = vmul.f32 %v3223, %v71
  %v3229 = vmul.f32 %v3226, %v71
  %v3230 = vadd.f32 %v3227, 1e-05
  %v3231 = vadd.f32 %v3228, 1e-05
  %v3232 = vadd.f32 %v3229, 1e-05
  %v3233 = vrsqrt.pop %v3230
  %v3234 = vrsqrt.pop %v3231
  %v3235 = vrsqrt.pop %v3232
  %v3236 = vmul.f32 %v3212, %v3233
  %v3237 = vmul.f32 %v3213, %v3234
  %v3238 = vmul.f32 %v3214, %v3235
  %v3240 = vlaneseq
  %v3241 = vshrl.u32 %v3240, 7
  %v3242 = vsub.s32 0, %v3241
  %v3243 = vrot.slane %v3198, %v3242
  %v3245 = vmul.f32 %v3236, %v3243
  %v3246 = vmul.f32 %v3237, %v3243
  %v3247 = vmul.f32 %v3238, %v3243
  %v3249 = vlaneseq
  %v3250 = vshrl.u32 %v3249, 7
  %v3251 = vsub.s32 0, %v3250
  %v3252 = vrot.slane %v3199, %v3251
  %v3254 = vadd.f32 %v3245, %v3252
  %v3255 = vadd.f32 %v3246, %v3252
  %v3256 = vadd.f32 %v3247, %v3252
  %v3257 = vld [vmem:[%s8] sm:$0xff]
  %v3258 = vld [vmem:[%s8 + $0x8] sm:$0xff]
  %v3259 = vld [vmem:[%s8 + $0x10] sm:$0xff]
  %v3260 = vld [vmem:[%s8 + $0x18] sm:$0xff]
  %v3261 = vld [vmem:[%s9] sm:$0x1]
  %v3263 = vlaneseq
  %v3264 = vshrl.u32 %v3263, 7
  %v3265 = vsub.s32 0, %v3264
  %v3266 = vrot.slane %v3261, %v3265
  %v3269 = vsel %vm54, %v3254, 0
  %v3272 = vsel %vm54, %v3255, 0
  %v3275 = vsel %vm54, %v3256, 0
  %3277 = vmatprep.subr.mxu0 0.0
  %3278 = vmatpush1.msra.mxu0 %v3257
  %3279 = vmatprep.subr.mxu0 0.0
  %3280 = vmatpush1.msra.mxu0 %v3258
  %3281 = vmatprep.subr.mxu0 0.0
  %3282 = vmatpush1.msra.mxu0 %v3259
  %3283 = vmatprep.subr.mxu0 0.0
  %3284 = vmatpush1.msra.mxu0 %v3260
  %3285 = vmatprep.subr.mxu0 0.0
  %3286 = vmatpush1.msra.mxu0 0.0
  %3287 = vmatprep.subr.mxu0 0.0
  %3288 = vmatpush1.msra.mxu0 0.0
  %3289 = vmatprep.subr.mxu0 0.0
  %3290 = vmatpush1.msra.mxu0 0.0
  %3291 = vmatprep.subr.mxu0 0.0
  %3292 = vmatpush1.msra.mxu0 0.0
  %3293 = vmatprep.subr.mxu0 0.0
  %3294 = vmatpush1.msra.mxu0 0.0
  %3295 = vmatprep.subr.mxu0 0.0
  %3296 = vmatpush1.msra.mxu0 0.0
  %3297 = vmatprep.subr.mxu0 0.0
  %3298 = vmatpush1.msra.mxu0 0.0
  %3299 = vmatprep.subr.mxu0 0.0
  %3300 = vmatpush1.msra.mxu0 0.0
  %3301 = vmatprep.subr.mxu0 0.0
  %3302 = vmatpush1.msra.mxu0 0.0
  %3303 = vmatprep.subr.mxu0 0.0
  %3304 = vmatpush1.msra.mxu0 0.0
  %3305 = vmatprep.subr.mxu0 0.0
  %3306 = vmatpush1.msra.mxu0 0.0
  %3307 = vmatprep.subr.mxu0 0.0
  %3308 = vmatpush1.msra.mxu0 0.0
  %3309 = vmatprep.subr.mxu0 0.0
  %3310 = vmatpush1.msra.mxu0 0.0
  %3311 = vmatprep.subr.mxu0 0.0
  %3312 = vmatpush1.msra.mxu0 0.0
  %3313 = vmatprep.subr.mxu0 0.0
  %3314 = vmatpush1.msra.mxu0 0.0
  %3315 = vmatprep.subr.mxu0 0.0
  %3316 = vmatpush1.msra.mxu0 0.0
  %3317 = vmatprep.subr.mxu0 0.0
  %3318 = vmatpush1.msra.mxu0 0.0
  %3319 = vmatprep.subr.mxu0 0.0
  %3320 = vmatpush1.msra.mxu0 0.0
  %3321 = vmatprep.subr.mxu0 0.0
  %3322 = vmatpush1.msra.mxu0 0.0
  %3323 = vmatprep.subr.mxu0 0.0
  %3324 = vmatpush1.msra.mxu0 0.0
  %3325 = vmatprep.subr.mxu0 0.0
  %3326 = vmatpush1.msra.mxu0 0.0
  %3327 = vmatprep.subr.mxu0 0.0
  %3328 = vmatpush1.msra.mxu0 0.0
  %3329 = vmatprep.subr.mxu0 0.0
  %3330 = vmatpush1.msra.mxu0 0.0
  %3331 = vmatprep.subr.mxu0 0.0
  %3332 = vmatpush1.msra.mxu0 0.0
  %3333 = vmatprep.subr.mxu0 0.0
  %3334 = vmatpush1.msra.mxu0 0.0
  %3335 = vmatprep.subr.mxu0 0.0
  %3336 = vmatpush1.msra.mxu0 0.0
  %3337 = vmatprep.subr.mxu0 0.0
  %3338 = vmatpush1.msra.mxu0 0.0
  %3339 = vmatprep.subr.mxu0 0.0
  %3340 = vmatpush1.msra.mxu0 0.0
  %3341 = vmatprep.mubr.f32.mxu0 0.0
  %3342 = vmatmul.mubr.f32.gmra.mrb[0].mxu0 %v3269
  %v3343 = vpop.f32.mrb[0].mxu0
  %v3344 = vadd.f32 %v3266, %v3343
  %v3345 = vpop.f32.mrb[0].mxu0
  %3346 = vmatprep.mubr.f32.mxu0 0.0
  %3347 = vmatmul.mubr.f32.gmra.mrb[0].mxu0 %v3272
  %v3348 = vpop.f32.mrb[0].mxu0
  %v3349 = vadd.f32 %v3266, %v3348
  %v3350 = vpop.f32.mrb[0].mxu0
  %3351 = vmatprep.mubr.f32.mxu0 0.0
  %3352 = vmatmul.mubr.f32.gmra.mrb[0].mxu0 %v3275
  %v3353 = vpop.f32.mrb[0].mxu0
  %v3354 = vadd.f32 %v3266, %v3353
  %v3355 = vpop.f32.mrb[0].mxu0
  %3356 = vdwg.mxu0
  %v3357 = vmul.f32 %v3344, 0.5
  %v3358 = vmul.f32 %v3349, 0.5
  %v3359 = vmul.f32 %v3354, 0.5
  %v3360 = vmul.f32 %v3344, 0.70710677
  %v3361 = vmul.f32 %v3349, 0.70710677
  %v3362 = vmul.f32 %v3354, 0.70710677
  %v3363 = verf.f32.pop %v3360
  %v3364 = verf.f32.pop %v3361
  %v3365 = verf.f32.pop %v3362
  %v3366 = vadd.f32 %v3363, 1.0
  %v3367 = vadd.f32 %v3364, 1.0
  %v3368 = vadd.f32 %v3365, 1.0
  %v3369 = vmul.f32 %v3357, %v3366
  %v3370 = vmul.f32 %v3358, %v3367
  %v3371 = vmul.f32 %v3359, %v3368
  %v3372 = vld [vmem:[%s10] sm:$0xff]
  %v3373 = vld [vmem:[%s10 + $0x8] sm:$0xff]
  %v3374 = vld [vmem:[%s10 + $0x10] sm:$0xff]
  %v3375 = vld [vmem:[%s10 + $0x18] sm:$0xff]
  %v3376 = vld [vmem:[%s10 + $0x20] sm:$0xff]
  %v3377 = vld [vmem:[%s10 + $0x28] sm:$0xff]
  %v3378 = vld [vmem:[%s10 + $0x30] sm:$0xff]
  %v3379 = vld [vmem:[%s10 + $0x38] sm:$0xff]
  %v3380 = vld [vmem:[%s11] sm:$0x1]
  %v3382 = vlaneseq
  %v3383 = vshrl.u32 %v3382, 7
  %v3384 = vsub.s32 0, %v3383
  %v3385 = vrot.slane %v3380, %v3384
  %vm3387 = vcmask 523264
  %v3389 = vsel %vm3387, %v3369, 0
  %v3392 = vsel %vm3387, %v3370, 0
  %v3395 = vsel %vm3387, %v3371, 0
  %3397 = vmatprep.subr.mxu0 0.0
  %3398 = vmatpush1.msra.mxu0 %v3372
  %3399 = vmatprep.subr.mxu0 0.0
  %3400 = vmatpush1.msra.mxu0 %v3373
  %3401 = vmatprep.subr.mxu0 0.0
  %3402 = vmatpush1.msra.mxu0 %v3374
  %3403 = vmatprep.subr.mxu0 0.0
  %3404 = vmatpush1.msra.mxu0 %v3375
  %3405 = vmatprep.subr.mxu0 0.0
  %3406 = vmatpush1.msra.mxu0 %v3376
  %3407 = vmatprep.subr.mxu0 0.0
  %3408 = vmatpush1.msra.mxu0 %v3377
  %3409 = vmatprep.subr.mxu0 0.0
  %3410 = vmatpush1.msra.mxu0 %v3378
  %3411 = vmatprep.subr.mxu0 0.0
  %3412 = vmatpush1.msra.mxu0 %v3379
  %3413 = vmatprep.subr.mxu0 0.0
  %3414 = vmatpush1.msra.mxu0 0.0
  %3415 = vmatprep.subr.mxu0 0.0
  %3416 = vmatpush1.msra.mxu0 0.0
  %3417 = vmatprep.subr.mxu0 0.0
  %3418 = vmatpush1.msra.mxu0 0.0
  %3419 = vmatprep.subr.mxu0 0.0
  %3420 = vmatpush1.msra.mxu0 0.0
  %3421 = vmatprep.subr.mxu0 0.0
  %3422 = vmatpush1.msra.mxu0 0.0
  %3423 = vmatprep.subr.mxu0 0.0
  %3424 = vmatpush1.msra.mxu0 0.0
  %3425 = vmatprep.subr.mxu0 0.0
  %3426 = vmatpush1.msra.mxu0 0.0
  %3427 = vmatprep.subr.mxu0 0.0
  %3428 = vmatpush1.msra.mxu0 0.0
  %3429 = vmatprep.subr.mxu0 0.0
  %3430 = vmatpush1.msra.mxu0 0.0
  %3431 = vmatprep.subr.mxu0 0.0
  %3432 = vmatpush1.msra.mxu0 0.0
  %3433 = vmatprep.subr.mxu0 0.0
  %3434 = vmatpush1.msra.mxu0 0.0
  %3435 = vmatprep.subr.mxu0 0.0
  %3436 = vmatpush1.msra.mxu0 0.0
  %3437 = vmatprep.subr.mxu0 0.0
  %3438 = vmatpush1.msra.mxu0 0.0
  %3439 = vmatprep.subr.mxu0 0.0
  %3440 = vmatpush1.msra.mxu0 0.0
  %3441 = vmatprep.subr.mxu0 0.0
  %3442 = vmatpush1.msra.mxu0 0.0
  %3443 = vmatprep.subr.mxu0 0.0
  %3444 = vmatpush1.msra.mxu0 0.0
  %3445 = vmatprep.subr.mxu0 0.0
  %3446 = vmatpush1.msra.mxu0 0.0
  %3447 = vmatprep.subr.mxu0 0.0
  %3448 = vmatpush1.msra.mxu0 0.0
  %3449 = vmatprep.subr.mxu0 0.0
  %3450 = vmatpush1.msra.mxu0 0.0
  %3451 = vmatprep.subr.mxu0 0.0
  %3452 = vmatpush1.msra.mxu0 0.0
  %3453 = vmatprep.subr.mxu0 0.0
  %3454 = vmatpush1.msra.mxu0 0.0
  %3455 = vmatprep.subr.mxu0 0.0
  %3456 = vmatpush1.msra.mxu0 0.0
  %3457 = vmatprep.subr.mxu0 0.0
  %3458 = vmatpush1.msra.mxu0 0.0
  %3459 = vmatprep.subr.mxu0 0.0
  %3460 = vmatpush1.msra.mxu0 0.0
  %3461 = vmatprep.mubr.f32.mxu0 0.0
  %3462 = vmatmul.mubr.f32.gmra.mrb[0].mxu0 %v3389
  %v3463 = vpop.f32.mrb[0].mxu0
  %v3464 = vadd.f32 %v3385, %v3463
  %v3465 = vpop.f32.mrb[0].mxu0
  %3466 = vmatprep.mubr.f32.mxu0 0.0
  %3467 = vmatmul.mubr.f32.gmra.mrb[0].mxu0 %v3392
  %v3468 = vpop.f32.mrb[0].mxu0
  %v3469 = vadd.f32 %v3385, %v3468
  %v3470 = vpop.f32.mrb[0].mxu0
  %3471 = vmatprep.mubr.f32.mxu0 0.0
  %3472 = vmatmul.mubr.f32.gmra.mrb[0].mxu0 %v3395
  %v3473 = vpop.f32.mrb[0].mxu0
  %v3474 = vadd.f32 %v3385, %v3473
  %v3475 = vpop.f32.mrb[0].mxu0
  %3476 = vdwg.mxu0
  %v3477 = vadd.f32 %v3464, %v3090
  %v3478 = vadd.f32 %v3469, %v3197
  %v3479 = vadd.f32 %v3474, %v3194
  %3480 = vst.msk [vmem:[%s14] sm:$0xff] %vm54, %v3477
  %3481 = vst.msk [vmem:[%s14 + $0x8] sm:$0xff] %vm54, %v3478
  %3482 = vst.msk [vmem:[%s14 + $0x10] sm:$0x3] %vm67, %v3479
  // Predicated region
  $region58: #{transformer_topk_forward.2} parent=0 // pred_check
    _
  $region59: #{transformer_topk_forward.2} parent=0 // pred_check_branch
    %3484 = sbr.rel (0) target = $region61
  $region60: #{transformer_topk_forward.2} parent=0 // pred_region
    _
  $region61: #{transformer_topk_forward.2} parent=0 // pred_fallthru
    _
  // Predicated region
  $region62: #{transformer_topk_forward.2} parent=0 // pred_check
    _
  $region63: #{transformer_topk_forward.2} parent=0 // pred_check_branch
    %3486 = sbr.rel (0) target = $region65
  $region64: #{transformer_topk_forward.2} parent=0 // pred_region
    _
  $region65: #{transformer_topk_forward.2} parent=0 // pred_fallthru
    _

</llo_original>
